<compile_context>
chip_gen: v7x
topology: tpu7x:2x2x1
jax: 0.10.0
libtpu: 0.0.40
codegen_flags: <defaults>
</compile_context>

<pallas_src>
import functools

import jax
import jax.numpy as jnp
from jax import lax
from jax.experimental import pallas as pl
from jax.experimental.pallas import tpu as pltpu

TAU = 2.0              # LIFNode tau (decay_input=True, v_reset=0, v_th=1)
V_TH = 1.0
BN_EPS = 1e-5
_LANES = 128


# ------------------------------ small helpers --------------------------------

def _round_up(x, m):
    return (x + m - 1) // m * m


def _pick_tile(n, target, align=8):
    """Largest divisor of n that is a multiple of `align` and <= max(target,
    align); falls back to n (a full-dim block is always layout-legal — this
    only triggers when n itself is not a multiple of `align`)."""
    target = max(align, min(n, int(target)))
    start = target - target % align
    for d in range(start, align - 1, -align):
        if n % d == 0:
            return d
    return n


def _largest_divisor_le(n, target):
    for d in range(max(1, min(n, int(target))), 0, -1):
        if n % d == 0:
            return d
    return 1


def _vmem_budget_bytes():
    """Generation-aware scoped-VMEM budget (v5e/v6e: 128 MiB physical,
    v7x: 64 MiB physical)."""
    try:
        cap = int(pltpu.get_tpu_info().vmem_capacity_bytes)
    except Exception:
        cap = 64 * 1024 * 1024
    if cap >= 96 * 1024 * 1024:
        return 80 * 1024 * 1024        # v5e / v6e
    return 40 * 1024 * 1024            # v7x (and anything small / unknown)


# ------------------------------ Pallas kernels --------------------------------

def _conv1x1_stats_kernel(x_ref, w_ref, b_ref, y_ref, ps_ref):
    # x: (TM, Cp) bf16   w: (Cp, Cp) bf16   b: (1, Cp) f32
    # y: (TM, Cp) bf16   ps: (2, Cp) f32 per-tile [sum ; sum-of-squares]
    y = (jnp.dot(x_ref[...], w_ref[...], preferred_element_type=jnp.float32)
         + b_ref[...])
    y_ref[...] = y.astype(y_ref.dtype)
    ps_ref[0:1, :] = jnp.sum(y, axis=0, keepdims=True)
    ps_ref[1:2, :] = jnp.sum(y * y, axis=0, keepdims=True)


def _conv3x3_stats_kernel(x_ref, w_ref, b_ref, y_ref, ps_ref, xh_ref):
    # 3x3 conv (padding=1) as 9 accumulating per-tap MXU matmuls.
    # x:  (Nb, H, W, Cp) bf16 spikes       w: (9*Cp, Cp) bf16 (tap-major)
    # b:  (1, Cp) f32                      y: (Nb, H*W, Cp) bf16
    # ps: (2, Cp) f32                      xh: (Nb, H+2, W+2, Cp) bf16 halo
    nb, h, w, cp = x_ref.shape
    hw = h * w

    # Re-zero just the 1-pixel border strips every step (cheap; correct even
    # when the grid is split across TensorCores), then drop the block interior
    # into the halo scratch.
    zrow = jnp.zeros((nb, 1, w + 2, cp), dtype=xh_ref.dtype)
    zcol = jnp.zeros((nb, h + 2, 1, cp), dtype=xh_ref.dtype)
    xh_ref[:, 0:1, :, :] = zrow
    xh_ref[:, h + 1:h + 2, :, :] = zrow
    xh_ref[:, :, 0:1, :] = zcol
    xh_ref[:, :, w + 1:w + 2, :] = zcol
    xh_ref[:, 1:h + 1, 1:w + 1, :] = x_ref[...]

    acc = jnp.zeros((nb * hw, cp), jnp.float32)
    for dy in range(3):
        for dx in range(3):
            tap = dy * 3 + dx
            lhs = xh_ref[:, dy:dy + h, dx:dx + w, :].reshape(nb * hw, cp)
            acc = acc + jnp.dot(lhs, w_ref[tap * cp:(tap + 1) * cp, :],
                                preferred_element_type=jnp.float32)
    y = acc + b_ref[...]
    y_ref[...] = y.reshape(nb, hw, cp).astype(y_ref.dtype)
    ps_ref[0:1, :] = jnp.sum(y, axis=0, keepdims=True)
    ps_ref[1:2, :] = jnp.sum(y * y, axis=0, keepdims=True)


def _bn_lif_kernel(y_ref, scale_ref, shift_ref, o_ref, v_ref):
    # Fused tdBN-apply + multi-step LIF. Grid = (batch, hw-tile, T); the time
    # axis is innermost/sequential and carries the membrane potential v_ref.
    t = pl.program_id(2)

    @pl.when(t == 0)
    def _():
        v_ref[...] = jnp.zeros_like(v_ref)

    x = y_ref[...].astype(jnp.float32) * scale_ref[...] + shift_ref[...]
    v = v_ref[...] + (x - v_ref[...]) * (1.0 / TAU)      # charge (decay_input)
    spike = (v >= V_TH).astype(jnp.float32)
    o_ref[...] = spike.astype(o_ref.dtype)
    v_ref[...] = v * (1.0 - spike)                       # hard reset to 0


def _bn_lif_res_kernel(y_ref, res_ref, scale_ref, shift_ref, o_ref, v_ref):
    # Same as above, plus the residual add fused into the final store.
    t = pl.program_id(2)

    @pl.when(t == 0)
    def _():
        v_ref[...] = jnp.zeros_like(v_ref)

    x = y_ref[...].astype(jnp.float32) * scale_ref[...] + shift_ref[...]
    v = v_ref[...] + (x - v_ref[...]) * (1.0 / TAU)
    spike = (v >= V_TH).astype(jnp.float32)
    o_ref[...] = res_ref[...].astype(jnp.float32) + spike
    v_ref[...] = v * (1.0 - spike)


# ------------------------------ host-side glue --------------------------------

def _fold_bn(partials, count, gamma, beta):
    # partials: (n_tiles, 2, Cp) -> folded (scale, shift), each (1, Cp) f32.
    s = jnp.sum(partials[:, 0, :], axis=0)
    ss = jnp.sum(partials[:, 1, :], axis=0)
    mean = s / count
    var = jnp.maximum(ss / count - mean * mean, 0.0)     # biased (training) var
    inv = lax.rsqrt(var + BN_EPS)
    scale = gamma * inv
    shift = beta - mean * scale
    return scale.reshape(1, -1), shift.reshape(1, -1)


@functools.partial(jax.jit, static_argnames=("with_residual",))
def bottleneck_forward(x, params, with_residual=True):
    B, T, C, H, W = x.shape
    BT, HW = B * T, H * W
    M = BT * HW
    Cp = _round_up(C, _LANES)
    budget = _vmem_budget_bytes()

    # ---- one-time layout change: NCHW -> channels-last, lane-dense, bf16 ----
    # (one bf16 copy serves both as K1's matmul input and K4's residual stream;
    #  the bf16 rounding of the residual is the only extra approximation)
    x_cl = jnp.transpose(x.reshape(BT, C, H, W).astype(jnp.bfloat16),
                         (0, 2, 3, 1))                                   # (BT,H,W,C)
    x_cl = jnp.pad(x_cl, ((0, 0), (0, 0), (0, 0), (0, Cp - C)))

    # ---- parameters: pad channels with zeros; matmul weights to bf16 ----
    w1 = jnp.pad(jnp.transpose(params["w1"][:, :, 0, 0]),                # (Cin,Cout)
                 ((0, Cp - C), (0, Cp - C))).astype(jnp.bfloat16)
    b1 = jnp.pad(params["b1"], (0, Cp - C)).reshape(1, Cp)
    g1 = jnp.pad(params["g1"], (0, Cp - C))
    be1 = jnp.pad(params["beta1"], (0, Cp - C))
    w2 = jnp.pad(jnp.transpose(params["w2"], (2, 3, 1, 0)),              # (3,3,Cin,Cout)
                 ((0, 0), (0, 0), (0, Cp - C), (0, Cp - C)))
    w2 = w2.reshape(9 * Cp, Cp).astype(jnp.bfloat16)                     # tap-major
    b2 = jnp.pad(params["b2"], (0, Cp - C)).reshape(1, Cp)
    g2 = jnp.pad(params["g2"], (0, Cp - C))
    be2 = jnp.pad(params["beta2"], (0, Cp - C))

    # ---- generation-aware tile sizing ----
    # K1: (TM, Cp) blocks; ~8 B/row/lane live (bf16 in/out, double-buffered).
    tm_cap = max(8, (budget // 4) // (8 * Cp))
    TM = _pick_tile(M, min(tm_cap, max(8, M // 2)))      # >= 2 programs
    n_m = M // TM

    # K2/K4: (THW, Cp) blocks; ~20 B/row/lane (bf16 streams + f32 out + carry).
    thw_cap = max(8, (budget // 3) // (20 * Cp))
    thw_target = min(HW, thw_cap)
    if B == 1 and HW >= 16:
        thw_target = min(thw_target, HW // 2)            # keep a wide parallel axis
    THW = _pick_tile(HW, thw_target)
    n_hw = HW // THW

    # K3: Nb frames/step; per-frame ~= HW*Cp*18 B (bf16 in x2, halo, bf16 out x2,
    # f32 acc, per-tap lhs temp) + halo border, plus double-buffered weights.
    w2_bytes = 2 * (9 * Cp) * Cp * 2
    per_frame = HW * Cp * 18 + ((H + 2) * (W + 2) - HW) * Cp * 2
    nb_cap = max(1, (budget * 2 // 3 - w2_bytes) // per_frame)
    if BT >= 2:
        nb_cap = min(nb_cap, BT // 2)                    # >= 2 programs (megacore)
    Nb = _largest_divisor_le(BT, nb_cap)
    n_img = BT // Nb

    def _cp(sem):
        return pltpu.CompilerParams(dimension_semantics=sem,
                                    vmem_limit_bytes=budget)

    # ============ stage 1: conv_1 (1x1 matmul) + BN1 partial stats ============
    y1, ps1 = pl.pallas_call(
        _conv1x1_stats_kernel,
        out_shape=(jax.ShapeDtypeStruct((M, Cp), jnp.bfloat16),
                   jax.ShapeDtypeStruct((n_m, 2, Cp), jnp.float32)),
        grid=(n_m,),
        in_specs=[pl.BlockSpec((TM, Cp), lambda i: (i, 0)),
                  pl.BlockSpec((Cp, Cp), lambda i: (0, 0)),
                  pl.BlockSpec((1, Cp), lambda i: (0, 0))],
        out_specs=(pl.BlockSpec((TM, Cp), lambda i: (i, 0)),
                   pl.BlockSpec((None, 2, Cp), lambda i: (i, 0, 0))),
        compiler_params=_cp(("parallel",)),
    )(x_cl.reshape(M, Cp), w1, b1)
    scale1, shift1 = _fold_bn(ps1, float(M), g1, be1)

    # ============ stage 2: tdBN_1-apply + LIF_1 (fused, time-sequential) ============
    # Input image-rows are in (b*T + t) order; spikes are written in the
    # (t*B + b) order that the module's reshape/permute chain hands to conv_2.
    s1 = pl.pallas_call(
        _bn_lif_kernel,
        out_shape=jax.ShapeDtypeStruct((BT, HW, Cp), jnp.bfloat16),
        grid=(B, n_hw, T),
        in_specs=[pl.BlockSpec((None, THW, Cp), lambda b, h, t: (b * T + t, h, 0)),
                  pl.BlockSpec((1, Cp), lambda b, h, t: (0, 0)),
                  pl.BlockSpec((1, Cp), lambda b, h, t: (0, 0))],
        out_specs=pl.BlockSpec((None, THW, Cp), lambda b, h, t: (t * B + b, h, 0)),
        scratch_shapes=[pltpu.VMEM((THW, Cp), jnp.float32)],
        compiler_params=_cp(("parallel", "parallel", "arbitrary")),
    )(y1.reshape(BT, HW, Cp), scale1, shift1)

    # ============ stage 3: conv_2 (3x3, padding=1) + BN2 partial stats ============
    # No host-side halo pad: the 1-pixel border lives in a small zero-bordered
    # VMEM scratch inside the kernel; the conv is 9 accumulating tap matmuls.
    y2, ps2 = pl.pallas_call(
        _conv3x3_stats_kernel,
        out_shape=(jax.ShapeDtypeStruct((BT, HW, Cp), jnp.bfloat16),
                   jax.ShapeDtypeStruct((n_img, 2, Cp), jnp.float32)),
        grid=(n_img,),
        in_specs=[pl.BlockSpec((Nb, H, W, Cp), lambda i: (i, 0, 0, 0)),
                  pl.BlockSpec((9 * Cp, Cp), lambda i: (0, 0)),
                  pl.BlockSpec((1, Cp), lambda i: (0, 0))],
        out_specs=(pl.BlockSpec((Nb, HW, Cp), lambda i: (i, 0, 0)),
                   pl.BlockSpec((None, 2, Cp), lambda i: (i, 0, 0))),
        scratch_shapes=[pltpu.VMEM((Nb, H + 2, W + 2, Cp), jnp.bfloat16)],
        compiler_params=_cp(("parallel",)),
    )(s1.reshape(BT, H, W, Cp), w2, b2)
    scale2, shift2 = _fold_bn(ps2, float(M), g2, be2)

    # ======= stage 4: tdBN_2-apply + LIF_2 + residual add (fused final store) =======
    # LIF_2's recurrence runs over rows i*T + j of the t-major conv_2 output
    # (exactly what the module's second reshape/permute produces); the residual
    # and the final output use the module's last-reshape row order j*B + i.
    res_v = x_cl.reshape(BT, HW, Cp)
    common = dict(
        out_shape=jax.ShapeDtypeStruct((BT, HW, Cp), jnp.float32),
        grid=(B, n_hw, T),
        out_specs=pl.BlockSpec((None, THW, Cp), lambda i, h, j: (j * B + i, h, 0)),
        scratch_shapes=[pltpu.VMEM((THW, Cp), jnp.float32)],
        compiler_params=_cp(("parallel", "parallel", "arbitrary")),
    )
    if with_residual:
        out_flat = pl.pallas_call(
            _bn_lif_res_kernel,
            in_specs=[pl.BlockSpec((None, THW, Cp), lambda i, h, j: (i * T + j, h, 0)),
                      pl.BlockSpec((None, THW, Cp), lambda i, h, j: (j * B + i, h, 0)),
                      pl.BlockSpec((1, Cp), lambda i, h, j: (0, 0)),
                      pl.BlockSpec((1, Cp), lambda i, h, j: (0, 0))],
            **common,
        )(y2, res_v, scale2, shift2)
    else:
        out_flat = pl.pallas_call(
            _bn_lif_kernel,
            in_specs=[pl.BlockSpec((None, THW, Cp), lambda i, h, j: (i * T + j, h, 0)),
                      pl.BlockSpec((1, Cp), lambda i, h, j: (0, 0)),
                      pl.BlockSpec((1, Cp), lambda i, h, j: (0, 0))],
            **common,
        )(y2, scale2, shift2)

    # ---- back to (B, T, C, H, W): drop channel padding, channels-last -> NCHW ----
    # (when C is already a multiple of 128 the slice is a no-op XLA elides)
    out = out_flat.reshape(B, T, H, W, Cp)[..., :C]
    return jnp.transpose(out, (0, 1, 4, 2, 3))


def init_params(key, C):
    k1, k2 = jax.random.split(key, 2)
    return {
        "w1": jax.random.normal(k1, (C, C, 1, 1), jnp.float32) * 0.25,
        "b1": jnp.linspace(-0.1, 0.1, C).astype(jnp.float32),
        "g1": jnp.ones((C,), jnp.float32),
        "beta1": jnp.full((C,), 0.05, jnp.float32),
        "w2": jax.random.normal(k2, (C, C, 3, 3), jnp.float32) * 0.1,
        "b2": jnp.linspace(-0.05, 0.05, C).astype(jnp.float32),
        "g2": jnp.full((C,), 0.9, jnp.float32),
        "beta2": jnp.full((C,), -0.02, jnp.float32),
    }


if __name__ == "__main__":
    B, T, C, H, W = 2, 4, 4, 8, 8
    key = jax.random.PRNGKey(0)
    kx, kp = jax.random.split(key)
    x = jax.random.normal(kx, (B, T, C, H, W), jnp.float32)
    params = init_params(kp, C)

    out = jax.block_until_ready(bottleneck_forward(x, params, with_residual=True))
    assert out.shape == (B, T, C, H, W), out.shape
    assert bool(jnp.all(jnp.isfinite(out)))

    out2 = jax.block_until_ready(bottleneck_forward(x, params, with_residual=False))
    assert out2.shape == (B, T, C, H, W), out2.shape
    assert bool(jnp.all(jnp.isfinite(out2)))

    print("KERNEL_OK")
</pallas_src>

<mosaic_0001>
module attributes {stable_mosaic.version = 11 : i64} {
  func.func @_conv1x1_stats_kernel(%arg0: i32, %arg1: memref<256x128xbf16, #tpu.memory_space<vmem>>, %arg2: memref<128x128xbf16, #tpu.memory_space<vmem>>, %arg3: memref<1x128xf32, #tpu.memory_space<vmem>>, %arg4: memref<256x128xbf16, #tpu.memory_space<vmem>>, %arg5: memref<1x2x128xf32, #tpu.memory_space<vmem>>) attributes {dimension_semantics = [#tpu.dimension_semantics<parallel>], iteration_bounds = array<i64: 2>, scalar_prefetch = 0 : i64, scratch_operands = 0 : i64, tpu.core_type = #tpu.core_type<tc>, window_params = [{transform_indices = @transform_0, window_bounds = array<i64: 256, 128>}, {pipeline_mode = #tpu.pipeline_mode<synchronous>, transform_indices = @transform_1, window_bounds = array<i64: 128, 128>}, {pipeline_mode = #tpu.pipeline_mode<synchronous>, transform_indices = @transform_2, window_bounds = array<i64: 1, 128>}, {transform_indices = @transform_3, window_bounds = array<i64: 256, 128>}, {transform_indices = @transform_4, window_bounds = array<i64: 1, 2, 128>}]} {
    %c0 = arith.constant 0 : index
    %c0_0 = arith.constant 0 : index
    %0 = vector.load %arg1[%c0, %c0_0] : memref<256x128xbf16, #tpu.memory_space<vmem>>, vector<256x128xbf16>
    %c0_1 = arith.constant 0 : index
    %c0_2 = arith.constant 0 : index
    %1 = vector.load %arg2[%c0_1, %c0_2] : memref<128x128xbf16, #tpu.memory_space<vmem>>, vector<128x128xbf16>
    %cst = arith.constant dense<0.000000e+00> : vector<256x128xf32>
    %2 = tpu.matmul %0, %1, %cst {dimension_numbers = #tpu.dot_dimension_numbers<[1], [0], [0], [1], [0, 0, 1, 1], [], []>} : vector<256x128xbf16>, vector<128x128xbf16>, vector<256x128xf32> -> vector<256x128xf32>
    %c0_3 = arith.constant 0 : index
    %c0_4 = arith.constant 0 : index
    %3 = vector.load %arg3[%c0_3, %c0_4] : memref<1x128xf32, #tpu.memory_space<vmem>>, vector<1x128xf32>
    %4 = vector.broadcast %3 : vector<1x128xf32> to vector<256x128xf32>
    %5 = arith.addf %2, %4 : vector<256x128xf32>
    %6 = arith.truncf %5 : vector<256x128xf32> to vector<256x128xbf16>
    %c0_5 = arith.constant 0 : index
    %c0_6 = arith.constant 0 : index
    %7 = vector.load %arg4[%c0_5, %c0_6] : memref<256x128xbf16, #tpu.memory_space<vmem>>, vector<256x128xbf16>
    tpu.vector_store %arg4[%c0_5, %c0_6], %6 {strides = array<i32>} : memref<256x128xbf16, #tpu.memory_space<vmem>>, vector<256x128xbf16>,
    %cst_7 = arith.constant dense<0.000000e+00> : vector<128xf32>
    %8 = vector.multi_reduction <add>, %5, %cst_7 [0] : vector<256x128xf32> to vector<128xf32>
    %9 = vector.shape_cast %8 : vector<128xf32> to vector<1x128xf32>
    %c0_8 = arith.constant 0 : index
    %c0_9 = arith.constant 0 : index
    %c0_10 = arith.constant 0 : index
    %10 = vector.load %arg5[%c0_8, %c0_9, %c0_10] : memref<1x2x128xf32, #tpu.memory_space<vmem>>, vector<1x1x128xf32>
    %11 = vector.shape_cast %10 : vector<1x1x128xf32> to vector<1x128xf32>
    %12 = vector.shape_cast %9 : vector<1x128xf32> to vector<1x1x128xf32>
    tpu.vector_store %arg5[%c0_8, %c0_9, %c0_10], %12 {strides = array<i32>} : memref<1x2x128xf32, #tpu.memory_space<vmem>>, vector<1x1x128xf32>,
    %13 = arith.mulf %5, %5 : vector<256x128xf32>
    %cst_11 = arith.constant dense<0.000000e+00> : vector<128xf32>
    %14 = vector.multi_reduction <add>, %13, %cst_11 [0] : vector<256x128xf32> to vector<128xf32>
    %15 = vector.shape_cast %14 : vector<128xf32> to vector<1x128xf32>
    %c0_12 = arith.constant 0 : index
    %c1 = arith.constant 1 : index
    %c0_13 = arith.constant 0 : index
    %16 = vector.load %arg5[%c0_12, %c1, %c0_13] : memref<1x2x128xf32, #tpu.memory_space<vmem>>, vector<1x1x128xf32>
    %17 = vector.shape_cast %16 : vector<1x1x128xf32> to vector<1x128xf32>
    %18 = vector.shape_cast %15 : vector<1x128xf32> to vector<1x1x128xf32>
    tpu.vector_store %arg5[%c0_12, %c1, %c0_13], %18 {strides = array<i32>} : memref<1x2x128xf32, #tpu.memory_space<vmem>>, vector<1x1x128xf32>,
    return
  }
  func.func @transform_0(%arg0: i32) -> (i32, i32) {
    %c0_i32 = arith.constant 0 : i32
    %c0_i32_0 = arith.constant 0 : i32
    return %arg0, %c0_i32 : i32, i32
  }
  func.func @transform_1(%arg0: i32) -> (i32, i32) {
    %c0_i32 = arith.constant 0 : i32
    %c0_i32_0 = arith.constant 0 : i32
    %c0_i32_1 = arith.constant 0 : i32
    return %c0_i32, %c0_i32_0 : i32, i32
  }
  func.func @transform_2(%arg0: i32) -> (i32, i32) {
    %c0_i32 = arith.constant 0 : i32
    %c0_i32_0 = arith.constant 0 : i32
    %c0_i32_1 = arith.constant 0 : i32
    return %c0_i32, %c0_i32_0 : i32, i32
  }
  func.func @transform_3(%arg0: i32) -> (i32, i32) {
    %c0_i32 = arith.constant 0 : i32
    %c0_i32_0 = arith.constant 0 : i32
    return %arg0, %c0_i32 : i32, i32
  }
  func.func @transform_4(%arg0: i32) -> (i32, i32, i32) {
    %c0_i32 = arith.constant 0 : i32
    %c0_i32_0 = arith.constant 0 : i32
    %c0_i32_1 = arith.constant 0 : i32
    return %arg0, %c0_i32, %c0_i32_0 : i32, i32, i32
  }
}

module attributes {stable_mosaic.version = 11 : i64} {
  func.func @_bn_lif_kernel(%arg0: i32, %arg1: i32, %arg2: i32, %arg3: memref<1x64x128xbf16, #tpu.memory_space<vmem>>, %arg4: memref<1x128xf32, #tpu.memory_space<vmem>>, %arg5: memref<1x128xf32, #tpu.memory_space<vmem>>, %arg6: memref<1x64x128xbf16, #tpu.memory_space<vmem>>, %arg7: memref<64x128xf32, #tpu.memory_space<vmem>>) attributes {dimension_semantics = [#tpu.dimension_semantics<parallel>, #tpu.dimension_semantics<parallel>, #tpu.dimension_semantics<arbitrary>], iteration_bounds = array<i64: 2, 1, 4>, scalar_prefetch = 0 : i64, scratch_operands = 1 : i64, tpu.core_type = #tpu.core_type<tc>, window_params = [{transform_indices = @transform_0, window_bounds = array<i64: 1, 64, 128>}, {pipeline_mode = #tpu.pipeline_mode<synchronous>, transform_indices = @transform_1, window_bounds = array<i64: 1, 128>}, {pipeline_mode = #tpu.pipeline_mode<synchronous>, transform_indices = @transform_2, window_bounds = array<i64: 1, 128>}, {transform_indices = @transform_3, window_bounds = array<i64: 1, 64, 128>}]} {
    %c0_i32 = arith.constant 0 : i32
    %0 = arith.cmpi eq, %arg2, %c0_i32 : i32
    %1 = arith.extui %0 : i1 to i32
    %c0_i32_0 = arith.constant 0 : i32
    %2 = arith.cmpi ne, %1, %c0_i32_0 : i32
    scf.if %2 {
      %cst_18 = arith.constant 0.000000e+00 : f32
      %30 = vector.broadcast %cst_18 : f32 to vector<64x128xf32>
      %c0_19 = arith.constant 0 : index
      %c0_20 = arith.constant 0 : index
      %31 = vector.load %arg7[%c0_19, %c0_20] : memref<64x128xf32, #tpu.memory_space<vmem>>, vector<64x128xf32>
      tpu.vector_store %arg7[%c0_19, %c0_20], %30 {strides = array<i32>} : memref<64x128xf32, #tpu.memory_space<vmem>>, vector<64x128xf32>,
    } else {
    }
    %c0 = arith.constant 0 : index
    %c0_1 = arith.constant 0 : index
    %c0_2 = arith.constant 0 : index
    %3 = vector.load %arg3[%c0, %c0_1, %c0_2] : memref<1x64x128xbf16, #tpu.memory_space<vmem>>, vector<1x64x128xbf16>
    %4 = vector.shape_cast %3 : vector<1x64x128xbf16> to vector<64x128xbf16>
    %5 = arith.extf %4 : vector<64x128xbf16> to vector<64x128xf32>
    %c0_3 = arith.constant 0 : index
    %c0_4 = arith.constant 0 : index
    %6 = vector.load %arg4[%c0_3, %c0_4] : memref<1x128xf32, #tpu.memory_space<vmem>>, vector<1x128xf32>
    %7 = vector.broadcast %6 : vector<1x128xf32> to vector<64x128xf32>
    %8 = arith.mulf %5, %7 : vector<64x128xf32>
    %c0_5 = arith.constant 0 : index
    %c0_6 = arith.constant 0 : index
    %9 = vector.load %arg5[%c0_5, %c0_6] : memref<1x128xf32, #tpu.memory_space<vmem>>, vector<1x128xf32>
    %10 = vector.broadcast %9 : vector<1x128xf32> to vector<64x128xf32>
    %11 = arith.addf %8, %10 : vector<64x128xf32>
    %c0_7 = arith.constant 0 : index
    %c0_8 = arith.constant 0 : index
    %12 = vector.load %arg7[%c0_7, %c0_8] : memref<64x128xf32, #tpu.memory_space<vmem>>, vector<64x128xf32>
    %c0_9 = arith.constant 0 : index
    %c0_10 = arith.constant 0 : index
    %13 = vector.load %arg7[%c0_9, %c0_10] : memref<64x128xf32, #tpu.memory_space<vmem>>, vector<64x128xf32>
    %14 = arith.subf %11, %13 : vector<64x128xf32>
    %cst = arith.constant 5.000000e-01 : f32
    %15 = vector.broadcast %cst : f32 to vector<64x128xf32>
    %16 = arith.mulf %14, %15 : vector<64x128xf32>
    %17 = arith.addf %12, %16 : vector<64x128xf32>
    %cst_11 = arith.constant 1.000000e+00 : f32
    %18 = vector.broadcast %cst_11 : f32 to vector<64x128xf32>
    %19 = arith.cmpf oge, %17, %18 : vector<64x128xf32>
    %20 = arith.extui %19 : vector<64x128xi1> to vector<64x128xi32>
    %21 = arith.sitofp %20 : vector<64x128xi32> to vector<64x128xf32>
    %22 = arith.truncf %21 : vector<64x128xf32> to vector<64x128xbf16>
    %c0_12 = arith.constant 0 : index
    %c0_13 = arith.constant 0 : index
    %c0_14 = arith.constant 0 : index
    %23 = vector.load %arg6[%c0_12, %c0_13, %c0_14] : memref<1x64x128xbf16, #tpu.memory_space<vmem>>, vector<1x64x128xbf16>
    %24 = vector.shape_cast %23 : vector<1x64x128xbf16> to vector<64x128xbf16>
    %25 = vector.shape_cast %22 : vector<64x128xbf16> to vector<1x64x128xbf16>
    tpu.vector_store %arg6[%c0_12, %c0_13, %c0_14], %25 {strides = array<i32>} : memref<1x64x128xbf16, #tpu.memory_space<vmem>>, vector<1x64x128xbf16>,
    %cst_15 = arith.constant 1.000000e+00 : f32
    %26 = vector.broadcast %cst_15 : f32 to vector<64x128xf32>
    %27 = arith.subf %26, %21 : vector<64x128xf32>
    %28 = arith.mulf %17, %27 : vector<64x128xf32>
    %c0_16 = arith.constant 0 : index
    %c0_17 = arith.constant 0 : index
    %29 = vector.load %arg7[%c0_16, %c0_17] : memref<64x128xf32, #tpu.memory_space<vmem>>, vector<64x128xf32>
    tpu.vector_store %arg7[%c0_16, %c0_17], %28 {strides = array<i32>} : memref<64x128xf32, #tpu.memory_space<vmem>>, vector<64x128xf32>,
    return
  }
  func.func @transform_0(%arg0: i32, %arg1: i32, %arg2: i32) -> (i32, i32, i32) {
    %c4_i32 = arith.constant 4 : i32
    %0 = arith.muli %arg0, %c4_i32 : i32
    %1 = arith.addi %0, %arg2 : i32
    %c0_i32 = arith.constant 0 : i32
    %c0_i32_0 = arith.constant 0 : i32
    return %1, %arg1, %c0_i32 : i32, i32, i32
  }
  func.func @transform_1(%arg0: i32, %arg1: i32, %arg2: i32) -> (i32, i32) {
    %c0_i32 = arith.constant 0 : i32
    %c0_i32_0 = arith.constant 0 : i32
    %c0_i32_1 = arith.constant 0 : i32
    return %c0_i32, %c0_i32_0 : i32, i32
  }
  func.func @transform_2(%arg0: i32, %arg1: i32, %arg2: i32) -> (i32, i32) {
    %c0_i32 = arith.constant 0 : i32
    %c0_i32_0 = arith.constant 0 : i32
    %c0_i32_1 = arith.constant 0 : i32
    return %c0_i32, %c0_i32_0 : i32, i32
  }
  func.func @transform_3(%arg0: i32, %arg1: i32, %arg2: i32) -> (i32, i32, i32) {
    %c2_i32 = arith.constant 2 : i32
    %0 = arith.muli %arg2, %c2_i32 : i32
    %1 = arith.addi %0, %arg0 : i32
    %c0_i32 = arith.constant 0 : i32
    %c0_i32_0 = arith.constant 0 : i32
    return %1, %arg1, %c0_i32 : i32, i32, i32
  }
}

module attributes {stable_mosaic.version = 11 : i64} {
  func.func @_conv3x3_stats_kernel(%arg0: i32, %arg1: memref<4x8x8x128xbf16, #tpu.memory_space<vmem>>, %arg2: memref<1152x128xbf16, #tpu.memory_space<vmem>>, %arg3: memref<1x128xf32, #tpu.memory_space<vmem>>, %arg4: memref<4x64x128xbf16, #tpu.memory_space<vmem>>, %arg5: memref<1x2x128xf32, #tpu.memory_space<vmem>>, %arg6: memref<4x10x10x128xbf16, #tpu.memory_space<vmem>>) attributes {dimension_semantics = [#tpu.dimension_semantics<parallel>], iteration_bounds = array<i64: 2>, scalar_prefetch = 0 : i64, scratch_operands = 1 : i64, tpu.core_type = #tpu.core_type<tc>, window_params = [{transform_indices = @transform_0, window_bounds = array<i64: 4, 8, 8, 128>}, {pipeline_mode = #tpu.pipeline_mode<synchronous>, transform_indices = @transform_1, window_bounds = array<i64: 1152, 128>}, {pipeline_mode = #tpu.pipeline_mode<synchronous>, transform_indices = @transform_2, window_bounds = array<i64: 1, 128>}, {transform_indices = @transform_3, window_bounds = array<i64: 4, 64, 128>}, {transform_indices = @transform_4, window_bounds = array<i64: 1, 2, 128>}]} {
    %cst = arith.constant 0.000000e+00 : bf16
    %0 = vector.broadcast %cst : bf16 to vector<4x1x10x128xbf16>
    %cst_0 = arith.constant 0.000000e+00 : bf16
    %1 = vector.broadcast %cst_0 : bf16 to vector<4x10x1x128xbf16>
    %c0 = arith.constant 0 : index
    %c0_1 = arith.constant 0 : index
    %c0_2 = arith.constant 0 : index
    %c0_3 = arith.constant 0 : index
    %2 = vector.load %arg6[%c0, %c0_1, %c0_2, %c0_3] : memref<4x10x10x128xbf16, #tpu.memory_space<vmem>>, vector<4x1x10x128xbf16>
    tpu.vector_store %arg6[%c0, %c0_1, %c0_2, %c0_3], %0 {strides = array<i32>} : memref<4x10x10x128xbf16, #tpu.memory_space<vmem>>, vector<4x1x10x128xbf16>,
    %c0_4 = arith.constant 0 : index
    %c9 = arith.constant 9 : index
    %c0_5 = arith.constant 0 : index
    %c0_6 = arith.constant 0 : index
    %3 = vector.load %arg6[%c0_4, %c9, %c0_5, %c0_6] : memref<4x10x10x128xbf16, #tpu.memory_space<vmem>>, vector<4x1x10x128xbf16>
    tpu.vector_store %arg6[%c0_4, %c9, %c0_5, %c0_6], %0 {strides = array<i32>} : memref<4x10x10x128xbf16, #tpu.memory_space<vmem>>, vector<4x1x10x128xbf16>,
    %c0_7 = arith.constant 0 : index
    %c0_8 = arith.constant 0 : index
    %c0_9 = arith.constant 0 : index
    %c0_10 = arith.constant 0 : index
    %4 = vector.load %arg6[%c0_7, %c0_8, %c0_9, %c0_10] : memref<4x10x10x128xbf16, #tpu.memory_space<vmem>>, vector<4x10x1x128xbf16>
    tpu.vector_store %arg6[%c0_7, %c0_8, %c0_9, %c0_10], %1 {strides = array<i32>} : memref<4x10x10x128xbf16, #tpu.memory_space<vmem>>, vector<4x10x1x128xbf16>,
    %c0_11 = arith.constant 0 : index
    %c0_12 = arith.constant 0 : index
    %c9_13 = arith.constant 9 : index
    %c0_14 = arith.constant 0 : index
    %5 = vector.load %arg6[%c0_11, %c0_12, %c9_13, %c0_14] : memref<4x10x10x128xbf16, #tpu.memory_space<vmem>>, vector<4x10x1x128xbf16>
    tpu.vector_store %arg6[%c0_11, %c0_12, %c9_13, %c0_14], %1 {strides = array<i32>} : memref<4x10x10x128xbf16, #tpu.memory_space<vmem>>, vector<4x10x1x128xbf16>,
    %c0_15 = arith.constant 0 : index
    %c0_16 = arith.constant 0 : index
    %c0_17 = arith.constant 0 : index
    %c0_18 = arith.constant 0 : index
    %6 = vector.load %arg1[%c0_15, %c0_16, %c0_17, %c0_18] : memref<4x8x8x128xbf16, #tpu.memory_space<vmem>>, vector<4x8x8x128xbf16>
    %c0_19 = arith.constant 0 : index
    %c1 = arith.constant 1 : index
    %c1_20 = arith.constant 1 : index
    %c0_21 = arith.constant 0 : index
    %7 = vector.load %arg6[%c0_19, %c1, %c1_20, %c0_21] : memref<4x10x10x128xbf16, #tpu.memory_space<vmem>>, vector<4x8x8x128xbf16>
    tpu.vector_store %arg6[%c0_19, %c1, %c1_20, %c0_21], %6 {strides = array<i32>} : memref<4x10x10x128xbf16, #tpu.memory_space<vmem>>, vector<4x8x8x128xbf16>,
    %cst_22 = arith.constant 0.000000e+00 : f32
    %8 = vector.broadcast %cst_22 : f32 to vector<256x128xf32>
    %c0_23 = arith.constant 0 : index
    %c0_24 = arith.constant 0 : index
    %c0_25 = arith.constant 0 : index
    %c0_26 = arith.constant 0 : index
    %9 = vector.load %arg6[%c0_23, %c0_24, %c0_25, %c0_26] : memref<4x10x10x128xbf16, #tpu.memory_space<vmem>>, vector<4x8x8x128xbf16>
    %10 = vector.shape_cast %9 : vector<4x8x8x128xbf16> to vector<256x128xbf16>
    %c0_27 = arith.constant 0 : index
    %c0_28 = arith.constant 0 : index
    %11 = vector.load %arg2[%c0_27, %c0_28] : memref<1152x128xbf16, #tpu.memory_space<vmem>>, vector<128x128xbf16>
    %cst_29 = arith.constant dense<0.000000e+00> : vector<256x128xf32>
    %12 = tpu.matmul %10, %11, %cst_29 {dimension_numbers = #tpu.dot_dimension_numbers<[1], [0], [0], [1], [0, 0, 1, 1], [], []>} : vector<256x128xbf16>, vector<128x128xbf16>, vector<256x128xf32> -> vector<256x128xf32>
    %13 = arith.addf %8, %12 : vector<256x128xf32>
    %c0_30 = arith.constant 0 : index
    %c0_31 = arith.constant 0 : index
    %c1_32 = arith.constant 1 : index
    %c0_33 = arith.constant 0 : index
    %14 = vector.load %arg6[%c0_30, %c0_31, %c1_32, %c0_33] : memref<4x10x10x128xbf16, #tpu.memory_space<vmem>>, vector<4x8x8x128xbf16>
    %15 = vector.shape_cast %14 : vector<4x8x8x128xbf16> to vector<256x128xbf16>
    %c128 = arith.constant 128 : index
    %c0_34 = arith.constant 0 : index
    %16 = vector.load %arg2[%c128, %c0_34] : memref<1152x128xbf16, #tpu.memory_space<vmem>>, vector<128x128xbf16>
    %cst_35 = arith.constant dense<0.000000e+00> : vector<256x128xf32>
    %17 = tpu.matmul %15, %16, %cst_35 {dimension_numbers = #tpu.dot_dimension_numbers<[1], [0], [0], [1], [0, 0, 1, 1], [], []>} : vector<256x128xbf16>, vector<128x128xbf16>, vector<256x128xf32> -> vector<256x128xf32>
    %18 = arith.addf %13, %17 : vector<256x128xf32>
    %c0_36 = arith.constant 0 : index
    %c0_37 = arith.constant 0 : index
    %c2 = arith.constant 2 : index
    %c0_38 = arith.constant 0 : index
    %19 = vector.load %arg6[%c0_36, %c0_37, %c2, %c0_38] : memref<4x10x10x128xbf16, #tpu.memory_space<vmem>>, vector<4x8x8x128xbf16>
    %20 = vector.shape_cast %19 : vector<4x8x8x128xbf16> to vector<256x128xbf16>
    %c256 = arith.constant 256 : index
    %c0_39 = arith.constant 0 : index
    %21 = vector.load %arg2[%c256, %c0_39] : memref<1152x128xbf16, #tpu.memory_space<vmem>>, vector<128x128xbf16>
    %cst_40 = arith.constant dense<0.000000e+00> : vector<256x128xf32>
    %22 = tpu.matmul %20, %21, %cst_40 {dimension_numbers = #tpu.dot_dimension_numbers<[1], [0], [0], [1], [0, 0, 1, 1], [], []>} : vector<256x128xbf16>, vector<128x128xbf16>, vector<256x128xf32> -> vector<256x128xf32>
    %23 = arith.addf %18, %22 : vector<256x128xf32>
    %c0_41 = arith.constant 0 : index
    %c1_42 = arith.constant 1 : index
    %c0_43 = arith.constant 0 : index
    %c0_44 = arith.constant 0 : index
    %24 = vector.load %arg6[%c0_41, %c1_42, %c0_43, %c0_44] : memref<4x10x10x128xbf16, #tpu.memory_space<vmem>>, vector<4x8x8x128xbf16>
    %25 = vector.shape_cast %24 : vector<4x8x8x128xbf16> to vector<256x128xbf16>
    %c384 = arith.constant 384 : index
    %c0_45 = arith.constant 0 : index
    %26 = vector.load %arg2[%c384, %c0_45] : memref<1152x128xbf16, #tpu.memory_space<vmem>>, vector<128x128xbf16>
    %cst_46 = arith.constant dense<0.000000e+00> : vector<256x128xf32>
    %27 = tpu.matmul %25, %26, %cst_46 {dimension_numbers = #tpu.dot_dimension_numbers<[1], [0], [0], [1], [0, 0, 1, 1], [], []>} : vector<256x128xbf16>, vector<128x128xbf16>, vector<256x128xf32> -> vector<256x128xf32>
    %28 = arith.addf %23, %27 : vector<256x128xf32>
    %c0_47 = arith.constant 0 : index
    %c1_48 = arith.constant 1 : index
    %c1_49 = arith.constant 1 : index
    %c0_50 = arith.constant 0 : index
    %29 = vector.load %arg6[%c0_47, %c1_48, %c1_49, %c0_50] : memref<4x10x10x128xbf16, #tpu.memory_space<vmem>>, vector<4x8x8x128xbf16>
    %30 = vector.shape_cast %29 : vector<4x8x8x128xbf16> to vector<256x128xbf16>
    %c512 = arith.constant 512 : index
    %c0_51 = arith.constant 0 : index
    %31 = vector.load %arg2[%c512, %c0_51] : memref<1152x128xbf16, #tpu.memory_space<vmem>>, vector<128x128xbf16>
    %cst_52 = arith.constant dense<0.000000e+00> : vector<256x128xf32>
    %32 = tpu.matmul %30, %31, %cst_52 {dimension_numbers = #tpu.dot_dimension_numbers<[1], [0], [0], [1], [0, 0, 1, 1], [], []>} : vector<256x128xbf16>, vector<128x128xbf16>, vector<256x128xf32> -> vector<256x128xf32>
    %33 = arith.addf %28, %32 : vector<256x128xf32>
    %c0_53 = arith.constant 0 : index
    %c1_54 = arith.constant 1 : index
    %c2_55 = arith.constant 2 : index
    %c0_56 = arith.constant 0 : index
    %34 = vector.load %arg6[%c0_53, %c1_54, %c2_55, %c0_56] : memref<4x10x10x128xbf16, #tpu.memory_space<vmem>>, vector<4x8x8x128xbf16>
    %35 = vector.shape_cast %34 : vector<4x8x8x128xbf16> to vector<256x128xbf16>
    %c640 = arith.constant 640 : index
    %c0_57 = arith.constant 0 : index
    %36 = vector.load %arg2[%c640, %c0_57] : memref<1152x128xbf16, #tpu.memory_space<vmem>>, vector<128x128xbf16>
    %cst_58 = arith.constant dense<0.000000e+00> : vector<256x128xf32>
    %37 = tpu.matmul %35, %36, %cst_58 {dimension_numbers = #tpu.dot_dimension_numbers<[1], [0], [0], [1], [0, 0, 1, 1], [], []>} : vector<256x128xbf16>, vector<128x128xbf16>, vector<256x128xf32> -> vector<256x128xf32>
    %38 = arith.addf %33, %37 : vector<256x128xf32>
    %c0_59 = arith.constant 0 : index
    %c2_60 = arith.constant 2 : index
    %c0_61 = arith.constant 0 : index
    %c0_62 = arith.constant 0 : index
    %39 = vector.load %arg6[%c0_59, %c2_60, %c0_61, %c0_62] : memref<4x10x10x128xbf16, #tpu.memory_space<vmem>>, vector<4x8x8x128xbf16>
    %40 = vector.shape_cast %39 : vector<4x8x8x128xbf16> to vector<256x128xbf16>
    %c768 = arith.constant 768 : index
    %c0_63 = arith.constant 0 : index
    %41 = vector.load %arg2[%c768, %c0_63] : memref<1152x128xbf16, #tpu.memory_space<vmem>>, vector<128x128xbf16>
    %cst_64 = arith.constant dense<0.000000e+00> : vector<256x128xf32>
    %42 = tpu.matmul %40, %41, %cst_64 {dimension_numbers = #tpu.dot_dimension_numbers<[1], [0], [0], [1], [0, 0, 1, 1], [], []>} : vector<256x128xbf16>, vector<128x128xbf16>, vector<256x128xf32> -> vector<256x128xf32>
    %43 = arith.addf %38, %42 : vector<256x128xf32>
    %c0_65 = arith.constant 0 : index
    %c2_66 = arith.constant 2 : index
    %c1_67 = arith.constant 1 : index
    %c0_68 = arith.constant 0 : index
    %44 = vector.load %arg6[%c0_65, %c2_66, %c1_67, %c0_68] : memref<4x10x10x128xbf16, #tpu.memory_space<vmem>>, vector<4x8x8x128xbf16>
    %45 = vector.shape_cast %44 : vector<4x8x8x128xbf16> to vector<256x128xbf16>
    %c896 = arith.constant 896 : index
    %c0_69 = arith.constant 0 : index
    %46 = vector.load %arg2[%c896, %c0_69] : memref<1152x128xbf16, #tpu.memory_space<vmem>>, vector<128x128xbf16>
    %cst_70 = arith.constant dense<0.000000e+00> : vector<256x128xf32>
    %47 = tpu.matmul %45, %46, %cst_70 {dimension_numbers = #tpu.dot_dimension_numbers<[1], [0], [0], [1], [0, 0, 1, 1], [], []>} : vector<256x128xbf16>, vector<128x128xbf16>, vector<256x128xf32> -> vector<256x128xf32>
    %48 = arith.addf %43, %47 : vector<256x128xf32>
    %c0_71 = arith.constant 0 : index
    %c2_72 = arith.constant 2 : index
    %c2_73 = arith.constant 2 : index
    %c0_74 = arith.constant 0 : index
    %49 = vector.load %arg6[%c0_71, %c2_72, %c2_73, %c0_74] : memref<4x10x10x128xbf16, #tpu.memory_space<vmem>>, vector<4x8x8x128xbf16>
    %50 = vector.shape_cast %49 : vector<4x8x8x128xbf16> to vector<256x128xbf16>
    %c1024 = arith.constant 1024 : index
    %c0_75 = arith.constant 0 : index
    %51 = vector.load %arg2[%c1024, %c0_75] : memref<1152x128xbf16, #tpu.memory_space<vmem>>, vector<128x128xbf16>
    %cst_76 = arith.constant dense<0.000000e+00> : vector<256x128xf32>
    %52 = tpu.matmul %50, %51, %cst_76 {dimension_numbers = #tpu.dot_dimension_numbers<[1], [0], [0], [1], [0, 0, 1, 1], [], []>} : vector<256x128xbf16>, vector<128x128xbf16>, vector<256x128xf32> -> vector<256x128xf32>
    %53 = arith.addf %48, %52 : vector<256x128xf32>
    %c0_77 = arith.constant 0 : index
    %c0_78 = arith.constant 0 : index
    %54 = vector.load %arg3[%c0_77, %c0_78] : memref<1x128xf32, #tpu.memory_space<vmem>>, vector<1x128xf32>
    %55 = vector.broadcast %54 : vector<1x128xf32> to vector<256x128xf32>
    %56 = arith.addf %53, %55 : vector<256x128xf32>
    %57 = vector.shape_cast %56 : vector<256x128xf32> to vector<4x64x128xf32>
    %58 = arith.truncf %57 : vector<4x64x128xf32> to vector<4x64x128xbf16>
    %c0_79 = arith.constant 0 : index
    %c0_80 = arith.constant 0 : index
    %c0_81 = arith.constant 0 : index
    %59 = vector.load %arg4[%c0_79, %c0_80, %c0_81] : memref<4x64x128xbf16, #tpu.memory_space<vmem>>, vector<4x64x128xbf16>
    tpu.vector_store %arg4[%c0_79, %c0_80, %c0_81], %58 {strides = array<i32>} : memref<4x64x128xbf16, #tpu.memory_space<vmem>>, vector<4x64x128xbf16>,
    %cst_82 = arith.constant dense<0.000000e+00> : vector<128xf32>
    %60 = vector.multi_reduction <add>, %56, %cst_82 [0] : vector<256x128xf32> to vector<128xf32>
    %61 = vector.shape_cast %60 : vector<128xf32> to vector<1x128xf32>
    %c0_83 = arith.constant 0 : index
    %c0_84 = arith.constant 0 : index
    %c0_85 = arith.constant 0 : index
    %62 = vector.load %arg5[%c0_83, %c0_84, %c0_85] : memref<1x2x128xf32, #tpu.memory_space<vmem>>, vector<1x1x128xf32>
    %63 = vector.shape_cast %62 : vector<1x1x128xf32> to vector<1x128xf32>
    %64 = vector.shape_cast %61 : vector<1x128xf32> to vector<1x1x128xf32>
    tpu.vector_store %arg5[%c0_83, %c0_84, %c0_85], %64 {strides = array<i32>} : memref<1x2x128xf32, #tpu.memory_space<vmem>>, vector<1x1x128xf32>,
    %65 = arith.mulf %56, %56 : vector<256x128xf32>
    %cst_86 = arith.constant dense<0.000000e+00> : vector<128xf32>
    %66 = vector.multi_reduction <add>, %65, %cst_86 [0] : vector<256x128xf32> to vector<128xf32>
    %67 = vector.shape_cast %66 : vector<128xf32> to vector<1x128xf32>
    %c0_87 = arith.constant 0 : index
    %c1_88 = arith.constant 1 : index
    %c0_89 = arith.constant 0 : index
    %68 = vector.load %arg5[%c0_87, %c1_88, %c0_89] : memref<1x2x128xf32, #tpu.memory_space<vmem>>, vector<1x1x128xf32>
    %69 = vector.shape_cast %68 : vector<1x1x128xf32> to vector<1x128xf32>
    %70 = vector.shape_cast %67 : vector<1x128xf32> to vector<1x1x128xf32>
    tpu.vector_store %arg5[%c0_87, %c1_88, %c0_89], %70 {strides = array<i32>} : memref<1x2x128xf32, #tpu.memory_space<vmem>>, vector<1x1x128xf32>,
    return
  }
  func.func @transform_0(%arg0: i32) -> (i32, i32, i32, i32) {
    %c0_i32 = arith.constant 0 : i32
    %c0_i32_0 = arith.constant 0 : i32
    %c0_i32_1 = arith.constant 0 : i32
    %c0_i32_2 = arith.constant 0 : i32
    return %arg0, %c0_i32, %c0_i32_0, %c0_i32_1 : i32, i32, i32, i32
  }
  func.func @transform_1(%arg0: i32) -> (i32, i32) {
    %c0_i32 = arith.constant 0 : i32
    %c0_i32_0 = arith.constant 0 : i32
    %c0_i32_1 = arith.constant 0 : i32
    return %c0_i32, %c0_i32_0 : i32, i32
  }
  func.func @transform_2(%arg0: i32) -> (i32, i32) {
    %c0_i32 = arith.constant 0 : i32
    %c0_i32_0 = arith.constant 0 : i32
    %c0_i32_1 = arith.constant 0 : i32
    return %c0_i32, %c0_i32_0 : i32, i32
  }
  func.func @transform_3(%arg0: i32) -> (i32, i32, i32) {
    %c0_i32 = arith.constant 0 : i32
    %c0_i32_0 = arith.constant 0 : i32
    %c0_i32_1 = arith.constant 0 : i32
    return %arg0, %c0_i32, %c0_i32_0 : i32, i32, i32
  }
  func.func @transform_4(%arg0: i32) -> (i32, i32, i32) {
    %c0_i32 = arith.constant 0 : i32
    %c0_i32_0 = arith.constant 0 : i32
    %c0_i32_1 = arith.constant 0 : i32
    return %arg0, %c0_i32, %c0_i32_0 : i32, i32, i32
  }
}

module attributes {stable_mosaic.version = 11 : i64} {
  func.func @_bn_lif_res_kernel(%arg0: i32, %arg1: i32, %arg2: i32, %arg3: memref<1x64x128xbf16, #tpu.memory_space<vmem>>, %arg4: memref<1x64x128xbf16, #tpu.memory_space<vmem>>, %arg5: memref<1x128xf32, #tpu.memory_space<vmem>>, %arg6: memref<1x128xf32, #tpu.memory_space<vmem>>, %arg7: memref<1x64x128xf32, #tpu.memory_space<vmem>>, %arg8: memref<64x128xf32, #tpu.memory_space<vmem>>) attributes {dimension_semantics = [#tpu.dimension_semantics<parallel>, #tpu.dimension_semantics<parallel>, #tpu.dimension_semantics<arbitrary>], iteration_bounds = array<i64: 2, 1, 4>, scalar_prefetch = 0 : i64, scratch_operands = 1 : i64, tpu.core_type = #tpu.core_type<tc>, window_params = [{transform_indices = @transform_0, window_bounds = array<i64: 1, 64, 128>}, {transform_indices = @transform_1, window_bounds = array<i64: 1, 64, 128>}, {pipeline_mode = #tpu.pipeline_mode<synchronous>, transform_indices = @transform_2, window_bounds = array<i64: 1, 128>}, {pipeline_mode = #tpu.pipeline_mode<synchronous>, transform_indices = @transform_3, window_bounds = array<i64: 1, 128>}, {transform_indices = @transform_4, window_bounds = array<i64: 1, 64, 128>}]} {
    %c0_i32 = arith.constant 0 : i32
    %0 = arith.cmpi eq, %arg2, %c0_i32 : i32
    %1 = arith.extui %0 : i1 to i32
    %c0_i32_0 = arith.constant 0 : i32
    %2 = arith.cmpi ne, %1, %c0_i32_0 : i32
    scf.if %2 {
      %cst_21 = arith.constant 0.000000e+00 : f32
      %33 = vector.broadcast %cst_21 : f32 to vector<64x128xf32>
      %c0_22 = arith.constant 0 : index
      %c0_23 = arith.constant 0 : index
      %34 = vector.load %arg8[%c0_22, %c0_23] : memref<64x128xf32, #tpu.memory_space<vmem>>, vector<64x128xf32>
      tpu.vector_store %arg8[%c0_22, %c0_23], %33 {strides = array<i32>} : memref<64x128xf32, #tpu.memory_space<vmem>>, vector<64x128xf32>,
    } else {
    }
    %c0 = arith.constant 0 : index
    %c0_1 = arith.constant 0 : index
    %c0_2 = arith.constant 0 : index
    %3 = vector.load %arg3[%c0, %c0_1, %c0_2] : memref<1x64x128xbf16, #tpu.memory_space<vmem>>, vector<1x64x128xbf16>
    %4 = vector.shape_cast %3 : vector<1x64x128xbf16> to vector<64x128xbf16>
    %5 = arith.extf %4 : vector<64x128xbf16> to vector<64x128xf32>
    %c0_3 = arith.constant 0 : index
    %c0_4 = arith.constant 0 : index
    %6 = vector.load %arg5[%c0_3, %c0_4] : memref<1x128xf32, #tpu.memory_space<vmem>>, vector<1x128xf32>
    %7 = vector.broadcast %6 : vector<1x128xf32> to vector<64x128xf32>
    %8 = arith.mulf %5, %7 : vector<64x128xf32>
    %c0_5 = arith.constant 0 : index
    %c0_6 = arith.constant 0 : index
    %9 = vector.load %arg6[%c0_5, %c0_6] : memref<1x128xf32, #tpu.memory_space<vmem>>, vector<1x128xf32>
    %10 = vector.broadcast %9 : vector<1x128xf32> to vector<64x128xf32>
    %11 = arith.addf %8, %10 : vector<64x128xf32>
    %c0_7 = arith.constant 0 : index
    %c0_8 = arith.constant 0 : index
    %12 = vector.load %arg8[%c0_7, %c0_8] : memref<64x128xf32, #tpu.memory_space<vmem>>, vector<64x128xf32>
    %c0_9 = arith.constant 0 : index
    %c0_10 = arith.constant 0 : index
    %13 = vector.load %arg8[%c0_9, %c0_10] : memref<64x128xf32, #tpu.memory_space<vmem>>, vector<64x128xf32>
    %14 = arith.subf %11, %13 : vector<64x128xf32>
    %cst = arith.constant 5.000000e-01 : f32
    %15 = vector.broadcast %cst : f32 to vector<64x128xf32>
    %16 = arith.mulf %14, %15 : vector<64x128xf32>
    %17 = arith.addf %12, %16 : vector<64x128xf32>
    %cst_11 = arith.constant 1.000000e+00 : f32
    %18 = vector.broadcast %cst_11 : f32 to vector<64x128xf32>
    %19 = arith.cmpf oge, %17, %18 : vector<64x128xf32>
    %20 = arith.extui %19 : vector<64x128xi1> to vector<64x128xi32>
    %21 = arith.sitofp %20 : vector<64x128xi32> to vector<64x128xf32>
    %c0_12 = arith.constant 0 : index
    %c0_13 = arith.constant 0 : index
    %c0_14 = arith.constant 0 : index
    %22 = vector.load %arg4[%c0_12, %c0_13, %c0_14] : memref<1x64x128xbf16, #tpu.memory_space<vmem>>, vector<1x64x128xbf16>
    %23 = vector.shape_cast %22 : vector<1x64x128xbf16> to vector<64x128xbf16>
    %24 = arith.extf %23 : vector<64x128xbf16> to vector<64x128xf32>
    %25 = arith.addf %24, %21 : vector<64x128xf32>
    %c0_15 = arith.constant 0 : index
    %c0_16 = arith.constant 0 : index
    %c0_17 = arith.constant 0 : index
    %26 = vector.load %arg7[%c0_15, %c0_16, %c0_17] : memref<1x64x128xf32, #tpu.memory_space<vmem>>, vector<1x64x128xf32>
    %27 = vector.shape_cast %26 : vector<1x64x128xf32> to vector<64x128xf32>
    %28 = vector.shape_cast %25 : vector<64x128xf32> to vector<1x64x128xf32>
    tpu.vector_store %arg7[%c0_15, %c0_16, %c0_17], %28 {strides = array<i32>} : memref<1x64x128xf32, #tpu.memory_space<vmem>>, vector<1x64x128xf32>,
    %cst_18 = arith.constant 1.000000e+00 : f32
    %29 = vector.broadcast %cst_18 : f32 to vector<64x128xf32>
    %30 = arith.subf %29, %21 : vector<64x128xf32>
    %31 = arith.mulf %17, %30 : vector<64x128xf32>
    %c0_19 = arith.constant 0 : index
    %c0_20 = arith.constant 0 : index
    %32 = vector.load %arg8[%c0_19, %c0_20] : memref<64x128xf32, #tpu.memory_space<vmem>>, vector<64x128xf32>
    tpu.vector_store %arg8[%c0_19, %c0_20], %31 {strides = array<i32>} : memref<64x128xf32, #tpu.memory_space<vmem>>, vector<64x128xf32>,
    return
  }
  func.func @transform_0(%arg0: i32, %arg1: i32, %arg2: i32) -> (i32, i32, i32) {
    %c4_i32 = arith.constant 4 : i32
    %0 = arith.muli %arg0, %c4_i32 : i32
    %1 = arith.addi %0, %arg2 : i32
    %c0_i32 = arith.constant 0 : i32
    %c0_i32_0 = arith.constant 0 : i32
    return %1, %arg1, %c0_i32 : i32, i32, i32
  }
  func.func @transform_1(%arg0: i32, %arg1: i32, %arg2: i32) -> (i32, i32, i32) {
    %c2_i32 = arith.constant 2 : i32
    %0 = arith.muli %arg2, %c2_i32 : i32
    %1 = arith.addi %0, %arg0 : i32
    %c0_i32 = arith.constant 0 : i32
    %c0_i32_0 = arith.constant 0 : i32
    return %1, %arg1, %c0_i32 : i32, i32, i32
  }
  func.func @transform_2(%arg0: i32, %arg1: i32, %arg2: i32) -> (i32, i32) {
    %c0_i32 = arith.constant 0 : i32
    %c0_i32_0 = arith.constant 0 : i32
    %c0_i32_1 = arith.constant 0 : i32
    return %c0_i32, %c0_i32_0 : i32, i32
  }
  func.func @transform_3(%arg0: i32, %arg1: i32, %arg2: i32) -> (i32, i32) {
    %c0_i32 = arith.constant 0 : i32
    %c0_i32_0 = arith.constant 0 : i32
    %c0_i32_1 = arith.constant 0 : i32
    return %c0_i32, %c0_i32_0 : i32, i32
  }
  func.func @transform_4(%arg0: i32, %arg1: i32, %arg2: i32) -> (i32, i32, i32) {
    %c2_i32 = arith.constant 2 : i32
    %0 = arith.muli %arg2, %c2_i32 : i32
    %1 = arith.addi %0, %arg0 : i32
    %c0_i32 = arith.constant 0 : i32
    %c0_i32_0 = arith.constant 0 : i32
    return %1, %arg1, %c0_i32 : i32, i32, i32
  }
}

</mosaic_0001>

<llo_original>
// kernel: bottleneck_forward.5
$region0: #{bottleneck_forward.5}
  #allocation0 [shape = 'u32[]', space=smem, size = 0x4, offset = 0x4, fixed_abs, tag = 'smem constant byte address 0x4 - core index']
  #allocation1 [shape = 'u32[144,128]{1,0:T(1,128)}', space=vmem, size = 0x12000, scoped, tag = 'internal scratch']
  #allocation2 [shape = 'f32[64,128]{1,0:T(8,128)}', space=vmem, size = 0x8000, scoped, tag = 'scratch operand']
  %s0 = inlined_call_operand.vmem [shape: bf16[8,64,128], index: 0, kind: input, shape index: {}]
  %s1 = inlined_call_operand.vmem [shape: f32[1,128], index: 1, kind: input, shape index: {}]
  %s2 = inlined_call_operand.vmem [shape: f32[1,128], index: 2, kind: input, shape index: {}]
  %s3 = inlined_call_operand.vmem [shape: bf16[8,64,128], index: 3, kind: output, shape index: {}]
  %s4 = sld [smem:[#allocation0]]
  $region49: #{bottleneck_forward.5} parent=0
    _
  %s6 = ssub.s32 1, %s4
  %s7 = scalar_select 0, %s6, %s4
  loop: start=0, step=1, limit=10
  $region2: #{bottleneck_forward.5} parent=0 // loop_pre_header
    _
  $region3: #{bottleneck_forward.5} parent=0 // loop_header
    %s9 = sphi 0, %s13
    %p10 = scmp.ge.s32.totalorder %s9, 10
    %s16 = sphi 0, %s35
    %s17 = sphi 0, %s31
    %s18 = sphi 0, %s27
    %s19 = sphi 0, %s16
    %s20 = sphi 0, %s17
    %s21 = sphi 0, %s18
    %s22 = sphi 0, %s19
    %s23 = sphi 0, %s20
    %s24 = sphi 0, %s21
    %s44 = sphi 0, %s46
    %s47 = sphi 0, %s44
    %s48 = sphi 0, %s47
    %s64 = sphi 0, %s48
    %s68 = sphi 0, %s68
    %s70 = sphi 0, %s68
    %s71 = sphi 0, %s70
    %s85 = sphi 0, %s71
    %s89 = sphi 0, %s89
    %s91 = sphi 0, %s89
    %s92 = sphi 0, %s91
    %s106 = sphi 0, %s92
    %s118 = sphi 0, %s120
    %s121 = sphi 0, %s118
    %s122 = sphi 0, %s121
    %s138 = sphi 0, %s122
  $region4: #{bottleneck_forward.5} parent=0 // loop_header_branch
    %12 = sbr.rel (%p10) target = $region8
  $region5: #{bottleneck_forward.5} parent=0 // loop_body
    %s14 = ssub.s32 %s9, 1
    %s15 = ssub.s32 %s9, 2
    %s25 = sadd.s32 1, %s18
    %p26 = scmp.ge.s32.totalorder %s25, 4
    %s27 = scalar_select %p26, 0, %s25
    %s28 = sadd.s32 1, %s17
    %s29 = scalar_select %p26, %s28, %s17
    %p30 = scmp.ge.s32.totalorder %s29, 1
    %s31 = scalar_select %p30, 0, %s29
    %s32 = sadd.s32 1, %s16
    %s33 = scalar_select %p30, %s32, %s16
    %p34 = scmp.ge.s32.totalorder %s33, 2
    %s35 = scalar_select %p34, 0, %s33
    %s36 = smul.u32 %s16, 4
    %s37 = sadd.s32 %s36, %s18
    %s38 = smul.u32 %s35, 4
    %s39 = sadd.s32 %s38, %s27
    %s40 = ssub.s32 %s37, %s39
    %s41 = ssub.s32 %s17, %s31
    %s42 = sor.u32 %s40, %s41
    %p43 = scmp.eq.s32.totalorder %s42, 0
    %s45 = sadd.s32 %s44, 1
    %s46 = scalar_select %p43, %s44, %s45
    %p49 = pneg %p43
    %p50 = scmp.eq.s32.totalorder %s9, 7
    %p51 = por %p49, %p50
    %p52 = scmp.ne.s32.totalorder %s44, %s47
    %p53 = scmp.eq.s32.totalorder %s9, 0
    %p54 = por %p52, %p53
    %p55 = scmp.ne.s32.totalorder %s44, %s47
    %p56 = scmp.eq.s32.totalorder %s14, 7
    %p57 = por %p55, %p56
    %p58 = scmp.ne.s32.totalorder %s47, %s48
    %p59 = scmp.eq.s32.totalorder %s14, 0
    %p60 = por %p58, %p59
    %p61 = scmp.ne.s32.totalorder %s47, %s48
    %p62 = scmp.eq.s32.totalorder %s15, 7
    %p63 = por %p61, %p62
    %p65 = scmp.ne.s32.totalorder %s48, %s64
    %p66 = scmp.eq.s32.totalorder %s15, 0
    %p67 = por %p65, %p66
    %s69 = sadd.s32 %s68, 1
    %p72 = scmp.eq.s32.totalorder %s9, 7
    %p73 = scmp.ne.s32.totalorder %s68, %s70
    %p74 = scmp.eq.s32.totalorder %s9, 0
    %p75 = por %p73, %p74
    %p76 = scmp.ne.s32.totalorder %s68, %s70
    %p77 = scmp.eq.s32.totalorder %s14, 7
    %p78 = por %p76, %p77
    %p79 = scmp.ne.s32.totalorder %s70, %s71
    %p80 = scmp.eq.s32.totalorder %s14, 0
    %p81 = por %p79, %p80
    %p82 = scmp.ne.s32.totalorder %s70, %s71
    %p83 = scmp.eq.s32.totalorder %s15, 7
    %p84 = por %p82, %p83
    %p86 = scmp.ne.s32.totalorder %s71, %s85
    %p87 = scmp.eq.s32.totalorder %s15, 0
    %p88 = por %p86, %p87
    %s90 = sadd.s32 %s89, 1
    %p93 = scmp.eq.s32.totalorder %s9, 7
    %p94 = scmp.ne.s32.totalorder %s89, %s91
    %p95 = scmp.eq.s32.totalorder %s9, 0
    %p96 = por %p94, %p95
    %p97 = scmp.ne.s32.totalorder %s89, %s91
    %p98 = scmp.eq.s32.totalorder %s14, 7
    %p99 = por %p97, %p98
    %p100 = scmp.ne.s32.totalorder %s91, %s92
    %p101 = scmp.eq.s32.totalorder %s14, 0
    %p102 = por %p100, %p101
    %p103 = scmp.ne.s32.totalorder %s91, %s92
    %p104 = scmp.eq.s32.totalorder %s15, 7
    %p105 = por %p103, %p104
    %p107 = scmp.ne.s32.totalorder %s92, %s106
    %p108 = scmp.eq.s32.totalorder %s15, 0
    %p109 = por %p107, %p108
    %s110 = smul.u32 %s18, 2
    %s111 = sadd.s32 %s110, %s16
    %s112 = smul.u32 %s27, 2
    %s113 = sadd.s32 %s112, %s35
    %s114 = ssub.s32 %s111, %s113
    %s115 = ssub.s32 %s17, %s31
    %s116 = sor.u32 %s114, %s115
    %p117 = scmp.eq.s32.totalorder %s116, 0
    %s119 = sadd.s32 %s118, 1
    %s120 = scalar_select %p117, %s118, %s119
    %p123 = pneg %p117
    %p124 = scmp.eq.s32.totalorder %s9, 7
    %p125 = por %p123, %p124
    %p126 = scmp.ne.s32.totalorder %s118, %s121
    %p127 = scmp.eq.s32.totalorder %s9, 0
    %p128 = por %p126, %p127
    %p129 = scmp.ne.s32.totalorder %s118, %s121
    %p130 = scmp.eq.s32.totalorder %s14, 7
    %p131 = por %p129, %p130
    %p132 = scmp.ne.s32.totalorder %s121, %s122
    %p133 = scmp.eq.s32.totalorder %s14, 0
    %p134 = por %p132, %p133
    %p135 = scmp.ne.s32.totalorder %s121, %s122
    %p136 = scmp.eq.s32.totalorder %s15, 7
    %p137 = por %p135, %p136
    %p139 = scmp.ne.s32.totalorder %s122, %s138
    %p140 = scmp.eq.s32.totalorder %s15, 0
    %p141 = por %p139, %p140
    %p142 = scmp.le.s32.totalorder 1, %s9
    %p143 = scmp.lt.s32.totalorder %s9, 9
    %p144 = pnand %p142, %p143
    %p145 = pneg %p144
    // Predicated region
    $region9: #{bottleneck_forward.5} parent=5 // pred_check
      _
    $region10: #{bottleneck_forward.5} parent=5 // pred_check_branch
      %147 = sbr.rel (%p144) target = $region12
    $region11: #{bottleneck_forward.5} parent=5 // pred_region
      %s148 = ssub.s32 %s9, 1
      // Predicated region
      $region13: #{bottleneck_forward.5} parent=11 // pred_check
        %p149 = pneg %p81
      $region14: #{bottleneck_forward.5} parent=11 // pred_check_branch
        %151 = sbr.rel (%p149) target = $region16
      $region15: #{bottleneck_forward.5} parent=11 // pred_region
        _
      $region16: #{bottleneck_forward.5} parent=11 // pred_fallthru
        _
      // Predicated region
      $region17: #{bottleneck_forward.5} parent=11 // pred_check
        %p152 = pneg %p102
      $region18: #{bottleneck_forward.5} parent=11 // pred_check_branch
        %154 = sbr.rel (%p152) target = $region20
      $region19: #{bottleneck_forward.5} parent=11 // pred_region
        _
      $region20: #{bottleneck_forward.5} parent=11 // pred_fallthru
        _
    $region12: #{bottleneck_forward.5} parent=5 // pred_fallthru
      _
    %p155 = scmp.lt.s32.totalorder %s9, 8
    // Predicated region
    $region21: #{bottleneck_forward.5} parent=5 // pred_check
      %p156 = pneg %p155
    $region22: #{bottleneck_forward.5} parent=5 // pred_check_branch
      %158 = sbr.rel (%p156) target = $region24
    $region23: #{bottleneck_forward.5} parent=5 // pred_region
      // Predicated region
      $region25: #{bottleneck_forward.5} parent=23 // pred_check
        %p159 = pneg %p54
      $region26: #{bottleneck_forward.5} parent=23 // pred_check_branch
        %161 = sbr.rel (%p159) target = $region28
      $region27: #{bottleneck_forward.5} parent=23 // pred_region
        %s162 = smul.u32 %s16, 4
        %s163 = sadd.s32 %s162, %s18
        %s164 = smul.u32 8, %s17
        %p165 = scmp.lt.s32.totalorder %s163, 7
        %s166 = scalar_select %p165, %s163, 7
        %p167 = scmp.lt.s32.totalorder %s164, 7
        %s168 = scalar_select %p167, %s164, 7
        %s169 = smul.addr %s166, 8
        %s170 = sadd.s32 %s168, %s169
        %s171 = smul.addr %s170, 4
        %s172 = scalar_lea.vmem %s0, %s171
        %s173 = smul.u32 %s16, 4
        %s174 = sadd.s32 %s173, %s18
        %s175 = smul.u32 8, %s17
      $region28: #{bottleneck_forward.5} parent=23 // pred_fallthru
        _
    $region24: #{bottleneck_forward.5} parent=5 // pred_fallthru
      _
    %p176 = scmp.le.s32.totalorder 1, %s9
    %p177 = scmp.lt.s32.totalorder %s9, 9
    %p178 = pnand %p176, %p177
    %p179 = pneg %p178
    // Predicated region
    $region29: #{bottleneck_forward.5} parent=5 // pred_check
      _
    $region30: #{bottleneck_forward.5} parent=5 // pred_check_branch
      %181 = sbr.rel (%p178) target = $region32
    $region31: #{bottleneck_forward.5} parent=5 // pred_region
      %s182 = ssub.s32 %s9, 1
      %s183 = smul.u32 %s19, 4
      %s184 = sadd.s32 %s183, %s21
      %s185 = smul.u32 8, %s20
      %p186 = scmp.lt.s32.totalorder %s184, 7
      %s187 = scalar_select %p186, %s184, 7
      %p188 = scmp.lt.s32.totalorder %s185, 7
      %s189 = scalar_select %p188, %s185, 7
      %s190 = smul.addr %s187, 8
      %s191 = sadd.s32 %s189, %s190
      %s192 = smul.addr %s191, 4
      %s193 = scalar_lea.vmem %s0, %s192
      %p194 = pneg %p60
      %p195 = pneg %p57
      %p196 = pneg %p81
      %p197 = pneg %p78
      %p198 = pneg %p102
      %p199 = pneg %p99
      %p200 = pneg %p134
      %p201 = pneg %p131
      %s202 = smul.u32 %s21, 2
      %s203 = sadd.s32 %s202, %s19
      %s204 = smul.u32 8, %s20
      %p205 = scmp.lt.s32.totalorder %s203, 7
      %s206 = scalar_select %p205, %s203, 7
      %p207 = scmp.lt.s32.totalorder %s204, 7
      %s208 = scalar_select %p207, %s204, 7
      %s209 = smul.addr %s206, 8
      %s210 = sadd.s32 %s208, %s209
      %s211 = smul.addr %s210, 4
      %s212 = scalar_lea.vmem %s3, %s211
      %s213 = smul.u32 %s19, 4
      %s214 = sadd.s32 %s213, %s21
      %s215 = smul.u32 8, %s20
      %p216 = scmp.lt.s32.totalorder %s214, 7
      %s217 = scalar_select %p216, %s214, 7
      %p218 = scmp.lt.s32.totalorder %s215, 7
      %s219 = scalar_select %p218, %s215, 7
      %s220 = smul.addr %s217, 8
      %s221 = sadd.s32 %s219, %s220
      %s222 = smul.addr %s221, 4
      %s223 = scalar_lea.vmem %s0, %s222
      %s224 = smul.u32 %s19, 4
      %s225 = sadd.s32 %s224, %s21
      %s226 = smul.u32 8, %s20
      %s227 = smul.u32 %s21, 2
      %s228 = sadd.s32 %s227, %s19
      %s229 = smul.u32 8, %s20
      %p230 = scmp.lt.s32.totalorder %s228, 7
      %s231 = scalar_select %p230, %s228, 7
      %p232 = scmp.lt.s32.totalorder %s229, 7
      %s233 = scalar_select %p232, %s229, 7
      %s234 = smul.addr %s231, 8
      %s235 = sadd.s32 %s233, %s234
      %s236 = smul.addr %s235, 4
      %s237 = scalar_lea.vmem %s3, %s236
      %s238 = smul.u32 %s21, 2
      %s239 = sadd.s32 %s238, %s19
      %s240 = smul.u32 8, %s20
      %p241 = scmp.eq.s32.totalorder %s21, 0
      // Predicated region
      $region33: #{bottleneck_forward.5} parent=31 // pred_check
        %p242 = pneg %p241
      $region34: #{bottleneck_forward.5} parent=31 // pred_check_branch
        %244 = sbr.rel (%p242) target = $region36
      $region35: #{bottleneck_forward.5} parent=31 // pred_region
        %245 = vst [vmem:[#allocation2] sm:$0xff] 0.0
        %246 = vst [vmem:[#allocation2 + $0x8] sm:$0xff] 0.0
        %247 = vst [vmem:[#allocation2 + $0x10] sm:$0xff] 0.0
        %248 = vst [vmem:[#allocation2 + $0x18] sm:$0xff] 0.0
        %249 = vst [vmem:[#allocation2 + $0x20] sm:$0xff] 0.0
        %250 = vst [vmem:[#allocation2 + $0x28] sm:$0xff] 0.0
        %251 = vst [vmem:[#allocation2 + $0x30] sm:$0xff] 0.0
        %252 = vst [vmem:[#allocation2 + $0x38] sm:$0xff] 0.0
      $region36: #{bottleneck_forward.5} parent=31 // pred_fallthru
        _
      %v253 = vld [vmem:[%s223] sm:$0xf]
      %v254 = vld [vmem:[%s223 + $0x4] sm:$0xf]
      %v255 = vld [vmem:[%s223 + $0x8] sm:$0xf]
      %v256 = vld [vmem:[%s223 + $0xc] sm:$0xf]
      %v257 = vld [vmem:[%s223 + $0x10] sm:$0xf]
      %v258 = vld [vmem:[%s223 + $0x14] sm:$0xf]
      %v259 = vld [vmem:[%s223 + $0x18] sm:$0xf]
      %v260 = vld [vmem:[%s223 + $0x1c] sm:$0xf]
      %v261 = vunpack.c.l.bf16 %v253
      %v262 = vunpack.c.l.bf16 %v254
      %v263 = vunpack.c.l.bf16 %v255
      %v264 = vunpack.c.l.bf16 %v256
      %v265 = vunpack.c.l.bf16 %v257
      %v266 = vunpack.c.l.bf16 %v258
      %v267 = vunpack.c.l.bf16 %v259
      %v268 = vunpack.c.l.bf16 %v260
      %v269 = vld [vmem:[%s1] sm:$0x1]
      %v271 = vlaneseq
      %v272 = vshrl.u32 %v271, 7
      %v273 = vsub.s32 0, %v272
      %v274 = vrot.slane %v269, %v273
      %v276 = vmul.f32 %v261, %v274
      %v277 = vmul.f32 %v262, %v274
      %v278 = vmul.f32 %v263, %v274
      %v279 = vmul.f32 %v264, %v274
      %v280 = vmul.f32 %v265, %v274
      %v281 = vmul.f32 %v266, %v274
      %v282 = vmul.f32 %v267, %v274
      %v283 = vmul.f32 %v268, %v274
      %v284 = vld [vmem:[%s2] sm:$0x1]
      %v286 = vlaneseq
      %v287 = vshrl.u32 %v286, 7
      %v288 = vsub.s32 0, %v287
      %v289 = vrot.slane %v284, %v288
      %v291 = vadd.f32 %v276, %v289
      %v292 = vadd.f32 %v277, %v289
      %v293 = vadd.f32 %v278, %v289
      %v294 = vadd.f32 %v279, %v289
      %v295 = vadd.f32 %v280, %v289
      %v296 = vadd.f32 %v281, %v289
      %v297 = vadd.f32 %v282, %v289
      %v298 = vadd.f32 %v283, %v289
      %v299 = vld [vmem:[#allocation2] sm:$0xff]
      %v300 = vld [vmem:[#allocation2 + $0x8] sm:$0xff]
      %v301 = vld [vmem:[#allocation2 + $0x10] sm:$0xff]
      %v302 = vld [vmem:[#allocation2 + $0x18] sm:$0xff]
      %v303 = vld [vmem:[#allocation2 + $0x20] sm:$0xff]
      %v304 = vld [vmem:[#allocation2 + $0x28] sm:$0xff]
      %v305 = vld [vmem:[#allocation2 + $0x30] sm:$0xff]
      %v306 = vld [vmem:[#allocation2 + $0x38] sm:$0xff]
      %v307 = vsub.f32 %v291, %v299
      %v308 = vsub.f32 %v292, %v300
      %v309 = vsub.f32 %v293, %v301
      %v310 = vsub.f32 %v294, %v302
      %v311 = vsub.f32 %v295, %v303
      %v312 = vsub.f32 %v296, %v304
      %v313 = vsub.f32 %v297, %v305
      %v314 = vsub.f32 %v298, %v306
      %v315 = vmul.f32 %v307, 0.5
      %v316 = vmul.f32 %v308, 0.5
      %v317 = vmul.f32 %v309, 0.5
      %v318 = vmul.f32 %v310, 0.5
      %v319 = vmul.f32 %v311, 0.5
      %v320 = vmul.f32 %v312, 0.5
      %v321 = vmul.f32 %v313, 0.5
      %v322 = vmul.f32 %v314, 0.5
      %v323 = vadd.f32 %v299, %v315
      %v324 = vadd.f32 %v300, %v316
      %v325 = vadd.f32 %v301, %v317
      %v326 = vadd.f32 %v302, %v318
      %v327 = vadd.f32 %v303, %v319
      %v328 = vadd.f32 %v304, %v320
      %v329 = vadd.f32 %v305, %v321
      %v330 = vadd.f32 %v306, %v322
      %vm331 = vcmp.ge.f32.partialorder %v323, 1.0
      %vm332 = vcmp.ge.f32.partialorder %v324, 1.0
      %vm333 = vcmp.ge.f32.partialorder %v325, 1.0
      %vm334 = vcmp.ge.f32.partialorder %v326, 1.0
      %vm335 = vcmp.ge.f32.partialorder %v327, 1.0
      %vm336 = vcmp.ge.f32.partialorder %v328, 1.0
      %vm337 = vcmp.ge.f32.partialorder %v329, 1.0
      %vm338 = vcmp.ge.f32.partialorder %v330, 1.0
      %v339 = vsel %vm331, 1, 0
      %v340 = vsel %vm332, 1, 0
      %v341 = vsel %vm333, 1, 0
      %v342 = vsel %vm334, 1, 0
      %v343 = vsel %vm335, 1, 0
      %v344 = vsel %vm336, 1, 0
      %v345 = vsel %vm337, 1, 0
      %v346 = vsel %vm338, 1, 0
      %v347 = vcvt.s32.f32 %v339
      %v348 = vcvt.s32.f32 %v340
      %v349 = vcvt.s32.f32 %v341
      %v350 = vcvt.s32.f32 %v342
      %v351 = vcvt.s32.f32 %v343
      %v352 = vcvt.s32.f32 %v344
      %v353 = vcvt.s32.f32 %v345
      %v354 = vcvt.s32.f32 %v346
      %v355 = vpack.c.bf16 %v348, %v347
      %v356 = vpack.c.bf16 %v350, %v349
      %v357 = vpack.c.bf16 %v352, %v351
      %v358 = vpack.c.bf16 %v354, %v353
      %v363 = vunpack.c.l.b16 %v355
      %v364 = vunpack.c.h.b16 %v355
      %v365 = vunpack.c.l.b16 %v356
      %v366 = vunpack.c.h.b16 %v356
      %v367 = vunpack.c.l.b16 %v357
      %v368 = vunpack.c.h.b16 %v357
      %v369 = vunpack.c.l.b16 %v358
      %v370 = vunpack.c.h.b16 %v358
      %v371 = vpack.c.b16 %v363, %v363
      %v372 = vpack.c.b16 %v364, %v364
      %v373 = vpack.c.b16 %v365, %v365
      %v374 = vpack.c.b16 %v366, %v366
      %v375 = vpack.c.b16 %v367, %v367
      %v376 = vpack.c.b16 %v368, %v368
      %v377 = vpack.c.b16 %v369, %v369
      %v378 = vpack.c.b16 %v370, %v370
      %387 = vst [vmem:[%s237] sm:$0xf] %v371
      %388 = vst [vmem:[%s237 + $0x4] sm:$0xf] %v372
      %389 = vst [vmem:[%s237 + $0x8] sm:$0xf] %v373
      %390 = vst [vmem:[%s237 + $0xc] sm:$0xf] %v374
      %391 = vst [vmem:[%s237 + $0x10] sm:$0xf] %v375
      %392 = vst [vmem:[%s237 + $0x14] sm:$0xf] %v376
      %393 = vst [vmem:[%s237 + $0x18] sm:$0xf] %v377
      %394 = vst [vmem:[%s237 + $0x1c] sm:$0xf] %v378
      %v395 = vsub.f32 1.0, %v347
      %v396 = vsub.f32 1.0, %v348
      %v397 = vsub.f32 1.0, %v349
      %v398 = vsub.f32 1.0, %v350
      %v399 = vsub.f32 1.0, %v351
      %v400 = vsub.f32 1.0, %v352
      %v401 = vsub.f32 1.0, %v353
      %v402 = vsub.f32 1.0, %v354
      %v403 = vmul.f32 %v323, %v395
      %v404 = vmul.f32 %v324, %v396
      %v405 = vmul.f32 %v325, %v397
      %v406 = vmul.f32 %v326, %v398
      %v407 = vmul.f32 %v327, %v399
      %v408 = vmul.f32 %v328, %v400
      %v409 = vmul.f32 %v329, %v401
      %v410 = vmul.f32 %v330, %v402
      %411 = vst [vmem:[#allocation2] sm:$0xff] %v403
      %412 = vst [vmem:[#allocation2 + $0x8] sm:$0xff] %v404
      %413 = vst [vmem:[#allocation2 + $0x10] sm:$0xff] %v405
      %414 = vst [vmem:[#allocation2 + $0x18] sm:$0xff] %v406
      %415 = vst [vmem:[#allocation2 + $0x20] sm:$0xff] %v407
      %416 = vst [vmem:[#allocation2 + $0x28] sm:$0xff] %v408
      %417 = vst [vmem:[#allocation2 + $0x30] sm:$0xff] %v409
      %418 = vst [vmem:[#allocation2 + $0x38] sm:$0xff] %v410
      %s419 = smul.u32 %s21, 2
      %s420 = sadd.s32 %s419, %s19
      %s421 = smul.u32 8, %s20
      %p422 = scmp.lt.s32.totalorder %s420, 7
      %s423 = scalar_select %p422, %s420, 7
      %p424 = scmp.lt.s32.totalorder %s421, 7
      %s425 = scalar_select %p424, %s421, 7
      %s426 = smul.addr %s423, 8
      %s427 = sadd.s32 %s425, %s426
      %s428 = smul.addr %s427, 4
      %s429 = scalar_lea.vmem %s3, %s428
      // Predicated region
      $region37: #{bottleneck_forward.5} parent=31 // pred_check
        %p430 = pneg %p131
      $region38: #{bottleneck_forward.5} parent=31 // pred_check_branch
        %432 = sbr.rel (%p430) target = $region40
      $region39: #{bottleneck_forward.5} parent=31 // pred_region
        %s433 = smul.u32 %s21, 2
        %s434 = sadd.s32 %s433, %s19
        %s435 = smul.u32 8, %s20
      $region40: #{bottleneck_forward.5} parent=31 // pred_fallthru
        _
    $region32: #{bottleneck_forward.5} parent=5 // pred_fallthru
      _
    %p436 = scmp.le.s32.totalorder 2, %s9
    // Predicated region
    $region41: #{bottleneck_forward.5} parent=5 // pred_check
      %p437 = pneg %p436
    $region42: #{bottleneck_forward.5} parent=5 // pred_check_branch
      %439 = sbr.rel (%p437) target = $region44
    $region43: #{bottleneck_forward.5} parent=5 // pred_region
      %s440 = ssub.s32 %s9, 2
      // Predicated region
      $region45: #{bottleneck_forward.5} parent=43 // pred_check
        %p441 = pneg %p137
      $region46: #{bottleneck_forward.5} parent=43 // pred_check_branch
        %443 = sbr.rel (%p441) target = $region48
      $region47: #{bottleneck_forward.5} parent=43 // pred_region
        %s444 = smul.u32 %s24, 2
        %s445 = sadd.s32 %s444, %s22
        %s446 = smul.u32 8, %s23
        %p447 = scmp.lt.s32.totalorder %s445, 7
        %s448 = scalar_select %p447, %s445, 7
        %p449 = scmp.lt.s32.totalorder %s446, 7
        %s450 = scalar_select %p449, %s446, 7
        %s451 = smul.addr %s448, 8
        %s452 = sadd.s32 %s450, %s451
        %s453 = smul.addr %s452, 4
        %s454 = scalar_lea.vmem %s3, %s453
      $region48: #{bottleneck_forward.5} parent=43 // pred_fallthru
        _
    $region44: #{bottleneck_forward.5} parent=5 // pred_fallthru
      _
  $region6: #{bottleneck_forward.5} parent=0 // loop_footer
    %s13 = sadd.s32 1, %s9
  $region7: #{bottleneck_forward.5} parent=0 // loop_footer_branch
    %8 = sbr.rel target = $region3
  $region8: #{bottleneck_forward.5} parent=0 // loop_exit
    _

// kernel: bottleneck_forward.4
$region0: #{bottleneck_forward.4}
  #allocation0 [shape = 'u32[]', space=smem, size = 0x4, offset = 0x4, fixed_abs, tag = 'smem constant byte address 0x4 - core index']
  #allocation1 [shape = 'u32[144,128]{1,0:T(1,128)}', space=vmem, size = 0x12000, scoped, tag = 'internal scratch']
  %s0 = inlined_call_operand.vmem [shape: bf16[512,128], index: 0, kind: input, shape index: {}]
  %s1 = inlined_call_operand.vmem [shape: bf16[128,128], index: 1, kind: input, shape index: {}]
  %s2 = inlined_call_operand.vmem [shape: f32[1,128], index: 2, kind: input, shape index: {}]
  %s3 = inlined_call_operand.vmem [shape: bf16[512,128], index: 3, kind: output, shape index: {0}]
  %s4 = inlined_call_operand.vmem [shape: f32[2,2,128], index: 4, kind: output, shape index: {1}]
  %5 = xla_tuple %s3, %s4
  %s6 = sld [smem:[#allocation0]]
  $region53: #{bottleneck_forward.4} parent=0
    _
  %s8 = ssub.s32 1, %s6
  %s9 = scalar_select 0, %s8, %s6
  loop: start=0, step=1, limit=4
  $region2: #{bottleneck_forward.4} parent=0 // loop_pre_header
    _
  $region3: #{bottleneck_forward.4} parent=0 // loop_header
    %s11 = sphi 0, %s15
    %p12 = scmp.ge.s32.totalorder %s11, 4
    %s21 = sphi 0, %s23
    %s24 = sphi 0, %s21
    %s25 = sphi 0, %s24
    %s41 = sphi 0, %s25
    %s45 = sphi 0, %s45
    %s47 = sphi 0, %s45
    %s48 = sphi 0, %s47
    %s62 = sphi 0, %s48
    %s66 = sphi 0, %s66
    %s68 = sphi 0, %s66
    %s69 = sphi 0, %s68
    %s83 = sphi 0, %s69
    %s89 = sphi 0, %s91
    %s92 = sphi 0, %s89
    %s93 = sphi 0, %s92
    %s109 = sphi 0, %s93
    %s115 = sphi 0, %s117
    %s118 = sphi 0, %s115
    %s119 = sphi 0, %s118
    %s135 = sphi 0, %s119
  $region4: #{bottleneck_forward.4} parent=0 // loop_header_branch
    %14 = sbr.rel (%p12) target = $region8
  $region5: #{bottleneck_forward.4} parent=0 // loop_body
    %s16 = ssub.s32 %s11, 1
    %s17 = ssub.s32 %s11, 2
    %s18 = sadd.s32 %s11, 1
    %s19 = ssub.s32 %s11, %s18
    %p20 = scmp.eq.s32.totalorder %s19, 0
    %s22 = sadd.s32 %s21, 1
    %s23 = scalar_select %p20, %s21, %s22
    %p26 = pneg %p20
    %p27 = scmp.eq.s32.totalorder %s11, 1
    %p28 = por %p26, %p27
    %p29 = scmp.ne.s32.totalorder %s21, %s24
    %p30 = scmp.eq.s32.totalorder %s11, 0
    %p31 = por %p29, %p30
    %p32 = scmp.ne.s32.totalorder %s21, %s24
    %p33 = scmp.eq.s32.totalorder %s16, 1
    %p34 = por %p32, %p33
    %p35 = scmp.ne.s32.totalorder %s24, %s25
    %p36 = scmp.eq.s32.totalorder %s16, 0
    %p37 = por %p35, %p36
    %p38 = scmp.ne.s32.totalorder %s24, %s25
    %p39 = scmp.eq.s32.totalorder %s17, 1
    %p40 = por %p38, %p39
    %p42 = scmp.ne.s32.totalorder %s25, %s41
    %p43 = scmp.eq.s32.totalorder %s17, 0
    %p44 = por %p42, %p43
    %s46 = sadd.s32 %s45, 1
    %p49 = scmp.eq.s32.totalorder %s11, 1
    %p50 = scmp.ne.s32.totalorder %s45, %s47
    %p51 = scmp.eq.s32.totalorder %s11, 0
    %p52 = por %p50, %p51
    %p53 = scmp.ne.s32.totalorder %s45, %s47
    %p54 = scmp.eq.s32.totalorder %s16, 1
    %p55 = por %p53, %p54
    %p56 = scmp.ne.s32.totalorder %s47, %s48
    %p57 = scmp.eq.s32.totalorder %s16, 0
    %p58 = por %p56, %p57
    %p59 = scmp.ne.s32.totalorder %s47, %s48
    %p60 = scmp.eq.s32.totalorder %s17, 1
    %p61 = por %p59, %p60
    %p63 = scmp.ne.s32.totalorder %s48, %s62
    %p64 = scmp.eq.s32.totalorder %s17, 0
    %p65 = por %p63, %p64
    %s67 = sadd.s32 %s66, 1
    %p70 = scmp.eq.s32.totalorder %s11, 1
    %p71 = scmp.ne.s32.totalorder %s66, %s68
    %p72 = scmp.eq.s32.totalorder %s11, 0
    %p73 = por %p71, %p72
    %p74 = scmp.ne.s32.totalorder %s66, %s68
    %p75 = scmp.eq.s32.totalorder %s16, 1
    %p76 = por %p74, %p75
    %p77 = scmp.ne.s32.totalorder %s68, %s69
    %p78 = scmp.eq.s32.totalorder %s16, 0
    %p79 = por %p77, %p78
    %p80 = scmp.ne.s32.totalorder %s68, %s69
    %p81 = scmp.eq.s32.totalorder %s17, 1
    %p82 = por %p80, %p81
    %p84 = scmp.ne.s32.totalorder %s69, %s83
    %p85 = scmp.eq.s32.totalorder %s17, 0
    %p86 = por %p84, %p85
    %s87 = ssub.s32 %s11, %s18
    %p88 = scmp.eq.s32.totalorder %s87, 0
    %s90 = sadd.s32 %s89, 1
    %s91 = scalar_select %p88, %s89, %s90
    %p94 = pneg %p88
    %p95 = scmp.eq.s32.totalorder %s11, 1
    %p96 = por %p94, %p95
    %p97 = scmp.ne.s32.totalorder %s89, %s92
    %p98 = scmp.eq.s32.totalorder %s11, 0
    %p99 = por %p97, %p98
    %p100 = scmp.ne.s32.totalorder %s89, %s92
    %p101 = scmp.eq.s32.totalorder %s16, 1
    %p102 = por %p100, %p101
    %p103 = scmp.ne.s32.totalorder %s92, %s93
    %p104 = scmp.eq.s32.totalorder %s16, 0
    %p105 = por %p103, %p104
    %p106 = scmp.ne.s32.totalorder %s92, %s93
    %p107 = scmp.eq.s32.totalorder %s17, 1
    %p108 = por %p106, %p107
    %p110 = scmp.ne.s32.totalorder %s93, %s109
    %p111 = scmp.eq.s32.totalorder %s17, 0
    %p112 = por %p110, %p111
    %s113 = ssub.s32 %s11, %s18
    %p114 = scmp.eq.s32.totalorder %s113, 0
    %s116 = sadd.s32 %s115, 1
    %s117 = scalar_select %p114, %s115, %s116
    %p120 = pneg %p114
    %p121 = scmp.eq.s32.totalorder %s11, 1
    %p122 = por %p120, %p121
    %p123 = scmp.ne.s32.totalorder %s115, %s118
    %p124 = scmp.eq.s32.totalorder %s11, 0
    %p125 = por %p123, %p124
    %p126 = scmp.ne.s32.totalorder %s115, %s118
    %p127 = scmp.eq.s32.totalorder %s16, 1
    %p128 = por %p126, %p127
    %p129 = scmp.ne.s32.totalorder %s118, %s119
    %p130 = scmp.eq.s32.totalorder %s16, 0
    %p131 = por %p129, %p130
    %p132 = scmp.ne.s32.totalorder %s118, %s119
    %p133 = scmp.eq.s32.totalorder %s17, 1
    %p134 = por %p132, %p133
    %p136 = scmp.ne.s32.totalorder %s119, %s135
    %p137 = scmp.eq.s32.totalorder %s17, 0
    %p138 = por %p136, %p137
    %p139 = scmp.le.s32.totalorder 1, %s11
    %p140 = scmp.lt.s32.totalorder %s11, 3
    %p141 = pnand %p139, %p140
    %p142 = pneg %p141
    // Predicated region
    $region9: #{bottleneck_forward.4} parent=5 // pred_check
      _
    $region10: #{bottleneck_forward.4} parent=5 // pred_check_branch
      %144 = sbr.rel (%p141) target = $region12
    $region11: #{bottleneck_forward.4} parent=5 // pred_region
      %s145 = ssub.s32 %s11, 1
      // Predicated region
      $region13: #{bottleneck_forward.4} parent=11 // pred_check
        %p146 = pneg %p58
      $region14: #{bottleneck_forward.4} parent=11 // pred_check_branch
        %148 = sbr.rel (%p146) target = $region16
      $region15: #{bottleneck_forward.4} parent=11 // pred_region
        _
      $region16: #{bottleneck_forward.4} parent=11 // pred_fallthru
        _
      // Predicated region
      $region17: #{bottleneck_forward.4} parent=11 // pred_check
        %p149 = pneg %p79
      $region18: #{bottleneck_forward.4} parent=11 // pred_check_branch
        %151 = sbr.rel (%p149) target = $region20
      $region19: #{bottleneck_forward.4} parent=11 // pred_region
        _
      $region20: #{bottleneck_forward.4} parent=11 // pred_fallthru
        _
    $region12: #{bottleneck_forward.4} parent=5 // pred_fallthru
      _
    %p152 = scmp.lt.s32.totalorder %s11, 2
    // Predicated region
    $region21: #{bottleneck_forward.4} parent=5 // pred_check
      %p153 = pneg %p152
    $region22: #{bottleneck_forward.4} parent=5 // pred_check_branch
      %155 = sbr.rel (%p153) target = $region24
    $region23: #{bottleneck_forward.4} parent=5 // pred_region
      // Predicated region
      $region25: #{bottleneck_forward.4} parent=23 // pred_check
        %p156 = pneg %p31
      $region26: #{bottleneck_forward.4} parent=23 // pred_check_branch
        %158 = sbr.rel (%p156) target = $region28
      $region27: #{bottleneck_forward.4} parent=23 // pred_region
        %s159 = smul.u32 32, %s11
        %p160 = scmp.lt.s32.totalorder %s159, 63
        %s161 = scalar_select %p160, %s159, 63
        %s162 = smul.addr %s161, 4
        %s163 = scalar_lea.vmem %s0, %s162
        %s164 = smul.u32 32, %s11
      $region28: #{bottleneck_forward.4} parent=23 // pred_fallthru
        _
    $region24: #{bottleneck_forward.4} parent=5 // pred_fallthru
      _
    %p165 = scmp.le.s32.totalorder 1, %s11
    %p166 = scmp.lt.s32.totalorder %s11, 3
    %p167 = pnand %p165, %p166
    %p168 = pneg %p167
    // Predicated region
    $region29: #{bottleneck_forward.4} parent=5 // pred_check
      _
    $region30: #{bottleneck_forward.4} parent=5 // pred_check_branch
      %170 = sbr.rel (%p167) target = $region32
    $region31: #{bottleneck_forward.4} parent=5 // pred_region
      %s171 = ssub.s32 %s11, 1
      %s172 = smul.u32 32, %s16
      %p173 = scmp.lt.s32.totalorder %s172, 63
      %s174 = scalar_select %p173, %s172, 63
      %s175 = smul.addr %s174, 4
      %s176 = scalar_lea.vmem %s0, %s175
      %p177 = pneg %p37
      %p178 = pneg %p34
      %p179 = pneg %p58
      %p180 = pneg %p55
      %p181 = pneg %p79
      %p182 = pneg %p76
      %p183 = pneg %p105
      %p184 = pneg %p102
      %s185 = smul.u32 32, %s16
      %p186 = scmp.lt.s32.totalorder %s185, 63
      %s187 = scalar_select %p186, %s185, 63
      %s188 = smul.addr %s187, 4
      %s189 = scalar_lea.vmem %s3, %s188
      %p190 = pneg %p131
      %p191 = pneg %p128
      %p192 = scmp.lt.s32.totalorder %s16, 1
      %s193 = scalar_select %p192, %s16, 1
      %s194 = smul.addr %s193, 2
      %s195 = scalar_lea.vmem %s4, %s194
      %s196 = smul.u32 32, %s16
      %p197 = scmp.lt.s32.totalorder %s196, 63
      %s198 = scalar_select %p197, %s196, 63
      %s199 = smul.addr %s198, 4
      %s200 = scalar_lea.vmem %s0, %s199
      %s201 = smul.u32 32, %s16
      %s202 = smul.u32 32, %s16
      %p203 = scmp.lt.s32.totalorder %s202, 63
      %s204 = scalar_select %p203, %s202, 63
      %s205 = smul.addr %s204, 4
      %s206 = scalar_lea.vmem %s3, %s205
      %s207 = smul.u32 32, %s16
      %p208 = scmp.lt.s32.totalorder %s16, 1
      %s209 = scalar_select %p208, %s16, 1
      %s210 = smul.addr %s209, 2
      %s211 = scalar_lea.vmem %s4, %s210
      %v213 = vld [vmem:[%s200] sm:$0xf]
      %v214 = vld [vmem:[%s200 + $0x4] sm:$0xf]
      %v215 = vld [vmem:[%s200 + $0x8] sm:$0xf]
      %v216 = vld [vmem:[%s200 + $0xc] sm:$0xf]
      %v217 = vld [vmem:[%s200 + $0x10] sm:$0xf]
      %v218 = vld [vmem:[%s200 + $0x14] sm:$0xf]
      %v219 = vld [vmem:[%s200 + $0x18] sm:$0xf]
      %v220 = vld [vmem:[%s200 + $0x1c] sm:$0xf]
      %v221 = vld [vmem:[%s200 + $0x20] sm:$0xf]
      %v222 = vld [vmem:[%s200 + $0x24] sm:$0xf]
      %v223 = vld [vmem:[%s200 + $0x28] sm:$0xf]
      %v224 = vld [vmem:[%s200 + $0x2c] sm:$0xf]
      %v225 = vld [vmem:[%s200 + $0x30] sm:$0xf]
      %v226 = vld [vmem:[%s200 + $0x34] sm:$0xf]
      %v227 = vld [vmem:[%s200 + $0x38] sm:$0xf]
      %v228 = vld [vmem:[%s200 + $0x3c] sm:$0xf]
      %v229 = vld [vmem:[%s200 + $0x40] sm:$0xf]
      %v230 = vld [vmem:[%s200 + $0x44] sm:$0xf]
      %v231 = vld [vmem:[%s200 + $0x48] sm:$0xf]
      %v232 = vld [vmem:[%s200 + $0x4c] sm:$0xf]
      %v233 = vld [vmem:[%s200 + $0x50] sm:$0xf]
      %v234 = vld [vmem:[%s200 + $0x54] sm:$0xf]
      %v235 = vld [vmem:[%s200 + $0x58] sm:$0xf]
      %v236 = vld [vmem:[%s200 + $0x5c] sm:$0xf]
      %v237 = vld [vmem:[%s200 + $0x60] sm:$0xf]
      %v238 = vld [vmem:[%s200 + $0x64] sm:$0xf]
      %v239 = vld [vmem:[%s200 + $0x68] sm:$0xf]
      %v240 = vld [vmem:[%s200 + $0x6c] sm:$0xf]
      %v241 = vld [vmem:[%s200 + $0x70] sm:$0xf]
      %v242 = vld [vmem:[%s200 + $0x74] sm:$0xf]
      %v243 = vld [vmem:[%s200 + $0x78] sm:$0xf]
      %v244 = vld [vmem:[%s200 + $0x7c] sm:$0xf]
      %v245 = vld [vmem:[%s1] sm:$0xf]
      %v246 = vld [vmem:[%s1 + $0x4] sm:$0xf]
      %v247 = vld [vmem:[%s1 + $0x8] sm:$0xf]
      %v248 = vld [vmem:[%s1 + $0xc] sm:$0xf]
      %v249 = vld [vmem:[%s1 + $0x10] sm:$0xf]
      %v250 = vld [vmem:[%s1 + $0x14] sm:$0xf]
      %v251 = vld [vmem:[%s1 + $0x18] sm:$0xf]
      %v252 = vld [vmem:[%s1 + $0x1c] sm:$0xf]
      %v253 = vld [vmem:[%s1 + $0x20] sm:$0xf]
      %v254 = vld [vmem:[%s1 + $0x24] sm:$0xf]
      %v255 = vld [vmem:[%s1 + $0x28] sm:$0xf]
      %v256 = vld [vmem:[%s1 + $0x2c] sm:$0xf]
      %v257 = vld [vmem:[%s1 + $0x30] sm:$0xf]
      %v258 = vld [vmem:[%s1 + $0x34] sm:$0xf]
      %v259 = vld [vmem:[%s1 + $0x38] sm:$0xf]
      %v260 = vld [vmem:[%s1 + $0x3c] sm:$0xf]
      %v261 = vld [vmem:[%s2] sm:$0x1]
      %v263 = vlaneseq
      %v264 = vshrl.u32 %v263, 7
      %v265 = vsub.s32 0, %v264
      %v266 = vrot.slane %v261, %v265
      %v300 = vunpack.c.l.b16 %v213
      %v301 = vunpack.c.l.b16 %v214
      %v302 = vunpack.c.l.b16 %v215
      %v303 = vunpack.c.l.b16 %v216
      %v304 = vunpack.c.l.b16 %v217
      %v305 = vunpack.c.l.b16 %v218
      %v306 = vunpack.c.l.b16 %v219
      %v307 = vunpack.c.l.b16 %v220
      %v308 = vunpack.c.l.b16 %v221
      %v309 = vunpack.c.l.b16 %v222
      %v310 = vunpack.c.l.b16 %v223
      %v311 = vunpack.c.l.b16 %v224
      %v312 = vunpack.c.l.b16 %v225
      %v313 = vunpack.c.l.b16 %v226
      %v314 = vunpack.c.l.b16 %v227
      %v315 = vunpack.c.l.b16 %v228
      %v316 = vunpack.c.l.b16 %v229
      %v317 = vunpack.c.l.b16 %v230
      %v318 = vunpack.c.l.b16 %v231
      %v319 = vunpack.c.l.b16 %v232
      %v320 = vunpack.c.l.b16 %v233
      %v321 = vunpack.c.l.b16 %v234
      %v322 = vunpack.c.l.b16 %v235
      %v323 = vunpack.c.l.b16 %v236
      %v324 = vunpack.c.l.b16 %v237
      %v325 = vunpack.c.l.b16 %v238
      %v326 = vunpack.c.l.b16 %v239
      %v327 = vunpack.c.l.b16 %v240
      %v328 = vunpack.c.l.b16 %v241
      %v329 = vunpack.c.l.b16 %v242
      %v330 = vunpack.c.l.b16 %v243
      %v331 = vunpack.c.l.b16 %v244
      %v332 = vpack.c.b16 %v301, %v300
      %v333 = vpack.c.b16 %v303, %v302
      %v334 = vpack.c.b16 %v305, %v304
      %v335 = vpack.c.b16 %v307, %v306
      %v336 = vpack.c.b16 %v309, %v308
      %v337 = vpack.c.b16 %v311, %v310
      %v338 = vpack.c.b16 %v313, %v312
      %v339 = vpack.c.b16 %v315, %v314
      %v340 = vpack.c.b16 %v317, %v316
      %v341 = vpack.c.b16 %v319, %v318
      %v342 = vpack.c.b16 %v321, %v320
      %v343 = vpack.c.b16 %v323, %v322
      %v344 = vpack.c.b16 %v325, %v324
      %v345 = vpack.c.b16 %v327, %v326
      %v346 = vpack.c.b16 %v329, %v328
      %v347 = vpack.c.b16 %v331, %v330
      %v380 = vunpack.c.l.b16 %v245
      %v381 = vunpack.c.l.b16 %v246
      %v382 = vunpack.c.l.b16 %v247
      %v383 = vunpack.c.l.b16 %v248
      %v384 = vunpack.c.l.b16 %v249
      %v385 = vunpack.c.l.b16 %v250
      %v386 = vunpack.c.l.b16 %v251
      %v387 = vunpack.c.l.b16 %v252
      %v388 = vunpack.c.l.b16 %v253
      %v389 = vunpack.c.l.b16 %v254
      %v390 = vunpack.c.l.b16 %v255
      %v391 = vunpack.c.l.b16 %v256
      %v392 = vunpack.c.l.b16 %v257
      %v393 = vunpack.c.l.b16 %v258
      %v394 = vunpack.c.l.b16 %v259
      %v395 = vunpack.c.l.b16 %v260
      %v396 = vpack.c.b16 %v381, %v380
      %v397 = vpack.c.b16 %v383, %v382
      %v398 = vpack.c.b16 %v385, %v384
      %v399 = vpack.c.b16 %v387, %v386
      %v400 = vpack.c.b16 %v389, %v388
      %v401 = vpack.c.b16 %v391, %v390
      %v402 = vpack.c.b16 %v393, %v392
      %v403 = vpack.c.b16 %v395, %v394
      %412 = vmatprep.subr.bf16.mxu0 0
      %413 = vmatpush1.bf16.msra.mxu0 %v396
      %414 = vmatprep.subr.bf16.mxu0 0
      %415 = vmatpush1.bf16.msra.mxu0 %v397
      %416 = vmatprep.subr.bf16.mxu0 0
      %417 = vmatpush1.bf16.msra.mxu0 %v398
      %418 = vmatprep.subr.bf16.mxu0 0
      %419 = vmatpush1.bf16.msra.mxu0 %v399
      %420 = vmatprep.subr.bf16.mxu0 0
      %421 = vmatpush1.bf16.msra.mxu0 %v400
      %422 = vmatprep.subr.bf16.mxu0 0
      %423 = vmatpush1.bf16.msra.mxu0 %v401
      %424 = vmatprep.subr.bf16.mxu0 0
      %425 = vmatpush1.bf16.msra.mxu0 %v402
      %426 = vmatprep.subr.bf16.mxu0 0
      %427 = vmatpush1.bf16.msra.mxu0 %v403
      %428 = vmatprep.subr.bf16.mxu0 0
      %429 = vmatpush1.bf16.msra.mxu0 0
      %430 = vmatprep.subr.bf16.mxu0 0
      %431 = vmatpush1.bf16.msra.mxu0 0
      %432 = vmatprep.subr.bf16.mxu0 0
      %433 = vmatpush1.bf16.msra.mxu0 0
      %434 = vmatprep.subr.bf16.mxu0 0
      %435 = vmatpush1.bf16.msra.mxu0 0
      %436 = vmatprep.subr.bf16.mxu0 0
      %437 = vmatpush1.bf16.msra.mxu0 0
      %438 = vmatprep.subr.bf16.mxu0 0
      %439 = vmatpush1.bf16.msra.mxu0 0
      %440 = vmatprep.subr.bf16.mxu0 0
      %441 = vmatpush1.bf16.msra.mxu0 0
      %442 = vmatprep.subr.bf16.mxu0 0
      %443 = vmatpush1.bf16.msra.mxu0 0
      %444 = vmatprep.mubr.bf16.mxu0 0
      %445 = vmatmul.mubr.bf16.gmra.mrb[0].mxu0 %v332
      %v446 = vpop.f32.mrb[0].mxu0
      %v447 = vadd.f32 %v266, %v446
      %v448 = vpop.f32.mrb[0].mxu0
      %v449 = vpop.f32.mrb[0].mxu0
      %v450 = vadd.f32 %v266, %v449
      %v451 = vpop.f32.mrb[0].mxu0
      %452 = vmatprep.mubr.bf16.mxu0 0
      %453 = vmatmul.mubr.bf16.gmra.mrb[0].mxu0 %v333
      %v454 = vpop.f32.mrb[0].mxu0
      %v455 = vadd.f32 %v266, %v454
      %v456 = vpop.f32.mrb[0].mxu0
      %v457 = vpop.f32.mrb[0].mxu0
      %v458 = vadd.f32 %v266, %v457
      %v459 = vpop.f32.mrb[0].mxu0
      %460 = vmatprep.mubr.bf16.mxu0 0
      %461 = vmatmul.mubr.bf16.gmra.mrb[0].mxu0 %v334
      %v462 = vpop.f32.mrb[0].mxu0
      %v463 = vadd.f32 %v266, %v462
      %v464 = vpop.f32.mrb[0].mxu0
      %v465 = vpop.f32.mrb[0].mxu0
      %v466 = vadd.f32 %v266, %v465
      %v467 = vpop.f32.mrb[0].mxu0
      %468 = vmatprep.mubr.bf16.mxu0 0
      %469 = vmatmul.mubr.bf16.gmra.mrb[0].mxu0 %v335
      %v470 = vpop.f32.mrb[0].mxu0
      %v471 = vadd.f32 %v266, %v470
      %v472 = vpop.f32.mrb[0].mxu0
      %v473 = vpop.f32.mrb[0].mxu0
      %v474 = vadd.f32 %v266, %v473
      %v475 = vpop.f32.mrb[0].mxu0
      %476 = vmatprep.mubr.bf16.mxu0 0
      %477 = vmatmul.mubr.bf16.gmra.mrb[0].mxu0 %v336
      %v478 = vpop.f32.mrb[0].mxu0
      %v479 = vadd.f32 %v266, %v478
      %v480 = vpop.f32.mrb[0].mxu0
      %v481 = vpop.f32.mrb[0].mxu0
      %v482 = vadd.f32 %v266, %v481
      %v483 = vpop.f32.mrb[0].mxu0
      %484 = vmatprep.mubr.bf16.mxu0 0
      %485 = vmatmul.mubr.bf16.gmra.mrb[0].mxu0 %v337
      %v486 = vpop.f32.mrb[0].mxu0
      %v487 = vadd.f32 %v266, %v486
      %v488 = vpop.f32.mrb[0].mxu0
      %v489 = vpop.f32.mrb[0].mxu0
      %v490 = vadd.f32 %v266, %v489
      %v491 = vpop.f32.mrb[0].mxu0
      %492 = vmatprep.mubr.bf16.mxu0 0
      %493 = vmatmul.mubr.bf16.gmra.mrb[0].mxu0 %v338
      %v494 = vpop.f32.mrb[0].mxu0
      %v495 = vadd.f32 %v266, %v494
      %v496 = vpop.f32.mrb[0].mxu0
      %v497 = vpop.f32.mrb[0].mxu0
      %v498 = vadd.f32 %v266, %v497
      %v499 = vpop.f32.mrb[0].mxu0
      %500 = vmatprep.mubr.bf16.mxu0 0
      %501 = vmatmul.mubr.bf16.gmra.mrb[0].mxu0 %v339
      %v502 = vpop.f32.mrb[0].mxu0
      %v503 = vadd.f32 %v266, %v502
      %v504 = vpop.f32.mrb[0].mxu0
      %v505 = vpop.f32.mrb[0].mxu0
      %v506 = vadd.f32 %v266, %v505
      %v507 = vpop.f32.mrb[0].mxu0
      %508 = vmatprep.mubr.bf16.mxu0 0
      %509 = vmatmul.mubr.bf16.gmra.mrb[0].mxu0 %v340
      %v510 = vpop.f32.mrb[0].mxu0
      %v511 = vadd.f32 %v266, %v510
      %v512 = vpop.f32.mrb[0].mxu0
      %v513 = vpop.f32.mrb[0].mxu0
      %v514 = vadd.f32 %v266, %v513
      %v515 = vpop.f32.mrb[0].mxu0
      %516 = vmatprep.mubr.bf16.mxu0 0
      %517 = vmatmul.mubr.bf16.gmra.mrb[0].mxu0 %v341
      %v518 = vpop.f32.mrb[0].mxu0
      %v519 = vadd.f32 %v266, %v518
      %v520 = vpop.f32.mrb[0].mxu0
      %v521 = vpop.f32.mrb[0].mxu0
      %v522 = vadd.f32 %v266, %v521
      %v523 = vpop.f32.mrb[0].mxu0
      %524 = vmatprep.mubr.bf16.mxu0 0
      %525 = vmatmul.mubr.bf16.gmra.mrb[0].mxu0 %v342
      %v526 = vpop.f32.mrb[0].mxu0
      %v527 = vadd.f32 %v266, %v526
      %v528 = vpop.f32.mrb[0].mxu0
      %v529 = vpop.f32.mrb[0].mxu0
      %v530 = vadd.f32 %v266, %v529
      %v531 = vpop.f32.mrb[0].mxu0
      %532 = vmatprep.mubr.bf16.mxu0 0
      %533 = vmatmul.mubr.bf16.gmra.mrb[0].mxu0 %v343
      %v534 = vpop.f32.mrb[0].mxu0
      %v535 = vadd.f32 %v266, %v534
      %v536 = vpop.f32.mrb[0].mxu0
      %v537 = vpop.f32.mrb[0].mxu0
      %v538 = vadd.f32 %v266, %v537
      %v539 = vpop.f32.mrb[0].mxu0
      %540 = vmatprep.mubr.bf16.mxu0 0
      %541 = vmatmul.mubr.bf16.gmra.mrb[0].mxu0 %v344
      %v542 = vpop.f32.mrb[0].mxu0
      %v543 = vadd.f32 %v266, %v542
      %v544 = vpop.f32.mrb[0].mxu0
      %v545 = vpop.f32.mrb[0].mxu0
      %v546 = vadd.f32 %v266, %v545
      %v547 = vpop.f32.mrb[0].mxu0
      %548 = vmatprep.mubr.bf16.mxu0 0
      %549 = vmatmul.mubr.bf16.gmra.mrb[0].mxu0 %v345
      %v550 = vpop.f32.mrb[0].mxu0
      %v551 = vadd.f32 %v266, %v550
      %v552 = vpop.f32.mrb[0].mxu0
      %v553 = vpop.f32.mrb[0].mxu0
      %v554 = vadd.f32 %v266, %v553
      %v555 = vpop.f32.mrb[0].mxu0
      %556 = vmatprep.mubr.bf16.mxu0 0
      %557 = vmatmul.mubr.bf16.gmra.mrb[0].mxu0 %v346
      %v558 = vpop.f32.mrb[0].mxu0
      %v559 = vadd.f32 %v266, %v558
      %v560 = vpop.f32.mrb[0].mxu0
      %v561 = vpop.f32.mrb[0].mxu0
      %v562 = vadd.f32 %v266, %v561
      %v563 = vpop.f32.mrb[0].mxu0
      %564 = vmatprep.mubr.bf16.mxu0 0
      %565 = vmatmul.mubr.bf16.gmra.mrb[0].mxu0 %v347
      %v566 = vpop.f32.mrb[0].mxu0
      %v567 = vadd.f32 %v266, %v566
      %v568 = vpop.f32.mrb[0].mxu0
      %v569 = vpop.f32.mrb[0].mxu0
      %v570 = vadd.f32 %v266, %v569
      %v571 = vpop.f32.mrb[0].mxu0
      %572 = vdwg.mxu0
      %v573 = vpack.c.bf16 %v450, %v447
      %v574 = vpack.c.bf16 %v458, %v455
      %v575 = vpack.c.bf16 %v466, %v463
      %v576 = vpack.c.bf16 %v474, %v471
      %v577 = vpack.c.bf16 %v482, %v479
      %v578 = vpack.c.bf16 %v490, %v487
      %v579 = vpack.c.bf16 %v498, %v495
      %v580 = vpack.c.bf16 %v506, %v503
      %v581 = vpack.c.bf16 %v514, %v511
      %v582 = vpack.c.bf16 %v522, %v519
      %v583 = vpack.c.bf16 %v530, %v527
      %v584 = vpack.c.bf16 %v538, %v535
      %v585 = vpack.c.bf16 %v546, %v543
      %v586 = vpack.c.bf16 %v554, %v551
      %v587 = vpack.c.bf16 %v562, %v559
      %v588 = vpack.c.bf16 %v570, %v567
      %v605 = vunpack.c.l.b16 %v573
      %v606 = vunpack.c.h.b16 %v573
      %v607 = vunpack.c.l.b16 %v574
      %v608 = vunpack.c.h.b16 %v574
      %v609 = vunpack.c.l.b16 %v575
      %v610 = vunpack.c.h.b16 %v575
      %v611 = vunpack.c.l.b16 %v576
      %v612 = vunpack.c.h.b16 %v576
      %v613 = vunpack.c.l.b16 %v577
      %v614 = vunpack.c.h.b16 %v577
      %v615 = vunpack.c.l.b16 %v578
      %v616 = vunpack.c.h.b16 %v578
      %v617 = vunpack.c.l.b16 %v579
      %v618 = vunpack.c.h.b16 %v579
      %v619 = vunpack.c.l.b16 %v580
      %v620 = vunpack.c.h.b16 %v580
      %v621 = vunpack.c.l.b16 %v581
      %v622 = vunpack.c.h.b16 %v581
      %v623 = vunpack.c.l.b16 %v582
      %v624 = vunpack.c.h.b16 %v582
      %v625 = vunpack.c.l.b16 %v583
      %v626 = vunpack.c.h.b16 %v583
      %v627 = vunpack.c.l.b16 %v584
      %v628 = vunpack.c.h.b16 %v584
      %v629 = vunpack.c.l.b16 %v585
      %v630 = vunpack.c.h.b16 %v585
      %v631 = vunpack.c.l.b16 %v586
      %v632 = vunpack.c.h.b16 %v586
      %v633 = vunpack.c.l.b16 %v587
      %v634 = vunpack.c.h.b16 %v587
      %v635 = vunpack.c.l.b16 %v588
      %v636 = vunpack.c.h.b16 %v588
      %v637 = vpack.c.b16 %v605, %v605
      %v638 = vpack.c.b16 %v606, %v606
      %v639 = vpack.c.b16 %v607, %v607
      %v640 = vpack.c.b16 %v608, %v608
      %v641 = vpack.c.b16 %v609, %v609
      %v642 = vpack.c.b16 %v610, %v610
      %v643 = vpack.c.b16 %v611, %v611
      %v644 = vpack.c.b16 %v612, %v612
      %v645 = vpack.c.b16 %v613, %v613
      %v646 = vpack.c.b16 %v614, %v614
      %v647 = vpack.c.b16 %v615, %v615
      %v648 = vpack.c.b16 %v616, %v616
      %v649 = vpack.c.b16 %v617, %v617
      %v650 = vpack.c.b16 %v618, %v618
      %v651 = vpack.c.b16 %v619, %v619
      %v652 = vpack.c.b16 %v620, %v620
      %v653 = vpack.c.b16 %v621, %v621
      %v654 = vpack.c.b16 %v622, %v622
      %v655 = vpack.c.b16 %v623, %v623
      %v656 = vpack.c.b16 %v624, %v624
      %v657 = vpack.c.b16 %v625, %v625
      %v658 = vpack.c.b16 %v626, %v626
      %v659 = vpack.c.b16 %v627, %v627
      %v660 = vpack.c.b16 %v628, %v628
      %v661 = vpack.c.b16 %v629, %v629
      %v662 = vpack.c.b16 %v630, %v630
      %v663 = vpack.c.b16 %v631, %v631
      %v664 = vpack.c.b16 %v632, %v632
      %v665 = vpack.c.b16 %v633, %v633
      %v666 = vpack.c.b16 %v634, %v634
      %v667 = vpack.c.b16 %v635, %v635
      %v668 = vpack.c.b16 %v636, %v636
      %701 = vst [vmem:[%s206] sm:$0xf] %v637
      %702 = vst [vmem:[%s206 + $0x4] sm:$0xf] %v638
      %703 = vst [vmem:[%s206 + $0x8] sm:$0xf] %v639
      %704 = vst [vmem:[%s206 + $0xc] sm:$0xf] %v640
      %705 = vst [vmem:[%s206 + $0x10] sm:$0xf] %v641
      %706 = vst [vmem:[%s206 + $0x14] sm:$0xf] %v642
      %707 = vst [vmem:[%s206 + $0x18] sm:$0xf] %v643
      %708 = vst [vmem:[%s206 + $0x1c] sm:$0xf] %v644
      %709 = vst [vmem:[%s206 + $0x20] sm:$0xf] %v645
      %710 = vst [vmem:[%s206 + $0x24] sm:$0xf] %v646
      %711 = vst [vmem:[%s206 + $0x28] sm:$0xf] %v647
      %712 = vst [vmem:[%s206 + $0x2c] sm:$0xf] %v648
      %713 = vst [vmem:[%s206 + $0x30] sm:$0xf] %v649
      %714 = vst [vmem:[%s206 + $0x34] sm:$0xf] %v650
      %715 = vst [vmem:[%s206 + $0x38] sm:$0xf] %v651
      %716 = vst [vmem:[%s206 + $0x3c] sm:$0xf] %v652
      %717 = vst [vmem:[%s206 + $0x40] sm:$0xf] %v653
      %718 = vst [vmem:[%s206 + $0x44] sm:$0xf] %v654
      %719 = vst [vmem:[%s206 + $0x48] sm:$0xf] %v655
      %720 = vst [vmem:[%s206 + $0x4c] sm:$0xf] %v656
      %721 = vst [vmem:[%s206 + $0x50] sm:$0xf] %v657
      %722 = vst [vmem:[%s206 + $0x54] sm:$0xf] %v658
      %723 = vst [vmem:[%s206 + $0x58] sm:$0xf] %v659
      %724 = vst [vmem:[%s206 + $0x5c] sm:$0xf] %v660
      %725 = vst [vmem:[%s206 + $0x60] sm:$0xf] %v661
      %726 = vst [vmem:[%s206 + $0x64] sm:$0xf] %v662
      %727 = vst [vmem:[%s206 + $0x68] sm:$0xf] %v663
      %728 = vst [vmem:[%s206 + $0x6c] sm:$0xf] %v664
      %729 = vst [vmem:[%s206 + $0x70] sm:$0xf] %v665
      %730 = vst [vmem:[%s206 + $0x74] sm:$0xf] %v666
      %731 = vst [vmem:[%s206 + $0x78] sm:$0xf] %v667
      %732 = vst [vmem:[%s206 + $0x7c] sm:$0xf] %v668
      %v733 = vadd.f32 %v447, %v450
      %v734 = vadd.f32 %v733, %v455
      %v735 = vadd.f32 %v734, %v458
      %v736 = vadd.f32 %v735, %v463
      %v737 = vadd.f32 %v736, %v466
      %v738 = vadd.f32 %v737, %v471
      %v739 = vadd.f32 %v738, %v474
      %v740 = vadd.f32 %v739, %v479
      %v741 = vadd.f32 %v740, %v482
      %v742 = vadd.f32 %v741, %v487
      %v743 = vadd.f32 %v742, %v490
      %v744 = vadd.f32 %v743, %v495
      %v745 = vadd.f32 %v744, %v498
      %v746 = vadd.f32 %v745, %v503
      %v747 = vadd.f32 %v746, %v506
      %v748 = vadd.f32 %v747, %v511
      %v749 = vadd.f32 %v748, %v514
      %v750 = vadd.f32 %v749, %v519
      %v751 = vadd.f32 %v750, %v522
      %v752 = vadd.f32 %v751, %v527
      %v753 = vadd.f32 %v752, %v530
      %v754 = vadd.f32 %v753, %v535
      %v755 = vadd.f32 %v754, %v538
      %v756 = vadd.f32 %v755, %v543
      %v757 = vadd.f32 %v756, %v546
      %v758 = vadd.f32 %v757, %v551
      %v759 = vadd.f32 %v758, %v554
      %v760 = vadd.f32 %v759, %v559
      %v761 = vadd.f32 %v760, %v562
      %v762 = vadd.f32 %v761, %v567
      %v763 = vadd.f32 %v762, %v570
      %v764 = vrot.slane %v763, 4
      %v765 = vadd.f32 %v763, %v764
      %v766 = vrot.slane %v765, 2
      %v767 = vadd.f32 %v765, %v766
      %v768 = vrot.slane %v767, 1
      %v769 = vadd.f32 %v767, %v768
      %770 = vst [vmem:[%s211] sm:$0x1] %v769
      %v771 = vmul.f32 %v447, %v447
      %v772 = vmul.f32 %v450, %v450
      %v773 = vmul.f32 %v455, %v455
      %v774 = vmul.f32 %v458, %v458
      %v775 = vmul.f32 %v463, %v463
      %v776 = vmul.f32 %v466, %v466
      %v777 = vmul.f32 %v471, %v471
      %v778 = vmul.f32 %v474, %v474
      %v779 = vmul.f32 %v479, %v479
      %v780 = vmul.f32 %v482, %v482
      %v781 = vmul.f32 %v487, %v487
      %v782 = vmul.f32 %v490, %v490
      %v783 = vmul.f32 %v495, %v495
      %v784 = vmul.f32 %v498, %v498
      %v785 = vmul.f32 %v503, %v503
      %v786 = vmul.f32 %v506, %v506
      %v787 = vmul.f32 %v511, %v511
      %v788 = vmul.f32 %v514, %v514
      %v789 = vmul.f32 %v519, %v519
      %v790 = vmul.f32 %v522, %v522
      %v791 = vmul.f32 %v527, %v527
      %v792 = vmul.f32 %v530, %v530
      %v793 = vmul.f32 %v535, %v535
      %v794 = vmul.f32 %v538, %v538
      %v795 = vmul.f32 %v543, %v543
      %v796 = vmul.f32 %v546, %v546
      %v797 = vmul.f32 %v551, %v551
      %v798 = vmul.f32 %v554, %v554
      %v799 = vmul.f32 %v559, %v559
      %v800 = vmul.f32 %v562, %v562
      %v801 = vmul.f32 %v567, %v567
      %v802 = vmul.f32 %v570, %v570
      %v803 = vadd.f32 %v771, %v772
      %v804 = vadd.f32 %v803, %v773
      %v805 = vadd.f32 %v804, %v774
      %v806 = vadd.f32 %v805, %v775
      %v807 = vadd.f32 %v806, %v776
      %v808 = vadd.f32 %v807, %v777
      %v809 = vadd.f32 %v808, %v778
      %v810 = vadd.f32 %v809, %v779
      %v811 = vadd.f32 %v810, %v780
      %v812 = vadd.f32 %v811, %v781
      %v813 = vadd.f32 %v812, %v782
      %v814 = vadd.f32 %v813, %v783
      %v815 = vadd.f32 %v814, %v784
      %v816 = vadd.f32 %v815, %v785
      %v817 = vadd.f32 %v816, %v786
      %v818 = vadd.f32 %v817, %v787
      %v819 = vadd.f32 %v818, %v788
      %v820 = vadd.f32 %v819, %v789
      %v821 = vadd.f32 %v820, %v790
      %v822 = vadd.f32 %v821, %v791
      %v823 = vadd.f32 %v822, %v792
      %v824 = vadd.f32 %v823, %v793
      %v825 = vadd.f32 %v824, %v794
      %v826 = vadd.f32 %v825, %v795
      %v827 = vadd.f32 %v826, %v796
      %v828 = vadd.f32 %v827, %v797
      %v829 = vadd.f32 %v828, %v798
      %v830 = vadd.f32 %v829, %v799
      %v831 = vadd.f32 %v830, %v800
      %v832 = vadd.f32 %v831, %v801
      %v833 = vadd.f32 %v832, %v802
      %v834 = vrot.slane %v833, 4
      %v835 = vadd.f32 %v833, %v834
      %v836 = vrot.slane %v835, 2
      %v837 = vadd.f32 %v835, %v836
      %v838 = vrot.slane %v837, 1
      %v839 = vadd.f32 %v837, %v838
      %840 = vst [vmem:[%s211 + $0x1] sm:$0x1] %v839
      %s841 = smul.u32 32, %s16
      %p842 = scmp.lt.s32.totalorder %s841, 63
      %s843 = scalar_select %p842, %s841, 63
      %s844 = smul.addr %s843, 4
      %s845 = scalar_lea.vmem %s3, %s844
      %p846 = scmp.lt.s32.totalorder %s16, 1
      %s847 = scalar_select %p846, %s16, 1
      %s848 = smul.addr %s847, 2
      %s849 = scalar_lea.vmem %s4, %s848
      // Predicated region
      $region33: #{bottleneck_forward.4} parent=31 // pred_check
        %p850 = pneg %p102
      $region34: #{bottleneck_forward.4} parent=31 // pred_check_branch
        %852 = sbr.rel (%p850) target = $region36
      $region35: #{bottleneck_forward.4} parent=31 // pred_region
        %s853 = smul.u32 32, %s16
      $region36: #{bottleneck_forward.4} parent=31 // pred_fallthru
        _
      // Predicated region
      $region37: #{bottleneck_forward.4} parent=31 // pred_check
        %p854 = pneg %p128
      $region38: #{bottleneck_forward.4} parent=31 // pred_check_branch
        %856 = sbr.rel (%p854) target = $region40
      $region39: #{bottleneck_forward.4} parent=31 // pred_region
        _
      $region40: #{bottleneck_forward.4} parent=31 // pred_fallthru
        _
    $region32: #{bottleneck_forward.4} parent=5 // pred_fallthru
      _
    %p857 = scmp.le.s32.totalorder 2, %s11
    // Predicated region
    $region41: #{bottleneck_forward.4} parent=5 // pred_check
      %p858 = pneg %p857
    $region42: #{bottleneck_forward.4} parent=5 // pred_check_branch
      %860 = sbr.rel (%p858) target = $region44
    $region43: #{bottleneck_forward.4} parent=5 // pred_region
      %s861 = ssub.s32 %s11, 2
      // Predicated region
      $region45: #{bottleneck_forward.4} parent=43 // pred_check
        %p862 = pneg %p108
      $region46: #{bottleneck_forward.4} parent=43 // pred_check_branch
        %864 = sbr.rel (%p862) target = $region48
      $region47: #{bottleneck_forward.4} parent=43 // pred_region
        %s865 = smul.u32 32, %s17
        %p866 = scmp.lt.s32.totalorder %s865, 63
        %s867 = scalar_select %p866, %s865, 63
        %s868 = smul.addr %s867, 4
        %s869 = scalar_lea.vmem %s3, %s868
      $region48: #{bottleneck_forward.4} parent=43 // pred_fallthru
        _
      // Predicated region
      $region49: #{bottleneck_forward.4} parent=43 // pred_check
        %p870 = pneg %p134
      $region50: #{bottleneck_forward.4} parent=43 // pred_check_branch
        %872 = sbr.rel (%p870) target = $region52
      $region51: #{bottleneck_forward.4} parent=43 // pred_region
        %p873 = scmp.lt.s32.totalorder %s17, 1
        %s874 = scalar_select %p873, %s17, 1
        %s875 = smul.addr %s874, 2
        %s876 = scalar_lea.vmem %s4, %s875
      $region52: #{bottleneck_forward.4} parent=43 // pred_fallthru
        _
    $region44: #{bottleneck_forward.4} parent=5 // pred_fallthru
      _
  $region6: #{bottleneck_forward.4} parent=0 // loop_footer
    %s15 = sadd.s32 1, %s11
  $region7: #{bottleneck_forward.4} parent=0 // loop_footer_branch
    %10 = sbr.rel target = $region3
  $region8: #{bottleneck_forward.4} parent=0 // loop_exit
    _

// kernel: bottleneck_forward.7
$region0: #{bottleneck_forward.7}
  #allocation0 [shape = 'u32[]', space=smem, size = 0x4, offset = 0x4, fixed_abs, tag = 'smem constant byte address 0x4 - core index']
  #allocation1 [shape = 'u32[144,128]{1,0:T(1,128)}', space=vmem, size = 0x12000, scoped, tag = 'internal scratch']
  #allocation2 [shape = 'f32[64,128]{1,0:T(8,128)}', space=vmem, size = 0x8000, scoped, tag = 'scratch operand']
  %s0 = inlined_call_operand.vmem [shape: bf16[8,64,128], index: 0, kind: input, shape index: {}]
  %s1 = inlined_call_operand.vmem [shape: bf16[8,64,128], index: 1, kind: input, shape index: {}]
  %s2 = inlined_call_operand.vmem [shape: f32[1,128], index: 2, kind: input, shape index: {}]
  %s3 = inlined_call_operand.vmem [shape: f32[1,128], index: 3, kind: input, shape index: {}]
  %s4 = inlined_call_operand.vmem [shape: f32[8,64,128], index: 4, kind: output, shape index: {}]
  %s5 = sld [smem:[#allocation0]]
  $region53: #{bottleneck_forward.7} parent=0
    _
  %s7 = ssub.s32 1, %s5
  %s8 = scalar_select 0, %s7, %s5
  loop: start=0, step=1, limit=10
  $region2: #{bottleneck_forward.7} parent=0 // loop_pre_header
    _
  $region3: #{bottleneck_forward.7} parent=0 // loop_header
    %s10 = sphi 0, %s14
    %p11 = scmp.ge.s32.totalorder %s10, 10
    %s17 = sphi 0, %s36
    %s18 = sphi 0, %s32
    %s19 = sphi 0, %s28
    %s20 = sphi 0, %s17
    %s21 = sphi 0, %s18
    %s22 = sphi 0, %s19
    %s23 = sphi 0, %s20
    %s24 = sphi 0, %s21
    %s25 = sphi 0, %s22
    %s45 = sphi 0, %s47
    %s48 = sphi 0, %s45
    %s49 = sphi 0, %s48
    %s65 = sphi 0, %s49
    %s77 = sphi 0, %s79
    %s80 = sphi 0, %s77
    %s81 = sphi 0, %s80
    %s97 = sphi 0, %s81
    %s101 = sphi 0, %s101
    %s103 = sphi 0, %s101
    %s104 = sphi 0, %s103
    %s118 = sphi 0, %s104
    %s122 = sphi 0, %s122
    %s124 = sphi 0, %s122
    %s125 = sphi 0, %s124
    %s139 = sphi 0, %s125
    %s151 = sphi 0, %s153
    %s154 = sphi 0, %s151
    %s155 = sphi 0, %s154
    %s171 = sphi 0, %s155
  $region4: #{bottleneck_forward.7} parent=0 // loop_header_branch
    %13 = sbr.rel (%p11) target = $region8
  $region5: #{bottleneck_forward.7} parent=0 // loop_body
    %s15 = ssub.s32 %s10, 1
    %s16 = ssub.s32 %s10, 2
    %s26 = sadd.s32 1, %s19
    %p27 = scmp.ge.s32.totalorder %s26, 4
    %s28 = scalar_select %p27, 0, %s26
    %s29 = sadd.s32 1, %s18
    %s30 = scalar_select %p27, %s29, %s18
    %p31 = scmp.ge.s32.totalorder %s30, 1
    %s32 = scalar_select %p31, 0, %s30
    %s33 = sadd.s32 1, %s17
    %s34 = scalar_select %p31, %s33, %s17
    %p35 = scmp.ge.s32.totalorder %s34, 2
    %s36 = scalar_select %p35, 0, %s34
    %s37 = smul.u32 %s17, 4
    %s38 = sadd.s32 %s37, %s19
    %s39 = smul.u32 %s36, 4
    %s40 = sadd.s32 %s39, %s28
    %s41 = ssub.s32 %s38, %s40
    %s42 = ssub.s32 %s18, %s32
    %s43 = sor.u32 %s41, %s42
    %p44 = scmp.eq.s32.totalorder %s43, 0
    %s46 = sadd.s32 %s45, 1
    %s47 = scalar_select %p44, %s45, %s46
    %p50 = pneg %p44
    %p51 = scmp.eq.s32.totalorder %s10, 7
    %p52 = por %p50, %p51
    %p53 = scmp.ne.s32.totalorder %s45, %s48
    %p54 = scmp.eq.s32.totalorder %s10, 0
    %p55 = por %p53, %p54
    %p56 = scmp.ne.s32.totalorder %s45, %s48
    %p57 = scmp.eq.s32.totalorder %s15, 7
    %p58 = por %p56, %p57
    %p59 = scmp.ne.s32.totalorder %s48, %s49
    %p60 = scmp.eq.s32.totalorder %s15, 0
    %p61 = por %p59, %p60
    %p62 = scmp.ne.s32.totalorder %s48, %s49
    %p63 = scmp.eq.s32.totalorder %s16, 7
    %p64 = por %p62, %p63
    %p66 = scmp.ne.s32.totalorder %s49, %s65
    %p67 = scmp.eq.s32.totalorder %s16, 0
    %p68 = por %p66, %p67
    %s69 = smul.u32 %s19, 2
    %s70 = sadd.s32 %s69, %s17
    %s71 = smul.u32 %s28, 2
    %s72 = sadd.s32 %s71, %s36
    %s73 = ssub.s32 %s70, %s72
    %s74 = ssub.s32 %s18, %s32
    %s75 = sor.u32 %s73, %s74
    %p76 = scmp.eq.s32.totalorder %s75, 0
    %s78 = sadd.s32 %s77, 1
    %s79 = scalar_select %p76, %s77, %s78
    %p82 = pneg %p76
    %p83 = scmp.eq.s32.totalorder %s10, 7
    %p84 = por %p82, %p83
    %p85 = scmp.ne.s32.totalorder %s77, %s80
    %p86 = scmp.eq.s32.totalorder %s10, 0
    %p87 = por %p85, %p86
    %p88 = scmp.ne.s32.totalorder %s77, %s80
    %p89 = scmp.eq.s32.totalorder %s15, 7
    %p90 = por %p88, %p89
    %p91 = scmp.ne.s32.totalorder %s80, %s81
    %p92 = scmp.eq.s32.totalorder %s15, 0
    %p93 = por %p91, %p92
    %p94 = scmp.ne.s32.totalorder %s80, %s81
    %p95 = scmp.eq.s32.totalorder %s16, 7
    %p96 = por %p94, %p95
    %p98 = scmp.ne.s32.totalorder %s81, %s97
    %p99 = scmp.eq.s32.totalorder %s16, 0
    %p100 = por %p98, %p99
    %s102 = sadd.s32 %s101, 1
    %p105 = scmp.eq.s32.totalorder %s10, 7
    %p106 = scmp.ne.s32.totalorder %s101, %s103
    %p107 = scmp.eq.s32.totalorder %s10, 0
    %p108 = por %p106, %p107
    %p109 = scmp.ne.s32.totalorder %s101, %s103
    %p110 = scmp.eq.s32.totalorder %s15, 7
    %p111 = por %p109, %p110
    %p112 = scmp.ne.s32.totalorder %s103, %s104
    %p113 = scmp.eq.s32.totalorder %s15, 0
    %p114 = por %p112, %p113
    %p115 = scmp.ne.s32.totalorder %s103, %s104
    %p116 = scmp.eq.s32.totalorder %s16, 7
    %p117 = por %p115, %p116
    %p119 = scmp.ne.s32.totalorder %s104, %s118
    %p120 = scmp.eq.s32.totalorder %s16, 0
    %p121 = por %p119, %p120
    %s123 = sadd.s32 %s122, 1
    %p126 = scmp.eq.s32.totalorder %s10, 7
    %p127 = scmp.ne.s32.totalorder %s122, %s124
    %p128 = scmp.eq.s32.totalorder %s10, 0
    %p129 = por %p127, %p128
    %p130 = scmp.ne.s32.totalorder %s122, %s124
    %p131 = scmp.eq.s32.totalorder %s15, 7
    %p132 = por %p130, %p131
    %p133 = scmp.ne.s32.totalorder %s124, %s125
    %p134 = scmp.eq.s32.totalorder %s15, 0
    %p135 = por %p133, %p134
    %p136 = scmp.ne.s32.totalorder %s124, %s125
    %p137 = scmp.eq.s32.totalorder %s16, 7
    %p138 = por %p136, %p137
    %p140 = scmp.ne.s32.totalorder %s125, %s139
    %p141 = scmp.eq.s32.totalorder %s16, 0
    %p142 = por %p140, %p141
    %s143 = smul.u32 %s19, 2
    %s144 = sadd.s32 %s143, %s17
    %s145 = smul.u32 %s28, 2
    %s146 = sadd.s32 %s145, %s36
    %s147 = ssub.s32 %s144, %s146
    %s148 = ssub.s32 %s18, %s32
    %s149 = sor.u32 %s147, %s148
    %p150 = scmp.eq.s32.totalorder %s149, 0
    %s152 = sadd.s32 %s151, 1
    %s153 = scalar_select %p150, %s151, %s152
    %p156 = pneg %p150
    %p157 = scmp.eq.s32.totalorder %s10, 7
    %p158 = por %p156, %p157
    %p159 = scmp.ne.s32.totalorder %s151, %s154
    %p160 = scmp.eq.s32.totalorder %s10, 0
    %p161 = por %p159, %p160
    %p162 = scmp.ne.s32.totalorder %s151, %s154
    %p163 = scmp.eq.s32.totalorder %s15, 7
    %p164 = por %p162, %p163
    %p165 = scmp.ne.s32.totalorder %s154, %s155
    %p166 = scmp.eq.s32.totalorder %s15, 0
    %p167 = por %p165, %p166
    %p168 = scmp.ne.s32.totalorder %s154, %s155
    %p169 = scmp.eq.s32.totalorder %s16, 7
    %p170 = por %p168, %p169
    %p172 = scmp.ne.s32.totalorder %s155, %s171
    %p173 = scmp.eq.s32.totalorder %s16, 0
    %p174 = por %p172, %p173
    %p175 = scmp.le.s32.totalorder 1, %s10
    %p176 = scmp.lt.s32.totalorder %s10, 9
    %p177 = pnand %p175, %p176
    %p178 = pneg %p177
    // Predicated region
    $region9: #{bottleneck_forward.7} parent=5 // pred_check
      _
    $region10: #{bottleneck_forward.7} parent=5 // pred_check_branch
      %180 = sbr.rel (%p177) target = $region12
    $region11: #{bottleneck_forward.7} parent=5 // pred_region
      %s181 = ssub.s32 %s10, 1
      // Predicated region
      $region13: #{bottleneck_forward.7} parent=11 // pred_check
        %p182 = pneg %p114
      $region14: #{bottleneck_forward.7} parent=11 // pred_check_branch
        %184 = sbr.rel (%p182) target = $region16
      $region15: #{bottleneck_forward.7} parent=11 // pred_region
        _
      $region16: #{bottleneck_forward.7} parent=11 // pred_fallthru
        _
      // Predicated region
      $region17: #{bottleneck_forward.7} parent=11 // pred_check
        %p185 = pneg %p135
      $region18: #{bottleneck_forward.7} parent=11 // pred_check_branch
        %187 = sbr.rel (%p185) target = $region20
      $region19: #{bottleneck_forward.7} parent=11 // pred_region
        _
      $region20: #{bottleneck_forward.7} parent=11 // pred_fallthru
        _
    $region12: #{bottleneck_forward.7} parent=5 // pred_fallthru
      _
    %p188 = scmp.lt.s32.totalorder %s10, 8
    // Predicated region
    $region21: #{bottleneck_forward.7} parent=5 // pred_check
      %p189 = pneg %p188
    $region22: #{bottleneck_forward.7} parent=5 // pred_check_branch
      %191 = sbr.rel (%p189) target = $region24
    $region23: #{bottleneck_forward.7} parent=5 // pred_region
      // Predicated region
      $region25: #{bottleneck_forward.7} parent=23 // pred_check
        %p192 = pneg %p55
      $region26: #{bottleneck_forward.7} parent=23 // pred_check_branch
        %194 = sbr.rel (%p192) target = $region28
      $region27: #{bottleneck_forward.7} parent=23 // pred_region
        %s195 = smul.u32 %s17, 4
        %s196 = sadd.s32 %s195, %s19
        %s197 = smul.u32 8, %s18
        %p198 = scmp.lt.s32.totalorder %s196, 7
        %s199 = scalar_select %p198, %s196, 7
        %p200 = scmp.lt.s32.totalorder %s197, 7
        %s201 = scalar_select %p200, %s197, 7
        %s202 = smul.addr %s199, 8
        %s203 = sadd.s32 %s201, %s202
        %s204 = smul.addr %s203, 4
        %s205 = scalar_lea.vmem %s0, %s204
        %s206 = smul.u32 %s17, 4
        %s207 = sadd.s32 %s206, %s19
        %s208 = smul.u32 8, %s18
      $region28: #{bottleneck_forward.7} parent=23 // pred_fallthru
        _
      // Predicated region
      $region29: #{bottleneck_forward.7} parent=23 // pred_check
        %p209 = pneg %p87
      $region30: #{bottleneck_forward.7} parent=23 // pred_check_branch
        %211 = sbr.rel (%p209) target = $region32
      $region31: #{bottleneck_forward.7} parent=23 // pred_region
        %s212 = smul.u32 %s19, 2
        %s213 = sadd.s32 %s212, %s17
        %s214 = smul.u32 8, %s18
        %p215 = scmp.lt.s32.totalorder %s213, 7
        %s216 = scalar_select %p215, %s213, 7
        %p217 = scmp.lt.s32.totalorder %s214, 7
        %s218 = scalar_select %p217, %s214, 7
        %s219 = smul.addr %s216, 8
        %s220 = sadd.s32 %s218, %s219
        %s221 = smul.addr %s220, 4
        %s222 = scalar_lea.vmem %s1, %s221
        %s223 = smul.u32 %s19, 2
        %s224 = sadd.s32 %s223, %s17
        %s225 = smul.u32 8, %s18
      $region32: #{bottleneck_forward.7} parent=23 // pred_fallthru
        _
    $region24: #{bottleneck_forward.7} parent=5 // pred_fallthru
      _
    %p226 = scmp.le.s32.totalorder 1, %s10
    %p227 = scmp.lt.s32.totalorder %s10, 9
    %p228 = pnand %p226, %p227
    %p229 = pneg %p228
    // Predicated region
    $region33: #{bottleneck_forward.7} parent=5 // pred_check
      _
    $region34: #{bottleneck_forward.7} parent=5 // pred_check_branch
      %231 = sbr.rel (%p228) target = $region36
    $region35: #{bottleneck_forward.7} parent=5 // pred_region
      %s232 = ssub.s32 %s10, 1
      %s233 = smul.u32 %s20, 4
      %s234 = sadd.s32 %s233, %s22
      %s235 = smul.u32 8, %s21
      %p236 = scmp.lt.s32.totalorder %s234, 7
      %s237 = scalar_select %p236, %s234, 7
      %p238 = scmp.lt.s32.totalorder %s235, 7
      %s239 = scalar_select %p238, %s235, 7
      %s240 = smul.addr %s237, 8
      %s241 = sadd.s32 %s239, %s240
      %s242 = smul.addr %s241, 4
      %s243 = scalar_lea.vmem %s0, %s242
      %p244 = pneg %p61
      %p245 = pneg %p58
      %s246 = smul.u32 %s22, 2
      %s247 = sadd.s32 %s246, %s20
      %s248 = smul.u32 8, %s21
      %p249 = scmp.lt.s32.totalorder %s247, 7
      %s250 = scalar_select %p249, %s247, 7
      %p251 = scmp.lt.s32.totalorder %s248, 7
      %s252 = scalar_select %p251, %s248, 7
      %s253 = smul.addr %s250, 8
      %s254 = sadd.s32 %s252, %s253
      %s255 = smul.addr %s254, 4
      %s256 = scalar_lea.vmem %s1, %s255
      %p257 = pneg %p93
      %p258 = pneg %p90
      %p259 = pneg %p114
      %p260 = pneg %p111
      %p261 = pneg %p135
      %p262 = pneg %p132
      %p263 = pneg %p167
      %p264 = pneg %p164
      %s265 = smul.u32 %s22, 2
      %s266 = sadd.s32 %s265, %s20
      %s267 = smul.u32 8, %s21
      %p268 = scmp.lt.s32.totalorder %s266, 7
      %s269 = scalar_select %p268, %s266, 7
      %p270 = scmp.lt.s32.totalorder %s267, 7
      %s271 = scalar_select %p270, %s267, 7
      %s272 = smul.addr %s269, 8
      %s273 = sadd.s32 %s271, %s272
      %s274 = smul.addr %s273, 8
      %s275 = scalar_lea.vmem %s4, %s274
      %s276 = smul.u32 %s20, 4
      %s277 = sadd.s32 %s276, %s22
      %s278 = smul.u32 8, %s21
      %p279 = scmp.lt.s32.totalorder %s277, 7
      %s280 = scalar_select %p279, %s277, 7
      %p281 = scmp.lt.s32.totalorder %s278, 7
      %s282 = scalar_select %p281, %s278, 7
      %s283 = smul.addr %s280, 8
      %s284 = sadd.s32 %s282, %s283
      %s285 = smul.addr %s284, 4
      %s286 = scalar_lea.vmem %s0, %s285
      %s287 = smul.u32 %s20, 4
      %s288 = sadd.s32 %s287, %s22
      %s289 = smul.u32 8, %s21
      %s290 = smul.u32 %s22, 2
      %s291 = sadd.s32 %s290, %s20
      %s292 = smul.u32 8, %s21
      %p293 = scmp.lt.s32.totalorder %s291, 7
      %s294 = scalar_select %p293, %s291, 7
      %p295 = scmp.lt.s32.totalorder %s292, 7
      %s296 = scalar_select %p295, %s292, 7
      %s297 = smul.addr %s294, 8
      %s298 = sadd.s32 %s296, %s297
      %s299 = smul.addr %s298, 4
      %s300 = scalar_lea.vmem %s1, %s299
      %s301 = smul.u32 %s22, 2
      %s302 = sadd.s32 %s301, %s20
      %s303 = smul.u32 8, %s21
      %s304 = smul.u32 %s22, 2
      %s305 = sadd.s32 %s304, %s20
      %s306 = smul.u32 8, %s21
      %p307 = scmp.lt.s32.totalorder %s305, 7
      %s308 = scalar_select %p307, %s305, 7
      %p309 = scmp.lt.s32.totalorder %s306, 7
      %s310 = scalar_select %p309, %s306, 7
      %s311 = smul.addr %s308, 8
      %s312 = sadd.s32 %s310, %s311
      %s313 = smul.addr %s312, 8
      %s314 = scalar_lea.vmem %s4, %s313
      %s315 = smul.u32 %s22, 2
      %s316 = sadd.s32 %s315, %s20
      %s317 = smul.u32 8, %s21
      %p318 = scmp.eq.s32.totalorder %s22, 0
      // Predicated region
      $region37: #{bottleneck_forward.7} parent=35 // pred_check
        %p319 = pneg %p318
      $region38: #{bottleneck_forward.7} parent=35 // pred_check_branch
        %321 = sbr.rel (%p319) target = $region40
      $region39: #{bottleneck_forward.7} parent=35 // pred_region
        %322 = vst [vmem:[#allocation2] sm:$0xff] 0.0
        %323 = vst [vmem:[#allocation2 + $0x8] sm:$0xff] 0.0
        %324 = vst [vmem:[#allocation2 + $0x10] sm:$0xff] 0.0
        %325 = vst [vmem:[#allocation2 + $0x18] sm:$0xff] 0.0
        %326 = vst [vmem:[#allocation2 + $0x20] sm:$0xff] 0.0
        %327 = vst [vmem:[#allocation2 + $0x28] sm:$0xff] 0.0
        %328 = vst [vmem:[#allocation2 + $0x30] sm:$0xff] 0.0
        %329 = vst [vmem:[#allocation2 + $0x38] sm:$0xff] 0.0
      $region40: #{bottleneck_forward.7} parent=35 // pred_fallthru
        _
      %v330 = vld [vmem:[%s286] sm:$0xf]
      %v331 = vld [vmem:[%s286 + $0x4] sm:$0xf]
      %v332 = vld [vmem:[%s286 + $0x8] sm:$0xf]
      %v333 = vld [vmem:[%s286 + $0xc] sm:$0xf]
      %v334 = vld [vmem:[%s286 + $0x10] sm:$0xf]
      %v335 = vld [vmem:[%s286 + $0x14] sm:$0xf]
      %v336 = vld [vmem:[%s286 + $0x18] sm:$0xf]
      %v337 = vld [vmem:[%s286 + $0x1c] sm:$0xf]
      %v338 = vunpack.c.l.bf16 %v330
      %v339 = vunpack.c.l.bf16 %v331
      %v340 = vunpack.c.l.bf16 %v332
      %v341 = vunpack.c.l.bf16 %v333
      %v342 = vunpack.c.l.bf16 %v334
      %v343 = vunpack.c.l.bf16 %v335
      %v344 = vunpack.c.l.bf16 %v336
      %v345 = vunpack.c.l.bf16 %v337
      %v346 = vld [vmem:[%s2] sm:$0x1]
      %v348 = vlaneseq
      %v349 = vshrl.u32 %v348, 7
      %v350 = vsub.s32 0, %v349
      %v351 = vrot.slane %v346, %v350
      %v353 = vmul.f32 %v338, %v351
      %v354 = vmul.f32 %v339, %v351
      %v355 = vmul.f32 %v340, %v351
      %v356 = vmul.f32 %v341, %v351
      %v357 = vmul.f32 %v342, %v351
      %v358 = vmul.f32 %v343, %v351
      %v359 = vmul.f32 %v344, %v351
      %v360 = vmul.f32 %v345, %v351
      %v361 = vld [vmem:[%s3] sm:$0x1]
      %v363 = vlaneseq
      %v364 = vshrl.u32 %v363, 7
      %v365 = vsub.s32 0, %v364
      %v366 = vrot.slane %v361, %v365
      %v368 = vadd.f32 %v353, %v366
      %v369 = vadd.f32 %v354, %v366
      %v370 = vadd.f32 %v355, %v366
      %v371 = vadd.f32 %v356, %v366
      %v372 = vadd.f32 %v357, %v366
      %v373 = vadd.f32 %v358, %v366
      %v374 = vadd.f32 %v359, %v366
      %v375 = vadd.f32 %v360, %v366
      %v376 = vld [vmem:[#allocation2] sm:$0xff]
      %v377 = vld [vmem:[#allocation2 + $0x8] sm:$0xff]
      %v378 = vld [vmem:[#allocation2 + $0x10] sm:$0xff]
      %v379 = vld [vmem:[#allocation2 + $0x18] sm:$0xff]
      %v380 = vld [vmem:[#allocation2 + $0x20] sm:$0xff]
      %v381 = vld [vmem:[#allocation2 + $0x28] sm:$0xff]
      %v382 = vld [vmem:[#allocation2 + $0x30] sm:$0xff]
      %v383 = vld [vmem:[#allocation2 + $0x38] sm:$0xff]
      %v384 = vsub.f32 %v368, %v376
      %v385 = vsub.f32 %v369, %v377
      %v386 = vsub.f32 %v370, %v378
      %v387 = vsub.f32 %v371, %v379
      %v388 = vsub.f32 %v372, %v380
      %v389 = vsub.f32 %v373, %v381
      %v390 = vsub.f32 %v374, %v382
      %v391 = vsub.f32 %v375, %v383
      %v392 = vmul.f32 %v384, 0.5
      %v393 = vmul.f32 %v385, 0.5
      %v394 = vmul.f32 %v386, 0.5
      %v395 = vmul.f32 %v387, 0.5
      %v396 = vmul.f32 %v388, 0.5
      %v397 = vmul.f32 %v389, 0.5
      %v398 = vmul.f32 %v390, 0.5
      %v399 = vmul.f32 %v391, 0.5
      %v400 = vadd.f32 %v376, %v392
      %v401 = vadd.f32 %v377, %v393
      %v402 = vadd.f32 %v378, %v394
      %v403 = vadd.f32 %v379, %v395
      %v404 = vadd.f32 %v380, %v396
      %v405 = vadd.f32 %v381, %v397
      %v406 = vadd.f32 %v382, %v398
      %v407 = vadd.f32 %v383, %v399
      %vm408 = vcmp.ge.f32.partialorder %v400, 1.0
      %vm409 = vcmp.ge.f32.partialorder %v401, 1.0
      %vm410 = vcmp.ge.f32.partialorder %v402, 1.0
      %vm411 = vcmp.ge.f32.partialorder %v403, 1.0
      %vm412 = vcmp.ge.f32.partialorder %v404, 1.0
      %vm413 = vcmp.ge.f32.partialorder %v405, 1.0
      %vm414 = vcmp.ge.f32.partialorder %v406, 1.0
      %vm415 = vcmp.ge.f32.partialorder %v407, 1.0
      %v416 = vsel %vm408, 1, 0
      %v417 = vsel %vm409, 1, 0
      %v418 = vsel %vm410, 1, 0
      %v419 = vsel %vm411, 1, 0
      %v420 = vsel %vm412, 1, 0
      %v421 = vsel %vm413, 1, 0
      %v422 = vsel %vm414, 1, 0
      %v423 = vsel %vm415, 1, 0
      %v424 = vcvt.s32.f32 %v416
      %v425 = vcvt.s32.f32 %v417
      %v426 = vcvt.s32.f32 %v418
      %v427 = vcvt.s32.f32 %v419
      %v428 = vcvt.s32.f32 %v420
      %v429 = vcvt.s32.f32 %v421
      %v430 = vcvt.s32.f32 %v422
      %v431 = vcvt.s32.f32 %v423
      %v432 = vld [vmem:[%s300] sm:$0xf]
      %v433 = vld [vmem:[%s300 + $0x4] sm:$0xf]
      %v434 = vld [vmem:[%s300 + $0x8] sm:$0xf]
      %v435 = vld [vmem:[%s300 + $0xc] sm:$0xf]
      %v436 = vld [vmem:[%s300 + $0x10] sm:$0xf]
      %v437 = vld [vmem:[%s300 + $0x14] sm:$0xf]
      %v438 = vld [vmem:[%s300 + $0x18] sm:$0xf]
      %v439 = vld [vmem:[%s300 + $0x1c] sm:$0xf]
      %v440 = vunpack.c.l.bf16 %v432
      %v441 = vunpack.c.l.bf16 %v433
      %v442 = vunpack.c.l.bf16 %v434
      %v443 = vunpack.c.l.bf16 %v435
      %v444 = vunpack.c.l.bf16 %v436
      %v445 = vunpack.c.l.bf16 %v437
      %v446 = vunpack.c.l.bf16 %v438
      %v447 = vunpack.c.l.bf16 %v439
      %v448 = vadd.f32 %v440, %v424
      %v449 = vadd.f32 %v441, %v425
      %v450 = vadd.f32 %v442, %v426
      %v451 = vadd.f32 %v443, %v427
      %v452 = vadd.f32 %v444, %v428
      %v453 = vadd.f32 %v445, %v429
      %v454 = vadd.f32 %v446, %v430
      %v455 = vadd.f32 %v447, %v431
      %456 = vst [vmem:[%s314] sm:$0xff] %v448
      %457 = vst [vmem:[%s314 + $0x8] sm:$0xff] %v449
      %458 = vst [vmem:[%s314 + $0x10] sm:$0xff] %v450
      %459 = vst [vmem:[%s314 + $0x18] sm:$0xff] %v451
      %460 = vst [vmem:[%s314 + $0x20] sm:$0xff] %v452
      %461 = vst [vmem:[%s314 + $0x28] sm:$0xff] %v453
      %462 = vst [vmem:[%s314 + $0x30] sm:$0xff] %v454
      %463 = vst [vmem:[%s314 + $0x38] sm:$0xff] %v455
      %v464 = vsub.f32 1.0, %v424
      %v465 = vsub.f32 1.0, %v425
      %v466 = vsub.f32 1.0, %v426
      %v467 = vsub.f32 1.0, %v427
      %v468 = vsub.f32 1.0, %v428
      %v469 = vsub.f32 1.0, %v429
      %v470 = vsub.f32 1.0, %v430
      %v471 = vsub.f32 1.0, %v431
      %v472 = vmul.f32 %v400, %v464
      %v473 = vmul.f32 %v401, %v465
      %v474 = vmul.f32 %v402, %v466
      %v475 = vmul.f32 %v403, %v467
      %v476 = vmul.f32 %v404, %v468
      %v477 = vmul.f32 %v405, %v469
      %v478 = vmul.f32 %v406, %v470
      %v479 = vmul.f32 %v407, %v471
      %480 = vst [vmem:[#allocation2] sm:$0xff] %v472
      %481 = vst [vmem:[#allocation2 + $0x8] sm:$0xff] %v473
      %482 = vst [vmem:[#allocation2 + $0x10] sm:$0xff] %v474
      %483 = vst [vmem:[#allocation2 + $0x18] sm:$0xff] %v475
      %484 = vst [vmem:[#allocation2 + $0x20] sm:$0xff] %v476
      %485 = vst [vmem:[#allocation2 + $0x28] sm:$0xff] %v477
      %486 = vst [vmem:[#allocation2 + $0x30] sm:$0xff] %v478
      %487 = vst [vmem:[#allocation2 + $0x38] sm:$0xff] %v479
      %s488 = smul.u32 %s22, 2
      %s489 = sadd.s32 %s488, %s20
      %s490 = smul.u32 8, %s21
      %p491 = scmp.lt.s32.totalorder %s489, 7
      %s492 = scalar_select %p491, %s489, 7
      %p493 = scmp.lt.s32.totalorder %s490, 7
      %s494 = scalar_select %p493, %s490, 7
      %s495 = smul.addr %s492, 8
      %s496 = sadd.s32 %s494, %s495
      %s497 = smul.addr %s496, 8
      %s498 = scalar_lea.vmem %s4, %s497
      // Predicated region
      $region41: #{bottleneck_forward.7} parent=35 // pred_check
        %p499 = pneg %p164
      $region42: #{bottleneck_forward.7} parent=35 // pred_check_branch
        %501 = sbr.rel (%p499) target = $region44
      $region43: #{bottleneck_forward.7} parent=35 // pred_region
        %s502 = smul.u32 %s22, 2
        %s503 = sadd.s32 %s502, %s20
        %s504 = smul.u32 8, %s21
      $region44: #{bottleneck_forward.7} parent=35 // pred_fallthru
        _
    $region36: #{bottleneck_forward.7} parent=5 // pred_fallthru
      _
    %p505 = scmp.le.s32.totalorder 2, %s10
    // Predicated region
    $region45: #{bottleneck_forward.7} parent=5 // pred_check
      %p506 = pneg %p505
    $region46: #{bottleneck_forward.7} parent=5 // pred_check_branch
      %508 = sbr.rel (%p506) target = $region48
    $region47: #{bottleneck_forward.7} parent=5 // pred_region
      %s509 = ssub.s32 %s10, 2
      // Predicated region
      $region49: #{bottleneck_forward.7} parent=47 // pred_check
        %p510 = pneg %p170
      $region50: #{bottleneck_forward.7} parent=47 // pred_check_branch
        %512 = sbr.rel (%p510) target = $region52
      $region51: #{bottleneck_forward.7} parent=47 // pred_region
        %s513 = smul.u32 %s25, 2
        %s514 = sadd.s32 %s513, %s23
        %s515 = smul.u32 8, %s24
        %p516 = scmp.lt.s32.totalorder %s514, 7
        %s517 = scalar_select %p516, %s514, 7
        %p518 = scmp.lt.s32.totalorder %s515, 7
        %s519 = scalar_select %p518, %s515, 7
        %s520 = smul.addr %s517, 8
        %s521 = sadd.s32 %s519, %s520
        %s522 = smul.addr %s521, 8
        %s523 = scalar_lea.vmem %s4, %s522
      $region52: #{bottleneck_forward.7} parent=47 // pred_fallthru
        _
    $region48: #{bottleneck_forward.7} parent=5 // pred_fallthru
      _
  $region6: #{bottleneck_forward.7} parent=0 // loop_footer
    %s14 = sadd.s32 1, %s10
  $region7: #{bottleneck_forward.7} parent=0 // loop_footer_branch
    %9 = sbr.rel target = $region3
  $region8: #{bottleneck_forward.7} parent=0 // loop_exit
    _

// kernel: bottleneck_forward.6
$region0: #{bottleneck_forward.6}
  #allocation0 [shape = 'u32[]', space=smem, size = 0x4, offset = 0x4, fixed_abs, tag = 'smem constant byte address 0x4 - core index']
  #allocation1 [shape = 'u32[144,128]{1,0:T(1,128)}', space=vmem, size = 0x12000, scoped, tag = 'internal scratch']
  #allocation2 [shape = 'bf16[4,10,10,128]{3,2,1,0:T(8,128)(2,1)}', space=vmem, size = 0x28000, scoped, tag = 'scratch operand']
  %s0 = inlined_call_operand.vmem [shape: bf16[8,8,8,128], index: 0, kind: input, shape index: {}]
  %s1 = inlined_call_operand.vmem [shape: bf16[1152,128], index: 1, kind: input, shape index: {}]
  %s2 = inlined_call_operand.vmem [shape: f32[1,128], index: 2, kind: input, shape index: {}]
  %s3 = inlined_call_operand.vmem [shape: bf16[8,64,128], index: 3, kind: output, shape index: {0}]
  %s4 = inlined_call_operand.vmem [shape: f32[2,2,128], index: 4, kind: output, shape index: {1}]
  %5 = xla_tuple %s3, %s4
  %s6 = sld [smem:[#allocation0]]
  $region53: #{bottleneck_forward.6} parent=0
    _
  %s8 = ssub.s32 1, %s6
  %s9 = scalar_select 0, %s8, %s6
  loop: start=0, step=1, limit=4
  $region2: #{bottleneck_forward.6} parent=0 // loop_pre_header
    _
  $region3: #{bottleneck_forward.6} parent=0 // loop_header
    %s11 = sphi 0, %s15
    %p12 = scmp.ge.s32.totalorder %s11, 4
    %s21 = sphi 0, %s23
    %s24 = sphi 0, %s21
    %s25 = sphi 0, %s24
    %s41 = sphi 0, %s25
    %s45 = sphi 0, %s45
    %s47 = sphi 0, %s45
    %s48 = sphi 0, %s47
    %s62 = sphi 0, %s48
    %s66 = sphi 0, %s66
    %s68 = sphi 0, %s66
    %s69 = sphi 0, %s68
    %s83 = sphi 0, %s69
    %s89 = sphi 0, %s91
    %s92 = sphi 0, %s89
    %s93 = sphi 0, %s92
    %s109 = sphi 0, %s93
    %s115 = sphi 0, %s117
    %s118 = sphi 0, %s115
    %s119 = sphi 0, %s118
    %s135 = sphi 0, %s119
  $region4: #{bottleneck_forward.6} parent=0 // loop_header_branch
    %14 = sbr.rel (%p12) target = $region8
  $region5: #{bottleneck_forward.6} parent=0 // loop_body
    %s16 = ssub.s32 %s11, 1
    %s17 = ssub.s32 %s11, 2
    %s18 = sadd.s32 %s11, 1
    %s19 = ssub.s32 %s11, %s18
    %p20 = scmp.eq.s32.totalorder %s19, 0
    %s22 = sadd.s32 %s21, 1
    %s23 = scalar_select %p20, %s21, %s22
    %p26 = pneg %p20
    %p27 = scmp.eq.s32.totalorder %s11, 1
    %p28 = por %p26, %p27
    %p29 = scmp.ne.s32.totalorder %s21, %s24
    %p30 = scmp.eq.s32.totalorder %s11, 0
    %p31 = por %p29, %p30
    %p32 = scmp.ne.s32.totalorder %s21, %s24
    %p33 = scmp.eq.s32.totalorder %s16, 1
    %p34 = por %p32, %p33
    %p35 = scmp.ne.s32.totalorder %s24, %s25
    %p36 = scmp.eq.s32.totalorder %s16, 0
    %p37 = por %p35, %p36
    %p38 = scmp.ne.s32.totalorder %s24, %s25
    %p39 = scmp.eq.s32.totalorder %s17, 1
    %p40 = por %p38, %p39
    %p42 = scmp.ne.s32.totalorder %s25, %s41
    %p43 = scmp.eq.s32.totalorder %s17, 0
    %p44 = por %p42, %p43
    %s46 = sadd.s32 %s45, 1
    %p49 = scmp.eq.s32.totalorder %s11, 1
    %p50 = scmp.ne.s32.totalorder %s45, %s47
    %p51 = scmp.eq.s32.totalorder %s11, 0
    %p52 = por %p50, %p51
    %p53 = scmp.ne.s32.totalorder %s45, %s47
    %p54 = scmp.eq.s32.totalorder %s16, 1
    %p55 = por %p53, %p54
    %p56 = scmp.ne.s32.totalorder %s47, %s48
    %p57 = scmp.eq.s32.totalorder %s16, 0
    %p58 = por %p56, %p57
    %p59 = scmp.ne.s32.totalorder %s47, %s48
    %p60 = scmp.eq.s32.totalorder %s17, 1
    %p61 = por %p59, %p60
    %p63 = scmp.ne.s32.totalorder %s48, %s62
    %p64 = scmp.eq.s32.totalorder %s17, 0
    %p65 = por %p63, %p64
    %s67 = sadd.s32 %s66, 1
    %p70 = scmp.eq.s32.totalorder %s11, 1
    %p71 = scmp.ne.s32.totalorder %s66, %s68
    %p72 = scmp.eq.s32.totalorder %s11, 0
    %p73 = por %p71, %p72
    %p74 = scmp.ne.s32.totalorder %s66, %s68
    %p75 = scmp.eq.s32.totalorder %s16, 1
    %p76 = por %p74, %p75
    %p77 = scmp.ne.s32.totalorder %s68, %s69
    %p78 = scmp.eq.s32.totalorder %s16, 0
    %p79 = por %p77, %p78
    %p80 = scmp.ne.s32.totalorder %s68, %s69
    %p81 = scmp.eq.s32.totalorder %s17, 1
    %p82 = por %p80, %p81
    %p84 = scmp.ne.s32.totalorder %s69, %s83
    %p85 = scmp.eq.s32.totalorder %s17, 0
    %p86 = por %p84, %p85
    %s87 = ssub.s32 %s11, %s18
    %p88 = scmp.eq.s32.totalorder %s87, 0
    %s90 = sadd.s32 %s89, 1
    %s91 = scalar_select %p88, %s89, %s90
    %p94 = pneg %p88
    %p95 = scmp.eq.s32.totalorder %s11, 1
    %p96 = por %p94, %p95
    %p97 = scmp.ne.s32.totalorder %s89, %s92
    %p98 = scmp.eq.s32.totalorder %s11, 0
    %p99 = por %p97, %p98
    %p100 = scmp.ne.s32.totalorder %s89, %s92
    %p101 = scmp.eq.s32.totalorder %s16, 1
    %p102 = por %p100, %p101
    %p103 = scmp.ne.s32.totalorder %s92, %s93
    %p104 = scmp.eq.s32.totalorder %s16, 0
    %p105 = por %p103, %p104
    %p106 = scmp.ne.s32.totalorder %s92, %s93
    %p107 = scmp.eq.s32.totalorder %s17, 1
    %p108 = por %p106, %p107
    %p110 = scmp.ne.s32.totalorder %s93, %s109
    %p111 = scmp.eq.s32.totalorder %s17, 0
    %p112 = por %p110, %p111
    %s113 = ssub.s32 %s11, %s18
    %p114 = scmp.eq.s32.totalorder %s113, 0
    %s116 = sadd.s32 %s115, 1
    %s117 = scalar_select %p114, %s115, %s116
    %p120 = pneg %p114
    %p121 = scmp.eq.s32.totalorder %s11, 1
    %p122 = por %p120, %p121
    %p123 = scmp.ne.s32.totalorder %s115, %s118
    %p124 = scmp.eq.s32.totalorder %s11, 0
    %p125 = por %p123, %p124
    %p126 = scmp.ne.s32.totalorder %s115, %s118
    %p127 = scmp.eq.s32.totalorder %s16, 1
    %p128 = por %p126, %p127
    %p129 = scmp.ne.s32.totalorder %s118, %s119
    %p130 = scmp.eq.s32.totalorder %s16, 0
    %p131 = por %p129, %p130
    %p132 = scmp.ne.s32.totalorder %s118, %s119
    %p133 = scmp.eq.s32.totalorder %s17, 1
    %p134 = por %p132, %p133
    %p136 = scmp.ne.s32.totalorder %s119, %s135
    %p137 = scmp.eq.s32.totalorder %s17, 0
    %p138 = por %p136, %p137
    %p139 = scmp.le.s32.totalorder 1, %s11
    %p140 = scmp.lt.s32.totalorder %s11, 3
    %p141 = pnand %p139, %p140
    %p142 = pneg %p141
    // Predicated region
    $region9: #{bottleneck_forward.6} parent=5 // pred_check
      _
    $region10: #{bottleneck_forward.6} parent=5 // pred_check_branch
      %144 = sbr.rel (%p141) target = $region12
    $region11: #{bottleneck_forward.6} parent=5 // pred_region
      %s145 = ssub.s32 %s11, 1
      // Predicated region
      $region13: #{bottleneck_forward.6} parent=11 // pred_check
        %p146 = pneg %p58
      $region14: #{bottleneck_forward.6} parent=11 // pred_check_branch
        %148 = sbr.rel (%p146) target = $region16
      $region15: #{bottleneck_forward.6} parent=11 // pred_region
        _
      $region16: #{bottleneck_forward.6} parent=11 // pred_fallthru
        _
      // Predicated region
      $region17: #{bottleneck_forward.6} parent=11 // pred_check
        %p149 = pneg %p79
      $region18: #{bottleneck_forward.6} parent=11 // pred_check_branch
        %151 = sbr.rel (%p149) target = $region20
      $region19: #{bottleneck_forward.6} parent=11 // pred_region
        _
      $region20: #{bottleneck_forward.6} parent=11 // pred_fallthru
        _
    $region12: #{bottleneck_forward.6} parent=5 // pred_fallthru
      _
    %p152 = scmp.lt.s32.totalorder %s11, 2
    // Predicated region
    $region21: #{bottleneck_forward.6} parent=5 // pred_check
      %p153 = pneg %p152
    $region22: #{bottleneck_forward.6} parent=5 // pred_check_branch
      %155 = sbr.rel (%p153) target = $region24
    $region23: #{bottleneck_forward.6} parent=5 // pred_region
      // Predicated region
      $region25: #{bottleneck_forward.6} parent=23 // pred_check
        %p156 = pneg %p31
      $region26: #{bottleneck_forward.6} parent=23 // pred_check_branch
        %158 = sbr.rel (%p156) target = $region28
      $region27: #{bottleneck_forward.6} parent=23 // pred_region
        %s159 = smul.u32 4, %s11
        %p160 = scmp.lt.s32.totalorder %s159, 7
        %s161 = scalar_select %p160, %s159, 7
        %s162 = smul.addr %s161, 8
        %s163 = smul.addr %s162, 4
        %s164 = scalar_lea.vmem %s0, %s163
        %s165 = smul.u32 4, %s11
      $region28: #{bottleneck_forward.6} parent=23 // pred_fallthru
        _
    $region24: #{bottleneck_forward.6} parent=5 // pred_fallthru
      _
    %p166 = scmp.le.s32.totalorder 1, %s11
    %p167 = scmp.lt.s32.totalorder %s11, 3
    %p168 = pnand %p166, %p167
    %p169 = pneg %p168
    // Predicated region
    $region29: #{bottleneck_forward.6} parent=5 // pred_check
      _
    $region30: #{bottleneck_forward.6} parent=5 // pred_check_branch
      %171 = sbr.rel (%p168) target = $region32
    $region31: #{bottleneck_forward.6} parent=5 // pred_region
      %s172 = ssub.s32 %s11, 1
      %s173 = smul.u32 4, %s16
      %p174 = scmp.lt.s32.totalorder %s173, 7
      %s175 = scalar_select %p174, %s173, 7
      %s176 = smul.addr %s175, 8
      %s177 = smul.addr %s176, 4
      %s178 = scalar_lea.vmem %s0, %s177
      %p179 = pneg %p37
      %p180 = pneg %p34
      %p181 = pneg %p58
      %p182 = pneg %p55
      %p183 = pneg %p79
      %p184 = pneg %p76
      %p185 = pneg %p105
      %p186 = pneg %p102
      %s187 = smul.u32 4, %s16
      %p188 = scmp.lt.s32.totalorder %s187, 7
      %s189 = scalar_select %p188, %s187, 7
      %s190 = smul.addr %s189, 8
      %s191 = smul.addr %s190, 4
      %s192 = scalar_lea.vmem %s3, %s191
      %p193 = pneg %p131
      %p194 = pneg %p128
      %p195 = scmp.lt.s32.totalorder %s16, 1
      %s196 = scalar_select %p195, %s16, 1
      %s197 = smul.addr %s196, 2
      %s198 = scalar_lea.vmem %s4, %s197
      %s199 = smul.u32 4, %s16
      %p200 = scmp.lt.s32.totalorder %s199, 7
      %s201 = scalar_select %p200, %s199, 7
      %s202 = smul.addr %s201, 8
      %s203 = smul.addr %s202, 4
      %s204 = scalar_lea.vmem %s0, %s203
      %s205 = smul.u32 4, %s16
      %s206 = smul.u32 4, %s16
      %p207 = scmp.lt.s32.totalorder %s206, 7
      %s208 = scalar_select %p207, %s206, 7
      %s209 = smul.addr %s208, 8
      %s210 = smul.addr %s209, 4
      %s211 = scalar_lea.vmem %s3, %s210
      %s212 = smul.u32 4, %s16
      %p213 = scmp.lt.s32.totalorder %s16, 1
      %s214 = scalar_select %p213, %s16, 1
      %s215 = smul.addr %s214, 2
      %s216 = scalar_lea.vmem %s4, %s215
      %218 = vst [vmem:[#allocation2] sm:$0xf] 0
      %219 = vst [vmem:[#allocation2 + $0x4] sm:$0x1] 0
      %220 = vst [vmem:[#allocation2 + $0x50] sm:$0xf] 0
      %221 = vst [vmem:[#allocation2 + $0x54] sm:$0x1] 0
      %222 = vst [vmem:[#allocation2 + $0xa0] sm:$0xf] 0
      %223 = vst [vmem:[#allocation2 + $0xa4] sm:$0x1] 0
      %224 = vst [vmem:[#allocation2 + $0xf0] sm:$0xf] 0
      %225 = vst [vmem:[#allocation2 + $0xf4] sm:$0x1] 0
      %s226 = scalar_lea.vmem [#allocation2], 72
      %227 = vst [vmem:[%s226] sm:$0xf] 0
      %228 = vst [vmem:[%s226 + $0x4] sm:$0x1] 0
      %229 = vst [vmem:[%s226 + $0x50] sm:$0xf] 0
      %230 = vst [vmem:[%s226 + $0x54] sm:$0x1] 0
      %231 = vst [vmem:[%s226 + $0xa0] sm:$0xf] 0
      %232 = vst [vmem:[%s226 + $0xa4] sm:$0x1] 0
      %233 = vst [vmem:[%s226 + $0xf0] sm:$0xf] 0
      %234 = vst [vmem:[%s226 + $0xf4] sm:$0x1] 0
      %vm235 = vcmask 1040384
      %vm236 = vsmask.f32 256
      %vm237 = vmand %vm235, %vm236
      %v238 = vld [vmem:[#allocation2] sm:$0x1]
      %v239 = vsel %vm237, 0, %v238
      %240 = vst [vmem:[#allocation2] sm:$0x1] %v239
      %v241 = vld [vmem:[#allocation2 + $0x8] sm:$0x1]
      %v242 = vsel %vm237, 0, %v241
      %243 = vst [vmem:[#allocation2 + $0x8] sm:$0x1] %v242
      %v244 = vld [vmem:[#allocation2 + $0x10] sm:$0x1]
      %v245 = vsel %vm237, 0, %v244
      %246 = vst [vmem:[#allocation2 + $0x10] sm:$0x1] %v245
      %v247 = vld [vmem:[#allocation2 + $0x18] sm:$0x1]
      %v248 = vsel %vm237, 0, %v247
      %249 = vst [vmem:[#allocation2 + $0x18] sm:$0x1] %v248
      %v250 = vld [vmem:[#allocation2 + $0x20] sm:$0x1]
      %v251 = vsel %vm237, 0, %v250
      %252 = vst [vmem:[#allocation2 + $0x20] sm:$0x1] %v251
      %v253 = vld [vmem:[#allocation2 + $0x28] sm:$0x1]
      %v254 = vsel %vm237, 0, %v253
      %255 = vst [vmem:[#allocation2 + $0x28] sm:$0x1] %v254
      %v256 = vld [vmem:[#allocation2 + $0x30] sm:$0x1]
      %v257 = vsel %vm237, 0, %v256
      %258 = vst [vmem:[#allocation2 + $0x30] sm:$0x1] %v257
      %v259 = vld [vmem:[#allocation2 + $0x38] sm:$0x1]
      %v260 = vsel %vm237, 0, %v259
      %261 = vst [vmem:[#allocation2 + $0x38] sm:$0x1] %v260
      %v262 = vld [vmem:[#allocation2 + $0x40] sm:$0x1]
      %v263 = vsel %vm237, 0, %v262
      %264 = vst [vmem:[#allocation2 + $0x40] sm:$0x1] %v263
      %v265 = vld [vmem:[#allocation2 + $0x48] sm:$0x1]
      %v266 = vsel %vm237, 0, %v265
      %267 = vst [vmem:[#allocation2 + $0x48] sm:$0x1] %v266
      %v268 = vld [vmem:[#allocation2 + $0x50] sm:$0x1]
      %v269 = vsel %vm237, 0, %v268
      %270 = vst [vmem:[#allocation2 + $0x50] sm:$0x1] %v269
      %v271 = vld [vmem:[#allocation2 + $0x58] sm:$0x1]
      %v272 = vsel %vm237, 0, %v271
      %273 = vst [vmem:[#allocation2 + $0x58] sm:$0x1] %v272
      %v274 = vld [vmem:[#allocation2 + $0x60] sm:$0x1]
      %v275 = vsel %vm237, 0, %v274
      %276 = vst [vmem:[#allocation2 + $0x60] sm:$0x1] %v275
      %v277 = vld [vmem:[#allocation2 + $0x68] sm:$0x1]
      %v278 = vsel %vm237, 0, %v277
      %279 = vst [vmem:[#allocation2 + $0x68] sm:$0x1] %v278
      %v280 = vld [vmem:[#allocation2 + $0x70] sm:$0x1]
      %v281 = vsel %vm237, 0, %v280
      %282 = vst [vmem:[#allocation2 + $0x70] sm:$0x1] %v281
      %v283 = vld [vmem:[#allocation2 + $0x78] sm:$0x1]
      %v284 = vsel %vm237, 0, %v283
      %285 = vst [vmem:[#allocation2 + $0x78] sm:$0x1] %v284
      %v286 = vld [vmem:[#allocation2 + $0x80] sm:$0x1]
      %v287 = vsel %vm237, 0, %v286
      %288 = vst [vmem:[#allocation2 + $0x80] sm:$0x1] %v287
      %v289 = vld [vmem:[#allocation2 + $0x88] sm:$0x1]
      %v290 = vsel %vm237, 0, %v289
      %291 = vst [vmem:[#allocation2 + $0x88] sm:$0x1] %v290
      %v292 = vld [vmem:[#allocation2 + $0x90] sm:$0x1]
      %v293 = vsel %vm237, 0, %v292
      %294 = vst [vmem:[#allocation2 + $0x90] sm:$0x1] %v293
      %v295 = vld [vmem:[#allocation2 + $0x98] sm:$0x1]
      %v296 = vsel %vm237, 0, %v295
      %297 = vst [vmem:[#allocation2 + $0x98] sm:$0x1] %v296
      %v298 = vld [vmem:[#allocation2 + $0xa0] sm:$0x1]
      %v299 = vsel %vm237, 0, %v298
      %300 = vst [vmem:[#allocation2 + $0xa0] sm:$0x1] %v299
      %v301 = vld [vmem:[#allocation2 + $0xa8] sm:$0x1]
      %v302 = vsel %vm237, 0, %v301
      %303 = vst [vmem:[#allocation2 + $0xa8] sm:$0x1] %v302
      %v304 = vld [vmem:[#allocation2 + $0xb0] sm:$0x1]
      %v305 = vsel %vm237, 0, %v304
      %306 = vst [vmem:[#allocation2 + $0xb0] sm:$0x1] %v305
      %v307 = vld [vmem:[#allocation2 + $0xb8] sm:$0x1]
      %v308 = vsel %vm237, 0, %v307
      %309 = vst [vmem:[#allocation2 + $0xb8] sm:$0x1] %v308
      %v310 = vld [vmem:[#allocation2 + $0xc0] sm:$0x1]
      %v311 = vsel %vm237, 0, %v310
      %312 = vst [vmem:[#allocation2 + $0xc0] sm:$0x1] %v311
      %v313 = vld [vmem:[#allocation2 + $0xc8] sm:$0x1]
      %v314 = vsel %vm237, 0, %v313
      %315 = vst [vmem:[#allocation2 + $0xc8] sm:$0x1] %v314
      %v316 = vld [vmem:[#allocation2 + $0xd0] sm:$0x1]
      %v317 = vsel %vm237, 0, %v316
      %318 = vst [vmem:[#allocation2 + $0xd0] sm:$0x1] %v317
      %v319 = vld [vmem:[#allocation2 + $0xd8] sm:$0x1]
      %v320 = vsel %vm237, 0, %v319
      %321 = vst [vmem:[#allocation2 + $0xd8] sm:$0x1] %v320
      %v322 = vld [vmem:[#allocation2 + $0xe0] sm:$0x1]
      %v323 = vsel %vm237, 0, %v322
      %324 = vst [vmem:[#allocation2 + $0xe0] sm:$0x1] %v323
      %v325 = vld [vmem:[#allocation2 + $0xe8] sm:$0x1]
      %v326 = vsel %vm237, 0, %v325
      %327 = vst [vmem:[#allocation2 + $0xe8] sm:$0x1] %v326
      %v328 = vld [vmem:[#allocation2 + $0xf0] sm:$0x1]
      %v329 = vsel %vm237, 0, %v328
      %330 = vst [vmem:[#allocation2 + $0xf0] sm:$0x1] %v329
      %v331 = vld [vmem:[#allocation2 + $0xf8] sm:$0x1]
      %v332 = vsel %vm237, 0, %v331
      %333 = vst [vmem:[#allocation2 + $0xf8] sm:$0x1] %v332
      %v334 = vld [vmem:[#allocation2 + $0x100] sm:$0x1]
      %v335 = vsel %vm237, 0, %v334
      %336 = vst [vmem:[#allocation2 + $0x100] sm:$0x1] %v335
      %v337 = vld [vmem:[#allocation2 + $0x108] sm:$0x1]
      %v338 = vsel %vm237, 0, %v337
      %339 = vst [vmem:[#allocation2 + $0x108] sm:$0x1] %v338
      %v340 = vld [vmem:[#allocation2 + $0x110] sm:$0x1]
      %v341 = vsel %vm237, 0, %v340
      %342 = vst [vmem:[#allocation2 + $0x110] sm:$0x1] %v341
      %v343 = vld [vmem:[#allocation2 + $0x118] sm:$0x1]
      %v344 = vsel %vm237, 0, %v343
      %345 = vst [vmem:[#allocation2 + $0x118] sm:$0x1] %v344
      %v346 = vld [vmem:[#allocation2 + $0x120] sm:$0x1]
      %v347 = vsel %vm237, 0, %v346
      %348 = vst [vmem:[#allocation2 + $0x120] sm:$0x1] %v347
      %v349 = vld [vmem:[#allocation2 + $0x128] sm:$0x1]
      %v350 = vsel %vm237, 0, %v349
      %351 = vst [vmem:[#allocation2 + $0x128] sm:$0x1] %v350
      %v352 = vld [vmem:[#allocation2 + $0x130] sm:$0x1]
      %v353 = vsel %vm237, 0, %v352
      %354 = vst [vmem:[#allocation2 + $0x130] sm:$0x1] %v353
      %v355 = vld [vmem:[#allocation2 + $0x138] sm:$0x1]
      %v356 = vsel %vm237, 0, %v355
      %357 = vst [vmem:[#allocation2 + $0x138] sm:$0x1] %v356
      %vm358 = vsmask.f32 7938
      %vm359 = vmand %vm235, %vm358
      %v360 = vld [vmem:[#allocation2 + $0x4] sm:$0x1]
      %v361 = vsel %vm359, 0, %v360
      %362 = vst [vmem:[#allocation2 + $0x4] sm:$0x1] %v361
      %v363 = vld [vmem:[#allocation2 + $0xc] sm:$0x1]
      %v364 = vsel %vm359, 0, %v363
      %365 = vst [vmem:[#allocation2 + $0xc] sm:$0x1] %v364
      %v366 = vld [vmem:[#allocation2 + $0x14] sm:$0x1]
      %v367 = vsel %vm359, 0, %v366
      %368 = vst [vmem:[#allocation2 + $0x14] sm:$0x1] %v367
      %v369 = vld [vmem:[#allocation2 + $0x1c] sm:$0x1]
      %v370 = vsel %vm359, 0, %v369
      %371 = vst [vmem:[#allocation2 + $0x1c] sm:$0x1] %v370
      %v372 = vld [vmem:[#allocation2 + $0x24] sm:$0x1]
      %v373 = vsel %vm359, 0, %v372
      %374 = vst [vmem:[#allocation2 + $0x24] sm:$0x1] %v373
      %v375 = vld [vmem:[#allocation2 + $0x2c] sm:$0x1]
      %v376 = vsel %vm359, 0, %v375
      %377 = vst [vmem:[#allocation2 + $0x2c] sm:$0x1] %v376
      %v378 = vld [vmem:[#allocation2 + $0x34] sm:$0x1]
      %v379 = vsel %vm359, 0, %v378
      %380 = vst [vmem:[#allocation2 + $0x34] sm:$0x1] %v379
      %v381 = vld [vmem:[#allocation2 + $0x3c] sm:$0x1]
      %v382 = vsel %vm359, 0, %v381
      %383 = vst [vmem:[#allocation2 + $0x3c] sm:$0x1] %v382
      %v384 = vld [vmem:[#allocation2 + $0x44] sm:$0x1]
      %v385 = vsel %vm359, 0, %v384
      %386 = vst [vmem:[#allocation2 + $0x44] sm:$0x1] %v385
      %v387 = vld [vmem:[#allocation2 + $0x4c] sm:$0x1]
      %v388 = vsel %vm359, 0, %v387
      %389 = vst [vmem:[#allocation2 + $0x4c] sm:$0x1] %v388
      %v390 = vld [vmem:[#allocation2 + $0x54] sm:$0x1]
      %v391 = vsel %vm359, 0, %v390
      %392 = vst [vmem:[#allocation2 + $0x54] sm:$0x1] %v391
      %v393 = vld [vmem:[#allocation2 + $0x5c] sm:$0x1]
      %v394 = vsel %vm359, 0, %v393
      %395 = vst [vmem:[#allocation2 + $0x5c] sm:$0x1] %v394
      %v396 = vld [vmem:[#allocation2 + $0x64] sm:$0x1]
      %v397 = vsel %vm359, 0, %v396
      %398 = vst [vmem:[#allocation2 + $0x64] sm:$0x1] %v397
      %v399 = vld [vmem:[#allocation2 + $0x6c] sm:$0x1]
      %v400 = vsel %vm359, 0, %v399
      %401 = vst [vmem:[#allocation2 + $0x6c] sm:$0x1] %v400
      %v402 = vld [vmem:[#allocation2 + $0x74] sm:$0x1]
      %v403 = vsel %vm359, 0, %v402
      %404 = vst [vmem:[#allocation2 + $0x74] sm:$0x1] %v403
      %v405 = vld [vmem:[#allocation2 + $0x7c] sm:$0x1]
      %v406 = vsel %vm359, 0, %v405
      %407 = vst [vmem:[#allocation2 + $0x7c] sm:$0x1] %v406
      %v408 = vld [vmem:[#allocation2 + $0x84] sm:$0x1]
      %v409 = vsel %vm359, 0, %v408
      %410 = vst [vmem:[#allocation2 + $0x84] sm:$0x1] %v409
      %v411 = vld [vmem:[#allocation2 + $0x8c] sm:$0x1]
      %v412 = vsel %vm359, 0, %v411
      %413 = vst [vmem:[#allocation2 + $0x8c] sm:$0x1] %v412
      %v414 = vld [vmem:[#allocation2 + $0x94] sm:$0x1]
      %v415 = vsel %vm359, 0, %v414
      %416 = vst [vmem:[#allocation2 + $0x94] sm:$0x1] %v415
      %v417 = vld [vmem:[#allocation2 + $0x9c] sm:$0x1]
      %v418 = vsel %vm359, 0, %v417
      %419 = vst [vmem:[#allocation2 + $0x9c] sm:$0x1] %v418
      %v420 = vld [vmem:[#allocation2 + $0xa4] sm:$0x1]
      %v421 = vsel %vm359, 0, %v420
      %422 = vst [vmem:[#allocation2 + $0xa4] sm:$0x1] %v421
      %v423 = vld [vmem:[#allocation2 + $0xac] sm:$0x1]
      %v424 = vsel %vm359, 0, %v423
      %425 = vst [vmem:[#allocation2 + $0xac] sm:$0x1] %v424
      %v426 = vld [vmem:[#allocation2 + $0xb4] sm:$0x1]
      %v427 = vsel %vm359, 0, %v426
      %428 = vst [vmem:[#allocation2 + $0xb4] sm:$0x1] %v427
      %v429 = vld [vmem:[#allocation2 + $0xbc] sm:$0x1]
      %v430 = vsel %vm359, 0, %v429
      %431 = vst [vmem:[#allocation2 + $0xbc] sm:$0x1] %v430
      %v432 = vld [vmem:[#allocation2 + $0xc4] sm:$0x1]
      %v433 = vsel %vm359, 0, %v432
      %434 = vst [vmem:[#allocation2 + $0xc4] sm:$0x1] %v433
      %v435 = vld [vmem:[#allocation2 + $0xcc] sm:$0x1]
      %v436 = vsel %vm359, 0, %v435
      %437 = vst [vmem:[#allocation2 + $0xcc] sm:$0x1] %v436
      %v438 = vld [vmem:[#allocation2 + $0xd4] sm:$0x1]
      %v439 = vsel %vm359, 0, %v438
      %440 = vst [vmem:[#allocation2 + $0xd4] sm:$0x1] %v439
      %v441 = vld [vmem:[#allocation2 + $0xdc] sm:$0x1]
      %v442 = vsel %vm359, 0, %v441
      %443 = vst [vmem:[#allocation2 + $0xdc] sm:$0x1] %v442
      %v444 = vld [vmem:[#allocation2 + $0xe4] sm:$0x1]
      %v445 = vsel %vm359, 0, %v444
      %446 = vst [vmem:[#allocation2 + $0xe4] sm:$0x1] %v445
      %v447 = vld [vmem:[#allocation2 + $0xec] sm:$0x1]
      %v448 = vsel %vm359, 0, %v447
      %449 = vst [vmem:[#allocation2 + $0xec] sm:$0x1] %v448
      %v450 = vld [vmem:[#allocation2 + $0xf4] sm:$0x1]
      %v451 = vsel %vm359, 0, %v450
      %452 = vst [vmem:[#allocation2 + $0xf4] sm:$0x1] %v451
      %v453 = vld [vmem:[#allocation2 + $0xfc] sm:$0x1]
      %v454 = vsel %vm359, 0, %v453
      %455 = vst [vmem:[#allocation2 + $0xfc] sm:$0x1] %v454
      %v456 = vld [vmem:[#allocation2 + $0x104] sm:$0x1]
      %v457 = vsel %vm359, 0, %v456
      %458 = vst [vmem:[#allocation2 + $0x104] sm:$0x1] %v457
      %v459 = vld [vmem:[#allocation2 + $0x10c] sm:$0x1]
      %v460 = vsel %vm359, 0, %v459
      %461 = vst [vmem:[#allocation2 + $0x10c] sm:$0x1] %v460
      %v462 = vld [vmem:[#allocation2 + $0x114] sm:$0x1]
      %v463 = vsel %vm359, 0, %v462
      %464 = vst [vmem:[#allocation2 + $0x114] sm:$0x1] %v463
      %v465 = vld [vmem:[#allocation2 + $0x11c] sm:$0x1]
      %v466 = vsel %vm359, 0, %v465
      %467 = vst [vmem:[#allocation2 + $0x11c] sm:$0x1] %v466
      %v468 = vld [vmem:[#allocation2 + $0x124] sm:$0x1]
      %v469 = vsel %vm359, 0, %v468
      %470 = vst [vmem:[#allocation2 + $0x124] sm:$0x1] %v469
      %v471 = vld [vmem:[#allocation2 + $0x12c] sm:$0x1]
      %v472 = vsel %vm359, 0, %v471
      %473 = vst [vmem:[#allocation2 + $0x12c] sm:$0x1] %v472
      %v474 = vld [vmem:[#allocation2 + $0x134] sm:$0x1]
      %v475 = vsel %vm359, 0, %v474
      %476 = vst [vmem:[#allocation2 + $0x134] sm:$0x1] %v475
      %v477 = vld [vmem:[#allocation2 + $0x13c] sm:$0x1]
      %v478 = vsel %vm359, 0, %v477
      %479 = vst [vmem:[#allocation2 + $0x13c] sm:$0x1] %v478
      %v480 = vld [vmem:[%s204] sm:$0xf]
      %v481 = vld [vmem:[%s204 + $0x4] sm:$0xf]
      %v482 = vld [vmem:[%s204 + $0x8] sm:$0xf]
      %v483 = vld [vmem:[%s204 + $0xc] sm:$0xf]
      %v484 = vld [vmem:[%s204 + $0x10] sm:$0xf]
      %v485 = vld [vmem:[%s204 + $0x14] sm:$0xf]
      %v486 = vld [vmem:[%s204 + $0x18] sm:$0xf]
      %v487 = vld [vmem:[%s204 + $0x1c] sm:$0xf]
      %v488 = vld [vmem:[%s204 + $0x20] sm:$0xf]
      %v489 = vld [vmem:[%s204 + $0x24] sm:$0xf]
      %v490 = vld [vmem:[%s204 + $0x28] sm:$0xf]
      %v491 = vld [vmem:[%s204 + $0x2c] sm:$0xf]
      %v492 = vld [vmem:[%s204 + $0x30] sm:$0xf]
      %v493 = vld [vmem:[%s204 + $0x34] sm:$0xf]
      %v494 = vld [vmem:[%s204 + $0x38] sm:$0xf]
      %v495 = vld [vmem:[%s204 + $0x3c] sm:$0xf]
      %v496 = vld [vmem:[%s204 + $0x40] sm:$0xf]
      %v497 = vld [vmem:[%s204 + $0x44] sm:$0xf]
      %v498 = vld [vmem:[%s204 + $0x48] sm:$0xf]
      %v499 = vld [vmem:[%s204 + $0x4c] sm:$0xf]
      %v500 = vld [vmem:[%s204 + $0x50] sm:$0xf]
      %v501 = vld [vmem:[%s204 + $0x54] sm:$0xf]
      %v502 = vld [vmem:[%s204 + $0x58] sm:$0xf]
      %v503 = vld [vmem:[%s204 + $0x5c] sm:$0xf]
      %v504 = vld [vmem:[%s204 + $0x60] sm:$0xf]
      %v505 = vld [vmem:[%s204 + $0x64] sm:$0xf]
      %v506 = vld [vmem:[%s204 + $0x68] sm:$0xf]
      %v507 = vld [vmem:[%s204 + $0x6c] sm:$0xf]
      %v508 = vld [vmem:[%s204 + $0x70] sm:$0xf]
      %v509 = vld [vmem:[%s204 + $0x74] sm:$0xf]
      %v510 = vld [vmem:[%s204 + $0x78] sm:$0xf]
      %v511 = vld [vmem:[%s204 + $0x7c] sm:$0xf]
      %v513 = vshrl.u32 %v480, 16
      %v515 = vrot.slane %v513, 7
      %v516 = vshll.u32 %v480, 16
      %v518 = vor.u32 %v515, %v516
      %v519 = vrot.slane %v515, 4
      %v521 = vshrl.u32 %v481, 16
      %v523 = vrot.slane %v521, 7
      %v524 = vshll.u32 %v481, 16
      %v526 = vor.u32 %v523, %v524
      %v527 = vrot.slane %v523, 4
      %v529 = vshrl.u32 %v482, 16
      %v531 = vrot.slane %v529, 7
      %v532 = vshll.u32 %v482, 16
      %v534 = vor.u32 %v531, %v532
      %v535 = vrot.slane %v531, 4
      %v537 = vshrl.u32 %v483, 16
      %v539 = vrot.slane %v537, 7
      %v540 = vshll.u32 %v483, 16
      %v542 = vor.u32 %v539, %v540
      %v543 = vrot.slane %v539, 4
      %v545 = vshrl.u32 %v484, 16
      %v547 = vrot.slane %v545, 7
      %v548 = vshll.u32 %v484, 16
      %v550 = vor.u32 %v547, %v548
      %v551 = vrot.slane %v547, 4
      %v553 = vshrl.u32 %v485, 16
      %v555 = vrot.slane %v553, 7
      %v556 = vshll.u32 %v485, 16
      %v558 = vor.u32 %v555, %v556
      %v559 = vrot.slane %v555, 4
      %v561 = vshrl.u32 %v486, 16
      %v563 = vrot.slane %v561, 7
      %v564 = vshll.u32 %v486, 16
      %v566 = vor.u32 %v563, %v564
      %v567 = vrot.slane %v563, 4
      %v569 = vshrl.u32 %v487, 16
      %v571 = vrot.slane %v569, 7
      %v572 = vshll.u32 %v487, 16
      %v574 = vor.u32 %v571, %v572
      %v575 = vrot.slane %v571, 4
      %v577 = vshrl.u32 %v488, 16
      %v579 = vrot.slane %v577, 7
      %v580 = vshll.u32 %v488, 16
      %v582 = vor.u32 %v579, %v580
      %v583 = vrot.slane %v579, 4
      %v585 = vshrl.u32 %v489, 16
      %v587 = vrot.slane %v585, 7
      %v588 = vshll.u32 %v489, 16
      %v590 = vor.u32 %v587, %v588
      %v591 = vrot.slane %v587, 4
      %v593 = vshrl.u32 %v490, 16
      %v595 = vrot.slane %v593, 7
      %v596 = vshll.u32 %v490, 16
      %v598 = vor.u32 %v595, %v596
      %v599 = vrot.slane %v595, 4
      %v601 = vshrl.u32 %v491, 16
      %v603 = vrot.slane %v601, 7
      %v604 = vshll.u32 %v491, 16
      %v606 = vor.u32 %v603, %v604
      %v607 = vrot.slane %v603, 4
      %v609 = vshrl.u32 %v492, 16
      %v611 = vrot.slane %v609, 7
      %v612 = vshll.u32 %v492, 16
      %v614 = vor.u32 %v611, %v612
      %v615 = vrot.slane %v611, 4
      %v617 = vshrl.u32 %v493, 16
      %v619 = vrot.slane %v617, 7
      %v620 = vshll.u32 %v493, 16
      %v622 = vor.u32 %v619, %v620
      %v623 = vrot.slane %v619, 4
      %v625 = vshrl.u32 %v494, 16
      %v627 = vrot.slane %v625, 7
      %v628 = vshll.u32 %v494, 16
      %v630 = vor.u32 %v627, %v628
      %v631 = vrot.slane %v627, 4
      %v633 = vshrl.u32 %v495, 16
      %v635 = vrot.slane %v633, 7
      %v636 = vshll.u32 %v495, 16
      %v638 = vor.u32 %v635, %v636
      %v639 = vrot.slane %v635, 4
      %v641 = vshrl.u32 %v496, 16
      %v643 = vrot.slane %v641, 7
      %v644 = vshll.u32 %v496, 16
      %v646 = vor.u32 %v643, %v644
      %v647 = vrot.slane %v643, 4
      %v649 = vshrl.u32 %v497, 16
      %v651 = vrot.slane %v649, 7
      %v652 = vshll.u32 %v497, 16
      %v654 = vor.u32 %v651, %v652
      %v655 = vrot.slane %v651, 4
      %v657 = vshrl.u32 %v498, 16
      %v659 = vrot.slane %v657, 7
      %v660 = vshll.u32 %v498, 16
      %v662 = vor.u32 %v659, %v660
      %v663 = vrot.slane %v659, 4
      %v665 = vshrl.u32 %v499, 16
      %v667 = vrot.slane %v665, 7
      %v668 = vshll.u32 %v499, 16
      %v670 = vor.u32 %v667, %v668
      %v671 = vrot.slane %v667, 4
      %v673 = vshrl.u32 %v500, 16
      %v675 = vrot.slane %v673, 7
      %v676 = vshll.u32 %v500, 16
      %v678 = vor.u32 %v675, %v676
      %v679 = vrot.slane %v675, 4
      %v681 = vshrl.u32 %v501, 16
      %v683 = vrot.slane %v681, 7
      %v684 = vshll.u32 %v501, 16
      %v686 = vor.u32 %v683, %v684
      %v687 = vrot.slane %v683, 4
      %v689 = vshrl.u32 %v502, 16
      %v691 = vrot.slane %v689, 7
      %v692 = vshll.u32 %v502, 16
      %v694 = vor.u32 %v691, %v692
      %v695 = vrot.slane %v691, 4
      %v697 = vshrl.u32 %v503, 16
      %v699 = vrot.slane %v697, 7
      %v700 = vshll.u32 %v503, 16
      %v702 = vor.u32 %v699, %v700
      %v703 = vrot.slane %v699, 4
      %v705 = vshrl.u32 %v504, 16
      %v707 = vrot.slane %v705, 7
      %v708 = vshll.u32 %v504, 16
      %v710 = vor.u32 %v707, %v708
      %v711 = vrot.slane %v707, 4
      %v713 = vshrl.u32 %v505, 16
      %v715 = vrot.slane %v713, 7
      %v716 = vshll.u32 %v505, 16
      %v718 = vor.u32 %v715, %v716
      %v719 = vrot.slane %v715, 4
      %v721 = vshrl.u32 %v506, 16
      %v723 = vrot.slane %v721, 7
      %v724 = vshll.u32 %v506, 16
      %v726 = vor.u32 %v723, %v724
      %v727 = vrot.slane %v723, 4
      %v729 = vshrl.u32 %v507, 16
      %v731 = vrot.slane %v729, 7
      %v732 = vshll.u32 %v507, 16
      %v734 = vor.u32 %v731, %v732
      %v735 = vrot.slane %v731, 4
      %v737 = vshrl.u32 %v508, 16
      %v739 = vrot.slane %v737, 7
      %v740 = vshll.u32 %v508, 16
      %v742 = vor.u32 %v739, %v740
      %v743 = vrot.slane %v739, 4
      %v745 = vshrl.u32 %v509, 16
      %v747 = vrot.slane %v745, 7
      %v748 = vshll.u32 %v509, 16
      %v750 = vor.u32 %v747, %v748
      %v751 = vrot.slane %v747, 4
      %v753 = vshrl.u32 %v510, 16
      %v755 = vrot.slane %v753, 7
      %v756 = vshll.u32 %v510, 16
      %v758 = vor.u32 %v755, %v756
      %v759 = vrot.slane %v755, 4
      %v761 = vshrl.u32 %v511, 16
      %v763 = vrot.slane %v761, 7
      %v764 = vshll.u32 %v511, 16
      %v766 = vor.u32 %v763, %v764
      %v767 = vrot.slane %v763, 4
      %s832 = scalar_lea.vmem [#allocation2], 8
      %vm833 = vcmask 1043456
      %vm834 = vmand %vm833, %vm358
      %v835 = vld [vmem:[%s832] sm:$0xf]
      %v836 = vsel %vm834, %v518, %v835
      %837 = vst [vmem:[%s832] sm:$0xf] %v836
      %v838 = vld [vmem:[%s832 + $0x4] sm:$0x1]
      %v839 = vsel %vm237, %v519, %v838
      %840 = vst [vmem:[%s832 + $0x4] sm:$0x1] %v839
      %v841 = vld [vmem:[%s832 + $0x8] sm:$0xf]
      %v842 = vsel %vm834, %v526, %v841
      %843 = vst [vmem:[%s832 + $0x8] sm:$0xf] %v842
      %v844 = vld [vmem:[%s832 + $0xc] sm:$0x1]
      %v845 = vsel %vm237, %v527, %v844
      %846 = vst [vmem:[%s832 + $0xc] sm:$0x1] %v845
      %v847 = vld [vmem:[%s832 + $0x10] sm:$0xf]
      %v848 = vsel %vm834, %v534, %v847
      %849 = vst [vmem:[%s832 + $0x10] sm:$0xf] %v848
      %v850 = vld [vmem:[%s832 + $0x14] sm:$0x1]
      %v851 = vsel %vm237, %v535, %v850
      %852 = vst [vmem:[%s832 + $0x14] sm:$0x1] %v851
      %v853 = vld [vmem:[%s832 + $0x18] sm:$0xf]
      %v854 = vsel %vm834, %v542, %v853
      %855 = vst [vmem:[%s832 + $0x18] sm:$0xf] %v854
      %v856 = vld [vmem:[%s832 + $0x1c] sm:$0x1]
      %v857 = vsel %vm237, %v543, %v856
      %858 = vst [vmem:[%s832 + $0x1c] sm:$0x1] %v857
      %v859 = vld [vmem:[%s832 + $0x20] sm:$0xf]
      %v860 = vsel %vm834, %v550, %v859
      %861 = vst [vmem:[%s832 + $0x20] sm:$0xf] %v860
      %v862 = vld [vmem:[%s832 + $0x24] sm:$0x1]
      %v863 = vsel %vm237, %v551, %v862
      %864 = vst [vmem:[%s832 + $0x24] sm:$0x1] %v863
      %v865 = vld [vmem:[%s832 + $0x28] sm:$0xf]
      %v866 = vsel %vm834, %v558, %v865
      %867 = vst [vmem:[%s832 + $0x28] sm:$0xf] %v866
      %v868 = vld [vmem:[%s832 + $0x2c] sm:$0x1]
      %v869 = vsel %vm237, %v559, %v868
      %870 = vst [vmem:[%s832 + $0x2c] sm:$0x1] %v869
      %v871 = vld [vmem:[%s832 + $0x30] sm:$0xf]
      %v872 = vsel %vm834, %v566, %v871
      %873 = vst [vmem:[%s832 + $0x30] sm:$0xf] %v872
      %v874 = vld [vmem:[%s832 + $0x34] sm:$0x1]
      %v875 = vsel %vm237, %v567, %v874
      %876 = vst [vmem:[%s832 + $0x34] sm:$0x1] %v875
      %v877 = vld [vmem:[%s832 + $0x38] sm:$0xf]
      %v878 = vsel %vm834, %v574, %v877
      %879 = vst [vmem:[%s832 + $0x38] sm:$0xf] %v878
      %v880 = vld [vmem:[%s832 + $0x3c] sm:$0x1]
      %v881 = vsel %vm237, %v575, %v880
      %882 = vst [vmem:[%s832 + $0x3c] sm:$0x1] %v881
      %v883 = vld [vmem:[%s832 + $0x50] sm:$0xf]
      %v884 = vsel %vm834, %v582, %v883
      %885 = vst [vmem:[%s832 + $0x50] sm:$0xf] %v884
      %v886 = vld [vmem:[%s832 + $0x54] sm:$0x1]
      %v887 = vsel %vm237, %v583, %v886
      %888 = vst [vmem:[%s832 + $0x54] sm:$0x1] %v887
      %v889 = vld [vmem:[%s832 + $0x58] sm:$0xf]
      %v890 = vsel %vm834, %v590, %v889
      %891 = vst [vmem:[%s832 + $0x58] sm:$0xf] %v890
      %v892 = vld [vmem:[%s832 + $0x5c] sm:$0x1]
      %v893 = vsel %vm237, %v591, %v892
      %894 = vst [vmem:[%s832 + $0x5c] sm:$0x1] %v893
      %v895 = vld [vmem:[%s832 + $0x60] sm:$0xf]
      %v896 = vsel %vm834, %v598, %v895
      %897 = vst [vmem:[%s832 + $0x60] sm:$0xf] %v896
      %v898 = vld [vmem:[%s832 + $0x64] sm:$0x1]
      %v899 = vsel %vm237, %v599, %v898
      %900 = vst [vmem:[%s832 + $0x64] sm:$0x1] %v899
      %v901 = vld [vmem:[%s832 + $0x68] sm:$0xf]
      %v902 = vsel %vm834, %v606, %v901
      %903 = vst [vmem:[%s832 + $0x68] sm:$0xf] %v902
      %v904 = vld [vmem:[%s832 + $0x6c] sm:$0x1]
      %v905 = vsel %vm237, %v607, %v904
      %906 = vst [vmem:[%s832 + $0x6c] sm:$0x1] %v905
      %v907 = vld [vmem:[%s832 + $0x70] sm:$0xf]
      %v908 = vsel %vm834, %v614, %v907
      %909 = vst [vmem:[%s832 + $0x70] sm:$0xf] %v908
      %v910 = vld [vmem:[%s832 + $0x74] sm:$0x1]
      %v911 = vsel %vm237, %v615, %v910
      %912 = vst [vmem:[%s832 + $0x74] sm:$0x1] %v911
      %v913 = vld [vmem:[%s832 + $0x78] sm:$0xf]
      %v914 = vsel %vm834, %v622, %v913
      %915 = vst [vmem:[%s832 + $0x78] sm:$0xf] %v914
      %v916 = vld [vmem:[%s832 + $0x7c] sm:$0x1]
      %v917 = vsel %vm237, %v623, %v916
      %918 = vst [vmem:[%s832 + $0x7c] sm:$0x1] %v917
      %v919 = vld [vmem:[%s832 + $0x80] sm:$0xf]
      %v920 = vsel %vm834, %v630, %v919
      %921 = vst [vmem:[%s832 + $0x80] sm:$0xf] %v920
      %v922 = vld [vmem:[%s832 + $0x84] sm:$0x1]
      %v923 = vsel %vm237, %v631, %v922
      %924 = vst [vmem:[%s832 + $0x84] sm:$0x1] %v923
      %v925 = vld [vmem:[%s832 + $0x88] sm:$0xf]
      %v926 = vsel %vm834, %v638, %v925
      %927 = vst [vmem:[%s832 + $0x88] sm:$0xf] %v926
      %v928 = vld [vmem:[%s832 + $0x8c] sm:$0x1]
      %v929 = vsel %vm237, %v639, %v928
      %930 = vst [vmem:[%s832 + $0x8c] sm:$0x1] %v929
      %v931 = vld [vmem:[%s832 + $0xa0] sm:$0xf]
      %v932 = vsel %vm834, %v646, %v931
      %933 = vst [vmem:[%s832 + $0xa0] sm:$0xf] %v932
      %v934 = vld [vmem:[%s832 + $0xa4] sm:$0x1]
      %v935 = vsel %vm237, %v647, %v934
      %936 = vst [vmem:[%s832 + $0xa4] sm:$0x1] %v935
      %v937 = vld [vmem:[%s832 + $0xa8] sm:$0xf]
      %v938 = vsel %vm834, %v654, %v937
      %939 = vst [vmem:[%s832 + $0xa8] sm:$0xf] %v938
      %v940 = vld [vmem:[%s832 + $0xac] sm:$0x1]
      %v941 = vsel %vm237, %v655, %v940
      %942 = vst [vmem:[%s832 + $0xac] sm:$0x1] %v941
      %v943 = vld [vmem:[%s832 + $0xb0] sm:$0xf]
      %v944 = vsel %vm834, %v662, %v943
      %945 = vst [vmem:[%s832 + $0xb0] sm:$0xf] %v944
      %v946 = vld [vmem:[%s832 + $0xb4] sm:$0x1]
      %v947 = vsel %vm237, %v663, %v946
      %948 = vst [vmem:[%s832 + $0xb4] sm:$0x1] %v947
      %v949 = vld [vmem:[%s832 + $0xb8] sm:$0xf]
      %v950 = vsel %vm834, %v670, %v949
      %951 = vst [vmem:[%s832 + $0xb8] sm:$0xf] %v950
      %v952 = vld [vmem:[%s832 + $0xbc] sm:$0x1]
      %v953 = vsel %vm237, %v671, %v952
      %954 = vst [vmem:[%s832 + $0xbc] sm:$0x1] %v953
      %v955 = vld [vmem:[%s832 + $0xc0] sm:$0xf]
      %v956 = vsel %vm834, %v678, %v955
      %957 = vst [vmem:[%s832 + $0xc0] sm:$0xf] %v956
      %v958 = vld [vmem:[%s832 + $0xc4] sm:$0x1]
      %v959 = vsel %vm237, %v679, %v958
      %960 = vst [vmem:[%s832 + $0xc4] sm:$0x1] %v959
      %v961 = vld [vmem:[%s832 + $0xc8] sm:$0xf]
      %v962 = vsel %vm834, %v686, %v961
      %963 = vst [vmem:[%s832 + $0xc8] sm:$0xf] %v962
      %v964 = vld [vmem:[%s832 + $0xcc] sm:$0x1]
      %v965 = vsel %vm237, %v687, %v964
      %966 = vst [vmem:[%s832 + $0xcc] sm:$0x1] %v965
      %v967 = vld [vmem:[%s832 + $0xd0] sm:$0xf]
      %v968 = vsel %vm834, %v694, %v967
      %969 = vst [vmem:[%s832 + $0xd0] sm:$0xf] %v968
      %v970 = vld [vmem:[%s832 + $0xd4] sm:$0x1]
      %v971 = vsel %vm237, %v695, %v970
      %972 = vst [vmem:[%s832 + $0xd4] sm:$0x1] %v971
      %v973 = vld [vmem:[%s832 + $0xd8] sm:$0xf]
      %v974 = vsel %vm834, %v702, %v973
      %975 = vst [vmem:[%s832 + $0xd8] sm:$0xf] %v974
      %v976 = vld [vmem:[%s832 + $0xdc] sm:$0x1]
      %v977 = vsel %vm237, %v703, %v976
      %978 = vst [vmem:[%s832 + $0xdc] sm:$0x1] %v977
      %v979 = vld [vmem:[%s832 + $0xf0] sm:$0xf]
      %v980 = vsel %vm834, %v710, %v979
      %981 = vst [vmem:[%s832 + $0xf0] sm:$0xf] %v980
      %v982 = vld [vmem:[%s832 + $0xf4] sm:$0x1]
      %v983 = vsel %vm237, %v711, %v982
      %984 = vst [vmem:[%s832 + $0xf4] sm:$0x1] %v983
      %v985 = vld [vmem:[%s832 + $0xf8] sm:$0xf]
      %v986 = vsel %vm834, %v718, %v985
      %987 = vst [vmem:[%s832 + $0xf8] sm:$0xf] %v986
      %v988 = vld [vmem:[%s832 + $0xfc] sm:$0x1]
      %v989 = vsel %vm237, %v719, %v988
      %990 = vst [vmem:[%s832 + $0xfc] sm:$0x1] %v989
      %v991 = vld [vmem:[%s832 + $0x100] sm:$0xf]
      %v992 = vsel %vm834, %v726, %v991
      %993 = vst [vmem:[%s832 + $0x100] sm:$0xf] %v992
      %v994 = vld [vmem:[%s832 + $0x104] sm:$0x1]
      %v995 = vsel %vm237, %v727, %v994
      %996 = vst [vmem:[%s832 + $0x104] sm:$0x1] %v995
      %v997 = vld [vmem:[%s832 + $0x108] sm:$0xf]
      %v998 = vsel %vm834, %v734, %v997
      %999 = vst [vmem:[%s832 + $0x108] sm:$0xf] %v998
      %v1000 = vld [vmem:[%s832 + $0x10c] sm:$0x1]
      %v1001 = vsel %vm237, %v735, %v1000
      %1002 = vst [vmem:[%s832 + $0x10c] sm:$0x1] %v1001
      %v1003 = vld [vmem:[%s832 + $0x110] sm:$0xf]
      %v1004 = vsel %vm834, %v742, %v1003
      %1005 = vst [vmem:[%s832 + $0x110] sm:$0xf] %v1004
      %v1006 = vld [vmem:[%s832 + $0x114] sm:$0x1]
      %v1007 = vsel %vm237, %v743, %v1006
      %1008 = vst [vmem:[%s832 + $0x114] sm:$0x1] %v1007
      %v1009 = vld [vmem:[%s832 + $0x118] sm:$0xf]
      %v1010 = vsel %vm834, %v750, %v1009
      %1011 = vst [vmem:[%s832 + $0x118] sm:$0xf] %v1010
      %v1012 = vld [vmem:[%s832 + $0x11c] sm:$0x1]
      %v1013 = vsel %vm237, %v751, %v1012
      %1014 = vst [vmem:[%s832 + $0x11c] sm:$0x1] %v1013
      %v1015 = vld [vmem:[%s832 + $0x120] sm:$0xf]
      %v1016 = vsel %vm834, %v758, %v1015
      %1017 = vst [vmem:[%s832 + $0x120] sm:$0xf] %v1016
      %v1018 = vld [vmem:[%s832 + $0x124] sm:$0x1]
      %v1019 = vsel %vm237, %v759, %v1018
      %1020 = vst [vmem:[%s832 + $0x124] sm:$0x1] %v1019
      %v1021 = vld [vmem:[%s832 + $0x128] sm:$0xf]
      %v1022 = vsel %vm834, %v766, %v1021
      %1023 = vst [vmem:[%s832 + $0x128] sm:$0xf] %v1022
      %v1024 = vld [vmem:[%s832 + $0x12c] sm:$0x1]
      %v1025 = vsel %vm237, %v767, %v1024
      %1026 = vst [vmem:[%s832 + $0x12c] sm:$0x1] %v1025
      %v1027 = vld [vmem:[#allocation2] sm:$0xf]
      %v1028 = vld [vmem:[#allocation2 + $0x8] sm:$0xf]
      %v1029 = vld [vmem:[#allocation2 + $0x10] sm:$0xf]
      %v1030 = vld [vmem:[#allocation2 + $0x18] sm:$0xf]
      %v1031 = vld [vmem:[#allocation2 + $0x20] sm:$0xf]
      %v1032 = vld [vmem:[#allocation2 + $0x28] sm:$0xf]
      %v1033 = vld [vmem:[#allocation2 + $0x30] sm:$0xf]
      %v1034 = vld [vmem:[#allocation2 + $0x38] sm:$0xf]
      %v1035 = vld [vmem:[#allocation2 + $0x50] sm:$0xf]
      %v1036 = vld [vmem:[#allocation2 + $0x58] sm:$0xf]
      %v1037 = vld [vmem:[#allocation2 + $0x60] sm:$0xf]
      %v1038 = vld [vmem:[#allocation2 + $0x68] sm:$0xf]
      %v1039 = vld [vmem:[#allocation2 + $0x70] sm:$0xf]
      %v1040 = vld [vmem:[#allocation2 + $0x78] sm:$0xf]
      %v1041 = vld [vmem:[#allocation2 + $0x80] sm:$0xf]
      %v1042 = vld [vmem:[#allocation2 + $0x88] sm:$0xf]
      %v1043 = vld [vmem:[#allocation2 + $0xa0] sm:$0xf]
      %v1044 = vld [vmem:[#allocation2 + $0xa8] sm:$0xf]
      %v1045 = vld [vmem:[#allocation2 + $0xb0] sm:$0xf]
      %v1046 = vld [vmem:[#allocation2 + $0xb8] sm:$0xf]
      %v1047 = vld [vmem:[#allocation2 + $0xc0] sm:$0xf]
      %v1048 = vld [vmem:[#allocation2 + $0xc8] sm:$0xf]
      %v1049 = vld [vmem:[#allocation2 + $0xd0] sm:$0xf]
      %v1050 = vld [vmem:[#allocation2 + $0xd8] sm:$0xf]
      %v1051 = vld [vmem:[#allocation2 + $0xf0] sm:$0xf]
      %v1052 = vld [vmem:[#allocation2 + $0xf8] sm:$0xf]
      %v1053 = vld [vmem:[#allocation2 + $0x100] sm:$0xf]
      %v1054 = vld [vmem:[#allocation2 + $0x108] sm:$0xf]
      %v1055 = vld [vmem:[#allocation2 + $0x110] sm:$0xf]
      %v1056 = vld [vmem:[#allocation2 + $0x118] sm:$0xf]
      %v1057 = vld [vmem:[#allocation2 + $0x120] sm:$0xf]
      %v1058 = vld [vmem:[#allocation2 + $0x128] sm:$0xf]
      %v1059 = vld [vmem:[%s1] sm:$0xf]
      %v1060 = vld [vmem:[%s1 + $0x4] sm:$0xf]
      %v1061 = vld [vmem:[%s1 + $0x8] sm:$0xf]
      %v1062 = vld [vmem:[%s1 + $0xc] sm:$0xf]
      %v1063 = vld [vmem:[%s1 + $0x10] sm:$0xf]
      %v1064 = vld [vmem:[%s1 + $0x14] sm:$0xf]
      %v1065 = vld [vmem:[%s1 + $0x18] sm:$0xf]
      %v1066 = vld [vmem:[%s1 + $0x1c] sm:$0xf]
      %v1067 = vld [vmem:[%s1 + $0x20] sm:$0xf]
      %v1068 = vld [vmem:[%s1 + $0x24] sm:$0xf]
      %v1069 = vld [vmem:[%s1 + $0x28] sm:$0xf]
      %v1070 = vld [vmem:[%s1 + $0x2c] sm:$0xf]
      %v1071 = vld [vmem:[%s1 + $0x30] sm:$0xf]
      %v1072 = vld [vmem:[%s1 + $0x34] sm:$0xf]
      %v1073 = vld [vmem:[%s1 + $0x38] sm:$0xf]
      %v1074 = vld [vmem:[%s1 + $0x3c] sm:$0xf]
      %v1075 = vld [vmem:[#allocation2 + $0x4] sm:$0x1]
      %v1076 = vld [vmem:[#allocation2 + $0xc] sm:$0x1]
      %v1077 = vld [vmem:[#allocation2 + $0x14] sm:$0x1]
      %v1078 = vld [vmem:[#allocation2 + $0x1c] sm:$0x1]
      %v1079 = vld [vmem:[#allocation2 + $0x24] sm:$0x1]
      %v1080 = vld [vmem:[#allocation2 + $0x2c] sm:$0x1]
      %v1081 = vld [vmem:[#allocation2 + $0x34] sm:$0x1]
      %v1082 = vld [vmem:[#allocation2 + $0x3c] sm:$0x1]
      %v1083 = vld [vmem:[#allocation2 + $0x54] sm:$0x1]
      %v1084 = vld [vmem:[#allocation2 + $0x5c] sm:$0x1]
      %v1085 = vld [vmem:[#allocation2 + $0x64] sm:$0x1]
      %v1086 = vld [vmem:[#allocation2 + $0x6c] sm:$0x1]
      %v1087 = vld [vmem:[#allocation2 + $0x74] sm:$0x1]
      %v1088 = vld [vmem:[#allocation2 + $0x7c] sm:$0x1]
      %v1089 = vld [vmem:[#allocation2 + $0x84] sm:$0x1]
      %v1090 = vld [vmem:[#allocation2 + $0x8c] sm:$0x1]
      %v1091 = vld [vmem:[#allocation2 + $0xa4] sm:$0x1]
      %v1092 = vld [vmem:[#allocation2 + $0xac] sm:$0x1]
      %v1093 = vld [vmem:[#allocation2 + $0xb4] sm:$0x1]
      %v1094 = vld [vmem:[#allocation2 + $0xbc] sm:$0x1]
      %v1095 = vld [vmem:[#allocation2 + $0xc4] sm:$0x1]
      %v1096 = vld [vmem:[#allocation2 + $0xcc] sm:$0x1]
      %v1097 = vld [vmem:[#allocation2 + $0xd4] sm:$0x1]
      %v1098 = vld [vmem:[#allocation2 + $0xdc] sm:$0x1]
      %v1099 = vld [vmem:[#allocation2 + $0xf4] sm:$0x1]
      %v1100 = vld [vmem:[#allocation2 + $0xfc] sm:$0x1]
      %v1101 = vld [vmem:[#allocation2 + $0x104] sm:$0x1]
      %v1102 = vld [vmem:[#allocation2 + $0x10c] sm:$0x1]
      %v1103 = vld [vmem:[#allocation2 + $0x114] sm:$0x1]
      %v1104 = vld [vmem:[#allocation2 + $0x11c] sm:$0x1]
      %v1105 = vld [vmem:[#allocation2 + $0x124] sm:$0x1]
      %v1106 = vld [vmem:[#allocation2 + $0x12c] sm:$0x1]
      %vm1107 = vsmask.f32 3328
      %vm1108 = vsmask.f32 7440
      %vm1109 = vmor %vm1107, %vm1108
      %v1111 = vshrl.u32 %v1027, 16
      %v1113 = vrot.slane %v1111, 4
      %v1114 = vshll.u32 %v1027, 16
      %v1116 = vrot.slane %v1114, 5
      %v1117 = vor.u32 %v1113, %v1116
      %v1118 = vrot.slane %v1117, 4
      %v1120 = vshll.u32 %v1075, 16
      %v1122 = vrot.slane %v1120, 5
      %v1123 = vsel %vm1109, %v1118, %v1122
      %v1125 = vshrl.u32 %v1028, 16
      %v1127 = vrot.slane %v1125, 4
      %v1128 = vshll.u32 %v1028, 16
      %v1130 = vrot.slane %v1128, 5
      %v1131 = vor.u32 %v1127, %v1130
      %v1132 = vrot.slane %v1131, 4
      %v1134 = vshll.u32 %v1076, 16
      %v1136 = vrot.slane %v1134, 5
      %v1137 = vsel %vm1109, %v1132, %v1136
      %v1139 = vshrl.u32 %v1029, 16
      %v1141 = vrot.slane %v1139, 4
      %v1142 = vshll.u32 %v1029, 16
      %v1144 = vrot.slane %v1142, 5
      %v1145 = vor.u32 %v1141, %v1144
      %v1146 = vrot.slane %v1145, 4
      %v1148 = vshll.u32 %v1077, 16
      %v1150 = vrot.slane %v1148, 5
      %v1151 = vsel %vm1109, %v1146, %v1150
      %v1153 = vshrl.u32 %v1030, 16
      %v1155 = vrot.slane %v1153, 4
      %v1156 = vshll.u32 %v1030, 16
      %v1158 = vrot.slane %v1156, 5
      %v1159 = vor.u32 %v1155, %v1158
      %v1160 = vrot.slane %v1159, 4
      %v1162 = vshll.u32 %v1078, 16
      %v1164 = vrot.slane %v1162, 5
      %v1165 = vsel %vm1109, %v1160, %v1164
      %v1167 = vshrl.u32 %v1031, 16
      %v1169 = vrot.slane %v1167, 4
      %v1170 = vshll.u32 %v1031, 16
      %v1172 = vrot.slane %v1170, 5
      %v1173 = vor.u32 %v1169, %v1172
      %v1174 = vrot.slane %v1173, 4
      %v1176 = vshll.u32 %v1079, 16
      %v1178 = vrot.slane %v1176, 5
      %v1179 = vsel %vm1109, %v1174, %v1178
      %v1181 = vshrl.u32 %v1032, 16
      %v1183 = vrot.slane %v1181, 4
      %v1184 = vshll.u32 %v1032, 16
      %v1186 = vrot.slane %v1184, 5
      %v1187 = vor.u32 %v1183, %v1186
      %v1188 = vrot.slane %v1187, 4
      %v1190 = vshll.u32 %v1080, 16
      %v1192 = vrot.slane %v1190, 5
      %v1193 = vsel %vm1109, %v1188, %v1192
      %v1195 = vshrl.u32 %v1033, 16
      %v1197 = vrot.slane %v1195, 4
      %v1198 = vshll.u32 %v1033, 16
      %v1200 = vrot.slane %v1198, 5
      %v1201 = vor.u32 %v1197, %v1200
      %v1202 = vrot.slane %v1201, 4
      %v1204 = vshll.u32 %v1081, 16
      %v1206 = vrot.slane %v1204, 5
      %v1207 = vsel %vm1109, %v1202, %v1206
      %v1209 = vshrl.u32 %v1034, 16
      %v1211 = vrot.slane %v1209, 4
      %v1212 = vshll.u32 %v1034, 16
      %v1214 = vrot.slane %v1212, 5
      %v1215 = vor.u32 %v1211, %v1214
      %v1216 = vrot.slane %v1215, 4
      %v1218 = vshll.u32 %v1082, 16
      %v1220 = vrot.slane %v1218, 5
      %v1221 = vsel %vm1109, %v1216, %v1220
      %v1223 = vshrl.u32 %v1035, 16
      %v1225 = vrot.slane %v1223, 4
      %v1226 = vshll.u32 %v1035, 16
      %v1228 = vrot.slane %v1226, 5
      %v1229 = vor.u32 %v1225, %v1228
      %v1230 = vrot.slane %v1229, 4
      %v1232 = vshll.u32 %v1083, 16
      %v1234 = vrot.slane %v1232, 5
      %v1235 = vsel %vm1109, %v1230, %v1234
      %v1237 = vshrl.u32 %v1036, 16
      %v1239 = vrot.slane %v1237, 4
      %v1240 = vshll.u32 %v1036, 16
      %v1242 = vrot.slane %v1240, 5
      %v1243 = vor.u32 %v1239, %v1242
      %v1244 = vrot.slane %v1243, 4
      %v1246 = vshll.u32 %v1084, 16
      %v1248 = vrot.slane %v1246, 5
      %v1249 = vsel %vm1109, %v1244, %v1248
      %v1251 = vshrl.u32 %v1037, 16
      %v1253 = vrot.slane %v1251, 4
      %v1254 = vshll.u32 %v1037, 16
      %v1256 = vrot.slane %v1254, 5
      %v1257 = vor.u32 %v1253, %v1256
      %v1258 = vrot.slane %v1257, 4
      %v1260 = vshll.u32 %v1085, 16
      %v1262 = vrot.slane %v1260, 5
      %v1263 = vsel %vm1109, %v1258, %v1262
      %v1265 = vshrl.u32 %v1038, 16
      %v1267 = vrot.slane %v1265, 4
      %v1268 = vshll.u32 %v1038, 16
      %v1270 = vrot.slane %v1268, 5
      %v1271 = vor.u32 %v1267, %v1270
      %v1272 = vrot.slane %v1271, 4
      %v1274 = vshll.u32 %v1086, 16
      %v1276 = vrot.slane %v1274, 5
      %v1277 = vsel %vm1109, %v1272, %v1276
      %v1279 = vshrl.u32 %v1039, 16
      %v1281 = vrot.slane %v1279, 4
      %v1282 = vshll.u32 %v1039, 16
      %v1284 = vrot.slane %v1282, 5
      %v1285 = vor.u32 %v1281, %v1284
      %v1286 = vrot.slane %v1285, 4
      %v1288 = vshll.u32 %v1087, 16
      %v1290 = vrot.slane %v1288, 5
      %v1291 = vsel %vm1109, %v1286, %v1290
      %v1293 = vshrl.u32 %v1040, 16
      %v1295 = vrot.slane %v1293, 4
      %v1296 = vshll.u32 %v1040, 16
      %v1298 = vrot.slane %v1296, 5
      %v1299 = vor.u32 %v1295, %v1298
      %v1300 = vrot.slane %v1299, 4
      %v1302 = vshll.u32 %v1088, 16
      %v1304 = vrot.slane %v1302, 5
      %v1305 = vsel %vm1109, %v1300, %v1304
      %v1307 = vshrl.u32 %v1041, 16
      %v1309 = vrot.slane %v1307, 4
      %v1310 = vshll.u32 %v1041, 16
      %v1312 = vrot.slane %v1310, 5
      %v1313 = vor.u32 %v1309, %v1312
      %v1314 = vrot.slane %v1313, 4
      %v1316 = vshll.u32 %v1089, 16
      %v1318 = vrot.slane %v1316, 5
      %v1319 = vsel %vm1109, %v1314, %v1318
      %v1321 = vshrl.u32 %v1042, 16
      %v1323 = vrot.slane %v1321, 4
      %v1324 = vshll.u32 %v1042, 16
      %v1326 = vrot.slane %v1324, 5
      %v1327 = vor.u32 %v1323, %v1326
      %v1328 = vrot.slane %v1327, 4
      %v1330 = vshll.u32 %v1090, 16
      %v1332 = vrot.slane %v1330, 5
      %v1333 = vsel %vm1109, %v1328, %v1332
      %v1335 = vshrl.u32 %v1043, 16
      %v1337 = vrot.slane %v1335, 4
      %v1338 = vshll.u32 %v1043, 16
      %v1340 = vrot.slane %v1338, 5
      %v1341 = vor.u32 %v1337, %v1340
      %v1342 = vrot.slane %v1341, 4
      %v1344 = vshll.u32 %v1091, 16
      %v1346 = vrot.slane %v1344, 5
      %v1347 = vsel %vm1109, %v1342, %v1346
      %v1349 = vshrl.u32 %v1044, 16
      %v1351 = vrot.slane %v1349, 4
      %v1352 = vshll.u32 %v1044, 16
      %v1354 = vrot.slane %v1352, 5
      %v1355 = vor.u32 %v1351, %v1354
      %v1356 = vrot.slane %v1355, 4
      %v1358 = vshll.u32 %v1092, 16
      %v1360 = vrot.slane %v1358, 5
      %v1361 = vsel %vm1109, %v1356, %v1360
      %v1363 = vshrl.u32 %v1045, 16
      %v1365 = vrot.slane %v1363, 4
      %v1366 = vshll.u32 %v1045, 16
      %v1368 = vrot.slane %v1366, 5
      %v1369 = vor.u32 %v1365, %v1368
      %v1370 = vrot.slane %v1369, 4
      %v1372 = vshll.u32 %v1093, 16
      %v1374 = vrot.slane %v1372, 5
      %v1375 = vsel %vm1109, %v1370, %v1374
      %v1377 = vshrl.u32 %v1046, 16
      %v1379 = vrot.slane %v1377, 4
      %v1380 = vshll.u32 %v1046, 16
      %v1382 = vrot.slane %v1380, 5
      %v1383 = vor.u32 %v1379, %v1382
      %v1384 = vrot.slane %v1383, 4
      %v1386 = vshll.u32 %v1094, 16
      %v1388 = vrot.slane %v1386, 5
      %v1389 = vsel %vm1109, %v1384, %v1388
      %v1391 = vshrl.u32 %v1047, 16
      %v1393 = vrot.slane %v1391, 4
      %v1394 = vshll.u32 %v1047, 16
      %v1396 = vrot.slane %v1394, 5
      %v1397 = vor.u32 %v1393, %v1396
      %v1398 = vrot.slane %v1397, 4
      %v1400 = vshll.u32 %v1095, 16
      %v1402 = vrot.slane %v1400, 5
      %v1403 = vsel %vm1109, %v1398, %v1402
      %v1405 = vshrl.u32 %v1048, 16
      %v1407 = vrot.slane %v1405, 4
      %v1408 = vshll.u32 %v1048, 16
      %v1410 = vrot.slane %v1408, 5
      %v1411 = vor.u32 %v1407, %v1410
      %v1412 = vrot.slane %v1411, 4
      %v1414 = vshll.u32 %v1096, 16
      %v1416 = vrot.slane %v1414, 5
      %v1417 = vsel %vm1109, %v1412, %v1416
      %v1419 = vshrl.u32 %v1049, 16
      %v1421 = vrot.slane %v1419, 4
      %v1422 = vshll.u32 %v1049, 16
      %v1424 = vrot.slane %v1422, 5
      %v1425 = vor.u32 %v1421, %v1424
      %v1426 = vrot.slane %v1425, 4
      %v1428 = vshll.u32 %v1097, 16
      %v1430 = vrot.slane %v1428, 5
      %v1431 = vsel %vm1109, %v1426, %v1430
      %v1433 = vshrl.u32 %v1050, 16
      %v1435 = vrot.slane %v1433, 4
      %v1436 = vshll.u32 %v1050, 16
      %v1438 = vrot.slane %v1436, 5
      %v1439 = vor.u32 %v1435, %v1438
      %v1440 = vrot.slane %v1439, 4
      %v1442 = vshll.u32 %v1098, 16
      %v1444 = vrot.slane %v1442, 5
      %v1445 = vsel %vm1109, %v1440, %v1444
      %v1447 = vshrl.u32 %v1051, 16
      %v1449 = vrot.slane %v1447, 4
      %v1450 = vshll.u32 %v1051, 16
      %v1452 = vrot.slane %v1450, 5
      %v1453 = vor.u32 %v1449, %v1452
      %v1454 = vrot.slane %v1453, 4
      %v1456 = vshll.u32 %v1099, 16
      %v1458 = vrot.slane %v1456, 5
      %v1459 = vsel %vm1109, %v1454, %v1458
      %v1461 = vshrl.u32 %v1052, 16
      %v1463 = vrot.slane %v1461, 4
      %v1464 = vshll.u32 %v1052, 16
      %v1466 = vrot.slane %v1464, 5
      %v1467 = vor.u32 %v1463, %v1466
      %v1468 = vrot.slane %v1467, 4
      %v1470 = vshll.u32 %v1100, 16
      %v1472 = vrot.slane %v1470, 5
      %v1473 = vsel %vm1109, %v1468, %v1472
      %v1475 = vshrl.u32 %v1053, 16
      %v1477 = vrot.slane %v1475, 4
      %v1478 = vshll.u32 %v1053, 16
      %v1480 = vrot.slane %v1478, 5
      %v1481 = vor.u32 %v1477, %v1480
      %v1482 = vrot.slane %v1481, 4
      %v1484 = vshll.u32 %v1101, 16
      %v1486 = vrot.slane %v1484, 5
      %v1487 = vsel %vm1109, %v1482, %v1486
      %v1489 = vshrl.u32 %v1054, 16
      %v1491 = vrot.slane %v1489, 4
      %v1492 = vshll.u32 %v1054, 16
      %v1494 = vrot.slane %v1492, 5
      %v1495 = vor.u32 %v1491, %v1494
      %v1496 = vrot.slane %v1495, 4
      %v1498 = vshll.u32 %v1102, 16
      %v1500 = vrot.slane %v1498, 5
      %v1501 = vsel %vm1109, %v1496, %v1500
      %v1503 = vshrl.u32 %v1055, 16
      %v1505 = vrot.slane %v1503, 4
      %v1506 = vshll.u32 %v1055, 16
      %v1508 = vrot.slane %v1506, 5
      %v1509 = vor.u32 %v1505, %v1508
      %v1510 = vrot.slane %v1509, 4
      %v1512 = vshll.u32 %v1103, 16
      %v1514 = vrot.slane %v1512, 5
      %v1515 = vsel %vm1109, %v1510, %v1514
      %v1517 = vshrl.u32 %v1056, 16
      %v1519 = vrot.slane %v1517, 4
      %v1520 = vshll.u32 %v1056, 16
      %v1522 = vrot.slane %v1520, 5
      %v1523 = vor.u32 %v1519, %v1522
      %v1524 = vrot.slane %v1523, 4
      %v1526 = vshll.u32 %v1104, 16
      %v1528 = vrot.slane %v1526, 5
      %v1529 = vsel %vm1109, %v1524, %v1528
      %v1531 = vshrl.u32 %v1057, 16
      %v1533 = vrot.slane %v1531, 4
      %v1534 = vshll.u32 %v1057, 16
      %v1536 = vrot.slane %v1534, 5
      %v1537 = vor.u32 %v1533, %v1536
      %v1538 = vrot.slane %v1537, 4
      %v1540 = vshll.u32 %v1105, 16
      %v1542 = vrot.slane %v1540, 5
      %v1543 = vsel %vm1109, %v1538, %v1542
      %v1545 = vshrl.u32 %v1058, 16
      %v1547 = vrot.slane %v1545, 4
      %v1548 = vshll.u32 %v1058, 16
      %v1550 = vrot.slane %v1548, 5
      %v1551 = vor.u32 %v1547, %v1550
      %v1552 = vrot.slane %v1551, 4
      %v1554 = vshll.u32 %v1106, 16
      %v1556 = vrot.slane %v1554, 5
      %v1557 = vsel %vm1109, %v1552, %v1556
      %v1558 = vld [vmem:[%s1 + $0x40] sm:$0xf]
      %v1559 = vld [vmem:[%s1 + $0x44] sm:$0xf]
      %v1560 = vld [vmem:[%s1 + $0x48] sm:$0xf]
      %v1561 = vld [vmem:[%s1 + $0x4c] sm:$0xf]
      %v1562 = vld [vmem:[%s1 + $0x50] sm:$0xf]
      %v1563 = vld [vmem:[%s1 + $0x54] sm:$0xf]
      %v1564 = vld [vmem:[%s1 + $0x58] sm:$0xf]
      %v1565 = vld [vmem:[%s1 + $0x5c] sm:$0xf]
      %v1566 = vld [vmem:[%s1 + $0x60] sm:$0xf]
      %v1567 = vld [vmem:[%s1 + $0x64] sm:$0xf]
      %v1568 = vld [vmem:[%s1 + $0x68] sm:$0xf]
      %v1569 = vld [vmem:[%s1 + $0x6c] sm:$0xf]
      %v1570 = vld [vmem:[%s1 + $0x70] sm:$0xf]
      %v1571 = vld [vmem:[%s1 + $0x74] sm:$0xf]
      %v1572 = vld [vmem:[%s1 + $0x78] sm:$0xf]
      %v1573 = vld [vmem:[%s1 + $0x7c] sm:$0xf]
      %v1574 = vunpack.c.l.b16 %v1123
      %v1575 = vunpack.c.l.b16 %v1137
      %v1576 = vunpack.c.l.b16 %v1151
      %v1577 = vunpack.c.l.b16 %v1165
      %v1578 = vunpack.c.l.b16 %v1179
      %v1579 = vunpack.c.l.b16 %v1193
      %v1580 = vunpack.c.l.b16 %v1207
      %v1581 = vunpack.c.l.b16 %v1221
      %v1582 = vunpack.c.l.b16 %v1235
      %v1583 = vunpack.c.l.b16 %v1249
      %v1584 = vunpack.c.l.b16 %v1263
      %v1585 = vunpack.c.l.b16 %v1277
      %v1586 = vunpack.c.l.b16 %v1291
      %v1587 = vunpack.c.l.b16 %v1305
      %v1588 = vunpack.c.l.b16 %v1319
      %v1589 = vunpack.c.l.b16 %v1333
      %v1590 = vunpack.c.l.b16 %v1347
      %v1591 = vunpack.c.l.b16 %v1361
      %v1592 = vunpack.c.l.b16 %v1375
      %v1593 = vunpack.c.l.b16 %v1389
      %v1594 = vunpack.c.l.b16 %v1403
      %v1595 = vunpack.c.l.b16 %v1417
      %v1596 = vunpack.c.l.b16 %v1431
      %v1597 = vunpack.c.l.b16 %v1445
      %v1598 = vunpack.c.l.b16 %v1459
      %v1599 = vunpack.c.l.b16 %v1473
      %v1600 = vunpack.c.l.b16 %v1487
      %v1601 = vunpack.c.l.b16 %v1501
      %v1602 = vunpack.c.l.b16 %v1515
      %v1603 = vunpack.c.l.b16 %v1529
      %v1604 = vunpack.c.l.b16 %v1543
      %v1605 = vunpack.c.l.b16 %v1557
      %v1606 = vpack.c.b16 %v1575, %v1574
      %v1607 = vpack.c.b16 %v1577, %v1576
      %v1608 = vpack.c.b16 %v1579, %v1578
      %v1609 = vpack.c.b16 %v1581, %v1580
      %v1610 = vpack.c.b16 %v1583, %v1582
      %v1611 = vpack.c.b16 %v1585, %v1584
      %v1612 = vpack.c.b16 %v1587, %v1586
      %v1613 = vpack.c.b16 %v1589, %v1588
      %v1614 = vpack.c.b16 %v1591, %v1590
      %v1615 = vpack.c.b16 %v1593, %v1592
      %v1616 = vpack.c.b16 %v1595, %v1594
      %v1617 = vpack.c.b16 %v1597, %v1596
      %v1618 = vpack.c.b16 %v1599, %v1598
      %v1619 = vpack.c.b16 %v1601, %v1600
      %v1620 = vpack.c.b16 %v1603, %v1602
      %v1621 = vpack.c.b16 %v1605, %v1604
      %v1654 = vunpack.c.l.b16 %v1558
      %v1655 = vunpack.c.l.b16 %v1559
      %v1656 = vunpack.c.l.b16 %v1560
      %v1657 = vunpack.c.l.b16 %v1561
      %v1658 = vunpack.c.l.b16 %v1562
      %v1659 = vunpack.c.l.b16 %v1563
      %v1660 = vunpack.c.l.b16 %v1564
      %v1661 = vunpack.c.l.b16 %v1565
      %v1662 = vunpack.c.l.b16 %v1566
      %v1663 = vunpack.c.l.b16 %v1567
      %v1664 = vunpack.c.l.b16 %v1568
      %v1665 = vunpack.c.l.b16 %v1569
      %v1666 = vunpack.c.l.b16 %v1570
      %v1667 = vunpack.c.l.b16 %v1571
      %v1668 = vunpack.c.l.b16 %v1572
      %v1669 = vunpack.c.l.b16 %v1573
      %v1670 = vpack.c.b16 %v1655, %v1654
      %v1671 = vpack.c.b16 %v1657, %v1656
      %v1672 = vpack.c.b16 %v1659, %v1658
      %v1673 = vpack.c.b16 %v1661, %v1660
      %v1674 = vpack.c.b16 %v1663, %v1662
      %v1675 = vpack.c.b16 %v1665, %v1664
      %v1676 = vpack.c.b16 %v1667, %v1666
      %v1677 = vpack.c.b16 %v1669, %v1668
      %1686 = vmatprep.subr.bf16.mxu0 0
      %1687 = vmatpush1.bf16.msra.mxu0 %v1670
      %1688 = vmatprep.subr.bf16.mxu0 0
      %1689 = vmatpush1.bf16.msra.mxu0 %v1671
      %1690 = vmatprep.subr.bf16.mxu0 0
      %1691 = vmatpush1.bf16.msra.mxu0 %v1672
      %1692 = vmatprep.subr.bf16.mxu0 0
      %1693 = vmatpush1.bf16.msra.mxu0 %v1673
      %1694 = vmatprep.subr.bf16.mxu0 0
      %1695 = vmatpush1.bf16.msra.mxu0 %v1674
      %1696 = vmatprep.subr.bf16.mxu0 0
      %1697 = vmatpush1.bf16.msra.mxu0 %v1675
      %1698 = vmatprep.subr.bf16.mxu0 0
      %1699 = vmatpush1.bf16.msra.mxu0 %v1676
      %1700 = vmatprep.subr.bf16.mxu0 0
      %1701 = vmatpush1.bf16.msra.mxu0 %v1677
      %1702 = vmatprep.subr.bf16.mxu0 0
      %1703 = vmatpush1.bf16.msra.mxu0 0
      %1704 = vmatprep.subr.bf16.mxu0 0
      %1705 = vmatpush1.bf16.msra.mxu0 0
      %1706 = vmatprep.subr.bf16.mxu0 0
      %1707 = vmatpush1.bf16.msra.mxu0 0
      %1708 = vmatprep.subr.bf16.mxu0 0
      %1709 = vmatpush1.bf16.msra.mxu0 0
      %1710 = vmatprep.subr.bf16.mxu0 0
      %1711 = vmatpush1.bf16.msra.mxu0 0
      %1712 = vmatprep.subr.bf16.mxu0 0
      %1713 = vmatpush1.bf16.msra.mxu0 0
      %1714 = vmatprep.subr.bf16.mxu0 0
      %1715 = vmatpush1.bf16.msra.mxu0 0
      %1716 = vmatprep.subr.bf16.mxu0 0
      %1717 = vmatpush1.bf16.msra.mxu0 0
      %1718 = vmatprep.mubr.bf16.mxu0 0
      %1719 = vmatmul.mubr.bf16.gmra.mrb[0].mxu0 %v1606
      %v1720 = vpop.f32.mrb[0].mxu0
      %v1721 = vadd.f32 0.0, %v1720
      %v1722 = vpop.f32.mrb[0].mxu0
      %v1723 = vpop.f32.mrb[0].mxu0
      %v1724 = vadd.f32 0.0, %v1723
      %v1725 = vpop.f32.mrb[0].mxu0
      %1726 = vmatprep.mubr.bf16.mxu0 0
      %1727 = vmatmul.mubr.bf16.gmra.mrb[0].mxu0 %v1607
      %v1728 = vpop.f32.mrb[0].mxu0
      %v1729 = vadd.f32 0.0, %v1728
      %v1730 = vpop.f32.mrb[0].mxu0
      %v1731 = vpop.f32.mrb[0].mxu0
      %v1732 = vadd.f32 0.0, %v1731
      %v1733 = vpop.f32.mrb[0].mxu0
      %1734 = vmatprep.mubr.bf16.mxu0 0
      %1735 = vmatmul.mubr.bf16.gmra.mrb[0].mxu0 %v1608
      %v1736 = vpop.f32.mrb[0].mxu0
      %v1737 = vadd.f32 0.0, %v1736
      %v1738 = vpop.f32.mrb[0].mxu0
      %v1739 = vpop.f32.mrb[0].mxu0
      %v1740 = vadd.f32 0.0, %v1739
      %v1741 = vpop.f32.mrb[0].mxu0
      %1742 = vmatprep.mubr.bf16.mxu0 0
      %1743 = vmatmul.mubr.bf16.gmra.mrb[0].mxu0 %v1609
      %v1744 = vpop.f32.mrb[0].mxu0
      %v1745 = vadd.f32 0.0, %v1744
      %v1746 = vpop.f32.mrb[0].mxu0
      %v1747 = vpop.f32.mrb[0].mxu0
      %v1748 = vadd.f32 0.0, %v1747
      %v1749 = vpop.f32.mrb[0].mxu0
      %1750 = vmatprep.mubr.bf16.mxu0 0
      %1751 = vmatmul.mubr.bf16.gmra.mrb[0].mxu0 %v1610
      %v1752 = vpop.f32.mrb[0].mxu0
      %v1753 = vadd.f32 0.0, %v1752
      %v1754 = vpop.f32.mrb[0].mxu0
      %v1755 = vpop.f32.mrb[0].mxu0
      %v1756 = vadd.f32 0.0, %v1755
      %v1757 = vpop.f32.mrb[0].mxu0
      %1758 = vmatprep.mubr.bf16.mxu0 0
      %1759 = vmatmul.mubr.bf16.gmra.mrb[0].mxu0 %v1611
      %v1760 = vpop.f32.mrb[0].mxu0
      %v1761 = vadd.f32 0.0, %v1760
      %v1762 = vpop.f32.mrb[0].mxu0
      %v1763 = vpop.f32.mrb[0].mxu0
      %v1764 = vadd.f32 0.0, %v1763
      %v1765 = vpop.f32.mrb[0].mxu0
      %1766 = vmatprep.mubr.bf16.mxu0 0
      %1767 = vmatmul.mubr.bf16.gmra.mrb[0].mxu0 %v1612
      %v1768 = vpop.f32.mrb[0].mxu0
      %v1769 = vadd.f32 0.0, %v1768
      %v1770 = vpop.f32.mrb[0].mxu0
      %v1771 = vpop.f32.mrb[0].mxu0
      %v1772 = vadd.f32 0.0, %v1771
      %v1773 = vpop.f32.mrb[0].mxu0
      %1774 = vmatprep.mubr.bf16.mxu0 0
      %1775 = vmatmul.mubr.bf16.gmra.mrb[0].mxu0 %v1613
      %v1776 = vpop.f32.mrb[0].mxu0
      %v1777 = vadd.f32 0.0, %v1776
      %v1778 = vpop.f32.mrb[0].mxu0
      %v1779 = vpop.f32.mrb[0].mxu0
      %v1780 = vadd.f32 0.0, %v1779
      %v1781 = vpop.f32.mrb[0].mxu0
      %1782 = vmatprep.mubr.bf16.mxu0 0
      %1783 = vmatmul.mubr.bf16.gmra.mrb[0].mxu0 %v1614
      %v1784 = vpop.f32.mrb[0].mxu0
      %v1785 = vadd.f32 0.0, %v1784
      %v1786 = vpop.f32.mrb[0].mxu0
      %v1787 = vpop.f32.mrb[0].mxu0
      %v1788 = vadd.f32 0.0, %v1787
      %v1789 = vpop.f32.mrb[0].mxu0
      %1790 = vmatprep.mubr.bf16.mxu0 0
      %1791 = vmatmul.mubr.bf16.gmra.mrb[0].mxu0 %v1615
      %v1792 = vpop.f32.mrb[0].mxu0
      %v1793 = vadd.f32 0.0, %v1792
      %v1794 = vpop.f32.mrb[0].mxu0
      %v1795 = vpop.f32.mrb[0].mxu0
      %v1796 = vadd.f32 0.0, %v1795
      %v1797 = vpop.f32.mrb[0].mxu0
      %1798 = vmatprep.mubr.bf16.mxu0 0
      %1799 = vmatmul.mubr.bf16.gmra.mrb[0].mxu0 %v1616
      %v1800 = vpop.f32.mrb[0].mxu0
      %v1801 = vadd.f32 0.0, %v1800
      %v1802 = vpop.f32.mrb[0].mxu0
      %v1803 = vpop.f32.mrb[0].mxu0
      %v1804 = vadd.f32 0.0, %v1803
      %v1805 = vpop.f32.mrb[0].mxu0
      %1806 = vmatprep.mubr.bf16.mxu0 0
      %1807 = vmatmul.mubr.bf16.gmra.mrb[0].mxu0 %v1617
      %v1808 = vpop.f32.mrb[0].mxu0
      %v1809 = vadd.f32 0.0, %v1808
      %v1810 = vpop.f32.mrb[0].mxu0
      %v1811 = vpop.f32.mrb[0].mxu0
      %v1812 = vadd.f32 0.0, %v1811
      %v1813 = vpop.f32.mrb[0].mxu0
      %1814 = vmatprep.mubr.bf16.mxu0 0
      %1815 = vmatmul.mubr.bf16.gmra.mrb[0].mxu0 %v1618
      %v1816 = vpop.f32.mrb[0].mxu0
      %v1817 = vadd.f32 0.0, %v1816
      %v1818 = vpop.f32.mrb[0].mxu0
      %v1819 = vpop.f32.mrb[0].mxu0
      %v1820 = vadd.f32 0.0, %v1819
      %v1821 = vpop.f32.mrb[0].mxu0
      %1822 = vmatprep.mubr.bf16.mxu0 0
      %1823 = vmatmul.mubr.bf16.gmra.mrb[0].mxu0 %v1619
      %v1824 = vpop.f32.mrb[0].mxu0
      %v1825 = vadd.f32 0.0, %v1824
      %v1826 = vpop.f32.mrb[0].mxu0
      %v1827 = vpop.f32.mrb[0].mxu0
      %v1828 = vadd.f32 0.0, %v1827
      %v1829 = vpop.f32.mrb[0].mxu0
      %1830 = vmatprep.mubr.bf16.mxu0 0
      %1831 = vmatmul.mubr.bf16.gmra.mrb[0].mxu0 %v1620
      %v1832 = vpop.f32.mrb[0].mxu0
      %v1833 = vadd.f32 0.0, %v1832
      %v1834 = vpop.f32.mrb[0].mxu0
      %v1835 = vpop.f32.mrb[0].mxu0
      %v1836 = vadd.f32 0.0, %v1835
      %v1837 = vpop.f32.mrb[0].mxu0
      %1838 = vmatprep.mubr.bf16.mxu0 0
      %1839 = vmatmul.mubr.bf16.gmra.mrb[0].mxu0 %v1621
      %v1840 = vpop.f32.mrb[0].mxu0
      %v1841 = vadd.f32 0.0, %v1840
      %v1842 = vpop.f32.mrb[0].mxu0
      %v1843 = vpop.f32.mrb[0].mxu0
      %v1844 = vadd.f32 0.0, %v1843
      %v1845 = vpop.f32.mrb[0].mxu0
      %1846 = vdwg.mxu0
      %v1879 = vunpack.c.l.b16 %v1027
      %v1880 = vunpack.c.l.b16 %v1028
      %v1881 = vunpack.c.l.b16 %v1029
      %v1882 = vunpack.c.l.b16 %v1030
      %v1883 = vunpack.c.l.b16 %v1031
      %v1884 = vunpack.c.l.b16 %v1032
      %v1885 = vunpack.c.l.b16 %v1033
      %v1886 = vunpack.c.l.b16 %v1034
      %v1887 = vunpack.c.l.b16 %v1035
      %v1888 = vunpack.c.l.b16 %v1036
      %v1889 = vunpack.c.l.b16 %v1037
      %v1890 = vunpack.c.l.b16 %v1038
      %v1891 = vunpack.c.l.b16 %v1039
      %v1892 = vunpack.c.l.b16 %v1040
      %v1893 = vunpack.c.l.b16 %v1041
      %v1894 = vunpack.c.l.b16 %v1042
      %v1895 = vunpack.c.l.b16 %v1043
      %v1896 = vunpack.c.l.b16 %v1044
      %v1897 = vunpack.c.l.b16 %v1045
      %v1898 = vunpack.c.l.b16 %v1046
      %v1899 = vunpack.c.l.b16 %v1047
      %v1900 = vunpack.c.l.b16 %v1048
      %v1901 = vunpack.c.l.b16 %v1049
      %v1902 = vunpack.c.l.b16 %v1050
      %v1903 = vunpack.c.l.b16 %v1051
      %v1904 = vunpack.c.l.b16 %v1052
      %v1905 = vunpack.c.l.b16 %v1053
      %v1906 = vunpack.c.l.b16 %v1054
      %v1907 = vunpack.c.l.b16 %v1055
      %v1908 = vunpack.c.l.b16 %v1056
      %v1909 = vunpack.c.l.b16 %v1057
      %v1910 = vunpack.c.l.b16 %v1058
      %v1911 = vpack.c.b16 %v1880, %v1879
      %v1912 = vpack.c.b16 %v1882, %v1881
      %v1913 = vpack.c.b16 %v1884, %v1883
      %v1914 = vpack.c.b16 %v1886, %v1885
      %v1915 = vpack.c.b16 %v1888, %v1887
      %v1916 = vpack.c.b16 %v1890, %v1889
      %v1917 = vpack.c.b16 %v1892, %v1891
      %v1918 = vpack.c.b16 %v1894, %v1893
      %v1919 = vpack.c.b16 %v1896, %v1895
      %v1920 = vpack.c.b16 %v1898, %v1897
      %v1921 = vpack.c.b16 %v1900, %v1899
      %v1922 = vpack.c.b16 %v1902, %v1901
      %v1923 = vpack.c.b16 %v1904, %v1903
      %v1924 = vpack.c.b16 %v1906, %v1905
      %v1925 = vpack.c.b16 %v1908, %v1907
      %v1926 = vpack.c.b16 %v1910, %v1909
      %v1959 = vunpack.c.l.b16 %v1059
      %v1960 = vunpack.c.l.b16 %v1060
      %v1961 = vunpack.c.l.b16 %v1061
      %v1962 = vunpack.c.l.b16 %v1062
      %v1963 = vunpack.c.l.b16 %v1063
      %v1964 = vunpack.c.l.b16 %v1064
      %v1965 = vunpack.c.l.b16 %v1065
      %v1966 = vunpack.c.l.b16 %v1066
      %v1967 = vunpack.c.l.b16 %v1067
      %v1968 = vunpack.c.l.b16 %v1068
      %v1969 = vunpack.c.l.b16 %v1069
      %v1970 = vunpack.c.l.b16 %v1070
      %v1971 = vunpack.c.l.b16 %v1071
      %v1972 = vunpack.c.l.b16 %v1072
      %v1973 = vunpack.c.l.b16 %v1073
      %v1974 = vunpack.c.l.b16 %v1074
      %v1975 = vpack.c.b16 %v1960, %v1959
      %v1976 = vpack.c.b16 %v1962, %v1961
      %v1977 = vpack.c.b16 %v1964, %v1963
      %v1978 = vpack.c.b16 %v1966, %v1965
      %v1979 = vpack.c.b16 %v1968, %v1967
      %v1980 = vpack.c.b16 %v1970, %v1969
      %v1981 = vpack.c.b16 %v1972, %v1971
      %v1982 = vpack.c.b16 %v1974, %v1973
      %1991 = vmatprep.subr.bf16.mxu0 0
      %1992 = vmatpush1.bf16.msra.mxu0 %v1975
      %1993 = vmatprep.subr.bf16.mxu0 0
      %1994 = vmatpush1.bf16.msra.mxu0 %v1976
      %1995 = vmatprep.subr.bf16.mxu0 0
      %1996 = vmatpush1.bf16.msra.mxu0 %v1977
      %1997 = vmatprep.subr.bf16.mxu0 0
      %1998 = vmatpush1.bf16.msra.mxu0 %v1978
      %1999 = vmatprep.subr.bf16.mxu0 0
      %2000 = vmatpush1.bf16.msra.mxu0 %v1979
      %2001 = vmatprep.subr.bf16.mxu0 0
      %2002 = vmatpush1.bf16.msra.mxu0 %v1980
      %2003 = vmatprep.subr.bf16.mxu0 0
      %2004 = vmatpush1.bf16.msra.mxu0 %v1981
      %2005 = vmatprep.subr.bf16.mxu0 0
      %2006 = vmatpush1.bf16.msra.mxu0 %v1982
      %2007 = vmatprep.subr.bf16.mxu0 0
      %2008 = vmatpush1.bf16.msra.mxu0 0
      %2009 = vmatprep.subr.bf16.mxu0 0
      %2010 = vmatpush1.bf16.msra.mxu0 0
      %2011 = vmatprep.subr.bf16.mxu0 0
      %2012 = vmatpush1.bf16.msra.mxu0 0
      %2013 = vmatprep.subr.bf16.mxu0 0
      %2014 = vmatpush1.bf16.msra.mxu0 0
      %2015 = vmatprep.subr.bf16.mxu0 0
      %2016 = vmatpush1.bf16.msra.mxu0 0
      %2017 = vmatprep.subr.bf16.mxu0 0
      %2018 = vmatpush1.bf16.msra.mxu0 0
      %2019 = vmatprep.subr.bf16.mxu0 0
      %2020 = vmatpush1.bf16.msra.mxu0 0
      %2021 = vmatprep.subr.bf16.mxu0 0
      %2022 = vmatpush1.bf16.msra.mxu0 0
      %2023 = vmatprep.mubr.bf16.mxu0 0
      %2024 = vmatmul.mubr.bf16.gmra.mrb[0].mxu0 %v1911
      %v2025 = vpop.f32.mrb[0].mxu0
      %v2026 = vadd.f32 %v1721, %v2025
      %v2027 = vpop.f32.mrb[0].mxu0
      %v2028 = vpop.f32.mrb[0].mxu0
      %v2029 = vadd.f32 %v1724, %v2028
      %v2030 = vpop.f32.mrb[0].mxu0
      %2031 = vmatprep.mubr.bf16.mxu0 0
      %2032 = vmatmul.mubr.bf16.gmra.mrb[0].mxu0 %v1912
      %v2033 = vpop.f32.mrb[0].mxu0
      %v2034 = vadd.f32 %v1729, %v2033
      %v2035 = vpop.f32.mrb[0].mxu0
      %v2036 = vpop.f32.mrb[0].mxu0
      %v2037 = vadd.f32 %v1732, %v2036
      %v2038 = vpop.f32.mrb[0].mxu0
      %2039 = vmatprep.mubr.bf16.mxu0 0
      %2040 = vmatmul.mubr.bf16.gmra.mrb[0].mxu0 %v1913
      %v2041 = vpop.f32.mrb[0].mxu0
      %v2042 = vadd.f32 %v1737, %v2041
      %v2043 = vpop.f32.mrb[0].mxu0
      %v2044 = vpop.f32.mrb[0].mxu0
      %v2045 = vadd.f32 %v1740, %v2044
      %v2046 = vpop.f32.mrb[0].mxu0
      %2047 = vmatprep.mubr.bf16.mxu0 0
      %2048 = vmatmul.mubr.bf16.gmra.mrb[0].mxu0 %v1914
      %v2049 = vpop.f32.mrb[0].mxu0
      %v2050 = vadd.f32 %v1745, %v2049
      %v2051 = vpop.f32.mrb[0].mxu0
      %v2052 = vpop.f32.mrb[0].mxu0
      %v2053 = vadd.f32 %v1748, %v2052
      %v2054 = vpop.f32.mrb[0].mxu0
      %2055 = vmatprep.mubr.bf16.mxu0 0
      %2056 = vmatmul.mubr.bf16.gmra.mrb[0].mxu0 %v1915
      %v2057 = vpop.f32.mrb[0].mxu0
      %v2058 = vadd.f32 %v1753, %v2057
      %v2059 = vpop.f32.mrb[0].mxu0
      %v2060 = vpop.f32.mrb[0].mxu0
      %v2061 = vadd.f32 %v1756, %v2060
      %v2062 = vpop.f32.mrb[0].mxu0
      %2063 = vmatprep.mubr.bf16.mxu0 0
      %2064 = vmatmul.mubr.bf16.gmra.mrb[0].mxu0 %v1916
      %v2065 = vpop.f32.mrb[0].mxu0
      %v2066 = vadd.f32 %v1761, %v2065
      %v2067 = vpop.f32.mrb[0].mxu0
      %v2068 = vpop.f32.mrb[0].mxu0
      %v2069 = vadd.f32 %v1764, %v2068
      %v2070 = vpop.f32.mrb[0].mxu0
      %2071 = vmatprep.mubr.bf16.mxu0 0
      %2072 = vmatmul.mubr.bf16.gmra.mrb[0].mxu0 %v1917
      %v2073 = vpop.f32.mrb[0].mxu0
      %v2074 = vadd.f32 %v1769, %v2073
      %v2075 = vpop.f32.mrb[0].mxu0
      %v2076 = vpop.f32.mrb[0].mxu0
      %v2077 = vadd.f32 %v1772, %v2076
      %v2078 = vpop.f32.mrb[0].mxu0
      %2079 = vmatprep.mubr.bf16.mxu0 0
      %2080 = vmatmul.mubr.bf16.gmra.mrb[0].mxu0 %v1918
      %v2081 = vpop.f32.mrb[0].mxu0
      %v2082 = vadd.f32 %v1777, %v2081
      %v2083 = vpop.f32.mrb[0].mxu0
      %v2084 = vpop.f32.mrb[0].mxu0
      %v2085 = vadd.f32 %v1780, %v2084
      %v2086 = vpop.f32.mrb[0].mxu0
      %2087 = vmatprep.mubr.bf16.mxu0 0
      %2088 = vmatmul.mubr.bf16.gmra.mrb[0].mxu0 %v1919
      %v2089 = vpop.f32.mrb[0].mxu0
      %v2090 = vadd.f32 %v1785, %v2089
      %v2091 = vpop.f32.mrb[0].mxu0
      %v2092 = vpop.f32.mrb[0].mxu0
      %v2093 = vadd.f32 %v1788, %v2092
      %v2094 = vpop.f32.mrb[0].mxu0
      %2095 = vmatprep.mubr.bf16.mxu0 0
      %2096 = vmatmul.mubr.bf16.gmra.mrb[0].mxu0 %v1920
      %v2097 = vpop.f32.mrb[0].mxu0
      %v2098 = vadd.f32 %v1793, %v2097
      %v2099 = vpop.f32.mrb[0].mxu0
      %v2100 = vpop.f32.mrb[0].mxu0
      %v2101 = vadd.f32 %v1796, %v2100
      %v2102 = vpop.f32.mrb[0].mxu0
      %2103 = vmatprep.mubr.bf16.mxu0 0
      %2104 = vmatmul.mubr.bf16.gmra.mrb[0].mxu0 %v1921
      %v2105 = vpop.f32.mrb[0].mxu0
      %v2106 = vadd.f32 %v1801, %v2105
      %v2107 = vpop.f32.mrb[0].mxu0
      %v2108 = vpop.f32.mrb[0].mxu0
      %v2109 = vadd.f32 %v1804, %v2108
      %v2110 = vpop.f32.mrb[0].mxu0
      %2111 = vmatprep.mubr.bf16.mxu0 0
      %2112 = vmatmul.mubr.bf16.gmra.mrb[0].mxu0 %v1922
      %v2113 = vpop.f32.mrb[0].mxu0
      %v2114 = vadd.f32 %v1809, %v2113
      %v2115 = vpop.f32.mrb[0].mxu0
      %v2116 = vpop.f32.mrb[0].mxu0
      %v2117 = vadd.f32 %v1812, %v2116
      %v2118 = vpop.f32.mrb[0].mxu0
      %2119 = vmatprep.mubr.bf16.mxu0 0
      %2120 = vmatmul.mubr.bf16.gmra.mrb[0].mxu0 %v1923
      %v2121 = vpop.f32.mrb[0].mxu0
      %v2122 = vadd.f32 %v1817, %v2121
      %v2123 = vpop.f32.mrb[0].mxu0
      %v2124 = vpop.f32.mrb[0].mxu0
      %v2125 = vadd.f32 %v1820, %v2124
      %v2126 = vpop.f32.mrb[0].mxu0
      %2127 = vmatprep.mubr.bf16.mxu0 0
      %2128 = vmatmul.mubr.bf16.gmra.mrb[0].mxu0 %v1924
      %v2129 = vpop.f32.mrb[0].mxu0
      %v2130 = vadd.f32 %v1825, %v2129
      %v2131 = vpop.f32.mrb[0].mxu0
      %v2132 = vpop.f32.mrb[0].mxu0
      %v2133 = vadd.f32 %v1828, %v2132
      %v2134 = vpop.f32.mrb[0].mxu0
      %2135 = vmatprep.mubr.bf16.mxu0 0
      %2136 = vmatmul.mubr.bf16.gmra.mrb[0].mxu0 %v1925
      %v2137 = vpop.f32.mrb[0].mxu0
      %v2138 = vadd.f32 %v1833, %v2137
      %v2139 = vpop.f32.mrb[0].mxu0
      %v2140 = vpop.f32.mrb[0].mxu0
      %v2141 = vadd.f32 %v1836, %v2140
      %v2142 = vpop.f32.mrb[0].mxu0
      %2143 = vmatprep.mubr.bf16.mxu0 0
      %2144 = vmatmul.mubr.bf16.gmra.mrb[0].mxu0 %v1926
      %v2145 = vpop.f32.mrb[0].mxu0
      %v2146 = vadd.f32 %v1841, %v2145
      %v2147 = vpop.f32.mrb[0].mxu0
      %v2148 = vpop.f32.mrb[0].mxu0
      %v2149 = vadd.f32 %v1844, %v2148
      %v2150 = vpop.f32.mrb[0].mxu0
      %2151 = vdwg.mxu0
      %v2152 = vld [vmem:[#allocation2] sm:$0xe]
      %v2153 = vld [vmem:[#allocation2 + $0x8] sm:$0xe]
      %v2154 = vld [vmem:[#allocation2 + $0x10] sm:$0xe]
      %v2155 = vld [vmem:[#allocation2 + $0x18] sm:$0xe]
      %v2156 = vld [vmem:[#allocation2 + $0x20] sm:$0xe]
      %v2157 = vld [vmem:[#allocation2 + $0x28] sm:$0xe]
      %v2158 = vld [vmem:[#allocation2 + $0x30] sm:$0xe]
      %v2159 = vld [vmem:[#allocation2 + $0x38] sm:$0xe]
      %v2160 = vld [vmem:[#allocation2 + $0x50] sm:$0xe]
      %v2161 = vld [vmem:[#allocation2 + $0x58] sm:$0xe]
      %v2162 = vld [vmem:[#allocation2 + $0x60] sm:$0xe]
      %v2163 = vld [vmem:[#allocation2 + $0x68] sm:$0xe]
      %v2164 = vld [vmem:[#allocation2 + $0x70] sm:$0xe]
      %v2165 = vld [vmem:[#allocation2 + $0x78] sm:$0xe]
      %v2166 = vld [vmem:[#allocation2 + $0x80] sm:$0xe]
      %v2167 = vld [vmem:[#allocation2 + $0x88] sm:$0xe]
      %v2168 = vld [vmem:[#allocation2 + $0xa0] sm:$0xe]
      %v2169 = vld [vmem:[#allocation2 + $0xa8] sm:$0xe]
      %v2170 = vld [vmem:[#allocation2 + $0xb0] sm:$0xe]
      %v2171 = vld [vmem:[#allocation2 + $0xb8] sm:$0xe]
      %v2172 = vld [vmem:[#allocation2 + $0xc0] sm:$0xe]
      %v2173 = vld [vmem:[#allocation2 + $0xc8] sm:$0xe]
      %v2174 = vld [vmem:[#allocation2 + $0xd0] sm:$0xe]
      %v2175 = vld [vmem:[#allocation2 + $0xd8] sm:$0xe]
      %v2176 = vld [vmem:[#allocation2 + $0xf0] sm:$0xe]
      %v2177 = vld [vmem:[#allocation2 + $0xf8] sm:$0xe]
      %v2178 = vld [vmem:[#allocation2 + $0x100] sm:$0xe]
      %v2179 = vld [vmem:[#allocation2 + $0x108] sm:$0xe]
      %v2180 = vld [vmem:[#allocation2 + $0x110] sm:$0xe]
      %v2181 = vld [vmem:[#allocation2 + $0x118] sm:$0xe]
      %v2182 = vld [vmem:[#allocation2 + $0x120] sm:$0xe]
      %v2183 = vld [vmem:[#allocation2 + $0x128] sm:$0xe]
      %vm2248 = vcmask 1042432
      %vm2249 = vcmask 1046532
      %vm2250 = vmor %vm2248, %vm2249
      %v2251 = vrot.slane %v2152, 5
      %v2252 = vrot.slane %v2251, 4
      %v2253 = vrot.slane %v1075, 5
      %v2254 = vsel %vm2250, %v2252, %v2253
      %v2255 = vrot.slane %v2153, 5
      %v2256 = vrot.slane %v2255, 4
      %v2257 = vrot.slane %v1076, 5
      %v2258 = vsel %vm2250, %v2256, %v2257
      %v2259 = vrot.slane %v2154, 5
      %v2260 = vrot.slane %v2259, 4
      %v2261 = vrot.slane %v1077, 5
      %v2262 = vsel %vm2250, %v2260, %v2261
      %v2263 = vrot.slane %v2155, 5
      %v2264 = vrot.slane %v2263, 4
      %v2265 = vrot.slane %v1078, 5
      %v2266 = vsel %vm2250, %v2264, %v2265
      %v2267 = vrot.slane %v2156, 5
      %v2268 = vrot.slane %v2267, 4
      %v2269 = vrot.slane %v1079, 5
      %v2270 = vsel %vm2250, %v2268, %v2269
      %v2271 = vrot.slane %v2157, 5
      %v2272 = vrot.slane %v2271, 4
      %v2273 = vrot.slane %v1080, 5
      %v2274 = vsel %vm2250, %v2272, %v2273
      %v2275 = vrot.slane %v2158, 5
      %v2276 = vrot.slane %v2275, 4
      %v2277 = vrot.slane %v1081, 5
      %v2278 = vsel %vm2250, %v2276, %v2277
      %v2279 = vrot.slane %v2159, 5
      %v2280 = vrot.slane %v2279, 4
      %v2281 = vrot.slane %v1082, 5
      %v2282 = vsel %vm2250, %v2280, %v2281
      %v2283 = vrot.slane %v2160, 5
      %v2284 = vrot.slane %v2283, 4
      %v2285 = vrot.slane %v1083, 5
      %v2286 = vsel %vm2250, %v2284, %v2285
      %v2287 = vrot.slane %v2161, 5
      %v2288 = vrot.slane %v2287, 4
      %v2289 = vrot.slane %v1084, 5
      %v2290 = vsel %vm2250, %v2288, %v2289
      %v2291 = vrot.slane %v2162, 5
      %v2292 = vrot.slane %v2291, 4
      %v2293 = vrot.slane %v1085, 5
      %v2294 = vsel %vm2250, %v2292, %v2293
      %v2295 = vrot.slane %v2163, 5
      %v2296 = vrot.slane %v2295, 4
      %v2297 = vrot.slane %v1086, 5
      %v2298 = vsel %vm2250, %v2296, %v2297
      %v2299 = vrot.slane %v2164, 5
      %v2300 = vrot.slane %v2299, 4
      %v2301 = vrot.slane %v1087, 5
      %v2302 = vsel %vm2250, %v2300, %v2301
      %v2303 = vrot.slane %v2165, 5
      %v2304 = vrot.slane %v2303, 4
      %v2305 = vrot.slane %v1088, 5
      %v2306 = vsel %vm2250, %v2304, %v2305
      %v2307 = vrot.slane %v2166, 5
      %v2308 = vrot.slane %v2307, 4
      %v2309 = vrot.slane %v1089, 5
      %v2310 = vsel %vm2250, %v2308, %v2309
      %v2311 = vrot.slane %v2167, 5
      %v2312 = vrot.slane %v2311, 4
      %v2313 = vrot.slane %v1090, 5
      %v2314 = vsel %vm2250, %v2312, %v2313
      %v2315 = vrot.slane %v2168, 5
      %v2316 = vrot.slane %v2315, 4
      %v2317 = vrot.slane %v1091, 5
      %v2318 = vsel %vm2250, %v2316, %v2317
      %v2319 = vrot.slane %v2169, 5
      %v2320 = vrot.slane %v2319, 4
      %v2321 = vrot.slane %v1092, 5
      %v2322 = vsel %vm2250, %v2320, %v2321
      %v2323 = vrot.slane %v2170, 5
      %v2324 = vrot.slane %v2323, 4
      %v2325 = vrot.slane %v1093, 5
      %v2326 = vsel %vm2250, %v2324, %v2325
      %v2327 = vrot.slane %v2171, 5
      %v2328 = vrot.slane %v2327, 4
      %v2329 = vrot.slane %v1094, 5
      %v2330 = vsel %vm2250, %v2328, %v2329
      %v2331 = vrot.slane %v2172, 5
      %v2332 = vrot.slane %v2331, 4
      %v2333 = vrot.slane %v1095, 5
      %v2334 = vsel %vm2250, %v2332, %v2333
      %v2335 = vrot.slane %v2173, 5
      %v2336 = vrot.slane %v2335, 4
      %v2337 = vrot.slane %v1096, 5
      %v2338 = vsel %vm2250, %v2336, %v2337
      %v2339 = vrot.slane %v2174, 5
      %v2340 = vrot.slane %v2339, 4
      %v2341 = vrot.slane %v1097, 5
      %v2342 = vsel %vm2250, %v2340, %v2341
      %v2343 = vrot.slane %v2175, 5
      %v2344 = vrot.slane %v2343, 4
      %v2345 = vrot.slane %v1098, 5
      %v2346 = vsel %vm2250, %v2344, %v2345
      %v2347 = vrot.slane %v2176, 5
      %v2348 = vrot.slane %v2347, 4
      %v2349 = vrot.slane %v1099, 5
      %v2350 = vsel %vm2250, %v2348, %v2349
      %v2351 = vrot.slane %v2177, 5
      %v2352 = vrot.slane %v2351, 4
      %v2353 = vrot.slane %v1100, 5
      %v2354 = vsel %vm2250, %v2352, %v2353
      %v2355 = vrot.slane %v2178, 5
      %v2356 = vrot.slane %v2355, 4
      %v2357 = vrot.slane %v1101, 5
      %v2358 = vsel %vm2250, %v2356, %v2357
      %v2359 = vrot.slane %v2179, 5
      %v2360 = vrot.slane %v2359, 4
      %v2361 = vrot.slane %v1102, 5
      %v2362 = vsel %vm2250, %v2360, %v2361
      %v2363 = vrot.slane %v2180, 5
      %v2364 = vrot.slane %v2363, 4
      %v2365 = vrot.slane %v1103, 5
      %v2366 = vsel %vm2250, %v2364, %v2365
      %v2367 = vrot.slane %v2181, 5
      %v2368 = vrot.slane %v2367, 4
      %v2369 = vrot.slane %v1104, 5
      %v2370 = vsel %vm2250, %v2368, %v2369
      %v2371 = vrot.slane %v2182, 5
      %v2372 = vrot.slane %v2371, 4
      %v2373 = vrot.slane %v1105, 5
      %v2374 = vsel %vm2250, %v2372, %v2373
      %v2375 = vrot.slane %v2183, 5
      %v2376 = vrot.slane %v2375, 4
      %v2377 = vrot.slane %v1106, 5
      %v2378 = vsel %vm2250, %v2376, %v2377
      %v2379 = vld [vmem:[%s1 + $0x80] sm:$0xf]
      %v2380 = vld [vmem:[%s1 + $0x84] sm:$0xf]
      %v2381 = vld [vmem:[%s1 + $0x88] sm:$0xf]
      %v2382 = vld [vmem:[%s1 + $0x8c] sm:$0xf]
      %v2383 = vld [vmem:[%s1 + $0x90] sm:$0xf]
      %v2384 = vld [vmem:[%s1 + $0x94] sm:$0xf]
      %v2385 = vld [vmem:[%s1 + $0x98] sm:$0xf]
      %v2386 = vld [vmem:[%s1 + $0x9c] sm:$0xf]
      %v2387 = vld [vmem:[%s1 + $0xa0] sm:$0xf]
      %v2388 = vld [vmem:[%s1 + $0xa4] sm:$0xf]
      %v2389 = vld [vmem:[%s1 + $0xa8] sm:$0xf]
      %v2390 = vld [vmem:[%s1 + $0xac] sm:$0xf]
      %v2391 = vld [vmem:[%s1 + $0xb0] sm:$0xf]
      %v2392 = vld [vmem:[%s1 + $0xb4] sm:$0xf]
      %v2393 = vld [vmem:[%s1 + $0xb8] sm:$0xf]
      %v2394 = vld [vmem:[%s1 + $0xbc] sm:$0xf]
      %v2395 = vunpack.c.l.b16 %v2254
      %v2396 = vunpack.c.l.b16 %v2258
      %v2397 = vunpack.c.l.b16 %v2262
      %v2398 = vunpack.c.l.b16 %v2266
      %v2399 = vunpack.c.l.b16 %v2270
      %v2400 = vunpack.c.l.b16 %v2274
      %v2401 = vunpack.c.l.b16 %v2278
      %v2402 = vunpack.c.l.b16 %v2282
      %v2403 = vunpack.c.l.b16 %v2286
      %v2404 = vunpack.c.l.b16 %v2290
      %v2405 = vunpack.c.l.b16 %v2294
      %v2406 = vunpack.c.l.b16 %v2298
      %v2407 = vunpack.c.l.b16 %v2302
      %v2408 = vunpack.c.l.b16 %v2306
      %v2409 = vunpack.c.l.b16 %v2310
      %v2410 = vunpack.c.l.b16 %v2314
      %v2411 = vunpack.c.l.b16 %v2318
      %v2412 = vunpack.c.l.b16 %v2322
      %v2413 = vunpack.c.l.b16 %v2326
      %v2414 = vunpack.c.l.b16 %v2330
      %v2415 = vunpack.c.l.b16 %v2334
      %v2416 = vunpack.c.l.b16 %v2338
      %v2417 = vunpack.c.l.b16 %v2342
      %v2418 = vunpack.c.l.b16 %v2346
      %v2419 = vunpack.c.l.b16 %v2350
      %v2420 = vunpack.c.l.b16 %v2354
      %v2421 = vunpack.c.l.b16 %v2358
      %v2422 = vunpack.c.l.b16 %v2362
      %v2423 = vunpack.c.l.b16 %v2366
      %v2424 = vunpack.c.l.b16 %v2370
      %v2425 = vunpack.c.l.b16 %v2374
      %v2426 = vunpack.c.l.b16 %v2378
      %v2427 = vpack.c.b16 %v2396, %v2395
      %v2428 = vpack.c.b16 %v2398, %v2397
      %v2429 = vpack.c.b16 %v2400, %v2399
      %v2430 = vpack.c.b16 %v2402, %v2401
      %v2431 = vpack.c.b16 %v2404, %v2403
      %v2432 = vpack.c.b16 %v2406, %v2405
      %v2433 = vpack.c.b16 %v2408, %v2407
      %v2434 = vpack.c.b16 %v2410, %v2409
      %v2435 = vpack.c.b16 %v2412, %v2411
      %v2436 = vpack.c.b16 %v2414, %v2413
      %v2437 = vpack.c.b16 %v2416, %v2415
      %v2438 = vpack.c.b16 %v2418, %v2417
      %v2439 = vpack.c.b16 %v2420, %v2419
      %v2440 = vpack.c.b16 %v2422, %v2421
      %v2441 = vpack.c.b16 %v2424, %v2423
      %v2442 = vpack.c.b16 %v2426, %v2425
      %v2475 = vunpack.c.l.b16 %v2379
      %v2476 = vunpack.c.l.b16 %v2380
      %v2477 = vunpack.c.l.b16 %v2381
      %v2478 = vunpack.c.l.b16 %v2382
      %v2479 = vunpack.c.l.b16 %v2383
      %v2480 = vunpack.c.l.b16 %v2384
      %v2481 = vunpack.c.l.b16 %v2385
      %v2482 = vunpack.c.l.b16 %v2386
      %v2483 = vunpack.c.l.b16 %v2387
      %v2484 = vunpack.c.l.b16 %v2388
      %v2485 = vunpack.c.l.b16 %v2389
      %v2486 = vunpack.c.l.b16 %v2390
      %v2487 = vunpack.c.l.b16 %v2391
      %v2488 = vunpack.c.l.b16 %v2392
      %v2489 = vunpack.c.l.b16 %v2393
      %v2490 = vunpack.c.l.b16 %v2394
      %v2491 = vpack.c.b16 %v2476, %v2475
      %v2492 = vpack.c.b16 %v2478, %v2477
      %v2493 = vpack.c.b16 %v2480, %v2479
      %v2494 = vpack.c.b16 %v2482, %v2481
      %v2495 = vpack.c.b16 %v2484, %v2483
      %v2496 = vpack.c.b16 %v2486, %v2485
      %v2497 = vpack.c.b16 %v2488, %v2487
      %v2498 = vpack.c.b16 %v2490, %v2489
      %2507 = vmatprep.subr.bf16.mxu0 0
      %2508 = vmatpush1.bf16.msra.mxu0 %v2491
      %2509 = vmatprep.subr.bf16.mxu0 0
      %2510 = vmatpush1.bf16.msra.mxu0 %v2492
      %2511 = vmatprep.subr.bf16.mxu0 0
      %2512 = vmatpush1.bf16.msra.mxu0 %v2493
      %2513 = vmatprep.subr.bf16.mxu0 0
      %2514 = vmatpush1.bf16.msra.mxu0 %v2494
      %2515 = vmatprep.subr.bf16.mxu0 0
      %2516 = vmatpush1.bf16.msra.mxu0 %v2495
      %2517 = vmatprep.subr.bf16.mxu0 0
      %2518 = vmatpush1.bf16.msra.mxu0 %v2496
      %2519 = vmatprep.subr.bf16.mxu0 0
      %2520 = vmatpush1.bf16.msra.mxu0 %v2497
      %2521 = vmatprep.subr.bf16.mxu0 0
      %2522 = vmatpush1.bf16.msra.mxu0 %v2498
      %2523 = vmatprep.subr.bf16.mxu0 0
      %2524 = vmatpush1.bf16.msra.mxu0 0
      %2525 = vmatprep.subr.bf16.mxu0 0
      %2526 = vmatpush1.bf16.msra.mxu0 0
      %2527 = vmatprep.subr.bf16.mxu0 0
      %2528 = vmatpush1.bf16.msra.mxu0 0
      %2529 = vmatprep.subr.bf16.mxu0 0
      %2530 = vmatpush1.bf16.msra.mxu0 0
      %2531 = vmatprep.subr.bf16.mxu0 0
      %2532 = vmatpush1.bf16.msra.mxu0 0
      %2533 = vmatprep.subr.bf16.mxu0 0
      %2534 = vmatpush1.bf16.msra.mxu0 0
      %2535 = vmatprep.subr.bf16.mxu0 0
      %2536 = vmatpush1.bf16.msra.mxu0 0
      %2537 = vmatprep.subr.bf16.mxu0 0
      %2538 = vmatpush1.bf16.msra.mxu0 0
      %2539 = vmatprep.mubr.bf16.mxu0 0
      %2540 = vmatmul.mubr.bf16.gmra.mrb[0].mxu0 %v2427
      %v2541 = vpop.f32.mrb[0].mxu0
      %v2542 = vadd.f32 0.0, %v2541
      %v2543 = vpop.f32.mrb[0].mxu0
      %v2544 = vpop.f32.mrb[0].mxu0
      %v2545 = vadd.f32 0.0, %v2544
      %v2546 = vpop.f32.mrb[0].mxu0
      %2547 = vmatprep.mubr.bf16.mxu0 0
      %2548 = vmatmul.mubr.bf16.gmra.mrb[0].mxu0 %v2428
      %v2549 = vpop.f32.mrb[0].mxu0
      %v2550 = vadd.f32 0.0, %v2549
      %v2551 = vpop.f32.mrb[0].mxu0
      %v2552 = vpop.f32.mrb[0].mxu0
      %v2553 = vadd.f32 0.0, %v2552
      %v2554 = vpop.f32.mrb[0].mxu0
      %2555 = vmatprep.mubr.bf16.mxu0 0
      %2556 = vmatmul.mubr.bf16.gmra.mrb[0].mxu0 %v2429
      %v2557 = vpop.f32.mrb[0].mxu0
      %v2558 = vadd.f32 0.0, %v2557
      %v2559 = vpop.f32.mrb[0].mxu0
      %v2560 = vpop.f32.mrb[0].mxu0
      %v2561 = vadd.f32 0.0, %v2560
      %v2562 = vpop.f32.mrb[0].mxu0
      %2563 = vmatprep.mubr.bf16.mxu0 0
      %2564 = vmatmul.mubr.bf16.gmra.mrb[0].mxu0 %v2430
      %v2565 = vpop.f32.mrb[0].mxu0
      %v2566 = vadd.f32 0.0, %v2565
      %v2567 = vpop.f32.mrb[0].mxu0
      %v2568 = vpop.f32.mrb[0].mxu0
      %v2569 = vadd.f32 0.0, %v2568
      %v2570 = vpop.f32.mrb[0].mxu0
      %2571 = vmatprep.mubr.bf16.mxu0 0
      %2572 = vmatmul.mubr.bf16.gmra.mrb[0].mxu0 %v2431
      %v2573 = vpop.f32.mrb[0].mxu0
      %v2574 = vadd.f32 0.0, %v2573
      %v2575 = vpop.f32.mrb[0].mxu0
      %v2576 = vpop.f32.mrb[0].mxu0
      %v2577 = vadd.f32 0.0, %v2576
      %v2578 = vpop.f32.mrb[0].mxu0
      %2579 = vmatprep.mubr.bf16.mxu0 0
      %2580 = vmatmul.mubr.bf16.gmra.mrb[0].mxu0 %v2432
      %v2581 = vpop.f32.mrb[0].mxu0
      %v2582 = vadd.f32 0.0, %v2581
      %v2583 = vpop.f32.mrb[0].mxu0
      %v2584 = vpop.f32.mrb[0].mxu0
      %v2585 = vadd.f32 0.0, %v2584
      %v2586 = vpop.f32.mrb[0].mxu0
      %2587 = vmatprep.mubr.bf16.mxu0 0
      %2588 = vmatmul.mubr.bf16.gmra.mrb[0].mxu0 %v2433
      %v2589 = vpop.f32.mrb[0].mxu0
      %v2590 = vadd.f32 0.0, %v2589
      %v2591 = vpop.f32.mrb[0].mxu0
      %v2592 = vpop.f32.mrb[0].mxu0
      %v2593 = vadd.f32 0.0, %v2592
      %v2594 = vpop.f32.mrb[0].mxu0
      %2595 = vmatprep.mubr.bf16.mxu0 0
      %2596 = vmatmul.mubr.bf16.gmra.mrb[0].mxu0 %v2434
      %v2597 = vpop.f32.mrb[0].mxu0
      %v2598 = vadd.f32 0.0, %v2597
      %v2599 = vpop.f32.mrb[0].mxu0
      %v2600 = vpop.f32.mrb[0].mxu0
      %v2601 = vadd.f32 0.0, %v2600
      %v2602 = vpop.f32.mrb[0].mxu0
      %2603 = vmatprep.mubr.bf16.mxu0 0
      %2604 = vmatmul.mubr.bf16.gmra.mrb[0].mxu0 %v2435
      %v2605 = vpop.f32.mrb[0].mxu0
      %v2606 = vadd.f32 0.0, %v2605
      %v2607 = vpop.f32.mrb[0].mxu0
      %v2608 = vpop.f32.mrb[0].mxu0
      %v2609 = vadd.f32 0.0, %v2608
      %v2610 = vpop.f32.mrb[0].mxu0
      %2611 = vmatprep.mubr.bf16.mxu0 0
      %2612 = vmatmul.mubr.bf16.gmra.mrb[0].mxu0 %v2436
      %v2613 = vpop.f32.mrb[0].mxu0
      %v2614 = vadd.f32 0.0, %v2613
      %v2615 = vpop.f32.mrb[0].mxu0
      %v2616 = vpop.f32.mrb[0].mxu0
      %v2617 = vadd.f32 0.0, %v2616
      %v2618 = vpop.f32.mrb[0].mxu0
      %2619 = vmatprep.mubr.bf16.mxu0 0
      %2620 = vmatmul.mubr.bf16.gmra.mrb[0].mxu0 %v2437
      %v2621 = vpop.f32.mrb[0].mxu0
      %v2622 = vadd.f32 0.0, %v2621
      %v2623 = vpop.f32.mrb[0].mxu0
      %v2624 = vpop.f32.mrb[0].mxu0
      %v2625 = vadd.f32 0.0, %v2624
      %v2626 = vpop.f32.mrb[0].mxu0
      %2627 = vmatprep.mubr.bf16.mxu0 0
      %2628 = vmatmul.mubr.bf16.gmra.mrb[0].mxu0 %v2438
      %v2629 = vpop.f32.mrb[0].mxu0
      %v2630 = vadd.f32 0.0, %v2629
      %v2631 = vpop.f32.mrb[0].mxu0
      %v2632 = vpop.f32.mrb[0].mxu0
      %v2633 = vadd.f32 0.0, %v2632
      %v2634 = vpop.f32.mrb[0].mxu0
      %2635 = vmatprep.mubr.bf16.mxu0 0
      %2636 = vmatmul.mubr.bf16.gmra.mrb[0].mxu0 %v2439
      %v2637 = vpop.f32.mrb[0].mxu0
      %v2638 = vadd.f32 0.0, %v2637
      %v2639 = vpop.f32.mrb[0].mxu0
      %v2640 = vpop.f32.mrb[0].mxu0
      %v2641 = vadd.f32 0.0, %v2640
      %v2642 = vpop.f32.mrb[0].mxu0
      %2643 = vmatprep.mubr.bf16.mxu0 0
      %2644 = vmatmul.mubr.bf16.gmra.mrb[0].mxu0 %v2440
      %v2645 = vpop.f32.mrb[0].mxu0
      %v2646 = vadd.f32 0.0, %v2645
      %v2647 = vpop.f32.mrb[0].mxu0
      %v2648 = vpop.f32.mrb[0].mxu0
      %v2649 = vadd.f32 0.0, %v2648
      %v2650 = vpop.f32.mrb[0].mxu0
      %2651 = vmatprep.mubr.bf16.mxu0 0
      %2652 = vmatmul.mubr.bf16.gmra.mrb[0].mxu0 %v2441
      %v2653 = vpop.f32.mrb[0].mxu0
      %v2654 = vadd.f32 0.0, %v2653
      %v2655 = vpop.f32.mrb[0].mxu0
      %v2656 = vpop.f32.mrb[0].mxu0
      %v2657 = vadd.f32 0.0, %v2656
      %v2658 = vpop.f32.mrb[0].mxu0
      %2659 = vmatprep.mubr.bf16.mxu0 0
      %2660 = vmatmul.mubr.bf16.gmra.mrb[0].mxu0 %v2442
      %v2661 = vpop.f32.mrb[0].mxu0
      %v2662 = vadd.f32 0.0, %v2661
      %v2663 = vpop.f32.mrb[0].mxu0
      %v2664 = vpop.f32.mrb[0].mxu0
      %v2665 = vadd.f32 0.0, %v2664
      %v2666 = vpop.f32.mrb[0].mxu0
      %2667 = vdwg.mxu0
      %v2668 = vadd.f32 %v2026, %v2542
      %v2669 = vadd.f32 %v2029, %v2545
      %v2670 = vadd.f32 %v2034, %v2550
      %v2671 = vadd.f32 %v2037, %v2553
      %v2672 = vadd.f32 %v2042, %v2558
      %v2673 = vadd.f32 %v2045, %v2561
      %v2674 = vadd.f32 %v2050, %v2566
      %v2675 = vadd.f32 %v2053, %v2569
      %v2676 = vadd.f32 %v2058, %v2574
      %v2677 = vadd.f32 %v2061, %v2577
      %v2678 = vadd.f32 %v2066, %v2582
      %v2679 = vadd.f32 %v2069, %v2585
      %v2680 = vadd.f32 %v2074, %v2590
      %v2681 = vadd.f32 %v2077, %v2593
      %v2682 = vadd.f32 %v2082, %v2598
      %v2683 = vadd.f32 %v2085, %v2601
      %v2684 = vadd.f32 %v2090, %v2606
      %v2685 = vadd.f32 %v2093, %v2609
      %v2686 = vadd.f32 %v2098, %v2614
      %v2687 = vadd.f32 %v2101, %v2617
      %v2688 = vadd.f32 %v2106, %v2622
      %v2689 = vadd.f32 %v2109, %v2625
      %v2690 = vadd.f32 %v2114, %v2630
      %v2691 = vadd.f32 %v2117, %v2633
      %v2692 = vadd.f32 %v2122, %v2638
      %v2693 = vadd.f32 %v2125, %v2641
      %v2694 = vadd.f32 %v2130, %v2646
      %v2695 = vadd.f32 %v2133, %v2649
      %v2696 = vadd.f32 %v2138, %v2654
      %v2697 = vadd.f32 %v2141, %v2657
      %v2698 = vadd.f32 %v2146, %v2662
      %v2699 = vadd.f32 %v2149, %v2665
      %v2700 = vld [vmem:[%s832] sm:$0xf]
      %v2701 = vld [vmem:[%s832 + $0x8] sm:$0xf]
      %v2702 = vld [vmem:[%s832 + $0x10] sm:$0xf]
      %v2703 = vld [vmem:[%s832 + $0x18] sm:$0xf]
      %v2704 = vld [vmem:[%s832 + $0x20] sm:$0xf]
      %v2705 = vld [vmem:[%s832 + $0x28] sm:$0xf]
      %v2706 = vld [vmem:[%s832 + $0x30] sm:$0xf]
      %v2707 = vld [vmem:[%s832 + $0x38] sm:$0xf]
      %v2708 = vld [vmem:[%s832 + $0x50] sm:$0xf]
      %v2709 = vld [vmem:[%s832 + $0x58] sm:$0xf]
      %v2710 = vld [vmem:[%s832 + $0x60] sm:$0xf]
      %v2711 = vld [vmem:[%s832 + $0x68] sm:$0xf]
      %v2712 = vld [vmem:[%s832 + $0x70] sm:$0xf]
      %v2713 = vld [vmem:[%s832 + $0x78] sm:$0xf]
      %v2714 = vld [vmem:[%s832 + $0x80] sm:$0xf]
      %v2715 = vld [vmem:[%s832 + $0x88] sm:$0xf]
      %v2716 = vld [vmem:[%s832 + $0xa0] sm:$0xf]
      %v2717 = vld [vmem:[%s832 + $0xa8] sm:$0xf]
      %v2718 = vld [vmem:[%s832 + $0xb0] sm:$0xf]
      %v2719 = vld [vmem:[%s832 + $0xb8] sm:$0xf]
      %v2720 = vld [vmem:[%s832 + $0xc0] sm:$0xf]
      %v2721 = vld [vmem:[%s832 + $0xc8] sm:$0xf]
      %v2722 = vld [vmem:[%s832 + $0xd0] sm:$0xf]
      %v2723 = vld [vmem:[%s832 + $0xd8] sm:$0xf]
      %v2724 = vld [vmem:[%s832 + $0xf0] sm:$0xf]
      %v2725 = vld [vmem:[%s832 + $0xf8] sm:$0xf]
      %v2726 = vld [vmem:[%s832 + $0x100] sm:$0xf]
      %v2727 = vld [vmem:[%s832 + $0x108] sm:$0xf]
      %v2728 = vld [vmem:[%s832 + $0x110] sm:$0xf]
      %v2729 = vld [vmem:[%s832 + $0x118] sm:$0xf]
      %v2730 = vld [vmem:[%s832 + $0x120] sm:$0xf]
      %v2731 = vld [vmem:[%s832 + $0x128] sm:$0xf]
      %v2732 = vld [vmem:[%s1 + $0xc0] sm:$0xf]
      %v2733 = vld [vmem:[%s1 + $0xc4] sm:$0xf]
      %v2734 = vld [vmem:[%s1 + $0xc8] sm:$0xf]
      %v2735 = vld [vmem:[%s1 + $0xcc] sm:$0xf]
      %v2736 = vld [vmem:[%s1 + $0xd0] sm:$0xf]
      %v2737 = vld [vmem:[%s1 + $0xd4] sm:$0xf]
      %v2738 = vld [vmem:[%s1 + $0xd8] sm:$0xf]
      %v2739 = vld [vmem:[%s1 + $0xdc] sm:$0xf]
      %v2740 = vld [vmem:[%s1 + $0xe0] sm:$0xf]
      %v2741 = vld [vmem:[%s1 + $0xe4] sm:$0xf]
      %v2742 = vld [vmem:[%s1 + $0xe8] sm:$0xf]
      %v2743 = vld [vmem:[%s1 + $0xec] sm:$0xf]
      %v2744 = vld [vmem:[%s1 + $0xf0] sm:$0xf]
      %v2745 = vld [vmem:[%s1 + $0xf4] sm:$0xf]
      %v2746 = vld [vmem:[%s1 + $0xf8] sm:$0xf]
      %v2747 = vld [vmem:[%s1 + $0xfc] sm:$0xf]
      %v2780 = vunpack.c.l.b16 %v2700
      %v2781 = vunpack.c.l.b16 %v2701
      %v2782 = vunpack.c.l.b16 %v2702
      %v2783 = vunpack.c.l.b16 %v2703
      %v2784 = vunpack.c.l.b16 %v2704
      %v2785 = vunpack.c.l.b16 %v2705
      %v2786 = vunpack.c.l.b16 %v2706
      %v2787 = vunpack.c.l.b16 %v2707
      %v2788 = vunpack.c.l.b16 %v2708
      %v2789 = vunpack.c.l.b16 %v2709
      %v2790 = vunpack.c.l.b16 %v2710
      %v2791 = vunpack.c.l.b16 %v2711
      %v2792 = vunpack.c.l.b16 %v2712
      %v2793 = vunpack.c.l.b16 %v2713
      %v2794 = vunpack.c.l.b16 %v2714
      %v2795 = vunpack.c.l.b16 %v2715
      %v2796 = vunpack.c.l.b16 %v2716
      %v2797 = vunpack.c.l.b16 %v2717
      %v2798 = vunpack.c.l.b16 %v2718
      %v2799 = vunpack.c.l.b16 %v2719
      %v2800 = vunpack.c.l.b16 %v2720
      %v2801 = vunpack.c.l.b16 %v2721
      %v2802 = vunpack.c.l.b16 %v2722
      %v2803 = vunpack.c.l.b16 %v2723
      %v2804 = vunpack.c.l.b16 %v2724
      %v2805 = vunpack.c.l.b16 %v2725
      %v2806 = vunpack.c.l.b16 %v2726
      %v2807 = vunpack.c.l.b16 %v2727
      %v2808 = vunpack.c.l.b16 %v2728
      %v2809 = vunpack.c.l.b16 %v2729
      %v2810 = vunpack.c.l.b16 %v2730
      %v2811 = vunpack.c.l.b16 %v2731
      %v2812 = vpack.c.b16 %v2781, %v2780
      %v2813 = vpack.c.b16 %v2783, %v2782
      %v2814 = vpack.c.b16 %v2785, %v2784
      %v2815 = vpack.c.b16 %v2787, %v2786
      %v2816 = vpack.c.b16 %v2789, %v2788
      %v2817 = vpack.c.b16 %v2791, %v2790
      %v2818 = vpack.c.b16 %v2793, %v2792
      %v2819 = vpack.c.b16 %v2795, %v2794
      %v2820 = vpack.c.b16 %v2797, %v2796
      %v2821 = vpack.c.b16 %v2799, %v2798
      %v2822 = vpack.c.b16 %v2801, %v2800
      %v2823 = vpack.c.b16 %v2803, %v2802
      %v2824 = vpack.c.b16 %v2805, %v2804
      %v2825 = vpack.c.b16 %v2807, %v2806
      %v2826 = vpack.c.b16 %v2809, %v2808
      %v2827 = vpack.c.b16 %v2811, %v2810
      %v2860 = vunpack.c.l.b16 %v2732
      %v2861 = vunpack.c.l.b16 %v2733
      %v2862 = vunpack.c.l.b16 %v2734
      %v2863 = vunpack.c.l.b16 %v2735
      %v2864 = vunpack.c.l.b16 %v2736
      %v2865 = vunpack.c.l.b16 %v2737
      %v2866 = vunpack.c.l.b16 %v2738
      %v2867 = vunpack.c.l.b16 %v2739
      %v2868 = vunpack.c.l.b16 %v2740
      %v2869 = vunpack.c.l.b16 %v2741
      %v2870 = vunpack.c.l.b16 %v2742
      %v2871 = vunpack.c.l.b16 %v2743
      %v2872 = vunpack.c.l.b16 %v2744
      %v2873 = vunpack.c.l.b16 %v2745
      %v2874 = vunpack.c.l.b16 %v2746
      %v2875 = vunpack.c.l.b16 %v2747
      %v2876 = vpack.c.b16 %v2861, %v2860
      %v2877 = vpack.c.b16 %v2863, %v2862
      %v2878 = vpack.c.b16 %v2865, %v2864
      %v2879 = vpack.c.b16 %v2867, %v2866
      %v2880 = vpack.c.b16 %v2869, %v2868
      %v2881 = vpack.c.b16 %v2871, %v2870
      %v2882 = vpack.c.b16 %v2873, %v2872
      %v2883 = vpack.c.b16 %v2875, %v2874
      %2892 = vmatprep.subr.bf16.mxu0 0
      %2893 = vmatpush1.bf16.msra.mxu0 %v2876
      %2894 = vmatprep.subr.bf16.mxu0 0
      %2895 = vmatpush1.bf16.msra.mxu0 %v2877
      %2896 = vmatprep.subr.bf16.mxu0 0
      %2897 = vmatpush1.bf16.msra.mxu0 %v2878
      %2898 = vmatprep.subr.bf16.mxu0 0
      %2899 = vmatpush1.bf16.msra.mxu0 %v2879
      %2900 = vmatprep.subr.bf16.mxu0 0
      %2901 = vmatpush1.bf16.msra.mxu0 %v2880
      %2902 = vmatprep.subr.bf16.mxu0 0
      %2903 = vmatpush1.bf16.msra.mxu0 %v2881
      %2904 = vmatprep.subr.bf16.mxu0 0
      %2905 = vmatpush1.bf16.msra.mxu0 %v2882
      %2906 = vmatprep.subr.bf16.mxu0 0
      %2907 = vmatpush1.bf16.msra.mxu0 %v2883
      %2908 = vmatprep.subr.bf16.mxu0 0
      %2909 = vmatpush1.bf16.msra.mxu0 0
      %2910 = vmatprep.subr.bf16.mxu0 0
      %2911 = vmatpush1.bf16.msra.mxu0 0
      %2912 = vmatprep.subr.bf16.mxu0 0
      %2913 = vmatpush1.bf16.msra.mxu0 0
      %2914 = vmatprep.subr.bf16.mxu0 0
      %2915 = vmatpush1.bf16.msra.mxu0 0
      %2916 = vmatprep.subr.bf16.mxu0 0
      %2917 = vmatpush1.bf16.msra.mxu0 0
      %2918 = vmatprep.subr.bf16.mxu0 0
      %2919 = vmatpush1.bf16.msra.mxu0 0
      %2920 = vmatprep.subr.bf16.mxu0 0
      %2921 = vmatpush1.bf16.msra.mxu0 0
      %2922 = vmatprep.subr.bf16.mxu0 0
      %2923 = vmatpush1.bf16.msra.mxu0 0
      %2924 = vmatprep.mubr.bf16.mxu0 0
      %2925 = vmatmul.mubr.bf16.gmra.mrb[0].mxu0 %v2812
      %v2926 = vpop.f32.mrb[0].mxu0
      %v2927 = vadd.f32 0.0, %v2926
      %v2928 = vpop.f32.mrb[0].mxu0
      %v2929 = vpop.f32.mrb[0].mxu0
      %v2930 = vadd.f32 0.0, %v2929
      %v2931 = vpop.f32.mrb[0].mxu0
      %2932 = vmatprep.mubr.bf16.mxu0 0
      %2933 = vmatmul.mubr.bf16.gmra.mrb[0].mxu0 %v2813
      %v2934 = vpop.f32.mrb[0].mxu0
      %v2935 = vadd.f32 0.0, %v2934
      %v2936 = vpop.f32.mrb[0].mxu0
      %v2937 = vpop.f32.mrb[0].mxu0
      %v2938 = vadd.f32 0.0, %v2937
      %v2939 = vpop.f32.mrb[0].mxu0
      %2940 = vmatprep.mubr.bf16.mxu0 0
      %2941 = vmatmul.mubr.bf16.gmra.mrb[0].mxu0 %v2814
      %v2942 = vpop.f32.mrb[0].mxu0
      %v2943 = vadd.f32 0.0, %v2942
      %v2944 = vpop.f32.mrb[0].mxu0
      %v2945 = vpop.f32.mrb[0].mxu0
      %v2946 = vadd.f32 0.0, %v2945
      %v2947 = vpop.f32.mrb[0].mxu0
      %2948 = vmatprep.mubr.bf16.mxu0 0
      %2949 = vmatmul.mubr.bf16.gmra.mrb[0].mxu0 %v2815
      %v2950 = vpop.f32.mrb[0].mxu0
      %v2951 = vadd.f32 0.0, %v2950
      %v2952 = vpop.f32.mrb[0].mxu0
      %v2953 = vpop.f32.mrb[0].mxu0
      %v2954 = vadd.f32 0.0, %v2953
      %v2955 = vpop.f32.mrb[0].mxu0
      %2956 = vmatprep.mubr.bf16.mxu0 0
      %2957 = vmatmul.mubr.bf16.gmra.mrb[0].mxu0 %v2816
      %v2958 = vpop.f32.mrb[0].mxu0
      %v2959 = vadd.f32 0.0, %v2958
      %v2960 = vpop.f32.mrb[0].mxu0
      %v2961 = vpop.f32.mrb[0].mxu0
      %v2962 = vadd.f32 0.0, %v2961
      %v2963 = vpop.f32.mrb[0].mxu0
      %2964 = vmatprep.mubr.bf16.mxu0 0
      %2965 = vmatmul.mubr.bf16.gmra.mrb[0].mxu0 %v2817
      %v2966 = vpop.f32.mrb[0].mxu0
      %v2967 = vadd.f32 0.0, %v2966
      %v2968 = vpop.f32.mrb[0].mxu0
      %v2969 = vpop.f32.mrb[0].mxu0
      %v2970 = vadd.f32 0.0, %v2969
      %v2971 = vpop.f32.mrb[0].mxu0
      %2972 = vmatprep.mubr.bf16.mxu0 0
      %2973 = vmatmul.mubr.bf16.gmra.mrb[0].mxu0 %v2818
      %v2974 = vpop.f32.mrb[0].mxu0
      %v2975 = vadd.f32 0.0, %v2974
      %v2976 = vpop.f32.mrb[0].mxu0
      %v2977 = vpop.f32.mrb[0].mxu0
      %v2978 = vadd.f32 0.0, %v2977
      %v2979 = vpop.f32.mrb[0].mxu0
      %2980 = vmatprep.mubr.bf16.mxu0 0
      %2981 = vmatmul.mubr.bf16.gmra.mrb[0].mxu0 %v2819
      %v2982 = vpop.f32.mrb[0].mxu0
      %v2983 = vadd.f32 0.0, %v2982
      %v2984 = vpop.f32.mrb[0].mxu0
      %v2985 = vpop.f32.mrb[0].mxu0
      %v2986 = vadd.f32 0.0, %v2985
      %v2987 = vpop.f32.mrb[0].mxu0
      %2988 = vmatprep.mubr.bf16.mxu0 0
      %2989 = vmatmul.mubr.bf16.gmra.mrb[0].mxu0 %v2820
      %v2990 = vpop.f32.mrb[0].mxu0
      %v2991 = vadd.f32 0.0, %v2990
      %v2992 = vpop.f32.mrb[0].mxu0
      %v2993 = vpop.f32.mrb[0].mxu0
      %v2994 = vadd.f32 0.0, %v2993
      %v2995 = vpop.f32.mrb[0].mxu0
      %2996 = vmatprep.mubr.bf16.mxu0 0
      %2997 = vmatmul.mubr.bf16.gmra.mrb[0].mxu0 %v2821
      %v2998 = vpop.f32.mrb[0].mxu0
      %v2999 = vadd.f32 0.0, %v2998
      %v3000 = vpop.f32.mrb[0].mxu0
      %v3001 = vpop.f32.mrb[0].mxu0
      %v3002 = vadd.f32 0.0, %v3001
      %v3003 = vpop.f32.mrb[0].mxu0
      %3004 = vmatprep.mubr.bf16.mxu0 0
      %3005 = vmatmul.mubr.bf16.gmra.mrb[0].mxu0 %v2822
      %v3006 = vpop.f32.mrb[0].mxu0
      %v3007 = vadd.f32 0.0, %v3006
      %v3008 = vpop.f32.mrb[0].mxu0
      %v3009 = vpop.f32.mrb[0].mxu0
      %v3010 = vadd.f32 0.0, %v3009
      %v3011 = vpop.f32.mrb[0].mxu0
      %3012 = vmatprep.mubr.bf16.mxu0 0
      %3013 = vmatmul.mubr.bf16.gmra.mrb[0].mxu0 %v2823
      %v3014 = vpop.f32.mrb[0].mxu0
      %v3015 = vadd.f32 0.0, %v3014
      %v3016 = vpop.f32.mrb[0].mxu0
      %v3017 = vpop.f32.mrb[0].mxu0
      %v3018 = vadd.f32 0.0, %v3017
      %v3019 = vpop.f32.mrb[0].mxu0
      %3020 = vmatprep.mubr.bf16.mxu0 0
      %3021 = vmatmul.mubr.bf16.gmra.mrb[0].mxu0 %v2824
      %v3022 = vpop.f32.mrb[0].mxu0
      %v3023 = vadd.f32 0.0, %v3022
      %v3024 = vpop.f32.mrb[0].mxu0
      %v3025 = vpop.f32.mrb[0].mxu0
      %v3026 = vadd.f32 0.0, %v3025
      %v3027 = vpop.f32.mrb[0].mxu0
      %3028 = vmatprep.mubr.bf16.mxu0 0
      %3029 = vmatmul.mubr.bf16.gmra.mrb[0].mxu0 %v2825
      %v3030 = vpop.f32.mrb[0].mxu0
      %v3031 = vadd.f32 0.0, %v3030
      %v3032 = vpop.f32.mrb[0].mxu0
      %v3033 = vpop.f32.mrb[0].mxu0
      %v3034 = vadd.f32 0.0, %v3033
      %v3035 = vpop.f32.mrb[0].mxu0
      %3036 = vmatprep.mubr.bf16.mxu0 0
      %3037 = vmatmul.mubr.bf16.gmra.mrb[0].mxu0 %v2826
      %v3038 = vpop.f32.mrb[0].mxu0
      %v3039 = vadd.f32 0.0, %v3038
      %v3040 = vpop.f32.mrb[0].mxu0
      %v3041 = vpop.f32.mrb[0].mxu0
      %v3042 = vadd.f32 0.0, %v3041
      %v3043 = vpop.f32.mrb[0].mxu0
      %3044 = vmatprep.mubr.bf16.mxu0 0
      %3045 = vmatmul.mubr.bf16.gmra.mrb[0].mxu0 %v2827
      %v3046 = vpop.f32.mrb[0].mxu0
      %v3047 = vadd.f32 0.0, %v3046
      %v3048 = vpop.f32.mrb[0].mxu0
      %v3049 = vpop.f32.mrb[0].mxu0
      %v3050 = vadd.f32 0.0, %v3049
      %v3051 = vpop.f32.mrb[0].mxu0
      %3052 = vdwg.mxu0
      %v3053 = vadd.f32 %v2668, %v2927
      %v3054 = vadd.f32 %v2669, %v2930
      %v3055 = vadd.f32 %v2670, %v2935
      %v3056 = vadd.f32 %v2671, %v2938
      %v3057 = vadd.f32 %v2672, %v2943
      %v3058 = vadd.f32 %v2673, %v2946
      %v3059 = vadd.f32 %v2674, %v2951
      %v3060 = vadd.f32 %v2675, %v2954
      %v3061 = vadd.f32 %v2676, %v2959
      %v3062 = vadd.f32 %v2677, %v2962
      %v3063 = vadd.f32 %v2678, %v2967
      %v3064 = vadd.f32 %v2679, %v2970
      %v3065 = vadd.f32 %v2680, %v2975
      %v3066 = vadd.f32 %v2681, %v2978
      %v3067 = vadd.f32 %v2682, %v2983
      %v3068 = vadd.f32 %v2683, %v2986
      %v3069 = vadd.f32 %v2684, %v2991
      %v3070 = vadd.f32 %v2685, %v2994
      %v3071 = vadd.f32 %v2686, %v2999
      %v3072 = vadd.f32 %v2687, %v3002
      %v3073 = vadd.f32 %v2688, %v3007
      %v3074 = vadd.f32 %v2689, %v3010
      %v3075 = vadd.f32 %v2690, %v3015
      %v3076 = vadd.f32 %v2691, %v3018
      %v3077 = vadd.f32 %v2692, %v3023
      %v3078 = vadd.f32 %v2693, %v3026
      %v3079 = vadd.f32 %v2694, %v3031
      %v3080 = vadd.f32 %v2695, %v3034
      %v3081 = vadd.f32 %v2696, %v3039
      %v3082 = vadd.f32 %v2697, %v3042
      %v3083 = vadd.f32 %v2698, %v3047
      %v3084 = vadd.f32 %v2699, %v3050
      %v3085 = vld [vmem:[%s832] sm:$0xf]
      %v3086 = vld [vmem:[%s832 + $0x4] sm:$0x1]
      %v3087 = vld [vmem:[%s832 + $0x8] sm:$0xf]
      %v3088 = vld [vmem:[%s832 + $0xc] sm:$0x1]
      %v3089 = vld [vmem:[%s832 + $0x10] sm:$0xf]
      %v3090 = vld [vmem:[%s832 + $0x14] sm:$0x1]
      %v3091 = vld [vmem:[%s832 + $0x18] sm:$0xf]
      %v3092 = vld [vmem:[%s832 + $0x1c] sm:$0x1]
      %v3093 = vld [vmem:[%s832 + $0x20] sm:$0xf]
      %v3094 = vld [vmem:[%s832 + $0x24] sm:$0x1]
      %v3095 = vld [vmem:[%s832 + $0x28] sm:$0xf]
      %v3096 = vld [vmem:[%s832 + $0x2c] sm:$0x1]
      %v3097 = vld [vmem:[%s832 + $0x30] sm:$0xf]
      %v3098 = vld [vmem:[%s832 + $0x34] sm:$0x1]
      %v3099 = vld [vmem:[%s832 + $0x38] sm:$0xf]
      %v3100 = vld [vmem:[%s832 + $0x3c] sm:$0x1]
      %v3101 = vld [vmem:[%s832 + $0x50] sm:$0xf]
      %v3102 = vld [vmem:[%s832 + $0x54] sm:$0x1]
      %v3103 = vld [vmem:[%s832 + $0x58] sm:$0xf]
      %v3104 = vld [vmem:[%s832 + $0x5c] sm:$0x1]
      %v3105 = vld [vmem:[%s832 + $0x60] sm:$0xf]
      %v3106 = vld [vmem:[%s832 + $0x64] sm:$0x1]
      %v3107 = vld [vmem:[%s832 + $0x68] sm:$0xf]
      %v3108 = vld [vmem:[%s832 + $0x6c] sm:$0x1]
      %v3109 = vld [vmem:[%s832 + $0x70] sm:$0xf]
      %v3110 = vld [vmem:[%s832 + $0x74] sm:$0x1]
      %v3111 = vld [vmem:[%s832 + $0x78] sm:$0xf]
      %v3112 = vld [vmem:[%s832 + $0x7c] sm:$0x1]
      %v3113 = vld [vmem:[%s832 + $0x80] sm:$0xf]
      %v3114 = vld [vmem:[%s832 + $0x84] sm:$0x1]
      %v3115 = vld [vmem:[%s832 + $0x88] sm:$0xf]
      %v3116 = vld [vmem:[%s832 + $0x8c] sm:$0x1]
      %v3117 = vld [vmem:[%s832 + $0xa0] sm:$0xf]
      %v3118 = vld [vmem:[%s832 + $0xa4] sm:$0x1]
      %v3119 = vld [vmem:[%s832 + $0xa8] sm:$0xf]
      %v3120 = vld [vmem:[%s832 + $0xac] sm:$0x1]
      %v3121 = vld [vmem:[%s832 + $0xb0] sm:$0xf]
      %v3122 = vld [vmem:[%s832 + $0xb4] sm:$0x1]
      %v3123 = vld [vmem:[%s832 + $0xb8] sm:$0xf]
      %v3124 = vld [vmem:[%s832 + $0xbc] sm:$0x1]
      %v3125 = vld [vmem:[%s832 + $0xc0] sm:$0xf]
      %v3126 = vld [vmem:[%s832 + $0xc4] sm:$0x1]
      %v3127 = vld [vmem:[%s832 + $0xc8] sm:$0xf]
      %v3128 = vld [vmem:[%s832 + $0xcc] sm:$0x1]
      %v3129 = vld [vmem:[%s832 + $0xd0] sm:$0xf]
      %v3130 = vld [vmem:[%s832 + $0xd4] sm:$0x1]
      %v3131 = vld [vmem:[%s832 + $0xd8] sm:$0xf]
      %v3132 = vld [vmem:[%s832 + $0xdc] sm:$0x1]
      %v3133 = vld [vmem:[%s832 + $0xf0] sm:$0xf]
      %v3134 = vld [vmem:[%s832 + $0xf4] sm:$0x1]
      %v3135 = vld [vmem:[%s832 + $0xf8] sm:$0xf]
      %v3136 = vld [vmem:[%s832 + $0xfc] sm:$0x1]
      %v3137 = vld [vmem:[%s832 + $0x100] sm:$0xf]
      %v3138 = vld [vmem:[%s832 + $0x104] sm:$0x1]
      %v3139 = vld [vmem:[%s832 + $0x108] sm:$0xf]
      %v3140 = vld [vmem:[%s832 + $0x10c] sm:$0x1]
      %v3141 = vld [vmem:[%s832 + $0x110] sm:$0xf]
      %v3142 = vld [vmem:[%s832 + $0x114] sm:$0x1]
      %v3143 = vld [vmem:[%s832 + $0x118] sm:$0xf]
      %v3144 = vld [vmem:[%s832 + $0x11c] sm:$0x1]
      %v3145 = vld [vmem:[%s832 + $0x120] sm:$0xf]
      %v3146 = vld [vmem:[%s832 + $0x124] sm:$0x1]
      %v3147 = vld [vmem:[%s832 + $0x128] sm:$0xf]
      %v3148 = vld [vmem:[%s832 + $0x12c] sm:$0x1]
      %v3150 = vshrl.u32 %v3085, 16
      %v3152 = vrot.slane %v3150, 4
      %v3153 = vshll.u32 %v3085, 16
      %v3155 = vrot.slane %v3153, 5
      %v3156 = vor.u32 %v3152, %v3155
      %v3157 = vrot.slane %v3156, 4
      %v3159 = vshll.u32 %v3086, 16
      %v3161 = vrot.slane %v3159, 5
      %v3162 = vsel %vm1109, %v3157, %v3161
      %v3164 = vshrl.u32 %v3087, 16
      %v3166 = vrot.slane %v3164, 4
      %v3167 = vshll.u32 %v3087, 16
      %v3169 = vrot.slane %v3167, 5
      %v3170 = vor.u32 %v3166, %v3169
      %v3171 = vrot.slane %v3170, 4
      %v3173 = vshll.u32 %v3088, 16
      %v3175 = vrot.slane %v3173, 5
      %v3176 = vsel %vm1109, %v3171, %v3175
      %v3178 = vshrl.u32 %v3089, 16
      %v3180 = vrot.slane %v3178, 4
      %v3181 = vshll.u32 %v3089, 16
      %v3183 = vrot.slane %v3181, 5
      %v3184 = vor.u32 %v3180, %v3183
      %v3185 = vrot.slane %v3184, 4
      %v3187 = vshll.u32 %v3090, 16
      %v3189 = vrot.slane %v3187, 5
      %v3190 = vsel %vm1109, %v3185, %v3189
      %v3192 = vshrl.u32 %v3091, 16
      %v3194 = vrot.slane %v3192, 4
      %v3195 = vshll.u32 %v3091, 16
      %v3197 = vrot.slane %v3195, 5
      %v3198 = vor.u32 %v3194, %v3197
      %v3199 = vrot.slane %v3198, 4
      %v3201 = vshll.u32 %v3092, 16
      %v3203 = vrot.slane %v3201, 5
      %v3204 = vsel %vm1109, %v3199, %v3203
      %v3206 = vshrl.u32 %v3093, 16
      %v3208 = vrot.slane %v3206, 4
      %v3209 = vshll.u32 %v3093, 16
      %v3211 = vrot.slane %v3209, 5
      %v3212 = vor.u32 %v3208, %v3211
      %v3213 = vrot.slane %v3212, 4
      %v3215 = vshll.u32 %v3094, 16
      %v3217 = vrot.slane %v3215, 5
      %v3218 = vsel %vm1109, %v3213, %v3217
      %v3220 = vshrl.u32 %v3095, 16
      %v3222 = vrot.slane %v3220, 4
      %v3223 = vshll.u32 %v3095, 16
      %v3225 = vrot.slane %v3223, 5
      %v3226 = vor.u32 %v3222, %v3225
      %v3227 = vrot.slane %v3226, 4
      %v3229 = vshll.u32 %v3096, 16
      %v3231 = vrot.slane %v3229, 5
      %v3232 = vsel %vm1109, %v3227, %v3231
      %v3234 = vshrl.u32 %v3097, 16
      %v3236 = vrot.slane %v3234, 4
      %v3237 = vshll.u32 %v3097, 16
      %v3239 = vrot.slane %v3237, 5
      %v3240 = vor.u32 %v3236, %v3239
      %v3241 = vrot.slane %v3240, 4
      %v3243 = vshll.u32 %v3098, 16
      %v3245 = vrot.slane %v3243, 5
      %v3246 = vsel %vm1109, %v3241, %v3245
      %v3248 = vshrl.u32 %v3099, 16
      %v3250 = vrot.slane %v3248, 4
      %v3251 = vshll.u32 %v3099, 16
      %v3253 = vrot.slane %v3251, 5
      %v3254 = vor.u32 %v3250, %v3253
      %v3255 = vrot.slane %v3254, 4
      %v3257 = vshll.u32 %v3100, 16
      %v3259 = vrot.slane %v3257, 5
      %v3260 = vsel %vm1109, %v3255, %v3259
      %v3262 = vshrl.u32 %v3101, 16
      %v3264 = vrot.slane %v3262, 4
      %v3265 = vshll.u32 %v3101, 16
      %v3267 = vrot.slane %v3265, 5
      %v3268 = vor.u32 %v3264, %v3267
      %v3269 = vrot.slane %v3268, 4
      %v3271 = vshll.u32 %v3102, 16
      %v3273 = vrot.slane %v3271, 5
      %v3274 = vsel %vm1109, %v3269, %v3273
      %v3276 = vshrl.u32 %v3103, 16
      %v3278 = vrot.slane %v3276, 4
      %v3279 = vshll.u32 %v3103, 16
      %v3281 = vrot.slane %v3279, 5
      %v3282 = vor.u32 %v3278, %v3281
      %v3283 = vrot.slane %v3282, 4
      %v3285 = vshll.u32 %v3104, 16
      %v3287 = vrot.slane %v3285, 5
      %v3288 = vsel %vm1109, %v3283, %v3287
      %v3290 = vshrl.u32 %v3105, 16
      %v3292 = vrot.slane %v3290, 4
      %v3293 = vshll.u32 %v3105, 16
      %v3295 = vrot.slane %v3293, 5
      %v3296 = vor.u32 %v3292, %v3295
      %v3297 = vrot.slane %v3296, 4
      %v3299 = vshll.u32 %v3106, 16
      %v3301 = vrot.slane %v3299, 5
      %v3302 = vsel %vm1109, %v3297, %v3301
      %v3304 = vshrl.u32 %v3107, 16
      %v3306 = vrot.slane %v3304, 4
      %v3307 = vshll.u32 %v3107, 16
      %v3309 = vrot.slane %v3307, 5
      %v3310 = vor.u32 %v3306, %v3309
      %v3311 = vrot.slane %v3310, 4
      %v3313 = vshll.u32 %v3108, 16
      %v3315 = vrot.slane %v3313, 5
      %v3316 = vsel %vm1109, %v3311, %v3315
      %v3318 = vshrl.u32 %v3109, 16
      %v3320 = vrot.slane %v3318, 4
      %v3321 = vshll.u32 %v3109, 16
      %v3323 = vrot.slane %v3321, 5
      %v3324 = vor.u32 %v3320, %v3323
      %v3325 = vrot.slane %v3324, 4
      %v3327 = vshll.u32 %v3110, 16
      %v3329 = vrot.slane %v3327, 5
      %v3330 = vsel %vm1109, %v3325, %v3329
      %v3332 = vshrl.u32 %v3111, 16
      %v3334 = vrot.slane %v3332, 4
      %v3335 = vshll.u32 %v3111, 16
      %v3337 = vrot.slane %v3335, 5
      %v3338 = vor.u32 %v3334, %v3337
      %v3339 = vrot.slane %v3338, 4
      %v3341 = vshll.u32 %v3112, 16
      %v3343 = vrot.slane %v3341, 5
      %v3344 = vsel %vm1109, %v3339, %v3343
      %v3346 = vshrl.u32 %v3113, 16
      %v3348 = vrot.slane %v3346, 4
      %v3349 = vshll.u32 %v3113, 16
      %v3351 = vrot.slane %v3349, 5
      %v3352 = vor.u32 %v3348, %v3351
      %v3353 = vrot.slane %v3352, 4
      %v3355 = vshll.u32 %v3114, 16
      %v3357 = vrot.slane %v3355, 5
      %v3358 = vsel %vm1109, %v3353, %v3357
      %v3360 = vshrl.u32 %v3115, 16
      %v3362 = vrot.slane %v3360, 4
      %v3363 = vshll.u32 %v3115, 16
      %v3365 = vrot.slane %v3363, 5
      %v3366 = vor.u32 %v3362, %v3365
      %v3367 = vrot.slane %v3366, 4
      %v3369 = vshll.u32 %v3116, 16
      %v3371 = vrot.slane %v3369, 5
      %v3372 = vsel %vm1109, %v3367, %v3371
      %v3374 = vshrl.u32 %v3117, 16
      %v3376 = vrot.slane %v3374, 4
      %v3377 = vshll.u32 %v3117, 16
      %v3379 = vrot.slane %v3377, 5
      %v3380 = vor.u32 %v3376, %v3379
      %v3381 = vrot.slane %v3380, 4
      %v3383 = vshll.u32 %v3118, 16
      %v3385 = vrot.slane %v3383, 5
      %v3386 = vsel %vm1109, %v3381, %v3385
      %v3388 = vshrl.u32 %v3119, 16
      %v3390 = vrot.slane %v3388, 4
      %v3391 = vshll.u32 %v3119, 16
      %v3393 = vrot.slane %v3391, 5
      %v3394 = vor.u32 %v3390, %v3393
      %v3395 = vrot.slane %v3394, 4
      %v3397 = vshll.u32 %v3120, 16
      %v3399 = vrot.slane %v3397, 5
      %v3400 = vsel %vm1109, %v3395, %v3399
      %v3402 = vshrl.u32 %v3121, 16
      %v3404 = vrot.slane %v3402, 4
      %v3405 = vshll.u32 %v3121, 16
      %v3407 = vrot.slane %v3405, 5
      %v3408 = vor.u32 %v3404, %v3407
      %v3409 = vrot.slane %v3408, 4
      %v3411 = vshll.u32 %v3122, 16
      %v3413 = vrot.slane %v3411, 5
      %v3414 = vsel %vm1109, %v3409, %v3413
      %v3416 = vshrl.u32 %v3123, 16
      %v3418 = vrot.slane %v3416, 4
      %v3419 = vshll.u32 %v3123, 16
      %v3421 = vrot.slane %v3419, 5
      %v3422 = vor.u32 %v3418, %v3421
      %v3423 = vrot.slane %v3422, 4
      %v3425 = vshll.u32 %v3124, 16
      %v3427 = vrot.slane %v3425, 5
      %v3428 = vsel %vm1109, %v3423, %v3427
      %v3430 = vshrl.u32 %v3125, 16
      %v3432 = vrot.slane %v3430, 4
      %v3433 = vshll.u32 %v3125, 16
      %v3435 = vrot.slane %v3433, 5
      %v3436 = vor.u32 %v3432, %v3435
      %v3437 = vrot.slane %v3436, 4
      %v3439 = vshll.u32 %v3126, 16
      %v3441 = vrot.slane %v3439, 5
      %v3442 = vsel %vm1109, %v3437, %v3441
      %v3444 = vshrl.u32 %v3127, 16
      %v3446 = vrot.slane %v3444, 4
      %v3447 = vshll.u32 %v3127, 16
      %v3449 = vrot.slane %v3447, 5
      %v3450 = vor.u32 %v3446, %v3449
      %v3451 = vrot.slane %v3450, 4
      %v3453 = vshll.u32 %v3128, 16
      %v3455 = vrot.slane %v3453, 5
      %v3456 = vsel %vm1109, %v3451, %v3455
      %v3458 = vshrl.u32 %v3129, 16
      %v3460 = vrot.slane %v3458, 4
      %v3461 = vshll.u32 %v3129, 16
      %v3463 = vrot.slane %v3461, 5
      %v3464 = vor.u32 %v3460, %v3463
      %v3465 = vrot.slane %v3464, 4
      %v3467 = vshll.u32 %v3130, 16
      %v3469 = vrot.slane %v3467, 5
      %v3470 = vsel %vm1109, %v3465, %v3469
      %v3472 = vshrl.u32 %v3131, 16
      %v3474 = vrot.slane %v3472, 4
      %v3475 = vshll.u32 %v3131, 16
      %v3477 = vrot.slane %v3475, 5
      %v3478 = vor.u32 %v3474, %v3477
      %v3479 = vrot.slane %v3478, 4
      %v3481 = vshll.u32 %v3132, 16
      %v3483 = vrot.slane %v3481, 5
      %v3484 = vsel %vm1109, %v3479, %v3483
      %v3486 = vshrl.u32 %v3133, 16
      %v3488 = vrot.slane %v3486, 4
      %v3489 = vshll.u32 %v3133, 16
      %v3491 = vrot.slane %v3489, 5
      %v3492 = vor.u32 %v3488, %v3491
      %v3493 = vrot.slane %v3492, 4
      %v3495 = vshll.u32 %v3134, 16
      %v3497 = vrot.slane %v3495, 5
      %v3498 = vsel %vm1109, %v3493, %v3497
      %v3500 = vshrl.u32 %v3135, 16
      %v3502 = vrot.slane %v3500, 4
      %v3503 = vshll.u32 %v3135, 16
      %v3505 = vrot.slane %v3503, 5
      %v3506 = vor.u32 %v3502, %v3505
      %v3507 = vrot.slane %v3506, 4
      %v3509 = vshll.u32 %v3136, 16
      %v3511 = vrot.slane %v3509, 5
      %v3512 = vsel %vm1109, %v3507, %v3511
      %v3514 = vshrl.u32 %v3137, 16
      %v3516 = vrot.slane %v3514, 4
      %v3517 = vshll.u32 %v3137, 16
      %v3519 = vrot.slane %v3517, 5
      %v3520 = vor.u32 %v3516, %v3519
      %v3521 = vrot.slane %v3520, 4
      %v3523 = vshll.u32 %v3138, 16
      %v3525 = vrot.slane %v3523, 5
      %v3526 = vsel %vm1109, %v3521, %v3525
      %v3528 = vshrl.u32 %v3139, 16
      %v3530 = vrot.slane %v3528, 4
      %v3531 = vshll.u32 %v3139, 16
      %v3533 = vrot.slane %v3531, 5
      %v3534 = vor.u32 %v3530, %v3533
      %v3535 = vrot.slane %v3534, 4
      %v3537 = vshll.u32 %v3140, 16
      %v3539 = vrot.slane %v3537, 5
      %v3540 = vsel %vm1109, %v3535, %v3539
      %v3542 = vshrl.u32 %v3141, 16
      %v3544 = vrot.slane %v3542, 4
      %v3545 = vshll.u32 %v3141, 16
      %v3547 = vrot.slane %v3545, 5
      %v3548 = vor.u32 %v3544, %v3547
      %v3549 = vrot.slane %v3548, 4
      %v3551 = vshll.u32 %v3142, 16
      %v3553 = vrot.slane %v3551, 5
      %v3554 = vsel %vm1109, %v3549, %v3553
      %v3556 = vshrl.u32 %v3143, 16
      %v3558 = vrot.slane %v3556, 4
      %v3559 = vshll.u32 %v3143, 16
      %v3561 = vrot.slane %v3559, 5
      %v3562 = vor.u32 %v3558, %v3561
      %v3563 = vrot.slane %v3562, 4
      %v3565 = vshll.u32 %v3144, 16
      %v3567 = vrot.slane %v3565, 5
      %v3568 = vsel %vm1109, %v3563, %v3567
      %v3570 = vshrl.u32 %v3145, 16
      %v3572 = vrot.slane %v3570, 4
      %v3573 = vshll.u32 %v3145, 16
      %v3575 = vrot.slane %v3573, 5
      %v3576 = vor.u32 %v3572, %v3575
      %v3577 = vrot.slane %v3576, 4
      %v3579 = vshll.u32 %v3146, 16
      %v3581 = vrot.slane %v3579, 5
      %v3582 = vsel %vm1109, %v3577, %v3581
      %v3584 = vshrl.u32 %v3147, 16
      %v3586 = vrot.slane %v3584, 4
      %v3587 = vshll.u32 %v3147, 16
      %v3589 = vrot.slane %v3587, 5
      %v3590 = vor.u32 %v3586, %v3589
      %v3591 = vrot.slane %v3590, 4
      %v3593 = vshll.u32 %v3148, 16
      %v3595 = vrot.slane %v3593, 5
      %v3596 = vsel %vm1109, %v3591, %v3595
      %v3597 = vld [vmem:[%s1 + $0x100] sm:$0xf]
      %v3598 = vld [vmem:[%s1 + $0x104] sm:$0xf]
      %v3599 = vld [vmem:[%s1 + $0x108] sm:$0xf]
      %v3600 = vld [vmem:[%s1 + $0x10c] sm:$0xf]
      %v3601 = vld [vmem:[%s1 + $0x110] sm:$0xf]
      %v3602 = vld [vmem:[%s1 + $0x114] sm:$0xf]
      %v3603 = vld [vmem:[%s1 + $0x118] sm:$0xf]
      %v3604 = vld [vmem:[%s1 + $0x11c] sm:$0xf]
      %v3605 = vld [vmem:[%s1 + $0x120] sm:$0xf]
      %v3606 = vld [vmem:[%s1 + $0x124] sm:$0xf]
      %v3607 = vld [vmem:[%s1 + $0x128] sm:$0xf]
      %v3608 = vld [vmem:[%s1 + $0x12c] sm:$0xf]
      %v3609 = vld [vmem:[%s1 + $0x130] sm:$0xf]
      %v3610 = vld [vmem:[%s1 + $0x134] sm:$0xf]
      %v3611 = vld [vmem:[%s1 + $0x138] sm:$0xf]
      %v3612 = vld [vmem:[%s1 + $0x13c] sm:$0xf]
      %v3613 = vunpack.c.l.b16 %v3162
      %v3614 = vunpack.c.l.b16 %v3176
      %v3615 = vunpack.c.l.b16 %v3190
      %v3616 = vunpack.c.l.b16 %v3204
      %v3617 = vunpack.c.l.b16 %v3218
      %v3618 = vunpack.c.l.b16 %v3232
      %v3619 = vunpack.c.l.b16 %v3246
      %v3620 = vunpack.c.l.b16 %v3260
      %v3621 = vunpack.c.l.b16 %v3274
      %v3622 = vunpack.c.l.b16 %v3288
      %v3623 = vunpack.c.l.b16 %v3302
      %v3624 = vunpack.c.l.b16 %v3316
      %v3625 = vunpack.c.l.b16 %v3330
      %v3626 = vunpack.c.l.b16 %v3344
      %v3627 = vunpack.c.l.b16 %v3358
      %v3628 = vunpack.c.l.b16 %v3372
      %v3629 = vunpack.c.l.b16 %v3386
      %v3630 = vunpack.c.l.b16 %v3400
      %v3631 = vunpack.c.l.b16 %v3414
      %v3632 = vunpack.c.l.b16 %v3428
      %v3633 = vunpack.c.l.b16 %v3442
      %v3634 = vunpack.c.l.b16 %v3456
      %v3635 = vunpack.c.l.b16 %v3470
      %v3636 = vunpack.c.l.b16 %v3484
      %v3637 = vunpack.c.l.b16 %v3498
      %v3638 = vunpack.c.l.b16 %v3512
      %v3639 = vunpack.c.l.b16 %v3526
      %v3640 = vunpack.c.l.b16 %v3540
      %v3641 = vunpack.c.l.b16 %v3554
      %v3642 = vunpack.c.l.b16 %v3568
      %v3643 = vunpack.c.l.b16 %v3582
      %v3644 = vunpack.c.l.b16 %v3596
      %v3645 = vpack.c.b16 %v3614, %v3613
      %v3646 = vpack.c.b16 %v3616, %v3615
      %v3647 = vpack.c.b16 %v3618, %v3617
      %v3648 = vpack.c.b16 %v3620, %v3619
      %v3649 = vpack.c.b16 %v3622, %v3621
      %v3650 = vpack.c.b16 %v3624, %v3623
      %v3651 = vpack.c.b16 %v3626, %v3625
      %v3652 = vpack.c.b16 %v3628, %v3627
      %v3653 = vpack.c.b16 %v3630, %v3629
      %v3654 = vpack.c.b16 %v3632, %v3631
      %v3655 = vpack.c.b16 %v3634, %v3633
      %v3656 = vpack.c.b16 %v3636, %v3635
      %v3657 = vpack.c.b16 %v3638, %v3637
      %v3658 = vpack.c.b16 %v3640, %v3639
      %v3659 = vpack.c.b16 %v3642, %v3641
      %v3660 = vpack.c.b16 %v3644, %v3643
      %v3693 = vunpack.c.l.b16 %v3597
      %v3694 = vunpack.c.l.b16 %v3598
      %v3695 = vunpack.c.l.b16 %v3599
      %v3696 = vunpack.c.l.b16 %v3600
      %v3697 = vunpack.c.l.b16 %v3601
      %v3698 = vunpack.c.l.b16 %v3602
      %v3699 = vunpack.c.l.b16 %v3603
      %v3700 = vunpack.c.l.b16 %v3604
      %v3701 = vunpack.c.l.b16 %v3605
      %v3702 = vunpack.c.l.b16 %v3606
      %v3703 = vunpack.c.l.b16 %v3607
      %v3704 = vunpack.c.l.b16 %v3608
      %v3705 = vunpack.c.l.b16 %v3609
      %v3706 = vunpack.c.l.b16 %v3610
      %v3707 = vunpack.c.l.b16 %v3611
      %v3708 = vunpack.c.l.b16 %v3612
      %v3709 = vpack.c.b16 %v3694, %v3693
      %v3710 = vpack.c.b16 %v3696, %v3695
      %v3711 = vpack.c.b16 %v3698, %v3697
      %v3712 = vpack.c.b16 %v3700, %v3699
      %v3713 = vpack.c.b16 %v3702, %v3701
      %v3714 = vpack.c.b16 %v3704, %v3703
      %v3715 = vpack.c.b16 %v3706, %v3705
      %v3716 = vpack.c.b16 %v3708, %v3707
      %3725 = vmatprep.subr.bf16.mxu0 0
      %3726 = vmatpush1.bf16.msra.mxu0 %v3709
      %3727 = vmatprep.subr.bf16.mxu0 0
      %3728 = vmatpush1.bf16.msra.mxu0 %v3710
      %3729 = vmatprep.subr.bf16.mxu0 0
      %3730 = vmatpush1.bf16.msra.mxu0 %v3711
      %3731 = vmatprep.subr.bf16.mxu0 0
      %3732 = vmatpush1.bf16.msra.mxu0 %v3712
      %3733 = vmatprep.subr.bf16.mxu0 0
      %3734 = vmatpush1.bf16.msra.mxu0 %v3713
      %3735 = vmatprep.subr.bf16.mxu0 0
      %3736 = vmatpush1.bf16.msra.mxu0 %v3714
      %3737 = vmatprep.subr.bf16.mxu0 0
      %3738 = vmatpush1.bf16.msra.mxu0 %v3715
      %3739 = vmatprep.subr.bf16.mxu0 0
      %3740 = vmatpush1.bf16.msra.mxu0 %v3716
      %3741 = vmatprep.subr.bf16.mxu0 0
      %3742 = vmatpush1.bf16.msra.mxu0 0
      %3743 = vmatprep.subr.bf16.mxu0 0
      %3744 = vmatpush1.bf16.msra.mxu0 0
      %3745 = vmatprep.subr.bf16.mxu0 0
      %3746 = vmatpush1.bf16.msra.mxu0 0
      %3747 = vmatprep.subr.bf16.mxu0 0
      %3748 = vmatpush1.bf16.msra.mxu0 0
      %3749 = vmatprep.subr.bf16.mxu0 0
      %3750 = vmatpush1.bf16.msra.mxu0 0
      %3751 = vmatprep.subr.bf16.mxu0 0
      %3752 = vmatpush1.bf16.msra.mxu0 0
      %3753 = vmatprep.subr.bf16.mxu0 0
      %3754 = vmatpush1.bf16.msra.mxu0 0
      %3755 = vmatprep.subr.bf16.mxu0 0
      %3756 = vmatpush1.bf16.msra.mxu0 0
      %3757 = vmatprep.mubr.bf16.mxu0 0
      %3758 = vmatmul.mubr.bf16.gmra.mrb[0].mxu0 %v3645
      %v3759 = vpop.f32.mrb[0].mxu0
      %v3760 = vadd.f32 0.0, %v3759
      %v3761 = vpop.f32.mrb[0].mxu0
      %v3762 = vpop.f32.mrb[0].mxu0
      %v3763 = vadd.f32 0.0, %v3762
      %v3764 = vpop.f32.mrb[0].mxu0
      %3765 = vmatprep.mubr.bf16.mxu0 0
      %3766 = vmatmul.mubr.bf16.gmra.mrb[0].mxu0 %v3646
      %v3767 = vpop.f32.mrb[0].mxu0
      %v3768 = vadd.f32 0.0, %v3767
      %v3769 = vpop.f32.mrb[0].mxu0
      %v3770 = vpop.f32.mrb[0].mxu0
      %v3771 = vadd.f32 0.0, %v3770
      %v3772 = vpop.f32.mrb[0].mxu0
      %3773 = vmatprep.mubr.bf16.mxu0 0
      %3774 = vmatmul.mubr.bf16.gmra.mrb[0].mxu0 %v3647
      %v3775 = vpop.f32.mrb[0].mxu0
      %v3776 = vadd.f32 0.0, %v3775
      %v3777 = vpop.f32.mrb[0].mxu0
      %v3778 = vpop.f32.mrb[0].mxu0
      %v3779 = vadd.f32 0.0, %v3778
      %v3780 = vpop.f32.mrb[0].mxu0
      %3781 = vmatprep.mubr.bf16.mxu0 0
      %3782 = vmatmul.mubr.bf16.gmra.mrb[0].mxu0 %v3648
      %v3783 = vpop.f32.mrb[0].mxu0
      %v3784 = vadd.f32 0.0, %v3783
      %v3785 = vpop.f32.mrb[0].mxu0
      %v3786 = vpop.f32.mrb[0].mxu0
      %v3787 = vadd.f32 0.0, %v3786
      %v3788 = vpop.f32.mrb[0].mxu0
      %3789 = vmatprep.mubr.bf16.mxu0 0
      %3790 = vmatmul.mubr.bf16.gmra.mrb[0].mxu0 %v3649
      %v3791 = vpop.f32.mrb[0].mxu0
      %v3792 = vadd.f32 0.0, %v3791
      %v3793 = vpop.f32.mrb[0].mxu0
      %v3794 = vpop.f32.mrb[0].mxu0
      %v3795 = vadd.f32 0.0, %v3794
      %v3796 = vpop.f32.mrb[0].mxu0
      %3797 = vmatprep.mubr.bf16.mxu0 0
      %3798 = vmatmul.mubr.bf16.gmra.mrb[0].mxu0 %v3650
      %v3799 = vpop.f32.mrb[0].mxu0
      %v3800 = vadd.f32 0.0, %v3799
      %v3801 = vpop.f32.mrb[0].mxu0
      %v3802 = vpop.f32.mrb[0].mxu0
      %v3803 = vadd.f32 0.0, %v3802
      %v3804 = vpop.f32.mrb[0].mxu0
      %3805 = vmatprep.mubr.bf16.mxu0 0
      %3806 = vmatmul.mubr.bf16.gmra.mrb[0].mxu0 %v3651
      %v3807 = vpop.f32.mrb[0].mxu0
      %v3808 = vadd.f32 0.0, %v3807
      %v3809 = vpop.f32.mrb[0].mxu0
      %v3810 = vpop.f32.mrb[0].mxu0
      %v3811 = vadd.f32 0.0, %v3810
      %v3812 = vpop.f32.mrb[0].mxu0
      %3813 = vmatprep.mubr.bf16.mxu0 0
      %3814 = vmatmul.mubr.bf16.gmra.mrb[0].mxu0 %v3652
      %v3815 = vpop.f32.mrb[0].mxu0
      %v3816 = vadd.f32 0.0, %v3815
      %v3817 = vpop.f32.mrb[0].mxu0
      %v3818 = vpop.f32.mrb[0].mxu0
      %v3819 = vadd.f32 0.0, %v3818
      %v3820 = vpop.f32.mrb[0].mxu0
      %3821 = vmatprep.mubr.bf16.mxu0 0
      %3822 = vmatmul.mubr.bf16.gmra.mrb[0].mxu0 %v3653
      %v3823 = vpop.f32.mrb[0].mxu0
      %v3824 = vadd.f32 0.0, %v3823
      %v3825 = vpop.f32.mrb[0].mxu0
      %v3826 = vpop.f32.mrb[0].mxu0
      %v3827 = vadd.f32 0.0, %v3826
      %v3828 = vpop.f32.mrb[0].mxu0
      %3829 = vmatprep.mubr.bf16.mxu0 0
      %3830 = vmatmul.mubr.bf16.gmra.mrb[0].mxu0 %v3654
      %v3831 = vpop.f32.mrb[0].mxu0
      %v3832 = vadd.f32 0.0, %v3831
      %v3833 = vpop.f32.mrb[0].mxu0
      %v3834 = vpop.f32.mrb[0].mxu0
      %v3835 = vadd.f32 0.0, %v3834
      %v3836 = vpop.f32.mrb[0].mxu0
      %3837 = vmatprep.mubr.bf16.mxu0 0
      %3838 = vmatmul.mubr.bf16.gmra.mrb[0].mxu0 %v3655
      %v3839 = vpop.f32.mrb[0].mxu0
      %v3840 = vadd.f32 0.0, %v3839
      %v3841 = vpop.f32.mrb[0].mxu0
      %v3842 = vpop.f32.mrb[0].mxu0
      %v3843 = vadd.f32 0.0, %v3842
      %v3844 = vpop.f32.mrb[0].mxu0
      %3845 = vmatprep.mubr.bf16.mxu0 0
      %3846 = vmatmul.mubr.bf16.gmra.mrb[0].mxu0 %v3656
      %v3847 = vpop.f32.mrb[0].mxu0
      %v3848 = vadd.f32 0.0, %v3847
      %v3849 = vpop.f32.mrb[0].mxu0
      %v3850 = vpop.f32.mrb[0].mxu0
      %v3851 = vadd.f32 0.0, %v3850
      %v3852 = vpop.f32.mrb[0].mxu0
      %3853 = vmatprep.mubr.bf16.mxu0 0
      %3854 = vmatmul.mubr.bf16.gmra.mrb[0].mxu0 %v3657
      %v3855 = vpop.f32.mrb[0].mxu0
      %v3856 = vadd.f32 0.0, %v3855
      %v3857 = vpop.f32.mrb[0].mxu0
      %v3858 = vpop.f32.mrb[0].mxu0
      %v3859 = vadd.f32 0.0, %v3858
      %v3860 = vpop.f32.mrb[0].mxu0
      %3861 = vmatprep.mubr.bf16.mxu0 0
      %3862 = vmatmul.mubr.bf16.gmra.mrb[0].mxu0 %v3658
      %v3863 = vpop.f32.mrb[0].mxu0
      %v3864 = vadd.f32 0.0, %v3863
      %v3865 = vpop.f32.mrb[0].mxu0
      %v3866 = vpop.f32.mrb[0].mxu0
      %v3867 = vadd.f32 0.0, %v3866
      %v3868 = vpop.f32.mrb[0].mxu0
      %3869 = vmatprep.mubr.bf16.mxu0 0
      %3870 = vmatmul.mubr.bf16.gmra.mrb[0].mxu0 %v3659
      %v3871 = vpop.f32.mrb[0].mxu0
      %v3872 = vadd.f32 0.0, %v3871
      %v3873 = vpop.f32.mrb[0].mxu0
      %v3874 = vpop.f32.mrb[0].mxu0
      %v3875 = vadd.f32 0.0, %v3874
      %v3876 = vpop.f32.mrb[0].mxu0
      %3877 = vmatprep.mubr.bf16.mxu0 0
      %3878 = vmatmul.mubr.bf16.gmra.mrb[0].mxu0 %v3660
      %v3879 = vpop.f32.mrb[0].mxu0
      %v3880 = vadd.f32 0.0, %v3879
      %v3881 = vpop.f32.mrb[0].mxu0
      %v3882 = vpop.f32.mrb[0].mxu0
      %v3883 = vadd.f32 0.0, %v3882
      %v3884 = vpop.f32.mrb[0].mxu0
      %3885 = vdwg.mxu0
      %v3886 = vadd.f32 %v3053, %v3760
      %v3887 = vadd.f32 %v3054, %v3763
      %v3888 = vadd.f32 %v3055, %v3768
      %v3889 = vadd.f32 %v3056, %v3771
      %v3890 = vadd.f32 %v3057, %v3776
      %v3891 = vadd.f32 %v3058, %v3779
      %v3892 = vadd.f32 %v3059, %v3784
      %v3893 = vadd.f32 %v3060, %v3787
      %v3894 = vadd.f32 %v3061, %v3792
      %v3895 = vadd.f32 %v3062, %v3795
      %v3896 = vadd.f32 %v3063, %v3800
      %v3897 = vadd.f32 %v3064, %v3803
      %v3898 = vadd.f32 %v3065, %v3808
      %v3899 = vadd.f32 %v3066, %v3811
      %v3900 = vadd.f32 %v3067, %v3816
      %v3901 = vadd.f32 %v3068, %v3819
      %v3902 = vadd.f32 %v3069, %v3824
      %v3903 = vadd.f32 %v3070, %v3827
      %v3904 = vadd.f32 %v3071, %v3832
      %v3905 = vadd.f32 %v3072, %v3835
      %v3906 = vadd.f32 %v3073, %v3840
      %v3907 = vadd.f32 %v3074, %v3843
      %v3908 = vadd.f32 %v3075, %v3848
      %v3909 = vadd.f32 %v3076, %v3851
      %v3910 = vadd.f32 %v3077, %v3856
      %v3911 = vadd.f32 %v3078, %v3859
      %v3912 = vadd.f32 %v3079, %v3864
      %v3913 = vadd.f32 %v3080, %v3867
      %v3914 = vadd.f32 %v3081, %v3872
      %v3915 = vadd.f32 %v3082, %v3875
      %v3916 = vadd.f32 %v3083, %v3880
      %v3917 = vadd.f32 %v3084, %v3883
      %v3918 = vld [vmem:[%s832] sm:$0xe]
      %v3919 = vld [vmem:[%s832 + $0x8] sm:$0xe]
      %v3920 = vld [vmem:[%s832 + $0x10] sm:$0xe]
      %v3921 = vld [vmem:[%s832 + $0x18] sm:$0xe]
      %v3922 = vld [vmem:[%s832 + $0x20] sm:$0xe]
      %v3923 = vld [vmem:[%s832 + $0x28] sm:$0xe]
      %v3924 = vld [vmem:[%s832 + $0x30] sm:$0xe]
      %v3925 = vld [vmem:[%s832 + $0x38] sm:$0xe]
      %v3926 = vld [vmem:[%s832 + $0x50] sm:$0xe]
      %v3927 = vld [vmem:[%s832 + $0x58] sm:$0xe]
      %v3928 = vld [vmem:[%s832 + $0x60] sm:$0xe]
      %v3929 = vld [vmem:[%s832 + $0x68] sm:$0xe]
      %v3930 = vld [vmem:[%s832 + $0x70] sm:$0xe]
      %v3931 = vld [vmem:[%s832 + $0x78] sm:$0xe]
      %v3932 = vld [vmem:[%s832 + $0x80] sm:$0xe]
      %v3933 = vld [vmem:[%s832 + $0x88] sm:$0xe]
      %v3934 = vld [vmem:[%s832 + $0xa0] sm:$0xe]
      %v3935 = vld [vmem:[%s832 + $0xa8] sm:$0xe]
      %v3936 = vld [vmem:[%s832 + $0xb0] sm:$0xe]
      %v3937 = vld [vmem:[%s832 + $0xb8] sm:$0xe]
      %v3938 = vld [vmem:[%s832 + $0xc0] sm:$0xe]
      %v3939 = vld [vmem:[%s832 + $0xc8] sm:$0xe]
      %v3940 = vld [vmem:[%s832 + $0xd0] sm:$0xe]
      %v3941 = vld [vmem:[%s832 + $0xd8] sm:$0xe]
      %v3942 = vld [vmem:[%s832 + $0xf0] sm:$0xe]
      %v3943 = vld [vmem:[%s832 + $0xf8] sm:$0xe]
      %v3944 = vld [vmem:[%s832 + $0x100] sm:$0xe]
      %v3945 = vld [vmem:[%s832 + $0x108] sm:$0xe]
      %v3946 = vld [vmem:[%s832 + $0x110] sm:$0xe]
      %v3947 = vld [vmem:[%s832 + $0x118] sm:$0xe]
      %v3948 = vld [vmem:[%s832 + $0x120] sm:$0xe]
      %v3949 = vld [vmem:[%s832 + $0x128] sm:$0xe]
      %v4014 = vrot.slane %v3918, 5
      %v4015 = vrot.slane %v4014, 4
      %v4016 = vrot.slane %v3086, 5
      %v4017 = vsel %vm2250, %v4015, %v4016
      %v4018 = vrot.slane %v3919, 5
      %v4019 = vrot.slane %v4018, 4
      %v4020 = vrot.slane %v3088, 5
      %v4021 = vsel %vm2250, %v4019, %v4020
      %v4022 = vrot.slane %v3920, 5
      %v4023 = vrot.slane %v4022, 4
      %v4024 = vrot.slane %v3090, 5
      %v4025 = vsel %vm2250, %v4023, %v4024
      %v4026 = vrot.slane %v3921, 5
      %v4027 = vrot.slane %v4026, 4
      %v4028 = vrot.slane %v3092, 5
      %v4029 = vsel %vm2250, %v4027, %v4028
      %v4030 = vrot.slane %v3922, 5
      %v4031 = vrot.slane %v4030, 4
      %v4032 = vrot.slane %v3094, 5
      %v4033 = vsel %vm2250, %v4031, %v4032
      %v4034 = vrot.slane %v3923, 5
      %v4035 = vrot.slane %v4034, 4
      %v4036 = vrot.slane %v3096, 5
      %v4037 = vsel %vm2250, %v4035, %v4036
      %v4038 = vrot.slane %v3924, 5
      %v4039 = vrot.slane %v4038, 4
      %v4040 = vrot.slane %v3098, 5
      %v4041 = vsel %vm2250, %v4039, %v4040
      %v4042 = vrot.slane %v3925, 5
      %v4043 = vrot.slane %v4042, 4
      %v4044 = vrot.slane %v3100, 5
      %v4045 = vsel %vm2250, %v4043, %v4044
      %v4046 = vrot.slane %v3926, 5
      %v4047 = vrot.slane %v4046, 4
      %v4048 = vrot.slane %v3102, 5
      %v4049 = vsel %vm2250, %v4047, %v4048
      %v4050 = vrot.slane %v3927, 5
      %v4051 = vrot.slane %v4050, 4
      %v4052 = vrot.slane %v3104, 5
      %v4053 = vsel %vm2250, %v4051, %v4052
      %v4054 = vrot.slane %v3928, 5
      %v4055 = vrot.slane %v4054, 4
      %v4056 = vrot.slane %v3106, 5
      %v4057 = vsel %vm2250, %v4055, %v4056
      %v4058 = vrot.slane %v3929, 5
      %v4059 = vrot.slane %v4058, 4
      %v4060 = vrot.slane %v3108, 5
      %v4061 = vsel %vm2250, %v4059, %v4060
      %v4062 = vrot.slane %v3930, 5
      %v4063 = vrot.slane %v4062, 4
      %v4064 = vrot.slane %v3110, 5
      %v4065 = vsel %vm2250, %v4063, %v4064
      %v4066 = vrot.slane %v3931, 5
      %v4067 = vrot.slane %v4066, 4
      %v4068 = vrot.slane %v3112, 5
      %v4069 = vsel %vm2250, %v4067, %v4068
      %v4070 = vrot.slane %v3932, 5
      %v4071 = vrot.slane %v4070, 4
      %v4072 = vrot.slane %v3114, 5
      %v4073 = vsel %vm2250, %v4071, %v4072
      %v4074 = vrot.slane %v3933, 5
      %v4075 = vrot.slane %v4074, 4
      %v4076 = vrot.slane %v3116, 5
      %v4077 = vsel %vm2250, %v4075, %v4076
      %v4078 = vrot.slane %v3934, 5
      %v4079 = vrot.slane %v4078, 4
      %v4080 = vrot.slane %v3118, 5
      %v4081 = vsel %vm2250, %v4079, %v4080
      %v4082 = vrot.slane %v3935, 5
      %v4083 = vrot.slane %v4082, 4
      %v4084 = vrot.slane %v3120, 5
      %v4085 = vsel %vm2250, %v4083, %v4084
      %v4086 = vrot.slane %v3936, 5
      %v4087 = vrot.slane %v4086, 4
      %v4088 = vrot.slane %v3122, 5
      %v4089 = vsel %vm2250, %v4087, %v4088
      %v4090 = vrot.slane %v3937, 5
      %v4091 = vrot.slane %v4090, 4
      %v4092 = vrot.slane %v3124, 5
      %v4093 = vsel %vm2250, %v4091, %v4092
      %v4094 = vrot.slane %v3938, 5
      %v4095 = vrot.slane %v4094, 4
      %v4096 = vrot.slane %v3126, 5
      %v4097 = vsel %vm2250, %v4095, %v4096
      %v4098 = vrot.slane %v3939, 5
      %v4099 = vrot.slane %v4098, 4
      %v4100 = vrot.slane %v3128, 5
      %v4101 = vsel %vm2250, %v4099, %v4100
      %v4102 = vrot.slane %v3940, 5
      %v4103 = vrot.slane %v4102, 4
      %v4104 = vrot.slane %v3130, 5
      %v4105 = vsel %vm2250, %v4103, %v4104
      %v4106 = vrot.slane %v3941, 5
      %v4107 = vrot.slane %v4106, 4
      %v4108 = vrot.slane %v3132, 5
      %v4109 = vsel %vm2250, %v4107, %v4108
      %v4110 = vrot.slane %v3942, 5
      %v4111 = vrot.slane %v4110, 4
      %v4112 = vrot.slane %v3134, 5
      %v4113 = vsel %vm2250, %v4111, %v4112
      %v4114 = vrot.slane %v3943, 5
      %v4115 = vrot.slane %v4114, 4
      %v4116 = vrot.slane %v3136, 5
      %v4117 = vsel %vm2250, %v4115, %v4116
      %v4118 = vrot.slane %v3944, 5
      %v4119 = vrot.slane %v4118, 4
      %v4120 = vrot.slane %v3138, 5
      %v4121 = vsel %vm2250, %v4119, %v4120
      %v4122 = vrot.slane %v3945, 5
      %v4123 = vrot.slane %v4122, 4
      %v4124 = vrot.slane %v3140, 5
      %v4125 = vsel %vm2250, %v4123, %v4124
      %v4126 = vrot.slane %v3946, 5
      %v4127 = vrot.slane %v4126, 4
      %v4128 = vrot.slane %v3142, 5
      %v4129 = vsel %vm2250, %v4127, %v4128
      %v4130 = vrot.slane %v3947, 5
      %v4131 = vrot.slane %v4130, 4
      %v4132 = vrot.slane %v3144, 5
      %v4133 = vsel %vm2250, %v4131, %v4132
      %v4134 = vrot.slane %v3948, 5
      %v4135 = vrot.slane %v4134, 4
      %v4136 = vrot.slane %v3146, 5
      %v4137 = vsel %vm2250, %v4135, %v4136
      %v4138 = vrot.slane %v3949, 5
      %v4139 = vrot.slane %v4138, 4
      %v4140 = vrot.slane %v3148, 5
      %v4141 = vsel %vm2250, %v4139, %v4140
      %v4142 = vld [vmem:[%s1 + $0x140] sm:$0xf]
      %v4143 = vld [vmem:[%s1 + $0x144] sm:$0xf]
      %v4144 = vld [vmem:[%s1 + $0x148] sm:$0xf]
      %v4145 = vld [vmem:[%s1 + $0x14c] sm:$0xf]
      %v4146 = vld [vmem:[%s1 + $0x150] sm:$0xf]
      %v4147 = vld [vmem:[%s1 + $0x154] sm:$0xf]
      %v4148 = vld [vmem:[%s1 + $0x158] sm:$0xf]
      %v4149 = vld [vmem:[%s1 + $0x15c] sm:$0xf]
      %v4150 = vld [vmem:[%s1 + $0x160] sm:$0xf]
      %v4151 = vld [vmem:[%s1 + $0x164] sm:$0xf]
      %v4152 = vld [vmem:[%s1 + $0x168] sm:$0xf]
      %v4153 = vld [vmem:[%s1 + $0x16c] sm:$0xf]
      %v4154 = vld [vmem:[%s1 + $0x170] sm:$0xf]
      %v4155 = vld [vmem:[%s1 + $0x174] sm:$0xf]
      %v4156 = vld [vmem:[%s1 + $0x178] sm:$0xf]
      %v4157 = vld [vmem:[%s1 + $0x17c] sm:$0xf]
      %v4158 = vunpack.c.l.b16 %v4017
      %v4159 = vunpack.c.l.b16 %v4021
      %v4160 = vunpack.c.l.b16 %v4025
      %v4161 = vunpack.c.l.b16 %v4029
      %v4162 = vunpack.c.l.b16 %v4033
      %v4163 = vunpack.c.l.b16 %v4037
      %v4164 = vunpack.c.l.b16 %v4041
      %v4165 = vunpack.c.l.b16 %v4045
      %v4166 = vunpack.c.l.b16 %v4049
      %v4167 = vunpack.c.l.b16 %v4053
      %v4168 = vunpack.c.l.b16 %v4057
      %v4169 = vunpack.c.l.b16 %v4061
      %v4170 = vunpack.c.l.b16 %v4065
      %v4171 = vunpack.c.l.b16 %v4069
      %v4172 = vunpack.c.l.b16 %v4073
      %v4173 = vunpack.c.l.b16 %v4077
      %v4174 = vunpack.c.l.b16 %v4081
      %v4175 = vunpack.c.l.b16 %v4085
      %v4176 = vunpack.c.l.b16 %v4089
      %v4177 = vunpack.c.l.b16 %v4093
      %v4178 = vunpack.c.l.b16 %v4097
      %v4179 = vunpack.c.l.b16 %v4101
      %v4180 = vunpack.c.l.b16 %v4105
      %v4181 = vunpack.c.l.b16 %v4109
      %v4182 = vunpack.c.l.b16 %v4113
      %v4183 = vunpack.c.l.b16 %v4117
      %v4184 = vunpack.c.l.b16 %v4121
      %v4185 = vunpack.c.l.b16 %v4125
      %v4186 = vunpack.c.l.b16 %v4129
      %v4187 = vunpack.c.l.b16 %v4133
      %v4188 = vunpack.c.l.b16 %v4137
      %v4189 = vunpack.c.l.b16 %v4141
      %v4190 = vpack.c.b16 %v4159, %v4158
      %v4191 = vpack.c.b16 %v4161, %v4160
      %v4192 = vpack.c.b16 %v4163, %v4162
      %v4193 = vpack.c.b16 %v4165, %v4164
      %v4194 = vpack.c.b16 %v4167, %v4166
      %v4195 = vpack.c.b16 %v4169, %v4168
      %v4196 = vpack.c.b16 %v4171, %v4170
      %v4197 = vpack.c.b16 %v4173, %v4172
      %v4198 = vpack.c.b16 %v4175, %v4174
      %v4199 = vpack.c.b16 %v4177, %v4176
      %v4200 = vpack.c.b16 %v4179, %v4178
      %v4201 = vpack.c.b16 %v4181, %v4180
      %v4202 = vpack.c.b16 %v4183, %v4182
      %v4203 = vpack.c.b16 %v4185, %v4184
      %v4204 = vpack.c.b16 %v4187, %v4186
      %v4205 = vpack.c.b16 %v4189, %v4188
      %v4238 = vunpack.c.l.b16 %v4142
      %v4239 = vunpack.c.l.b16 %v4143
      %v4240 = vunpack.c.l.b16 %v4144
      %v4241 = vunpack.c.l.b16 %v4145
      %v4242 = vunpack.c.l.b16 %v4146
      %v4243 = vunpack.c.l.b16 %v4147
      %v4244 = vunpack.c.l.b16 %v4148
      %v4245 = vunpack.c.l.b16 %v4149
      %v4246 = vunpack.c.l.b16 %v4150
      %v4247 = vunpack.c.l.b16 %v4151
      %v4248 = vunpack.c.l.b16 %v4152
      %v4249 = vunpack.c.l.b16 %v4153
      %v4250 = vunpack.c.l.b16 %v4154
      %v4251 = vunpack.c.l.b16 %v4155
      %v4252 = vunpack.c.l.b16 %v4156
      %v4253 = vunpack.c.l.b16 %v4157
      %v4254 = vpack.c.b16 %v4239, %v4238
      %v4255 = vpack.c.b16 %v4241, %v4240
      %v4256 = vpack.c.b16 %v4243, %v4242
      %v4257 = vpack.c.b16 %v4245, %v4244
      %v4258 = vpack.c.b16 %v4247, %v4246
      %v4259 = vpack.c.b16 %v4249, %v4248
      %v4260 = vpack.c.b16 %v4251, %v4250
      %v4261 = vpack.c.b16 %v4253, %v4252
      %4270 = vmatprep.subr.bf16.mxu0 0
      %4271 = vmatpush1.bf16.msra.mxu0 %v4254
      %4272 = vmatprep.subr.bf16.mxu0 0
      %4273 = vmatpush1.bf16.msra.mxu0 %v4255
      %4274 = vmatprep.subr.bf16.mxu0 0
      %4275 = vmatpush1.bf16.msra.mxu0 %v4256
      %4276 = vmatprep.subr.bf16.mxu0 0
      %4277 = vmatpush1.bf16.msra.mxu0 %v4257
      %4278 = vmatprep.subr.bf16.mxu0 0
      %4279 = vmatpush1.bf16.msra.mxu0 %v4258
      %4280 = vmatprep.subr.bf16.mxu0 0
      %4281 = vmatpush1.bf16.msra.mxu0 %v4259
      %4282 = vmatprep.subr.bf16.mxu0 0
      %4283 = vmatpush1.bf16.msra.mxu0 %v4260
      %4284 = vmatprep.subr.bf16.mxu0 0
      %4285 = vmatpush1.bf16.msra.mxu0 %v4261
      %4286 = vmatprep.subr.bf16.mxu0 0
      %4287 = vmatpush1.bf16.msra.mxu0 0
      %4288 = vmatprep.subr.bf16.mxu0 0
      %4289 = vmatpush1.bf16.msra.mxu0 0
      %4290 = vmatprep.subr.bf16.mxu0 0
      %4291 = vmatpush1.bf16.msra.mxu0 0
      %4292 = vmatprep.subr.bf16.mxu0 0
      %4293 = vmatpush1.bf16.msra.mxu0 0
      %4294 = vmatprep.subr.bf16.mxu0 0
      %4295 = vmatpush1.bf16.msra.mxu0 0
      %4296 = vmatprep.subr.bf16.mxu0 0
      %4297 = vmatpush1.bf16.msra.mxu0 0
      %4298 = vmatprep.subr.bf16.mxu0 0
      %4299 = vmatpush1.bf16.msra.mxu0 0
      %4300 = vmatprep.subr.bf16.mxu0 0
      %4301 = vmatpush1.bf16.msra.mxu0 0
      %4302 = vmatprep.mubr.bf16.mxu0 0
      %4303 = vmatmul.mubr.bf16.gmra.mrb[0].mxu0 %v4190
      %v4304 = vpop.f32.mrb[0].mxu0
      %v4305 = vadd.f32 0.0, %v4304
      %v4306 = vpop.f32.mrb[0].mxu0
      %v4307 = vpop.f32.mrb[0].mxu0
      %v4308 = vadd.f32 0.0, %v4307
      %v4309 = vpop.f32.mrb[0].mxu0
      %4310 = vmatprep.mubr.bf16.mxu0 0
      %4311 = vmatmul.mubr.bf16.gmra.mrb[0].mxu0 %v4191
      %v4312 = vpop.f32.mrb[0].mxu0
      %v4313 = vadd.f32 0.0, %v4312
      %v4314 = vpop.f32.mrb[0].mxu0
      %v4315 = vpop.f32.mrb[0].mxu0
      %v4316 = vadd.f32 0.0, %v4315
      %v4317 = vpop.f32.mrb[0].mxu0
      %4318 = vmatprep.mubr.bf16.mxu0 0
      %4319 = vmatmul.mubr.bf16.gmra.mrb[0].mxu0 %v4192
      %v4320 = vpop.f32.mrb[0].mxu0
      %v4321 = vadd.f32 0.0, %v4320
      %v4322 = vpop.f32.mrb[0].mxu0
      %v4323 = vpop.f32.mrb[0].mxu0
      %v4324 = vadd.f32 0.0, %v4323
      %v4325 = vpop.f32.mrb[0].mxu0
      %4326 = vmatprep.mubr.bf16.mxu0 0
      %4327 = vmatmul.mubr.bf16.gmra.mrb[0].mxu0 %v4193
      %v4328 = vpop.f32.mrb[0].mxu0
      %v4329 = vadd.f32 0.0, %v4328
      %v4330 = vpop.f32.mrb[0].mxu0
      %v4331 = vpop.f32.mrb[0].mxu0
      %v4332 = vadd.f32 0.0, %v4331
      %v4333 = vpop.f32.mrb[0].mxu0
      %4334 = vmatprep.mubr.bf16.mxu0 0
      %4335 = vmatmul.mubr.bf16.gmra.mrb[0].mxu0 %v4194
      %v4336 = vpop.f32.mrb[0].mxu0
      %v4337 = vadd.f32 0.0, %v4336
      %v4338 = vpop.f32.mrb[0].mxu0
      %v4339 = vpop.f32.mrb[0].mxu0
      %v4340 = vadd.f32 0.0, %v4339
      %v4341 = vpop.f32.mrb[0].mxu0
      %4342 = vmatprep.mubr.bf16.mxu0 0
      %4343 = vmatmul.mubr.bf16.gmra.mrb[0].mxu0 %v4195
      %v4344 = vpop.f32.mrb[0].mxu0
      %v4345 = vadd.f32 0.0, %v4344
      %v4346 = vpop.f32.mrb[0].mxu0
      %v4347 = vpop.f32.mrb[0].mxu0
      %v4348 = vadd.f32 0.0, %v4347
      %v4349 = vpop.f32.mrb[0].mxu0
      %4350 = vmatprep.mubr.bf16.mxu0 0
      %4351 = vmatmul.mubr.bf16.gmra.mrb[0].mxu0 %v4196
      %v4352 = vpop.f32.mrb[0].mxu0
      %v4353 = vadd.f32 0.0, %v4352
      %v4354 = vpop.f32.mrb[0].mxu0
      %v4355 = vpop.f32.mrb[0].mxu0
      %v4356 = vadd.f32 0.0, %v4355
      %v4357 = vpop.f32.mrb[0].mxu0
      %4358 = vmatprep.mubr.bf16.mxu0 0
      %4359 = vmatmul.mubr.bf16.gmra.mrb[0].mxu0 %v4197
      %v4360 = vpop.f32.mrb[0].mxu0
      %v4361 = vadd.f32 0.0, %v4360
      %v4362 = vpop.f32.mrb[0].mxu0
      %v4363 = vpop.f32.mrb[0].mxu0
      %v4364 = vadd.f32 0.0, %v4363
      %v4365 = vpop.f32.mrb[0].mxu0
      %4366 = vmatprep.mubr.bf16.mxu0 0
      %4367 = vmatmul.mubr.bf16.gmra.mrb[0].mxu0 %v4198
      %v4368 = vpop.f32.mrb[0].mxu0
      %v4369 = vadd.f32 0.0, %v4368
      %v4370 = vpop.f32.mrb[0].mxu0
      %v4371 = vpop.f32.mrb[0].mxu0
      %v4372 = vadd.f32 0.0, %v4371
      %v4373 = vpop.f32.mrb[0].mxu0
      %4374 = vmatprep.mubr.bf16.mxu0 0
      %4375 = vmatmul.mubr.bf16.gmra.mrb[0].mxu0 %v4199
      %v4376 = vpop.f32.mrb[0].mxu0
      %v4377 = vadd.f32 0.0, %v4376
      %v4378 = vpop.f32.mrb[0].mxu0
      %v4379 = vpop.f32.mrb[0].mxu0
      %v4380 = vadd.f32 0.0, %v4379
      %v4381 = vpop.f32.mrb[0].mxu0
      %4382 = vmatprep.mubr.bf16.mxu0 0
      %4383 = vmatmul.mubr.bf16.gmra.mrb[0].mxu0 %v4200
      %v4384 = vpop.f32.mrb[0].mxu0
      %v4385 = vadd.f32 0.0, %v4384
      %v4386 = vpop.f32.mrb[0].mxu0
      %v4387 = vpop.f32.mrb[0].mxu0
      %v4388 = vadd.f32 0.0, %v4387
      %v4389 = vpop.f32.mrb[0].mxu0
      %4390 = vmatprep.mubr.bf16.mxu0 0
      %4391 = vmatmul.mubr.bf16.gmra.mrb[0].mxu0 %v4201
      %v4392 = vpop.f32.mrb[0].mxu0
      %v4393 = vadd.f32 0.0, %v4392
      %v4394 = vpop.f32.mrb[0].mxu0
      %v4395 = vpop.f32.mrb[0].mxu0
      %v4396 = vadd.f32 0.0, %v4395
      %v4397 = vpop.f32.mrb[0].mxu0
      %4398 = vmatprep.mubr.bf16.mxu0 0
      %4399 = vmatmul.mubr.bf16.gmra.mrb[0].mxu0 %v4202
      %v4400 = vpop.f32.mrb[0].mxu0
      %v4401 = vadd.f32 0.0, %v4400
      %v4402 = vpop.f32.mrb[0].mxu0
      %v4403 = vpop.f32.mrb[0].mxu0
      %v4404 = vadd.f32 0.0, %v4403
      %v4405 = vpop.f32.mrb[0].mxu0
      %4406 = vmatprep.mubr.bf16.mxu0 0
      %4407 = vmatmul.mubr.bf16.gmra.mrb[0].mxu0 %v4203
      %v4408 = vpop.f32.mrb[0].mxu0
      %v4409 = vadd.f32 0.0, %v4408
      %v4410 = vpop.f32.mrb[0].mxu0
      %v4411 = vpop.f32.mrb[0].mxu0
      %v4412 = vadd.f32 0.0, %v4411
      %v4413 = vpop.f32.mrb[0].mxu0
      %4414 = vmatprep.mubr.bf16.mxu0 0
      %4415 = vmatmul.mubr.bf16.gmra.mrb[0].mxu0 %v4204
      %v4416 = vpop.f32.mrb[0].mxu0
      %v4417 = vadd.f32 0.0, %v4416
      %v4418 = vpop.f32.mrb[0].mxu0
      %v4419 = vpop.f32.mrb[0].mxu0
      %v4420 = vadd.f32 0.0, %v4419
      %v4421 = vpop.f32.mrb[0].mxu0
      %4422 = vmatprep.mubr.bf16.mxu0 0
      %4423 = vmatmul.mubr.bf16.gmra.mrb[0].mxu0 %v4205
      %v4424 = vpop.f32.mrb[0].mxu0
      %v4425 = vadd.f32 0.0, %v4424
      %v4426 = vpop.f32.mrb[0].mxu0
      %v4427 = vpop.f32.mrb[0].mxu0
      %v4428 = vadd.f32 0.0, %v4427
      %v4429 = vpop.f32.mrb[0].mxu0
      %4430 = vdwg.mxu0
      %v4431 = vadd.f32 %v3886, %v4305
      %v4432 = vadd.f32 %v3887, %v4308
      %v4433 = vadd.f32 %v3888, %v4313
      %v4434 = vadd.f32 %v3889, %v4316
      %v4435 = vadd.f32 %v3890, %v4321
      %v4436 = vadd.f32 %v3891, %v4324
      %v4437 = vadd.f32 %v3892, %v4329
      %v4438 = vadd.f32 %v3893, %v4332
      %v4439 = vadd.f32 %v3894, %v4337
      %v4440 = vadd.f32 %v3895, %v4340
      %v4441 = vadd.f32 %v3896, %v4345
      %v4442 = vadd.f32 %v3897, %v4348
      %v4443 = vadd.f32 %v3898, %v4353
      %v4444 = vadd.f32 %v3899, %v4356
      %v4445 = vadd.f32 %v3900, %v4361
      %v4446 = vadd.f32 %v3901, %v4364
      %v4447 = vadd.f32 %v3902, %v4369
      %v4448 = vadd.f32 %v3903, %v4372
      %v4449 = vadd.f32 %v3904, %v4377
      %v4450 = vadd.f32 %v3905, %v4380
      %v4451 = vadd.f32 %v3906, %v4385
      %v4452 = vadd.f32 %v3907, %v4388
      %v4453 = vadd.f32 %v3908, %v4393
      %v4454 = vadd.f32 %v3909, %v4396
      %v4455 = vadd.f32 %v3910, %v4401
      %v4456 = vadd.f32 %v3911, %v4404
      %v4457 = vadd.f32 %v3912, %v4409
      %v4458 = vadd.f32 %v3913, %v4412
      %v4459 = vadd.f32 %v3914, %v4417
      %v4460 = vadd.f32 %v3915, %v4420
      %v4461 = vadd.f32 %v3916, %v4425
      %v4462 = vadd.f32 %v3917, %v4428
      %s4463 = scalar_lea.vmem [#allocation2], 16
      %v4464 = vld [vmem:[%s4463] sm:$0xf]
      %v4465 = vld [vmem:[%s4463 + $0x8] sm:$0xf]
      %v4466 = vld [vmem:[%s4463 + $0x10] sm:$0xf]
      %v4467 = vld [vmem:[%s4463 + $0x18] sm:$0xf]
      %v4468 = vld [vmem:[%s4463 + $0x20] sm:$0xf]
      %v4469 = vld [vmem:[%s4463 + $0x28] sm:$0xf]
      %v4470 = vld [vmem:[%s4463 + $0x30] sm:$0xf]
      %v4471 = vld [vmem:[%s4463 + $0x38] sm:$0xf]
      %v4472 = vld [vmem:[%s4463 + $0x50] sm:$0xf]
      %v4473 = vld [vmem:[%s4463 + $0x58] sm:$0xf]
      %v4474 = vld [vmem:[%s4463 + $0x60] sm:$0xf]
      %v4475 = vld [vmem:[%s4463 + $0x68] sm:$0xf]
      %v4476 = vld [vmem:[%s4463 + $0x70] sm:$0xf]
      %v4477 = vld [vmem:[%s4463 + $0x78] sm:$0xf]
      %v4478 = vld [vmem:[%s4463 + $0x80] sm:$0xf]
      %v4479 = vld [vmem:[%s4463 + $0x88] sm:$0xf]
      %v4480 = vld [vmem:[%s4463 + $0xa0] sm:$0xf]
      %v4481 = vld [vmem:[%s4463 + $0xa8] sm:$0xf]
      %v4482 = vld [vmem:[%s4463 + $0xb0] sm:$0xf]
      %v4483 = vld [vmem:[%s4463 + $0xb8] sm:$0xf]
      %v4484 = vld [vmem:[%s4463 + $0xc0] sm:$0xf]
      %v4485 = vld [vmem:[%s4463 + $0xc8] sm:$0xf]
      %v4486 = vld [vmem:[%s4463 + $0xd0] sm:$0xf]
      %v4487 = vld [vmem:[%s4463 + $0xd8] sm:$0xf]
      %v4488 = vld [vmem:[%s4463 + $0xf0] sm:$0xf]
      %v4489 = vld [vmem:[%s4463 + $0xf8] sm:$0xf]
      %v4490 = vld [vmem:[%s4463 + $0x100] sm:$0xf]
      %v4491 = vld [vmem:[%s4463 + $0x108] sm:$0xf]
      %v4492 = vld [vmem:[%s4463 + $0x110] sm:$0xf]
      %v4493 = vld [vmem:[%s4463 + $0x118] sm:$0xf]
      %v4494 = vld [vmem:[%s4463 + $0x120] sm:$0xf]
      %v4495 = vld [vmem:[%s4463 + $0x128] sm:$0xf]
      %v4496 = vld [vmem:[%s1 + $0x180] sm:$0xf]
      %v4497 = vld [vmem:[%s1 + $0x184] sm:$0xf]
      %v4498 = vld [vmem:[%s1 + $0x188] sm:$0xf]
      %v4499 = vld [vmem:[%s1 + $0x18c] sm:$0xf]
      %v4500 = vld [vmem:[%s1 + $0x190] sm:$0xf]
      %v4501 = vld [vmem:[%s1 + $0x194] sm:$0xf]
      %v4502 = vld [vmem:[%s1 + $0x198] sm:$0xf]
      %v4503 = vld [vmem:[%s1 + $0x19c] sm:$0xf]
      %v4504 = vld [vmem:[%s1 + $0x1a0] sm:$0xf]
      %v4505 = vld [vmem:[%s1 + $0x1a4] sm:$0xf]
      %v4506 = vld [vmem:[%s1 + $0x1a8] sm:$0xf]
      %v4507 = vld [vmem:[%s1 + $0x1ac] sm:$0xf]
      %v4508 = vld [vmem:[%s1 + $0x1b0] sm:$0xf]
      %v4509 = vld [vmem:[%s1 + $0x1b4] sm:$0xf]
      %v4510 = vld [vmem:[%s1 + $0x1b8] sm:$0xf]
      %v4511 = vld [vmem:[%s1 + $0x1bc] sm:$0xf]
      %v4544 = vunpack.c.l.b16 %v4464
      %v4545 = vunpack.c.l.b16 %v4465
      %v4546 = vunpack.c.l.b16 %v4466
      %v4547 = vunpack.c.l.b16 %v4467
      %v4548 = vunpack.c.l.b16 %v4468
      %v4549 = vunpack.c.l.b16 %v4469
      %v4550 = vunpack.c.l.b16 %v4470
      %v4551 = vunpack.c.l.b16 %v4471
      %v4552 = vunpack.c.l.b16 %v4472
      %v4553 = vunpack.c.l.b16 %v4473
      %v4554 = vunpack.c.l.b16 %v4474
      %v4555 = vunpack.c.l.b16 %v4475
      %v4556 = vunpack.c.l.b16 %v4476
      %v4557 = vunpack.c.l.b16 %v4477
      %v4558 = vunpack.c.l.b16 %v4478
      %v4559 = vunpack.c.l.b16 %v4479
      %v4560 = vunpack.c.l.b16 %v4480
      %v4561 = vunpack.c.l.b16 %v4481
      %v4562 = vunpack.c.l.b16 %v4482
      %v4563 = vunpack.c.l.b16 %v4483
      %v4564 = vunpack.c.l.b16 %v4484
      %v4565 = vunpack.c.l.b16 %v4485
      %v4566 = vunpack.c.l.b16 %v4486
      %v4567 = vunpack.c.l.b16 %v4487
      %v4568 = vunpack.c.l.b16 %v4488
      %v4569 = vunpack.c.l.b16 %v4489
      %v4570 = vunpack.c.l.b16 %v4490
      %v4571 = vunpack.c.l.b16 %v4491
      %v4572 = vunpack.c.l.b16 %v4492
      %v4573 = vunpack.c.l.b16 %v4493
      %v4574 = vunpack.c.l.b16 %v4494
      %v4575 = vunpack.c.l.b16 %v4495
      %v4576 = vpack.c.b16 %v4545, %v4544
      %v4577 = vpack.c.b16 %v4547, %v4546
      %v4578 = vpack.c.b16 %v4549, %v4548
      %v4579 = vpack.c.b16 %v4551, %v4550
      %v4580 = vpack.c.b16 %v4553, %v4552
      %v4581 = vpack.c.b16 %v4555, %v4554
      %v4582 = vpack.c.b16 %v4557, %v4556
      %v4583 = vpack.c.b16 %v4559, %v4558
      %v4584 = vpack.c.b16 %v4561, %v4560
      %v4585 = vpack.c.b16 %v4563, %v4562
      %v4586 = vpack.c.b16 %v4565, %v4564
      %v4587 = vpack.c.b16 %v4567, %v4566
      %v4588 = vpack.c.b16 %v4569, %v4568
      %v4589 = vpack.c.b16 %v4571, %v4570
      %v4590 = vpack.c.b16 %v4573, %v4572
      %v4591 = vpack.c.b16 %v4575, %v4574
      %v4624 = vunpack.c.l.b16 %v4496
      %v4625 = vunpack.c.l.b16 %v4497
      %v4626 = vunpack.c.l.b16 %v4498
      %v4627 = vunpack.c.l.b16 %v4499
      %v4628 = vunpack.c.l.b16 %v4500
      %v4629 = vunpack.c.l.b16 %v4501
      %v4630 = vunpack.c.l.b16 %v4502
      %v4631 = vunpack.c.l.b16 %v4503
      %v4632 = vunpack.c.l.b16 %v4504
      %v4633 = vunpack.c.l.b16 %v4505
      %v4634 = vunpack.c.l.b16 %v4506
      %v4635 = vunpack.c.l.b16 %v4507
      %v4636 = vunpack.c.l.b16 %v4508
      %v4637 = vunpack.c.l.b16 %v4509
      %v4638 = vunpack.c.l.b16 %v4510
      %v4639 = vunpack.c.l.b16 %v4511
      %v4640 = vpack.c.b16 %v4625, %v4624
      %v4641 = vpack.c.b16 %v4627, %v4626
      %v4642 = vpack.c.b16 %v4629, %v4628
      %v4643 = vpack.c.b16 %v4631, %v4630
      %v4644 = vpack.c.b16 %v4633, %v4632
      %v4645 = vpack.c.b16 %v4635, %v4634
      %v4646 = vpack.c.b16 %v4637, %v4636
      %v4647 = vpack.c.b16 %v4639, %v4638
      %4656 = vmatprep.subr.bf16.mxu0 0
      %4657 = vmatpush1.bf16.msra.mxu0 %v4640
      %4658 = vmatprep.subr.bf16.mxu0 0
      %4659 = vmatpush1.bf16.msra.mxu0 %v4641
      %4660 = vmatprep.subr.bf16.mxu0 0
      %4661 = vmatpush1.bf16.msra.mxu0 %v4642
      %4662 = vmatprep.subr.bf16.mxu0 0
      %4663 = vmatpush1.bf16.msra.mxu0 %v4643
      %4664 = vmatprep.subr.bf16.mxu0 0
      %4665 = vmatpush1.bf16.msra.mxu0 %v4644
      %4666 = vmatprep.subr.bf16.mxu0 0
      %4667 = vmatpush1.bf16.msra.mxu0 %v4645
      %4668 = vmatprep.subr.bf16.mxu0 0
      %4669 = vmatpush1.bf16.msra.mxu0 %v4646
      %4670 = vmatprep.subr.bf16.mxu0 0
      %4671 = vmatpush1.bf16.msra.mxu0 %v4647
      %4672 = vmatprep.subr.bf16.mxu0 0
      %4673 = vmatpush1.bf16.msra.mxu0 0
      %4674 = vmatprep.subr.bf16.mxu0 0
      %4675 = vmatpush1.bf16.msra.mxu0 0
      %4676 = vmatprep.subr.bf16.mxu0 0
      %4677 = vmatpush1.bf16.msra.mxu0 0
      %4678 = vmatprep.subr.bf16.mxu0 0
      %4679 = vmatpush1.bf16.msra.mxu0 0
      %4680 = vmatprep.subr.bf16.mxu0 0
      %4681 = vmatpush1.bf16.msra.mxu0 0
      %4682 = vmatprep.subr.bf16.mxu0 0
      %4683 = vmatpush1.bf16.msra.mxu0 0
      %4684 = vmatprep.subr.bf16.mxu0 0
      %4685 = vmatpush1.bf16.msra.mxu0 0
      %4686 = vmatprep.subr.bf16.mxu0 0
      %4687 = vmatpush1.bf16.msra.mxu0 0
      %4688 = vmatprep.mubr.bf16.mxu0 0
      %4689 = vmatmul.mubr.bf16.gmra.mrb[0].mxu0 %v4576
      %v4690 = vpop.f32.mrb[0].mxu0
      %v4691 = vadd.f32 0.0, %v4690
      %v4692 = vpop.f32.mrb[0].mxu0
      %v4693 = vpop.f32.mrb[0].mxu0
      %v4694 = vadd.f32 0.0, %v4693
      %v4695 = vpop.f32.mrb[0].mxu0
      %4696 = vmatprep.mubr.bf16.mxu0 0
      %4697 = vmatmul.mubr.bf16.gmra.mrb[0].mxu0 %v4577
      %v4698 = vpop.f32.mrb[0].mxu0
      %v4699 = vadd.f32 0.0, %v4698
      %v4700 = vpop.f32.mrb[0].mxu0
      %v4701 = vpop.f32.mrb[0].mxu0
      %v4702 = vadd.f32 0.0, %v4701
      %v4703 = vpop.f32.mrb[0].mxu0
      %4704 = vmatprep.mubr.bf16.mxu0 0
      %4705 = vmatmul.mubr.bf16.gmra.mrb[0].mxu0 %v4578
      %v4706 = vpop.f32.mrb[0].mxu0
      %v4707 = vadd.f32 0.0, %v4706
      %v4708 = vpop.f32.mrb[0].mxu0
      %v4709 = vpop.f32.mrb[0].mxu0
      %v4710 = vadd.f32 0.0, %v4709
      %v4711 = vpop.f32.mrb[0].mxu0
      %4712 = vmatprep.mubr.bf16.mxu0 0
      %4713 = vmatmul.mubr.bf16.gmra.mrb[0].mxu0 %v4579
      %v4714 = vpop.f32.mrb[0].mxu0
      %v4715 = vadd.f32 0.0, %v4714
      %v4716 = vpop.f32.mrb[0].mxu0
      %v4717 = vpop.f32.mrb[0].mxu0
      %v4718 = vadd.f32 0.0, %v4717
      %v4719 = vpop.f32.mrb[0].mxu0
      %4720 = vmatprep.mubr.bf16.mxu0 0
      %4721 = vmatmul.mubr.bf16.gmra.mrb[0].mxu0 %v4580
      %v4722 = vpop.f32.mrb[0].mxu0
      %v4723 = vadd.f32 0.0, %v4722
      %v4724 = vpop.f32.mrb[0].mxu0
      %v4725 = vpop.f32.mrb[0].mxu0
      %v4726 = vadd.f32 0.0, %v4725
      %v4727 = vpop.f32.mrb[0].mxu0
      %4728 = vmatprep.mubr.bf16.mxu0 0
      %4729 = vmatmul.mubr.bf16.gmra.mrb[0].mxu0 %v4581
      %v4730 = vpop.f32.mrb[0].mxu0
      %v4731 = vadd.f32 0.0, %v4730
      %v4732 = vpop.f32.mrb[0].mxu0
      %v4733 = vpop.f32.mrb[0].mxu0
      %v4734 = vadd.f32 0.0, %v4733
      %v4735 = vpop.f32.mrb[0].mxu0
      %4736 = vmatprep.mubr.bf16.mxu0 0
      %4737 = vmatmul.mubr.bf16.gmra.mrb[0].mxu0 %v4582
      %v4738 = vpop.f32.mrb[0].mxu0
      %v4739 = vadd.f32 0.0, %v4738
      %v4740 = vpop.f32.mrb[0].mxu0
      %v4741 = vpop.f32.mrb[0].mxu0
      %v4742 = vadd.f32 0.0, %v4741
      %v4743 = vpop.f32.mrb[0].mxu0
      %4744 = vmatprep.mubr.bf16.mxu0 0
      %4745 = vmatmul.mubr.bf16.gmra.mrb[0].mxu0 %v4583
      %v4746 = vpop.f32.mrb[0].mxu0
      %v4747 = vadd.f32 0.0, %v4746
      %v4748 = vpop.f32.mrb[0].mxu0
      %v4749 = vpop.f32.mrb[0].mxu0
      %v4750 = vadd.f32 0.0, %v4749
      %v4751 = vpop.f32.mrb[0].mxu0
      %4752 = vmatprep.mubr.bf16.mxu0 0
      %4753 = vmatmul.mubr.bf16.gmra.mrb[0].mxu0 %v4584
      %v4754 = vpop.f32.mrb[0].mxu0
      %v4755 = vadd.f32 0.0, %v4754
      %v4756 = vpop.f32.mrb[0].mxu0
      %v4757 = vpop.f32.mrb[0].mxu0
      %v4758 = vadd.f32 0.0, %v4757
      %v4759 = vpop.f32.mrb[0].mxu0
      %4760 = vmatprep.mubr.bf16.mxu0 0
      %4761 = vmatmul.mubr.bf16.gmra.mrb[0].mxu0 %v4585
      %v4762 = vpop.f32.mrb[0].mxu0
      %v4763 = vadd.f32 0.0, %v4762
      %v4764 = vpop.f32.mrb[0].mxu0
      %v4765 = vpop.f32.mrb[0].mxu0
      %v4766 = vadd.f32 0.0, %v4765
      %v4767 = vpop.f32.mrb[0].mxu0
      %4768 = vmatprep.mubr.bf16.mxu0 0
      %4769 = vmatmul.mubr.bf16.gmra.mrb[0].mxu0 %v4586
      %v4770 = vpop.f32.mrb[0].mxu0
      %v4771 = vadd.f32 0.0, %v4770
      %v4772 = vpop.f32.mrb[0].mxu0
      %v4773 = vpop.f32.mrb[0].mxu0
      %v4774 = vadd.f32 0.0, %v4773
      %v4775 = vpop.f32.mrb[0].mxu0
      %4776 = vmatprep.mubr.bf16.mxu0 0
      %4777 = vmatmul.mubr.bf16.gmra.mrb[0].mxu0 %v4587
      %v4778 = vpop.f32.mrb[0].mxu0
      %v4779 = vadd.f32 0.0, %v4778
      %v4780 = vpop.f32.mrb[0].mxu0
      %v4781 = vpop.f32.mrb[0].mxu0
      %v4782 = vadd.f32 0.0, %v4781
      %v4783 = vpop.f32.mrb[0].mxu0
      %4784 = vmatprep.mubr.bf16.mxu0 0
      %4785 = vmatmul.mubr.bf16.gmra.mrb[0].mxu0 %v4588
      %v4786 = vpop.f32.mrb[0].mxu0
      %v4787 = vadd.f32 0.0, %v4786
      %v4788 = vpop.f32.mrb[0].mxu0
      %v4789 = vpop.f32.mrb[0].mxu0
      %v4790 = vadd.f32 0.0, %v4789
      %v4791 = vpop.f32.mrb[0].mxu0
      %4792 = vmatprep.mubr.bf16.mxu0 0
      %4793 = vmatmul.mubr.bf16.gmra.mrb[0].mxu0 %v4589
      %v4794 = vpop.f32.mrb[0].mxu0
      %v4795 = vadd.f32 0.0, %v4794
      %v4796 = vpop.f32.mrb[0].mxu0
      %v4797 = vpop.f32.mrb[0].mxu0
      %v4798 = vadd.f32 0.0, %v4797
      %v4799 = vpop.f32.mrb[0].mxu0
      %4800 = vmatprep.mubr.bf16.mxu0 0
      %4801 = vmatmul.mubr.bf16.gmra.mrb[0].mxu0 %v4590
      %v4802 = vpop.f32.mrb[0].mxu0
      %v4803 = vadd.f32 0.0, %v4802
      %v4804 = vpop.f32.mrb[0].mxu0
      %v4805 = vpop.f32.mrb[0].mxu0
      %v4806 = vadd.f32 0.0, %v4805
      %v4807 = vpop.f32.mrb[0].mxu0
      %4808 = vmatprep.mubr.bf16.mxu0 0
      %4809 = vmatmul.mubr.bf16.gmra.mrb[0].mxu0 %v4591
      %v4810 = vpop.f32.mrb[0].mxu0
      %v4811 = vadd.f32 0.0, %v4810
      %v4812 = vpop.f32.mrb[0].mxu0
      %v4813 = vpop.f32.mrb[0].mxu0
      %v4814 = vadd.f32 0.0, %v4813
      %v4815 = vpop.f32.mrb[0].mxu0
      %4816 = vdwg.mxu0
      %v4817 = vadd.f32 %v4431, %v4691
      %v4818 = vadd.f32 %v4432, %v4694
      %v4819 = vadd.f32 %v4433, %v4699
      %v4820 = vadd.f32 %v4434, %v4702
      %v4821 = vadd.f32 %v4435, %v4707
      %v4822 = vadd.f32 %v4436, %v4710
      %v4823 = vadd.f32 %v4437, %v4715
      %v4824 = vadd.f32 %v4438, %v4718
      %v4825 = vadd.f32 %v4439, %v4723
      %v4826 = vadd.f32 %v4440, %v4726
      %v4827 = vadd.f32 %v4441, %v4731
      %v4828 = vadd.f32 %v4442, %v4734
      %v4829 = vadd.f32 %v4443, %v4739
      %v4830 = vadd.f32 %v4444, %v4742
      %v4831 = vadd.f32 %v4445, %v4747
      %v4832 = vadd.f32 %v4446, %v4750
      %v4833 = vadd.f32 %v4447, %v4755
      %v4834 = vadd.f32 %v4448, %v4758
      %v4835 = vadd.f32 %v4449, %v4763
      %v4836 = vadd.f32 %v4450, %v4766
      %v4837 = vadd.f32 %v4451, %v4771
      %v4838 = vadd.f32 %v4452, %v4774
      %v4839 = vadd.f32 %v4453, %v4779
      %v4840 = vadd.f32 %v4454, %v4782
      %v4841 = vadd.f32 %v4455, %v4787
      %v4842 = vadd.f32 %v4456, %v4790
      %v4843 = vadd.f32 %v4457, %v4795
      %v4844 = vadd.f32 %v4458, %v4798
      %v4845 = vadd.f32 %v4459, %v4803
      %v4846 = vadd.f32 %v4460, %v4806
      %v4847 = vadd.f32 %v4461, %v4811
      %v4848 = vadd.f32 %v4462, %v4814
      %v4849 = vld [vmem:[%s4463] sm:$0xf]
      %v4850 = vld [vmem:[%s4463 + $0x4] sm:$0x1]
      %v4851 = vld [vmem:[%s4463 + $0x8] sm:$0xf]
      %v4852 = vld [vmem:[%s4463 + $0xc] sm:$0x1]
      %v4853 = vld [vmem:[%s4463 + $0x10] sm:$0xf]
      %v4854 = vld [vmem:[%s4463 + $0x14] sm:$0x1]
      %v4855 = vld [vmem:[%s4463 + $0x18] sm:$0xf]
      %v4856 = vld [vmem:[%s4463 + $0x1c] sm:$0x1]
      %v4857 = vld [vmem:[%s4463 + $0x20] sm:$0xf]
      %v4858 = vld [vmem:[%s4463 + $0x24] sm:$0x1]
      %v4859 = vld [vmem:[%s4463 + $0x28] sm:$0xf]
      %v4860 = vld [vmem:[%s4463 + $0x2c] sm:$0x1]
      %v4861 = vld [vmem:[%s4463 + $0x30] sm:$0xf]
      %v4862 = vld [vmem:[%s4463 + $0x34] sm:$0x1]
      %v4863 = vld [vmem:[%s4463 + $0x38] sm:$0xf]
      %v4864 = vld [vmem:[%s4463 + $0x3c] sm:$0x1]
      %v4865 = vld [vmem:[%s4463 + $0x50] sm:$0xf]
      %v4866 = vld [vmem:[%s4463 + $0x54] sm:$0x1]
      %v4867 = vld [vmem:[%s4463 + $0x58] sm:$0xf]
      %v4868 = vld [vmem:[%s4463 + $0x5c] sm:$0x1]
      %v4869 = vld [vmem:[%s4463 + $0x60] sm:$0xf]
      %v4870 = vld [vmem:[%s4463 + $0x64] sm:$0x1]
      %v4871 = vld [vmem:[%s4463 + $0x68] sm:$0xf]
      %v4872 = vld [vmem:[%s4463 + $0x6c] sm:$0x1]
      %v4873 = vld [vmem:[%s4463 + $0x70] sm:$0xf]
      %v4874 = vld [vmem:[%s4463 + $0x74] sm:$0x1]
      %v4875 = vld [vmem:[%s4463 + $0x78] sm:$0xf]
      %v4876 = vld [vmem:[%s4463 + $0x7c] sm:$0x1]
      %v4877 = vld [vmem:[%s4463 + $0x80] sm:$0xf]
      %v4878 = vld [vmem:[%s4463 + $0x84] sm:$0x1]
      %v4879 = vld [vmem:[%s4463 + $0x88] sm:$0xf]
      %v4880 = vld [vmem:[%s4463 + $0x8c] sm:$0x1]
      %v4881 = vld [vmem:[%s4463 + $0xa0] sm:$0xf]
      %v4882 = vld [vmem:[%s4463 + $0xa4] sm:$0x1]
      %v4883 = vld [vmem:[%s4463 + $0xa8] sm:$0xf]
      %v4884 = vld [vmem:[%s4463 + $0xac] sm:$0x1]
      %v4885 = vld [vmem:[%s4463 + $0xb0] sm:$0xf]
      %v4886 = vld [vmem:[%s4463 + $0xb4] sm:$0x1]
      %v4887 = vld [vmem:[%s4463 + $0xb8] sm:$0xf]
      %v4888 = vld [vmem:[%s4463 + $0xbc] sm:$0x1]
      %v4889 = vld [vmem:[%s4463 + $0xc0] sm:$0xf]
      %v4890 = vld [vmem:[%s4463 + $0xc4] sm:$0x1]
      %v4891 = vld [vmem:[%s4463 + $0xc8] sm:$0xf]
      %v4892 = vld [vmem:[%s4463 + $0xcc] sm:$0x1]
      %v4893 = vld [vmem:[%s4463 + $0xd0] sm:$0xf]
      %v4894 = vld [vmem:[%s4463 + $0xd4] sm:$0x1]
      %v4895 = vld [vmem:[%s4463 + $0xd8] sm:$0xf]
      %v4896 = vld [vmem:[%s4463 + $0xdc] sm:$0x1]
      %v4897 = vld [vmem:[%s4463 + $0xf0] sm:$0xf]
      %v4898 = vld [vmem:[%s4463 + $0xf4] sm:$0x1]
      %v4899 = vld [vmem:[%s4463 + $0xf8] sm:$0xf]
      %v4900 = vld [vmem:[%s4463 + $0xfc] sm:$0x1]
      %v4901 = vld [vmem:[%s4463 + $0x100] sm:$0xf]
      %v4902 = vld [vmem:[%s4463 + $0x104] sm:$0x1]
      %v4903 = vld [vmem:[%s4463 + $0x108] sm:$0xf]
      %v4904 = vld [vmem:[%s4463 + $0x10c] sm:$0x1]
      %v4905 = vld [vmem:[%s4463 + $0x110] sm:$0xf]
      %v4906 = vld [vmem:[%s4463 + $0x114] sm:$0x1]
      %v4907 = vld [vmem:[%s4463 + $0x118] sm:$0xf]
      %v4908 = vld [vmem:[%s4463 + $0x11c] sm:$0x1]
      %v4909 = vld [vmem:[%s4463 + $0x120] sm:$0xf]
      %v4910 = vld [vmem:[%s4463 + $0x124] sm:$0x1]
      %v4911 = vld [vmem:[%s4463 + $0x128] sm:$0xf]
      %v4912 = vld [vmem:[%s4463 + $0x12c] sm:$0x1]
      %v4914 = vshrl.u32 %v4849, 16
      %v4916 = vrot.slane %v4914, 4
      %v4917 = vshll.u32 %v4849, 16
      %v4919 = vrot.slane %v4917, 5
      %v4920 = vor.u32 %v4916, %v4919
      %v4921 = vrot.slane %v4920, 4
      %v4923 = vshll.u32 %v4850, 16
      %v4925 = vrot.slane %v4923, 5
      %v4926 = vsel %vm1109, %v4921, %v4925
      %v4928 = vshrl.u32 %v4851, 16
      %v4930 = vrot.slane %v4928, 4
      %v4931 = vshll.u32 %v4851, 16
      %v4933 = vrot.slane %v4931, 5
      %v4934 = vor.u32 %v4930, %v4933
      %v4935 = vrot.slane %v4934, 4
      %v4937 = vshll.u32 %v4852, 16
      %v4939 = vrot.slane %v4937, 5
      %v4940 = vsel %vm1109, %v4935, %v4939
      %v4942 = vshrl.u32 %v4853, 16
      %v4944 = vrot.slane %v4942, 4
      %v4945 = vshll.u32 %v4853, 16
      %v4947 = vrot.slane %v4945, 5
      %v4948 = vor.u32 %v4944, %v4947
      %v4949 = vrot.slane %v4948, 4
      %v4951 = vshll.u32 %v4854, 16
      %v4953 = vrot.slane %v4951, 5
      %v4954 = vsel %vm1109, %v4949, %v4953
      %v4956 = vshrl.u32 %v4855, 16
      %v4958 = vrot.slane %v4956, 4
      %v4959 = vshll.u32 %v4855, 16
      %v4961 = vrot.slane %v4959, 5
      %v4962 = vor.u32 %v4958, %v4961
      %v4963 = vrot.slane %v4962, 4
      %v4965 = vshll.u32 %v4856, 16
      %v4967 = vrot.slane %v4965, 5
      %v4968 = vsel %vm1109, %v4963, %v4967
      %v4970 = vshrl.u32 %v4857, 16
      %v4972 = vrot.slane %v4970, 4
      %v4973 = vshll.u32 %v4857, 16
      %v4975 = vrot.slane %v4973, 5
      %v4976 = vor.u32 %v4972, %v4975
      %v4977 = vrot.slane %v4976, 4
      %v4979 = vshll.u32 %v4858, 16
      %v4981 = vrot.slane %v4979, 5
      %v4982 = vsel %vm1109, %v4977, %v4981
      %v4984 = vshrl.u32 %v4859, 16
      %v4986 = vrot.slane %v4984, 4
      %v4987 = vshll.u32 %v4859, 16
      %v4989 = vrot.slane %v4987, 5
      %v4990 = vor.u32 %v4986, %v4989
      %v4991 = vrot.slane %v4990, 4
      %v4993 = vshll.u32 %v4860, 16
      %v4995 = vrot.slane %v4993, 5
      %v4996 = vsel %vm1109, %v4991, %v4995
      %v4998 = vshrl.u32 %v4861, 16
      %v5000 = vrot.slane %v4998, 4
      %v5001 = vshll.u32 %v4861, 16
      %v5003 = vrot.slane %v5001, 5
      %v5004 = vor.u32 %v5000, %v5003
      %v5005 = vrot.slane %v5004, 4
      %v5007 = vshll.u32 %v4862, 16
      %v5009 = vrot.slane %v5007, 5
      %v5010 = vsel %vm1109, %v5005, %v5009
      %v5012 = vshrl.u32 %v4863, 16
      %v5014 = vrot.slane %v5012, 4
      %v5015 = vshll.u32 %v4863, 16
      %v5017 = vrot.slane %v5015, 5
      %v5018 = vor.u32 %v5014, %v5017
      %v5019 = vrot.slane %v5018, 4
      %v5021 = vshll.u32 %v4864, 16
      %v5023 = vrot.slane %v5021, 5
      %v5024 = vsel %vm1109, %v5019, %v5023
      %v5026 = vshrl.u32 %v4865, 16
      %v5028 = vrot.slane %v5026, 4
      %v5029 = vshll.u32 %v4865, 16
      %v5031 = vrot.slane %v5029, 5
      %v5032 = vor.u32 %v5028, %v5031
      %v5033 = vrot.slane %v5032, 4
      %v5035 = vshll.u32 %v4866, 16
      %v5037 = vrot.slane %v5035, 5
      %v5038 = vsel %vm1109, %v5033, %v5037
      %v5040 = vshrl.u32 %v4867, 16
      %v5042 = vrot.slane %v5040, 4
      %v5043 = vshll.u32 %v4867, 16
      %v5045 = vrot.slane %v5043, 5
      %v5046 = vor.u32 %v5042, %v5045
      %v5047 = vrot.slane %v5046, 4
      %v5049 = vshll.u32 %v4868, 16
      %v5051 = vrot.slane %v5049, 5
      %v5052 = vsel %vm1109, %v5047, %v5051
      %v5054 = vshrl.u32 %v4869, 16
      %v5056 = vrot.slane %v5054, 4
      %v5057 = vshll.u32 %v4869, 16
      %v5059 = vrot.slane %v5057, 5
      %v5060 = vor.u32 %v5056, %v5059
      %v5061 = vrot.slane %v5060, 4
      %v5063 = vshll.u32 %v4870, 16
      %v5065 = vrot.slane %v5063, 5
      %v5066 = vsel %vm1109, %v5061, %v5065
      %v5068 = vshrl.u32 %v4871, 16
      %v5070 = vrot.slane %v5068, 4
      %v5071 = vshll.u32 %v4871, 16
      %v5073 = vrot.slane %v5071, 5
      %v5074 = vor.u32 %v5070, %v5073
      %v5075 = vrot.slane %v5074, 4
      %v5077 = vshll.u32 %v4872, 16
      %v5079 = vrot.slane %v5077, 5
      %v5080 = vsel %vm1109, %v5075, %v5079
      %v5082 = vshrl.u32 %v4873, 16
      %v5084 = vrot.slane %v5082, 4
      %v5085 = vshll.u32 %v4873, 16
      %v5087 = vrot.slane %v5085, 5
      %v5088 = vor.u32 %v5084, %v5087
      %v5089 = vrot.slane %v5088, 4
      %v5091 = vshll.u32 %v4874, 16
      %v5093 = vrot.slane %v5091, 5
      %v5094 = vsel %vm1109, %v5089, %v5093
      %v5096 = vshrl.u32 %v4875, 16
      %v5098 = vrot.slane %v5096, 4
      %v5099 = vshll.u32 %v4875, 16
      %v5101 = vrot.slane %v5099, 5
      %v5102 = vor.u32 %v5098, %v5101
      %v5103 = vrot.slane %v5102, 4
      %v5105 = vshll.u32 %v4876, 16
      %v5107 = vrot.slane %v5105, 5
      %v5108 = vsel %vm1109, %v5103, %v5107
      %v5110 = vshrl.u32 %v4877, 16
      %v5112 = vrot.slane %v5110, 4
      %v5113 = vshll.u32 %v4877, 16
      %v5115 = vrot.slane %v5113, 5
      %v5116 = vor.u32 %v5112, %v5115
      %v5117 = vrot.slane %v5116, 4
      %v5119 = vshll.u32 %v4878, 16
      %v5121 = vrot.slane %v5119, 5
      %v5122 = vsel %vm1109, %v5117, %v5121
      %v5124 = vshrl.u32 %v4879, 16
      %v5126 = vrot.slane %v5124, 4
      %v5127 = vshll.u32 %v4879, 16
      %v5129 = vrot.slane %v5127, 5
      %v5130 = vor.u32 %v5126, %v5129
      %v5131 = vrot.slane %v5130, 4
      %v5133 = vshll.u32 %v4880, 16
      %v5135 = vrot.slane %v5133, 5
      %v5136 = vsel %vm1109, %v5131, %v5135
      %v5138 = vshrl.u32 %v4881, 16
      %v5140 = vrot.slane %v5138, 4
      %v5141 = vshll.u32 %v4881, 16
      %v5143 = vrot.slane %v5141, 5
      %v5144 = vor.u32 %v5140, %v5143
      %v5145 = vrot.slane %v5144, 4
      %v5147 = vshll.u32 %v4882, 16
      %v5149 = vrot.slane %v5147, 5
      %v5150 = vsel %vm1109, %v5145, %v5149
      %v5152 = vshrl.u32 %v4883, 16
      %v5154 = vrot.slane %v5152, 4
      %v5155 = vshll.u32 %v4883, 16
      %v5157 = vrot.slane %v5155, 5
      %v5158 = vor.u32 %v5154, %v5157
      %v5159 = vrot.slane %v5158, 4
      %v5161 = vshll.u32 %v4884, 16
      %v5163 = vrot.slane %v5161, 5
      %v5164 = vsel %vm1109, %v5159, %v5163
      %v5166 = vshrl.u32 %v4885, 16
      %v5168 = vrot.slane %v5166, 4
      %v5169 = vshll.u32 %v4885, 16
      %v5171 = vrot.slane %v5169, 5
      %v5172 = vor.u32 %v5168, %v5171
      %v5173 = vrot.slane %v5172, 4
      %v5175 = vshll.u32 %v4886, 16
      %v5177 = vrot.slane %v5175, 5
      %v5178 = vsel %vm1109, %v5173, %v5177
      %v5180 = vshrl.u32 %v4887, 16
      %v5182 = vrot.slane %v5180, 4
      %v5183 = vshll.u32 %v4887, 16
      %v5185 = vrot.slane %v5183, 5
      %v5186 = vor.u32 %v5182, %v5185
      %v5187 = vrot.slane %v5186, 4
      %v5189 = vshll.u32 %v4888, 16
      %v5191 = vrot.slane %v5189, 5
      %v5192 = vsel %vm1109, %v5187, %v5191
      %v5194 = vshrl.u32 %v4889, 16
      %v5196 = vrot.slane %v5194, 4
      %v5197 = vshll.u32 %v4889, 16
      %v5199 = vrot.slane %v5197, 5
      %v5200 = vor.u32 %v5196, %v5199
      %v5201 = vrot.slane %v5200, 4
      %v5203 = vshll.u32 %v4890, 16
      %v5205 = vrot.slane %v5203, 5
      %v5206 = vsel %vm1109, %v5201, %v5205
      %v5208 = vshrl.u32 %v4891, 16
      %v5210 = vrot.slane %v5208, 4
      %v5211 = vshll.u32 %v4891, 16
      %v5213 = vrot.slane %v5211, 5
      %v5214 = vor.u32 %v5210, %v5213
      %v5215 = vrot.slane %v5214, 4
      %v5217 = vshll.u32 %v4892, 16
      %v5219 = vrot.slane %v5217, 5
      %v5220 = vsel %vm1109, %v5215, %v5219
      %v5222 = vshrl.u32 %v4893, 16
      %v5224 = vrot.slane %v5222, 4
      %v5225 = vshll.u32 %v4893, 16
      %v5227 = vrot.slane %v5225, 5
      %v5228 = vor.u32 %v5224, %v5227
      %v5229 = vrot.slane %v5228, 4
      %v5231 = vshll.u32 %v4894, 16
      %v5233 = vrot.slane %v5231, 5
      %v5234 = vsel %vm1109, %v5229, %v5233
      %v5236 = vshrl.u32 %v4895, 16
      %v5238 = vrot.slane %v5236, 4
      %v5239 = vshll.u32 %v4895, 16
      %v5241 = vrot.slane %v5239, 5
      %v5242 = vor.u32 %v5238, %v5241
      %v5243 = vrot.slane %v5242, 4
      %v5245 = vshll.u32 %v4896, 16
      %v5247 = vrot.slane %v5245, 5
      %v5248 = vsel %vm1109, %v5243, %v5247
      %v5250 = vshrl.u32 %v4897, 16
      %v5252 = vrot.slane %v5250, 4
      %v5253 = vshll.u32 %v4897, 16
      %v5255 = vrot.slane %v5253, 5
      %v5256 = vor.u32 %v5252, %v5255
      %v5257 = vrot.slane %v5256, 4
      %v5259 = vshll.u32 %v4898, 16
      %v5261 = vrot.slane %v5259, 5
      %v5262 = vsel %vm1109, %v5257, %v5261
      %v5264 = vshrl.u32 %v4899, 16
      %v5266 = vrot.slane %v5264, 4
      %v5267 = vshll.u32 %v4899, 16
      %v5269 = vrot.slane %v5267, 5
      %v5270 = vor.u32 %v5266, %v5269
      %v5271 = vrot.slane %v5270, 4
      %v5273 = vshll.u32 %v4900, 16
      %v5275 = vrot.slane %v5273, 5
      %v5276 = vsel %vm1109, %v5271, %v5275
      %v5278 = vshrl.u32 %v4901, 16
      %v5280 = vrot.slane %v5278, 4
      %v5281 = vshll.u32 %v4901, 16
      %v5283 = vrot.slane %v5281, 5
      %v5284 = vor.u32 %v5280, %v5283
      %v5285 = vrot.slane %v5284, 4
      %v5287 = vshll.u32 %v4902, 16
      %v5289 = vrot.slane %v5287, 5
      %v5290 = vsel %vm1109, %v5285, %v5289
      %v5292 = vshrl.u32 %v4903, 16
      %v5294 = vrot.slane %v5292, 4
      %v5295 = vshll.u32 %v4903, 16
      %v5297 = vrot.slane %v5295, 5
      %v5298 = vor.u32 %v5294, %v5297
      %v5299 = vrot.slane %v5298, 4
      %v5301 = vshll.u32 %v4904, 16
      %v5303 = vrot.slane %v5301, 5
      %v5304 = vsel %vm1109, %v5299, %v5303
      %v5306 = vshrl.u32 %v4905, 16
      %v5308 = vrot.slane %v5306, 4
      %v5309 = vshll.u32 %v4905, 16
      %v5311 = vrot.slane %v5309, 5
      %v5312 = vor.u32 %v5308, %v5311
      %v5313 = vrot.slane %v5312, 4
      %v5315 = vshll.u32 %v4906, 16
      %v5317 = vrot.slane %v5315, 5
      %v5318 = vsel %vm1109, %v5313, %v5317
      %v5320 = vshrl.u32 %v4907, 16
      %v5322 = vrot.slane %v5320, 4
      %v5323 = vshll.u32 %v4907, 16
      %v5325 = vrot.slane %v5323, 5
      %v5326 = vor.u32 %v5322, %v5325
      %v5327 = vrot.slane %v5326, 4
      %v5329 = vshll.u32 %v4908, 16
      %v5331 = vrot.slane %v5329, 5
      %v5332 = vsel %vm1109, %v5327, %v5331
      %v5334 = vshrl.u32 %v4909, 16
      %v5336 = vrot.slane %v5334, 4
      %v5337 = vshll.u32 %v4909, 16
      %v5339 = vrot.slane %v5337, 5
      %v5340 = vor.u32 %v5336, %v5339
      %v5341 = vrot.slane %v5340, 4
      %v5343 = vshll.u32 %v4910, 16
      %v5345 = vrot.slane %v5343, 5
      %v5346 = vsel %vm1109, %v5341, %v5345
      %v5348 = vshrl.u32 %v4911, 16
      %v5350 = vrot.slane %v5348, 4
      %v5351 = vshll.u32 %v4911, 16
      %v5353 = vrot.slane %v5351, 5
      %v5354 = vor.u32 %v5350, %v5353
      %v5355 = vrot.slane %v5354, 4
      %v5357 = vshll.u32 %v4912, 16
      %v5359 = vrot.slane %v5357, 5
      %v5360 = vsel %vm1109, %v5355, %v5359
      %v5361 = vld [vmem:[%s1 + $0x1c0] sm:$0xf]
      %v5362 = vld [vmem:[%s1 + $0x1c4] sm:$0xf]
      %v5363 = vld [vmem:[%s1 + $0x1c8] sm:$0xf]
      %v5364 = vld [vmem:[%s1 + $0x1cc] sm:$0xf]
      %v5365 = vld [vmem:[%s1 + $0x1d0] sm:$0xf]
      %v5366 = vld [vmem:[%s1 + $0x1d4] sm:$0xf]
      %v5367 = vld [vmem:[%s1 + $0x1d8] sm:$0xf]
      %v5368 = vld [vmem:[%s1 + $0x1dc] sm:$0xf]
      %v5369 = vld [vmem:[%s1 + $0x1e0] sm:$0xf]
      %v5370 = vld [vmem:[%s1 + $0x1e4] sm:$0xf]
      %v5371 = vld [vmem:[%s1 + $0x1e8] sm:$0xf]
      %v5372 = vld [vmem:[%s1 + $0x1ec] sm:$0xf]
      %v5373 = vld [vmem:[%s1 + $0x1f0] sm:$0xf]
      %v5374 = vld [vmem:[%s1 + $0x1f4] sm:$0xf]
      %v5375 = vld [vmem:[%s1 + $0x1f8] sm:$0xf]
      %v5376 = vld [vmem:[%s1 + $0x1fc] sm:$0xf]
      %v5377 = vunpack.c.l.b16 %v4926
      %v5378 = vunpack.c.l.b16 %v4940
      %v5379 = vunpack.c.l.b16 %v4954
      %v5380 = vunpack.c.l.b16 %v4968
      %v5381 = vunpack.c.l.b16 %v4982
      %v5382 = vunpack.c.l.b16 %v4996
      %v5383 = vunpack.c.l.b16 %v5010
      %v5384 = vunpack.c.l.b16 %v5024
      %v5385 = vunpack.c.l.b16 %v5038
      %v5386 = vunpack.c.l.b16 %v5052
      %v5387 = vunpack.c.l.b16 %v5066
      %v5388 = vunpack.c.l.b16 %v5080
      %v5389 = vunpack.c.l.b16 %v5094
      %v5390 = vunpack.c.l.b16 %v5108
      %v5391 = vunpack.c.l.b16 %v5122
      %v5392 = vunpack.c.l.b16 %v5136
      %v5393 = vunpack.c.l.b16 %v5150
      %v5394 = vunpack.c.l.b16 %v5164
      %v5395 = vunpack.c.l.b16 %v5178
      %v5396 = vunpack.c.l.b16 %v5192
      %v5397 = vunpack.c.l.b16 %v5206
      %v5398 = vunpack.c.l.b16 %v5220
      %v5399 = vunpack.c.l.b16 %v5234
      %v5400 = vunpack.c.l.b16 %v5248
      %v5401 = vunpack.c.l.b16 %v5262
      %v5402 = vunpack.c.l.b16 %v5276
      %v5403 = vunpack.c.l.b16 %v5290
      %v5404 = vunpack.c.l.b16 %v5304
      %v5405 = vunpack.c.l.b16 %v5318
      %v5406 = vunpack.c.l.b16 %v5332
      %v5407 = vunpack.c.l.b16 %v5346
      %v5408 = vunpack.c.l.b16 %v5360
      %v5409 = vpack.c.b16 %v5378, %v5377
      %v5410 = vpack.c.b16 %v5380, %v5379
      %v5411 = vpack.c.b16 %v5382, %v5381
      %v5412 = vpack.c.b16 %v5384, %v5383
      %v5413 = vpack.c.b16 %v5386, %v5385
      %v5414 = vpack.c.b16 %v5388, %v5387
      %v5415 = vpack.c.b16 %v5390, %v5389
      %v5416 = vpack.c.b16 %v5392, %v5391
      %v5417 = vpack.c.b16 %v5394, %v5393
      %v5418 = vpack.c.b16 %v5396, %v5395
      %v5419 = vpack.c.b16 %v5398, %v5397
      %v5420 = vpack.c.b16 %v5400, %v5399
      %v5421 = vpack.c.b16 %v5402, %v5401
      %v5422 = vpack.c.b16 %v5404, %v5403
      %v5423 = vpack.c.b16 %v5406, %v5405
      %v5424 = vpack.c.b16 %v5408, %v5407
      %v5457 = vunpack.c.l.b16 %v5361
      %v5458 = vunpack.c.l.b16 %v5362
      %v5459 = vunpack.c.l.b16 %v5363
      %v5460 = vunpack.c.l.b16 %v5364
      %v5461 = vunpack.c.l.b16 %v5365
      %v5462 = vunpack.c.l.b16 %v5366
      %v5463 = vunpack.c.l.b16 %v5367
      %v5464 = vunpack.c.l.b16 %v5368
      %v5465 = vunpack.c.l.b16 %v5369
      %v5466 = vunpack.c.l.b16 %v5370
      %v5467 = vunpack.c.l.b16 %v5371
      %v5468 = vunpack.c.l.b16 %v5372
      %v5469 = vunpack.c.l.b16 %v5373
      %v5470 = vunpack.c.l.b16 %v5374
      %v5471 = vunpack.c.l.b16 %v5375
      %v5472 = vunpack.c.l.b16 %v5376
      %v5473 = vpack.c.b16 %v5458, %v5457
      %v5474 = vpack.c.b16 %v5460, %v5459
      %v5475 = vpack.c.b16 %v5462, %v5461
      %v5476 = vpack.c.b16 %v5464, %v5463
      %v5477 = vpack.c.b16 %v5466, %v5465
      %v5478 = vpack.c.b16 %v5468, %v5467
      %v5479 = vpack.c.b16 %v5470, %v5469
      %v5480 = vpack.c.b16 %v5472, %v5471
      %5489 = vmatprep.subr.bf16.mxu0 0
      %5490 = vmatpush1.bf16.msra.mxu0 %v5473
      %5491 = vmatprep.subr.bf16.mxu0 0
      %5492 = vmatpush1.bf16.msra.mxu0 %v5474
      %5493 = vmatprep.subr.bf16.mxu0 0
      %5494 = vmatpush1.bf16.msra.mxu0 %v5475
      %5495 = vmatprep.subr.bf16.mxu0 0
      %5496 = vmatpush1.bf16.msra.mxu0 %v5476
      %5497 = vmatprep.subr.bf16.mxu0 0
      %5498 = vmatpush1.bf16.msra.mxu0 %v5477
      %5499 = vmatprep.subr.bf16.mxu0 0
      %5500 = vmatpush1.bf16.msra.mxu0 %v5478
      %5501 = vmatprep.subr.bf16.mxu0 0
      %5502 = vmatpush1.bf16.msra.mxu0 %v5479
      %5503 = vmatprep.subr.bf16.mxu0 0
      %5504 = vmatpush1.bf16.msra.mxu0 %v5480
      %5505 = vmatprep.subr.bf16.mxu0 0
      %5506 = vmatpush1.bf16.msra.mxu0 0
      %5507 = vmatprep.subr.bf16.mxu0 0
      %5508 = vmatpush1.bf16.msra.mxu0 0
      %5509 = vmatprep.subr.bf16.mxu0 0
      %5510 = vmatpush1.bf16.msra.mxu0 0
      %5511 = vmatprep.subr.bf16.mxu0 0
      %5512 = vmatpush1.bf16.msra.mxu0 0
      %5513 = vmatprep.subr.bf16.mxu0 0
      %5514 = vmatpush1.bf16.msra.mxu0 0
      %5515 = vmatprep.subr.bf16.mxu0 0
      %5516 = vmatpush1.bf16.msra.mxu0 0
      %5517 = vmatprep.subr.bf16.mxu0 0
      %5518 = vmatpush1.bf16.msra.mxu0 0
      %5519 = vmatprep.subr.bf16.mxu0 0
      %5520 = vmatpush1.bf16.msra.mxu0 0
      %5521 = vmatprep.mubr.bf16.mxu0 0
      %5522 = vmatmul.mubr.bf16.gmra.mrb[0].mxu0 %v5409
      %v5523 = vpop.f32.mrb[0].mxu0
      %v5524 = vadd.f32 0.0, %v5523
      %v5525 = vpop.f32.mrb[0].mxu0
      %v5526 = vpop.f32.mrb[0].mxu0
      %v5527 = vadd.f32 0.0, %v5526
      %v5528 = vpop.f32.mrb[0].mxu0
      %5529 = vmatprep.mubr.bf16.mxu0 0
      %5530 = vmatmul.mubr.bf16.gmra.mrb[0].mxu0 %v5410
      %v5531 = vpop.f32.mrb[0].mxu0
      %v5532 = vadd.f32 0.0, %v5531
      %v5533 = vpop.f32.mrb[0].mxu0
      %v5534 = vpop.f32.mrb[0].mxu0
      %v5535 = vadd.f32 0.0, %v5534
      %v5536 = vpop.f32.mrb[0].mxu0
      %5537 = vmatprep.mubr.bf16.mxu0 0
      %5538 = vmatmul.mubr.bf16.gmra.mrb[0].mxu0 %v5411
      %v5539 = vpop.f32.mrb[0].mxu0
      %v5540 = vadd.f32 0.0, %v5539
      %v5541 = vpop.f32.mrb[0].mxu0
      %v5542 = vpop.f32.mrb[0].mxu0
      %v5543 = vadd.f32 0.0, %v5542
      %v5544 = vpop.f32.mrb[0].mxu0
      %5545 = vmatprep.mubr.bf16.mxu0 0
      %5546 = vmatmul.mubr.bf16.gmra.mrb[0].mxu0 %v5412
      %v5547 = vpop.f32.mrb[0].mxu0
      %v5548 = vadd.f32 0.0, %v5547
      %v5549 = vpop.f32.mrb[0].mxu0
      %v5550 = vpop.f32.mrb[0].mxu0
      %v5551 = vadd.f32 0.0, %v5550
      %v5552 = vpop.f32.mrb[0].mxu0
      %5553 = vmatprep.mubr.bf16.mxu0 0
      %5554 = vmatmul.mubr.bf16.gmra.mrb[0].mxu0 %v5413
      %v5555 = vpop.f32.mrb[0].mxu0
      %v5556 = vadd.f32 0.0, %v5555
      %v5557 = vpop.f32.mrb[0].mxu0
      %v5558 = vpop.f32.mrb[0].mxu0
      %v5559 = vadd.f32 0.0, %v5558
      %v5560 = vpop.f32.mrb[0].mxu0
      %5561 = vmatprep.mubr.bf16.mxu0 0
      %5562 = vmatmul.mubr.bf16.gmra.mrb[0].mxu0 %v5414
      %v5563 = vpop.f32.mrb[0].mxu0
      %v5564 = vadd.f32 0.0, %v5563
      %v5565 = vpop.f32.mrb[0].mxu0
      %v5566 = vpop.f32.mrb[0].mxu0
      %v5567 = vadd.f32 0.0, %v5566
      %v5568 = vpop.f32.mrb[0].mxu0
      %5569 = vmatprep.mubr.bf16.mxu0 0
      %5570 = vmatmul.mubr.bf16.gmra.mrb[0].mxu0 %v5415
      %v5571 = vpop.f32.mrb[0].mxu0
      %v5572 = vadd.f32 0.0, %v5571
      %v5573 = vpop.f32.mrb[0].mxu0
      %v5574 = vpop.f32.mrb[0].mxu0
      %v5575 = vadd.f32 0.0, %v5574
      %v5576 = vpop.f32.mrb[0].mxu0
      %5577 = vmatprep.mubr.bf16.mxu0 0
      %5578 = vmatmul.mubr.bf16.gmra.mrb[0].mxu0 %v5416
      %v5579 = vpop.f32.mrb[0].mxu0
      %v5580 = vadd.f32 0.0, %v5579
      %v5581 = vpop.f32.mrb[0].mxu0
      %v5582 = vpop.f32.mrb[0].mxu0
      %v5583 = vadd.f32 0.0, %v5582
      %v5584 = vpop.f32.mrb[0].mxu0
      %5585 = vmatprep.mubr.bf16.mxu0 0
      %5586 = vmatmul.mubr.bf16.gmra.mrb[0].mxu0 %v5417
      %v5587 = vpop.f32.mrb[0].mxu0
      %v5588 = vadd.f32 0.0, %v5587
      %v5589 = vpop.f32.mrb[0].mxu0
      %v5590 = vpop.f32.mrb[0].mxu0
      %v5591 = vadd.f32 0.0, %v5590
      %v5592 = vpop.f32.mrb[0].mxu0
      %5593 = vmatprep.mubr.bf16.mxu0 0
      %5594 = vmatmul.mubr.bf16.gmra.mrb[0].mxu0 %v5418
      %v5595 = vpop.f32.mrb[0].mxu0
      %v5596 = vadd.f32 0.0, %v5595
      %v5597 = vpop.f32.mrb[0].mxu0
      %v5598 = vpop.f32.mrb[0].mxu0
      %v5599 = vadd.f32 0.0, %v5598
      %v5600 = vpop.f32.mrb[0].mxu0
      %5601 = vmatprep.mubr.bf16.mxu0 0
      %5602 = vmatmul.mubr.bf16.gmra.mrb[0].mxu0 %v5419
      %v5603 = vpop.f32.mrb[0].mxu0
      %v5604 = vadd.f32 0.0, %v5603
      %v5605 = vpop.f32.mrb[0].mxu0
      %v5606 = vpop.f32.mrb[0].mxu0
      %v5607 = vadd.f32 0.0, %v5606
      %v5608 = vpop.f32.mrb[0].mxu0
      %5609 = vmatprep.mubr.bf16.mxu0 0
      %5610 = vmatmul.mubr.bf16.gmra.mrb[0].mxu0 %v5420
      %v5611 = vpop.f32.mrb[0].mxu0
      %v5612 = vadd.f32 0.0, %v5611
      %v5613 = vpop.f32.mrb[0].mxu0
      %v5614 = vpop.f32.mrb[0].mxu0
      %v5615 = vadd.f32 0.0, %v5614
      %v5616 = vpop.f32.mrb[0].mxu0
      %5617 = vmatprep.mubr.bf16.mxu0 0
      %5618 = vmatmul.mubr.bf16.gmra.mrb[0].mxu0 %v5421
      %v5619 = vpop.f32.mrb[0].mxu0
      %v5620 = vadd.f32 0.0, %v5619
      %v5621 = vpop.f32.mrb[0].mxu0
      %v5622 = vpop.f32.mrb[0].mxu0
      %v5623 = vadd.f32 0.0, %v5622
      %v5624 = vpop.f32.mrb[0].mxu0
      %5625 = vmatprep.mubr.bf16.mxu0 0
      %5626 = vmatmul.mubr.bf16.gmra.mrb[0].mxu0 %v5422
      %v5627 = vpop.f32.mrb[0].mxu0
      %v5628 = vadd.f32 0.0, %v5627
      %v5629 = vpop.f32.mrb[0].mxu0
      %v5630 = vpop.f32.mrb[0].mxu0
      %v5631 = vadd.f32 0.0, %v5630
      %v5632 = vpop.f32.mrb[0].mxu0
      %5633 = vmatprep.mubr.bf16.mxu0 0
      %5634 = vmatmul.mubr.bf16.gmra.mrb[0].mxu0 %v5423
      %v5635 = vpop.f32.mrb[0].mxu0
      %v5636 = vadd.f32 0.0, %v5635
      %v5637 = vpop.f32.mrb[0].mxu0
      %v5638 = vpop.f32.mrb[0].mxu0
      %v5639 = vadd.f32 0.0, %v5638
      %v5640 = vpop.f32.mrb[0].mxu0
      %5641 = vmatprep.mubr.bf16.mxu0 0
      %5642 = vmatmul.mubr.bf16.gmra.mrb[0].mxu0 %v5424
      %v5643 = vpop.f32.mrb[0].mxu0
      %v5644 = vadd.f32 0.0, %v5643
      %v5645 = vpop.f32.mrb[0].mxu0
      %v5646 = vpop.f32.mrb[0].mxu0
      %v5647 = vadd.f32 0.0, %v5646
      %v5648 = vpop.f32.mrb[0].mxu0
      %5649 = vdwg.mxu0
      %v5650 = vadd.f32 %v4817, %v5524
      %v5651 = vadd.f32 %v4818, %v5527
      %v5652 = vadd.f32 %v4819, %v5532
      %v5653 = vadd.f32 %v4820, %v5535
      %v5654 = vadd.f32 %v4821, %v5540
      %v5655 = vadd.f32 %v4822, %v5543
      %v5656 = vadd.f32 %v4823, %v5548
      %v5657 = vadd.f32 %v4824, %v5551
      %v5658 = vadd.f32 %v4825, %v5556
      %v5659 = vadd.f32 %v4826, %v5559
      %v5660 = vadd.f32 %v4827, %v5564
      %v5661 = vadd.f32 %v4828, %v5567
      %v5662 = vadd.f32 %v4829, %v5572
      %v5663 = vadd.f32 %v4830, %v5575
      %v5664 = vadd.f32 %v4831, %v5580
      %v5665 = vadd.f32 %v4832, %v5583
      %v5666 = vadd.f32 %v4833, %v5588
      %v5667 = vadd.f32 %v4834, %v5591
      %v5668 = vadd.f32 %v4835, %v5596
      %v5669 = vadd.f32 %v4836, %v5599
      %v5670 = vadd.f32 %v4837, %v5604
      %v5671 = vadd.f32 %v4838, %v5607
      %v5672 = vadd.f32 %v4839, %v5612
      %v5673 = vadd.f32 %v4840, %v5615
      %v5674 = vadd.f32 %v4841, %v5620
      %v5675 = vadd.f32 %v4842, %v5623
      %v5676 = vadd.f32 %v4843, %v5628
      %v5677 = vadd.f32 %v4844, %v5631
      %v5678 = vadd.f32 %v4845, %v5636
      %v5679 = vadd.f32 %v4846, %v5639
      %v5680 = vadd.f32 %v4847, %v5644
      %v5681 = vadd.f32 %v4848, %v5647
      %v5682 = vld [vmem:[%s4463] sm:$0xe]
      %v5683 = vld [vmem:[%s4463 + $0x8] sm:$0xe]
      %v5684 = vld [vmem:[%s4463 + $0x10] sm:$0xe]
      %v5685 = vld [vmem:[%s4463 + $0x18] sm:$0xe]
      %v5686 = vld [vmem:[%s4463 + $0x20] sm:$0xe]
      %v5687 = vld [vmem:[%s4463 + $0x28] sm:$0xe]
      %v5688 = vld [vmem:[%s4463 + $0x30] sm:$0xe]
      %v5689 = vld [vmem:[%s4463 + $0x38] sm:$0xe]
      %v5690 = vld [vmem:[%s4463 + $0x50] sm:$0xe]
      %v5691 = vld [vmem:[%s4463 + $0x58] sm:$0xe]
      %v5692 = vld [vmem:[%s4463 + $0x60] sm:$0xe]
      %v5693 = vld [vmem:[%s4463 + $0x68] sm:$0xe]
      %v5694 = vld [vmem:[%s4463 + $0x70] sm:$0xe]
      %v5695 = vld [vmem:[%s4463 + $0x78] sm:$0xe]
      %v5696 = vld [vmem:[%s4463 + $0x80] sm:$0xe]
      %v5697 = vld [vmem:[%s4463 + $0x88] sm:$0xe]
      %v5698 = vld [vmem:[%s4463 + $0xa0] sm:$0xe]
      %v5699 = vld [vmem:[%s4463 + $0xa8] sm:$0xe]
      %v5700 = vld [vmem:[%s4463 + $0xb0] sm:$0xe]
      %v5701 = vld [vmem:[%s4463 + $0xb8] sm:$0xe]
      %v5702 = vld [vmem:[%s4463 + $0xc0] sm:$0xe]
      %v5703 = vld [vmem:[%s4463 + $0xc8] sm:$0xe]
      %v5704 = vld [vmem:[%s4463 + $0xd0] sm:$0xe]
      %v5705 = vld [vmem:[%s4463 + $0xd8] sm:$0xe]
      %v5706 = vld [vmem:[%s4463 + $0xf0] sm:$0xe]
      %v5707 = vld [vmem:[%s4463 + $0xf8] sm:$0xe]
      %v5708 = vld [vmem:[%s4463 + $0x100] sm:$0xe]
      %v5709 = vld [vmem:[%s4463 + $0x108] sm:$0xe]
      %v5710 = vld [vmem:[%s4463 + $0x110] sm:$0xe]
      %v5711 = vld [vmem:[%s4463 + $0x118] sm:$0xe]
      %v5712 = vld [vmem:[%s4463 + $0x120] sm:$0xe]
      %v5713 = vld [vmem:[%s4463 + $0x128] sm:$0xe]
      %v5778 = vrot.slane %v5682, 5
      %v5779 = vrot.slane %v5778, 4
      %v5780 = vrot.slane %v4850, 5
      %v5781 = vsel %vm2250, %v5779, %v5780
      %v5782 = vrot.slane %v5683, 5
      %v5783 = vrot.slane %v5782, 4
      %v5784 = vrot.slane %v4852, 5
      %v5785 = vsel %vm2250, %v5783, %v5784
      %v5786 = vrot.slane %v5684, 5
      %v5787 = vrot.slane %v5786, 4
      %v5788 = vrot.slane %v4854, 5
      %v5789 = vsel %vm2250, %v5787, %v5788
      %v5790 = vrot.slane %v5685, 5
      %v5791 = vrot.slane %v5790, 4
      %v5792 = vrot.slane %v4856, 5
      %v5793 = vsel %vm2250, %v5791, %v5792
      %v5794 = vrot.slane %v5686, 5
      %v5795 = vrot.slane %v5794, 4
      %v5796 = vrot.slane %v4858, 5
      %v5797 = vsel %vm2250, %v5795, %v5796
      %v5798 = vrot.slane %v5687, 5
      %v5799 = vrot.slane %v5798, 4
      %v5800 = vrot.slane %v4860, 5
      %v5801 = vsel %vm2250, %v5799, %v5800
      %v5802 = vrot.slane %v5688, 5
      %v5803 = vrot.slane %v5802, 4
      %v5804 = vrot.slane %v4862, 5
      %v5805 = vsel %vm2250, %v5803, %v5804
      %v5806 = vrot.slane %v5689, 5
      %v5807 = vrot.slane %v5806, 4
      %v5808 = vrot.slane %v4864, 5
      %v5809 = vsel %vm2250, %v5807, %v5808
      %v5810 = vrot.slane %v5690, 5
      %v5811 = vrot.slane %v5810, 4
      %v5812 = vrot.slane %v4866, 5
      %v5813 = vsel %vm2250, %v5811, %v5812
      %v5814 = vrot.slane %v5691, 5
      %v5815 = vrot.slane %v5814, 4
      %v5816 = vrot.slane %v4868, 5
      %v5817 = vsel %vm2250, %v5815, %v5816
      %v5818 = vrot.slane %v5692, 5
      %v5819 = vrot.slane %v5818, 4
      %v5820 = vrot.slane %v4870, 5
      %v5821 = vsel %vm2250, %v5819, %v5820
      %v5822 = vrot.slane %v5693, 5
      %v5823 = vrot.slane %v5822, 4
      %v5824 = vrot.slane %v4872, 5
      %v5825 = vsel %vm2250, %v5823, %v5824
      %v5826 = vrot.slane %v5694, 5
      %v5827 = vrot.slane %v5826, 4
      %v5828 = vrot.slane %v4874, 5
      %v5829 = vsel %vm2250, %v5827, %v5828
      %v5830 = vrot.slane %v5695, 5
      %v5831 = vrot.slane %v5830, 4
      %v5832 = vrot.slane %v4876, 5
      %v5833 = vsel %vm2250, %v5831, %v5832
      %v5834 = vrot.slane %v5696, 5
      %v5835 = vrot.slane %v5834, 4
      %v5836 = vrot.slane %v4878, 5
      %v5837 = vsel %vm2250, %v5835, %v5836
      %v5838 = vrot.slane %v5697, 5
      %v5839 = vrot.slane %v5838, 4
      %v5840 = vrot.slane %v4880, 5
      %v5841 = vsel %vm2250, %v5839, %v5840
      %v5842 = vrot.slane %v5698, 5
      %v5843 = vrot.slane %v5842, 4
      %v5844 = vrot.slane %v4882, 5
      %v5845 = vsel %vm2250, %v5843, %v5844
      %v5846 = vrot.slane %v5699, 5
      %v5847 = vrot.slane %v5846, 4
      %v5848 = vrot.slane %v4884, 5
      %v5849 = vsel %vm2250, %v5847, %v5848
      %v5850 = vrot.slane %v5700, 5
      %v5851 = vrot.slane %v5850, 4
      %v5852 = vrot.slane %v4886, 5
      %v5853 = vsel %vm2250, %v5851, %v5852
      %v5854 = vrot.slane %v5701, 5
      %v5855 = vrot.slane %v5854, 4
      %v5856 = vrot.slane %v4888, 5
      %v5857 = vsel %vm2250, %v5855, %v5856
      %v5858 = vrot.slane %v5702, 5
      %v5859 = vrot.slane %v5858, 4
      %v5860 = vrot.slane %v4890, 5
      %v5861 = vsel %vm2250, %v5859, %v5860
      %v5862 = vrot.slane %v5703, 5
      %v5863 = vrot.slane %v5862, 4
      %v5864 = vrot.slane %v4892, 5
      %v5865 = vsel %vm2250, %v5863, %v5864
      %v5866 = vrot.slane %v5704, 5
      %v5867 = vrot.slane %v5866, 4
      %v5868 = vrot.slane %v4894, 5
      %v5869 = vsel %vm2250, %v5867, %v5868
      %v5870 = vrot.slane %v5705, 5
      %v5871 = vrot.slane %v5870, 4
      %v5872 = vrot.slane %v4896, 5
      %v5873 = vsel %vm2250, %v5871, %v5872
      %v5874 = vrot.slane %v5706, 5
      %v5875 = vrot.slane %v5874, 4
      %v5876 = vrot.slane %v4898, 5
      %v5877 = vsel %vm2250, %v5875, %v5876
      %v5878 = vrot.slane %v5707, 5
      %v5879 = vrot.slane %v5878, 4
      %v5880 = vrot.slane %v4900, 5
      %v5881 = vsel %vm2250, %v5879, %v5880
      %v5882 = vrot.slane %v5708, 5
      %v5883 = vrot.slane %v5882, 4
      %v5884 = vrot.slane %v4902, 5
      %v5885 = vsel %vm2250, %v5883, %v5884
      %v5886 = vrot.slane %v5709, 5
      %v5887 = vrot.slane %v5886, 4
      %v5888 = vrot.slane %v4904, 5
      %v5889 = vsel %vm2250, %v5887, %v5888
      %v5890 = vrot.slane %v5710, 5
      %v5891 = vrot.slane %v5890, 4
      %v5892 = vrot.slane %v4906, 5
      %v5893 = vsel %vm2250, %v5891, %v5892
      %v5894 = vrot.slane %v5711, 5
      %v5895 = vrot.slane %v5894, 4
      %v5896 = vrot.slane %v4908, 5
      %v5897 = vsel %vm2250, %v5895, %v5896
      %v5898 = vrot.slane %v5712, 5
      %v5899 = vrot.slane %v5898, 4
      %v5900 = vrot.slane %v4910, 5
      %v5901 = vsel %vm2250, %v5899, %v5900
      %v5902 = vrot.slane %v5713, 5
      %v5903 = vrot.slane %v5902, 4
      %v5904 = vrot.slane %v4912, 5
      %v5905 = vsel %vm2250, %v5903, %v5904
      %v5906 = vld [vmem:[%s1 + $0x200] sm:$0xf]
      %v5907 = vld [vmem:[%s1 + $0x204] sm:$0xf]
      %v5908 = vld [vmem:[%s1 + $0x208] sm:$0xf]
      %v5909 = vld [vmem:[%s1 + $0x20c] sm:$0xf]
      %v5910 = vld [vmem:[%s1 + $0x210] sm:$0xf]
      %v5911 = vld [vmem:[%s1 + $0x214] sm:$0xf]
      %v5912 = vld [vmem:[%s1 + $0x218] sm:$0xf]
      %v5913 = vld [vmem:[%s1 + $0x21c] sm:$0xf]
      %v5914 = vld [vmem:[%s1 + $0x220] sm:$0xf]
      %v5915 = vld [vmem:[%s1 + $0x224] sm:$0xf]
      %v5916 = vld [vmem:[%s1 + $0x228] sm:$0xf]
      %v5917 = vld [vmem:[%s1 + $0x22c] sm:$0xf]
      %v5918 = vld [vmem:[%s1 + $0x230] sm:$0xf]
      %v5919 = vld [vmem:[%s1 + $0x234] sm:$0xf]
      %v5920 = vld [vmem:[%s1 + $0x238] sm:$0xf]
      %v5921 = vld [vmem:[%s1 + $0x23c] sm:$0xf]
      %v5922 = vunpack.c.l.b16 %v5781
      %v5923 = vunpack.c.l.b16 %v5785
      %v5924 = vunpack.c.l.b16 %v5789
      %v5925 = vunpack.c.l.b16 %v5793
      %v5926 = vunpack.c.l.b16 %v5797
      %v5927 = vunpack.c.l.b16 %v5801
      %v5928 = vunpack.c.l.b16 %v5805
      %v5929 = vunpack.c.l.b16 %v5809
      %v5930 = vunpack.c.l.b16 %v5813
      %v5931 = vunpack.c.l.b16 %v5817
      %v5932 = vunpack.c.l.b16 %v5821
      %v5933 = vunpack.c.l.b16 %v5825
      %v5934 = vunpack.c.l.b16 %v5829
      %v5935 = vunpack.c.l.b16 %v5833
      %v5936 = vunpack.c.l.b16 %v5837
      %v5937 = vunpack.c.l.b16 %v5841
      %v5938 = vunpack.c.l.b16 %v5845
      %v5939 = vunpack.c.l.b16 %v5849
      %v5940 = vunpack.c.l.b16 %v5853
      %v5941 = vunpack.c.l.b16 %v5857
      %v5942 = vunpack.c.l.b16 %v5861
      %v5943 = vunpack.c.l.b16 %v5865
      %v5944 = vunpack.c.l.b16 %v5869
      %v5945 = vunpack.c.l.b16 %v5873
      %v5946 = vunpack.c.l.b16 %v5877
      %v5947 = vunpack.c.l.b16 %v5881
      %v5948 = vunpack.c.l.b16 %v5885
      %v5949 = vunpack.c.l.b16 %v5889
      %v5950 = vunpack.c.l.b16 %v5893
      %v5951 = vunpack.c.l.b16 %v5897
      %v5952 = vunpack.c.l.b16 %v5901
      %v5953 = vunpack.c.l.b16 %v5905
      %v5954 = vpack.c.b16 %v5923, %v5922
      %v5955 = vpack.c.b16 %v5925, %v5924
      %v5956 = vpack.c.b16 %v5927, %v5926
      %v5957 = vpack.c.b16 %v5929, %v5928
      %v5958 = vpack.c.b16 %v5931, %v5930
      %v5959 = vpack.c.b16 %v5933, %v5932
      %v5960 = vpack.c.b16 %v5935, %v5934
      %v5961 = vpack.c.b16 %v5937, %v5936
      %v5962 = vpack.c.b16 %v5939, %v5938
      %v5963 = vpack.c.b16 %v5941, %v5940
      %v5964 = vpack.c.b16 %v5943, %v5942
      %v5965 = vpack.c.b16 %v5945, %v5944
      %v5966 = vpack.c.b16 %v5947, %v5946
      %v5967 = vpack.c.b16 %v5949, %v5948
      %v5968 = vpack.c.b16 %v5951, %v5950
      %v5969 = vpack.c.b16 %v5953, %v5952
      %v6002 = vunpack.c.l.b16 %v5906
      %v6003 = vunpack.c.l.b16 %v5907
      %v6004 = vunpack.c.l.b16 %v5908
      %v6005 = vunpack.c.l.b16 %v5909
      %v6006 = vunpack.c.l.b16 %v5910
      %v6007 = vunpack.c.l.b16 %v5911
      %v6008 = vunpack.c.l.b16 %v5912
      %v6009 = vunpack.c.l.b16 %v5913
      %v6010 = vunpack.c.l.b16 %v5914
      %v6011 = vunpack.c.l.b16 %v5915
      %v6012 = vunpack.c.l.b16 %v5916
      %v6013 = vunpack.c.l.b16 %v5917
      %v6014 = vunpack.c.l.b16 %v5918
      %v6015 = vunpack.c.l.b16 %v5919
      %v6016 = vunpack.c.l.b16 %v5920
      %v6017 = vunpack.c.l.b16 %v5921
      %v6018 = vpack.c.b16 %v6003, %v6002
      %v6019 = vpack.c.b16 %v6005, %v6004
      %v6020 = vpack.c.b16 %v6007, %v6006
      %v6021 = vpack.c.b16 %v6009, %v6008
      %v6022 = vpack.c.b16 %v6011, %v6010
      %v6023 = vpack.c.b16 %v6013, %v6012
      %v6024 = vpack.c.b16 %v6015, %v6014
      %v6025 = vpack.c.b16 %v6017, %v6016
      %6034 = vmatprep.subr.bf16.mxu0 0
      %6035 = vmatpush1.bf16.msra.mxu0 %v6018
      %6036 = vmatprep.subr.bf16.mxu0 0
      %6037 = vmatpush1.bf16.msra.mxu0 %v6019
      %6038 = vmatprep.subr.bf16.mxu0 0
      %6039 = vmatpush1.bf16.msra.mxu0 %v6020
      %6040 = vmatprep.subr.bf16.mxu0 0
      %6041 = vmatpush1.bf16.msra.mxu0 %v6021
      %6042 = vmatprep.subr.bf16.mxu0 0
      %6043 = vmatpush1.bf16.msra.mxu0 %v6022
      %6044 = vmatprep.subr.bf16.mxu0 0
      %6045 = vmatpush1.bf16.msra.mxu0 %v6023
      %6046 = vmatprep.subr.bf16.mxu0 0
      %6047 = vmatpush1.bf16.msra.mxu0 %v6024
      %6048 = vmatprep.subr.bf16.mxu0 0
      %6049 = vmatpush1.bf16.msra.mxu0 %v6025
      %6050 = vmatprep.subr.bf16.mxu0 0
      %6051 = vmatpush1.bf16.msra.mxu0 0
      %6052 = vmatprep.subr.bf16.mxu0 0
      %6053 = vmatpush1.bf16.msra.mxu0 0
      %6054 = vmatprep.subr.bf16.mxu0 0
      %6055 = vmatpush1.bf16.msra.mxu0 0
      %6056 = vmatprep.subr.bf16.mxu0 0
      %6057 = vmatpush1.bf16.msra.mxu0 0
      %6058 = vmatprep.subr.bf16.mxu0 0
      %6059 = vmatpush1.bf16.msra.mxu0 0
      %6060 = vmatprep.subr.bf16.mxu0 0
      %6061 = vmatpush1.bf16.msra.mxu0 0
      %6062 = vmatprep.subr.bf16.mxu0 0
      %6063 = vmatpush1.bf16.msra.mxu0 0
      %6064 = vmatprep.subr.bf16.mxu0 0
      %6065 = vmatpush1.bf16.msra.mxu0 0
      %6066 = vmatprep.mubr.bf16.mxu0 0
      %6067 = vmatmul.mubr.bf16.gmra.mrb[0].mxu0 %v5954
      %v6068 = vpop.f32.mrb[0].mxu0
      %v6069 = vadd.f32 0.0, %v6068
      %v6070 = vpop.f32.mrb[0].mxu0
      %v6071 = vpop.f32.mrb[0].mxu0
      %v6072 = vadd.f32 0.0, %v6071
      %v6073 = vpop.f32.mrb[0].mxu0
      %6074 = vmatprep.mubr.bf16.mxu0 0
      %6075 = vmatmul.mubr.bf16.gmra.mrb[0].mxu0 %v5955
      %v6076 = vpop.f32.mrb[0].mxu0
      %v6077 = vadd.f32 0.0, %v6076
      %v6078 = vpop.f32.mrb[0].mxu0
      %v6079 = vpop.f32.mrb[0].mxu0
      %v6080 = vadd.f32 0.0, %v6079
      %v6081 = vpop.f32.mrb[0].mxu0
      %6082 = vmatprep.mubr.bf16.mxu0 0
      %6083 = vmatmul.mubr.bf16.gmra.mrb[0].mxu0 %v5956
      %v6084 = vpop.f32.mrb[0].mxu0
      %v6085 = vadd.f32 0.0, %v6084
      %v6086 = vpop.f32.mrb[0].mxu0
      %v6087 = vpop.f32.mrb[0].mxu0
      %v6088 = vadd.f32 0.0, %v6087
      %v6089 = vpop.f32.mrb[0].mxu0
      %6090 = vmatprep.mubr.bf16.mxu0 0
      %6091 = vmatmul.mubr.bf16.gmra.mrb[0].mxu0 %v5957
      %v6092 = vpop.f32.mrb[0].mxu0
      %v6093 = vadd.f32 0.0, %v6092
      %v6094 = vpop.f32.mrb[0].mxu0
      %v6095 = vpop.f32.mrb[0].mxu0
      %v6096 = vadd.f32 0.0, %v6095
      %v6097 = vpop.f32.mrb[0].mxu0
      %6098 = vmatprep.mubr.bf16.mxu0 0
      %6099 = vmatmul.mubr.bf16.gmra.mrb[0].mxu0 %v5958
      %v6100 = vpop.f32.mrb[0].mxu0
      %v6101 = vadd.f32 0.0, %v6100
      %v6102 = vpop.f32.mrb[0].mxu0
      %v6103 = vpop.f32.mrb[0].mxu0
      %v6104 = vadd.f32 0.0, %v6103
      %v6105 = vpop.f32.mrb[0].mxu0
      %6106 = vmatprep.mubr.bf16.mxu0 0
      %6107 = vmatmul.mubr.bf16.gmra.mrb[0].mxu0 %v5959
      %v6108 = vpop.f32.mrb[0].mxu0
      %v6109 = vadd.f32 0.0, %v6108
      %v6110 = vpop.f32.mrb[0].mxu0
      %v6111 = vpop.f32.mrb[0].mxu0
      %v6112 = vadd.f32 0.0, %v6111
      %v6113 = vpop.f32.mrb[0].mxu0
      %6114 = vmatprep.mubr.bf16.mxu0 0
      %6115 = vmatmul.mubr.bf16.gmra.mrb[0].mxu0 %v5960
      %v6116 = vpop.f32.mrb[0].mxu0
      %v6117 = vadd.f32 0.0, %v6116
      %v6118 = vpop.f32.mrb[0].mxu0
      %v6119 = vpop.f32.mrb[0].mxu0
      %v6120 = vadd.f32 0.0, %v6119
      %v6121 = vpop.f32.mrb[0].mxu0
      %6122 = vmatprep.mubr.bf16.mxu0 0
      %6123 = vmatmul.mubr.bf16.gmra.mrb[0].mxu0 %v5961
      %v6124 = vpop.f32.mrb[0].mxu0
      %v6125 = vadd.f32 0.0, %v6124
      %v6126 = vpop.f32.mrb[0].mxu0
      %v6127 = vpop.f32.mrb[0].mxu0
      %v6128 = vadd.f32 0.0, %v6127
      %v6129 = vpop.f32.mrb[0].mxu0
      %6130 = vmatprep.mubr.bf16.mxu0 0
      %6131 = vmatmul.mubr.bf16.gmra.mrb[0].mxu0 %v5962
      %v6132 = vpop.f32.mrb[0].mxu0
      %v6133 = vadd.f32 0.0, %v6132
      %v6134 = vpop.f32.mrb[0].mxu0
      %v6135 = vpop.f32.mrb[0].mxu0
      %v6136 = vadd.f32 0.0, %v6135
      %v6137 = vpop.f32.mrb[0].mxu0
      %6138 = vmatprep.mubr.bf16.mxu0 0
      %6139 = vmatmul.mubr.bf16.gmra.mrb[0].mxu0 %v5963
      %v6140 = vpop.f32.mrb[0].mxu0
      %v6141 = vadd.f32 0.0, %v6140
      %v6142 = vpop.f32.mrb[0].mxu0
      %v6143 = vpop.f32.mrb[0].mxu0
      %v6144 = vadd.f32 0.0, %v6143
      %v6145 = vpop.f32.mrb[0].mxu0
      %6146 = vmatprep.mubr.bf16.mxu0 0
      %6147 = vmatmul.mubr.bf16.gmra.mrb[0].mxu0 %v5964
      %v6148 = vpop.f32.mrb[0].mxu0
      %v6149 = vadd.f32 0.0, %v6148
      %v6150 = vpop.f32.mrb[0].mxu0
      %v6151 = vpop.f32.mrb[0].mxu0
      %v6152 = vadd.f32 0.0, %v6151
      %v6153 = vpop.f32.mrb[0].mxu0
      %6154 = vmatprep.mubr.bf16.mxu0 0
      %6155 = vmatmul.mubr.bf16.gmra.mrb[0].mxu0 %v5965
      %v6156 = vpop.f32.mrb[0].mxu0
      %v6157 = vadd.f32 0.0, %v6156
      %v6158 = vpop.f32.mrb[0].mxu0
      %v6159 = vpop.f32.mrb[0].mxu0
      %v6160 = vadd.f32 0.0, %v6159
      %v6161 = vpop.f32.mrb[0].mxu0
      %6162 = vmatprep.mubr.bf16.mxu0 0
      %6163 = vmatmul.mubr.bf16.gmra.mrb[0].mxu0 %v5966
      %v6164 = vpop.f32.mrb[0].mxu0
      %v6165 = vadd.f32 0.0, %v6164
      %v6166 = vpop.f32.mrb[0].mxu0
      %v6167 = vpop.f32.mrb[0].mxu0
      %v6168 = vadd.f32 0.0, %v6167
      %v6169 = vpop.f32.mrb[0].mxu0
      %6170 = vmatprep.mubr.bf16.mxu0 0
      %6171 = vmatmul.mubr.bf16.gmra.mrb[0].mxu0 %v5967
      %v6172 = vpop.f32.mrb[0].mxu0
      %v6173 = vadd.f32 0.0, %v6172
      %v6174 = vpop.f32.mrb[0].mxu0
      %v6175 = vpop.f32.mrb[0].mxu0
      %v6176 = vadd.f32 0.0, %v6175
      %v6177 = vpop.f32.mrb[0].mxu0
      %6178 = vmatprep.mubr.bf16.mxu0 0
      %6179 = vmatmul.mubr.bf16.gmra.mrb[0].mxu0 %v5968
      %v6180 = vpop.f32.mrb[0].mxu0
      %v6181 = vadd.f32 0.0, %v6180
      %v6182 = vpop.f32.mrb[0].mxu0
      %v6183 = vpop.f32.mrb[0].mxu0
      %v6184 = vadd.f32 0.0, %v6183
      %v6185 = vpop.f32.mrb[0].mxu0
      %6186 = vmatprep.mubr.bf16.mxu0 0
      %6187 = vmatmul.mubr.bf16.gmra.mrb[0].mxu0 %v5969
      %v6188 = vpop.f32.mrb[0].mxu0
      %v6189 = vadd.f32 0.0, %v6188
      %v6190 = vpop.f32.mrb[0].mxu0
      %v6191 = vpop.f32.mrb[0].mxu0
      %v6192 = vadd.f32 0.0, %v6191
      %v6193 = vpop.f32.mrb[0].mxu0
      %6194 = vdwg.mxu0
      %v6195 = vadd.f32 %v5650, %v6069
      %v6196 = vadd.f32 %v5651, %v6072
      %v6197 = vadd.f32 %v5652, %v6077
      %v6198 = vadd.f32 %v5653, %v6080
      %v6199 = vadd.f32 %v5654, %v6085
      %v6200 = vadd.f32 %v5655, %v6088
      %v6201 = vadd.f32 %v5656, %v6093
      %v6202 = vadd.f32 %v5657, %v6096
      %v6203 = vadd.f32 %v5658, %v6101
      %v6204 = vadd.f32 %v5659, %v6104
      %v6205 = vadd.f32 %v5660, %v6109
      %v6206 = vadd.f32 %v5661, %v6112
      %v6207 = vadd.f32 %v5662, %v6117
      %v6208 = vadd.f32 %v5663, %v6120
      %v6209 = vadd.f32 %v5664, %v6125
      %v6210 = vadd.f32 %v5665, %v6128
      %v6211 = vadd.f32 %v5666, %v6133
      %v6212 = vadd.f32 %v5667, %v6136
      %v6213 = vadd.f32 %v5668, %v6141
      %v6214 = vadd.f32 %v5669, %v6144
      %v6215 = vadd.f32 %v5670, %v6149
      %v6216 = vadd.f32 %v5671, %v6152
      %v6217 = vadd.f32 %v5672, %v6157
      %v6218 = vadd.f32 %v5673, %v6160
      %v6219 = vadd.f32 %v5674, %v6165
      %v6220 = vadd.f32 %v5675, %v6168
      %v6221 = vadd.f32 %v5676, %v6173
      %v6222 = vadd.f32 %v5677, %v6176
      %v6223 = vadd.f32 %v5678, %v6181
      %v6224 = vadd.f32 %v5679, %v6184
      %v6225 = vadd.f32 %v5680, %v6189
      %v6226 = vadd.f32 %v5681, %v6192
      %v6227 = vld [vmem:[%s2] sm:$0x1]
      %v6229 = vlaneseq
      %v6230 = vshrl.u32 %v6229, 7
      %v6231 = vsub.s32 0, %v6230
      %v6232 = vrot.slane %v6227, %v6231
      %v6234 = vadd.f32 %v6195, %v6232
      %v6235 = vadd.f32 %v6196, %v6232
      %v6236 = vadd.f32 %v6197, %v6232
      %v6237 = vadd.f32 %v6198, %v6232
      %v6238 = vadd.f32 %v6199, %v6232
      %v6239 = vadd.f32 %v6200, %v6232
      %v6240 = vadd.f32 %v6201, %v6232
      %v6241 = vadd.f32 %v6202, %v6232
      %v6242 = vadd.f32 %v6203, %v6232
      %v6243 = vadd.f32 %v6204, %v6232
      %v6244 = vadd.f32 %v6205, %v6232
      %v6245 = vadd.f32 %v6206, %v6232
      %v6246 = vadd.f32 %v6207, %v6232
      %v6247 = vadd.f32 %v6208, %v6232
      %v6248 = vadd.f32 %v6209, %v6232
      %v6249 = vadd.f32 %v6210, %v6232
      %v6250 = vadd.f32 %v6211, %v6232
      %v6251 = vadd.f32 %v6212, %v6232
      %v6252 = vadd.f32 %v6213, %v6232
      %v6253 = vadd.f32 %v6214, %v6232
      %v6254 = vadd.f32 %v6215, %v6232
      %v6255 = vadd.f32 %v6216, %v6232
      %v6256 = vadd.f32 %v6217, %v6232
      %v6257 = vadd.f32 %v6218, %v6232
      %v6258 = vadd.f32 %v6219, %v6232
      %v6259 = vadd.f32 %v6220, %v6232
      %v6260 = vadd.f32 %v6221, %v6232
      %v6261 = vadd.f32 %v6222, %v6232
      %v6262 = vadd.f32 %v6223, %v6232
      %v6263 = vadd.f32 %v6224, %v6232
      %v6264 = vadd.f32 %v6225, %v6232
      %v6265 = vadd.f32 %v6226, %v6232
      %v6266 = vpack.c.bf16 %v6235, %v6234
      %v6267 = vpack.c.bf16 %v6237, %v6236
      %v6268 = vpack.c.bf16 %v6239, %v6238
      %v6269 = vpack.c.bf16 %v6241, %v6240
      %v6270 = vpack.c.bf16 %v6243, %v6242
      %v6271 = vpack.c.bf16 %v6245, %v6244
      %v6272 = vpack.c.bf16 %v6247, %v6246
      %v6273 = vpack.c.bf16 %v6249, %v6248
      %v6274 = vpack.c.bf16 %v6251, %v6250
      %v6275 = vpack.c.bf16 %v6253, %v6252
      %v6276 = vpack.c.bf16 %v6255, %v6254
      %v6277 = vpack.c.bf16 %v6257, %v6256
      %v6278 = vpack.c.bf16 %v6259, %v6258
      %v6279 = vpack.c.bf16 %v6261, %v6260
      %v6280 = vpack.c.bf16 %v6263, %v6262
      %v6281 = vpack.c.bf16 %v6265, %v6264
      %v6298 = vunpack.c.l.b16 %v6266
      %v6299 = vunpack.c.h.b16 %v6266
      %v6300 = vunpack.c.l.b16 %v6267
      %v6301 = vunpack.c.h.b16 %v6267
      %v6302 = vunpack.c.l.b16 %v6268
      %v6303 = vunpack.c.h.b16 %v6268
      %v6304 = vunpack.c.l.b16 %v6269
      %v6305 = vunpack.c.h.b16 %v6269
      %v6306 = vunpack.c.l.b16 %v6270
      %v6307 = vunpack.c.h.b16 %v6270
      %v6308 = vunpack.c.l.b16 %v6271
      %v6309 = vunpack.c.h.b16 %v6271
      %v6310 = vunpack.c.l.b16 %v6272
      %v6311 = vunpack.c.h.b16 %v6272
      %v6312 = vunpack.c.l.b16 %v6273
      %v6313 = vunpack.c.h.b16 %v6273
      %v6314 = vunpack.c.l.b16 %v6274
      %v6315 = vunpack.c.h.b16 %v6274
      %v6316 = vunpack.c.l.b16 %v6275
      %v6317 = vunpack.c.h.b16 %v6275
      %v6318 = vunpack.c.l.b16 %v6276
      %v6319 = vunpack.c.h.b16 %v6276
      %v6320 = vunpack.c.l.b16 %v6277
      %v6321 = vunpack.c.h.b16 %v6277
      %v6322 = vunpack.c.l.b16 %v6278
      %v6323 = vunpack.c.h.b16 %v6278
      %v6324 = vunpack.c.l.b16 %v6279
      %v6325 = vunpack.c.h.b16 %v6279
      %v6326 = vunpack.c.l.b16 %v6280
      %v6327 = vunpack.c.h.b16 %v6280
      %v6328 = vunpack.c.l.b16 %v6281
      %v6329 = vunpack.c.h.b16 %v6281
      %v6330 = vpack.c.b16 %v6298, %v6298
      %v6331 = vpack.c.b16 %v6299, %v6299
      %v6332 = vpack.c.b16 %v6300, %v6300
      %v6333 = vpack.c.b16 %v6301, %v6301
      %v6334 = vpack.c.b16 %v6302, %v6302
      %v6335 = vpack.c.b16 %v6303, %v6303
      %v6336 = vpack.c.b16 %v6304, %v6304
      %v6337 = vpack.c.b16 %v6305, %v6305
      %v6338 = vpack.c.b16 %v6306, %v6306
      %v6339 = vpack.c.b16 %v6307, %v6307
      %v6340 = vpack.c.b16 %v6308, %v6308
      %v6341 = vpack.c.b16 %v6309, %v6309
      %v6342 = vpack.c.b16 %v6310, %v6310
      %v6343 = vpack.c.b16 %v6311, %v6311
      %v6344 = vpack.c.b16 %v6312, %v6312
      %v6345 = vpack.c.b16 %v6313, %v6313
      %v6346 = vpack.c.b16 %v6314, %v6314
      %v6347 = vpack.c.b16 %v6315, %v6315
      %v6348 = vpack.c.b16 %v6316, %v6316
      %v6349 = vpack.c.b16 %v6317, %v6317
      %v6350 = vpack.c.b16 %v6318, %v6318
      %v6351 = vpack.c.b16 %v6319, %v6319
      %v6352 = vpack.c.b16 %v6320, %v6320
      %v6353 = vpack.c.b16 %v6321, %v6321
      %v6354 = vpack.c.b16 %v6322, %v6322
      %v6355 = vpack.c.b16 %v6323, %v6323
      %v6356 = vpack.c.b16 %v6324, %v6324
      %v6357 = vpack.c.b16 %v6325, %v6325
      %v6358 = vpack.c.b16 %v6326, %v6326
      %v6359 = vpack.c.b16 %v6327, %v6327
      %v6360 = vpack.c.b16 %v6328, %v6328
      %v6361 = vpack.c.b16 %v6329, %v6329
      %6394 = vst [vmem:[%s211] sm:$0xf] %v6330
      %6395 = vst [vmem:[%s211 + $0x4] sm:$0xf] %v6331
      %6396 = vst [vmem:[%s211 + $0x8] sm:$0xf] %v6332
      %6397 = vst [vmem:[%s211 + $0xc] sm:$0xf] %v6333
      %6398 = vst [vmem:[%s211 + $0x10] sm:$0xf] %v6334
      %6399 = vst [vmem:[%s211 + $0x14] sm:$0xf] %v6335
      %6400 = vst [vmem:[%s211 + $0x18] sm:$0xf] %v6336
      %6401 = vst [vmem:[%s211 + $0x1c] sm:$0xf] %v6337
      %6402 = vst [vmem:[%s211 + $0x20] sm:$0xf] %v6338
      %6403 = vst [vmem:[%s211 + $0x24] sm:$0xf] %v6339
      %6404 = vst [vmem:[%s211 + $0x28] sm:$0xf] %v6340
      %6405 = vst [vmem:[%s211 + $0x2c] sm:$0xf] %v6341
      %6406 = vst [vmem:[%s211 + $0x30] sm:$0xf] %v6342
      %6407 = vst [vmem:[%s211 + $0x34] sm:$0xf] %v6343
      %6408 = vst [vmem:[%s211 + $0x38] sm:$0xf] %v6344
      %6409 = vst [vmem:[%s211 + $0x3c] sm:$0xf] %v6345
      %6410 = vst [vmem:[%s211 + $0x40] sm:$0xf] %v6346
      %6411 = vst [vmem:[%s211 + $0x44] sm:$0xf] %v6347
      %6412 = vst [vmem:[%s211 + $0x48] sm:$0xf] %v6348
      %6413 = vst [vmem:[%s211 + $0x4c] sm:$0xf] %v6349
      %6414 = vst [vmem:[%s211 + $0x50] sm:$0xf] %v6350
      %6415 = vst [vmem:[%s211 + $0x54] sm:$0xf] %v6351
      %6416 = vst [vmem:[%s211 + $0x58] sm:$0xf] %v6352
      %6417 = vst [vmem:[%s211 + $0x5c] sm:$0xf] %v6353
      %6418 = vst [vmem:[%s211 + $0x60] sm:$0xf] %v6354
      %6419 = vst [vmem:[%s211 + $0x64] sm:$0xf] %v6355
      %6420 = vst [vmem:[%s211 + $0x68] sm:$0xf] %v6356
      %6421 = vst [vmem:[%s211 + $0x6c] sm:$0xf] %v6357
      %6422 = vst [vmem:[%s211 + $0x70] sm:$0xf] %v6358
      %6423 = vst [vmem:[%s211 + $0x74] sm:$0xf] %v6359
      %6424 = vst [vmem:[%s211 + $0x78] sm:$0xf] %v6360
      %6425 = vst [vmem:[%s211 + $0x7c] sm:$0xf] %v6361
      %v6426 = vadd.f32 %v6234, %v6235
      %v6427 = vadd.f32 %v6426, %v6236
      %v6428 = vadd.f32 %v6427, %v6237
      %v6429 = vadd.f32 %v6428, %v6238
      %v6430 = vadd.f32 %v6429, %v6239
      %v6431 = vadd.f32 %v6430, %v6240
      %v6432 = vadd.f32 %v6431, %v6241
      %v6433 = vadd.f32 %v6432, %v6242
      %v6434 = vadd.f32 %v6433, %v6243
      %v6435 = vadd.f32 %v6434, %v6244
      %v6436 = vadd.f32 %v6435, %v6245
      %v6437 = vadd.f32 %v6436, %v6246
      %v6438 = vadd.f32 %v6437, %v6247
      %v6439 = vadd.f32 %v6438, %v6248
      %v6440 = vadd.f32 %v6439, %v6249
      %v6441 = vadd.f32 %v6440, %v6250
      %v6442 = vadd.f32 %v6441, %v6251
      %v6443 = vadd.f32 %v6442, %v6252
      %v6444 = vadd.f32 %v6443, %v6253
      %v6445 = vadd.f32 %v6444, %v6254
      %v6446 = vadd.f32 %v6445, %v6255
      %v6447 = vadd.f32 %v6446, %v6256
      %v6448 = vadd.f32 %v6447, %v6257
      %v6449 = vadd.f32 %v6448, %v6258
      %v6450 = vadd.f32 %v6449, %v6259
      %v6451 = vadd.f32 %v6450, %v6260
      %v6452 = vadd.f32 %v6451, %v6261
      %v6453 = vadd.f32 %v6452, %v6262
      %v6454 = vadd.f32 %v6453, %v6263
      %v6455 = vadd.f32 %v6454, %v6264
      %v6456 = vadd.f32 %v6455, %v6265
      %v6457 = vrot.slane %v6456, 4
      %v6458 = vadd.f32 %v6456, %v6457
      %v6459 = vrot.slane %v6458, 2
      %v6460 = vadd.f32 %v6458, %v6459
      %v6461 = vrot.slane %v6460, 1
      %v6462 = vadd.f32 %v6460, %v6461
      %6463 = vst [vmem:[%s216] sm:$0x1] %v6462
      %v6464 = vmul.f32 %v6234, %v6234
      %v6465 = vmul.f32 %v6235, %v6235
      %v6466 = vmul.f32 %v6236, %v6236
      %v6467 = vmul.f32 %v6237, %v6237
      %v6468 = vmul.f32 %v6238, %v6238
      %v6469 = vmul.f32 %v6239, %v6239
      %v6470 = vmul.f32 %v6240, %v6240
      %v6471 = vmul.f32 %v6241, %v6241
      %v6472 = vmul.f32 %v6242, %v6242
      %v6473 = vmul.f32 %v6243, %v6243
      %v6474 = vmul.f32 %v6244, %v6244
      %v6475 = vmul.f32 %v6245, %v6245
      %v6476 = vmul.f32 %v6246, %v6246
      %v6477 = vmul.f32 %v6247, %v6247
      %v6478 = vmul.f32 %v6248, %v6248
      %v6479 = vmul.f32 %v6249, %v6249
      %v6480 = vmul.f32 %v6250, %v6250
      %v6481 = vmul.f32 %v6251, %v6251
      %v6482 = vmul.f32 %v6252, %v6252
      %v6483 = vmul.f32 %v6253, %v6253
      %v6484 = vmul.f32 %v6254, %v6254
      %v6485 = vmul.f32 %v6255, %v6255
      %v6486 = vmul.f32 %v6256, %v6256
      %v6487 = vmul.f32 %v6257, %v6257
      %v6488 = vmul.f32 %v6258, %v6258
      %v6489 = vmul.f32 %v6259, %v6259
      %v6490 = vmul.f32 %v6260, %v6260
      %v6491 = vmul.f32 %v6261, %v6261
      %v6492 = vmul.f32 %v6262, %v6262
      %v6493 = vmul.f32 %v6263, %v6263
      %v6494 = vmul.f32 %v6264, %v6264
      %v6495 = vmul.f32 %v6265, %v6265
      %v6496 = vadd.f32 %v6464, %v6465
      %v6497 = vadd.f32 %v6496, %v6466
      %v6498 = vadd.f32 %v6497, %v6467
      %v6499 = vadd.f32 %v6498, %v6468
      %v6500 = vadd.f32 %v6499, %v6469
      %v6501 = vadd.f32 %v6500, %v6470
      %v6502 = vadd.f32 %v6501, %v6471
      %v6503 = vadd.f32 %v6502, %v6472
      %v6504 = vadd.f32 %v6503, %v6473
      %v6505 = vadd.f32 %v6504, %v6474
      %v6506 = vadd.f32 %v6505, %v6475
      %v6507 = vadd.f32 %v6506, %v6476
      %v6508 = vadd.f32 %v6507, %v6477
      %v6509 = vadd.f32 %v6508, %v6478
      %v6510 = vadd.f32 %v6509, %v6479
      %v6511 = vadd.f32 %v6510, %v6480
      %v6512 = vadd.f32 %v6511, %v6481
      %v6513 = vadd.f32 %v6512, %v6482
      %v6514 = vadd.f32 %v6513, %v6483
      %v6515 = vadd.f32 %v6514, %v6484
      %v6516 = vadd.f32 %v6515, %v6485
      %v6517 = vadd.f32 %v6516, %v6486
      %v6518 = vadd.f32 %v6517, %v6487
      %v6519 = vadd.f32 %v6518, %v6488
      %v6520 = vadd.f32 %v6519, %v6489
      %v6521 = vadd.f32 %v6520, %v6490
      %v6522 = vadd.f32 %v6521, %v6491
      %v6523 = vadd.f32 %v6522, %v6492
      %v6524 = vadd.f32 %v6523, %v6493
      %v6525 = vadd.f32 %v6524, %v6494
      %v6526 = vadd.f32 %v6525, %v6495
      %v6527 = vrot.slane %v6526, 4
      %v6528 = vadd.f32 %v6526, %v6527
      %v6529 = vrot.slane %v6528, 2
      %v6530 = vadd.f32 %v6528, %v6529
      %v6531 = vrot.slane %v6530, 1
      %v6532 = vadd.f32 %v6530, %v6531
      %6533 = vst [vmem:[%s216 + $0x1] sm:$0x1] %v6532
      %s6534 = smul.u32 4, %s16
      %p6535 = scmp.lt.s32.totalorder %s6534, 7
      %s6536 = scalar_select %p6535, %s6534, 7
      %s6537 = smul.addr %s6536, 8
      %s6538 = smul.addr %s6537, 4
      %s6539 = scalar_lea.vmem %s3, %s6538
      %p6540 = scmp.lt.s32.totalorder %s16, 1
      %s6541 = scalar_select %p6540, %s16, 1
      %s6542 = smul.addr %s6541, 2
      %s6543 = scalar_lea.vmem %s4, %s6542
      // Predicated region
      $region33: #{bottleneck_forward.6} parent=31 // pred_check
        %p6544 = pneg %p102
      $region34: #{bottleneck_forward.6} parent=31 // pred_check_branch
        %6546 = sbr.rel (%p6544) target = $region36
      $region35: #{bottleneck_forward.6} parent=31 // pred_region
        %s6547 = smul.u32 4, %s16
      $region36: #{bottleneck_forward.6} parent=31 // pred_fallthru
        _
      // Predicated region
      $region37: #{bottleneck_forward.6} parent=31 // pred_check
        %p6548 = pneg %p128
      $region38: #{bottleneck_forward.6} parent=31 // pred_check_branch
        %6550 = sbr.rel (%p6548) target = $region40
      $region39: #{bottleneck_forward.6} parent=31 // pred_region
        _
      $region40: #{bottleneck_forward.6} parent=31 // pred_fallthru
        _
    $region32: #{bottleneck_forward.6} parent=5 // pred_fallthru
      _
    %p6551 = scmp.le.s32.totalorder 2, %s11
    // Predicated region
    $region41: #{bottleneck_forward.6} parent=5 // pred_check
      %p6552 = pneg %p6551
    $region42: #{bottleneck_forward.6} parent=5 // pred_check_branch
      %6554 = sbr.rel (%p6552) target = $region44
    $region43: #{bottleneck_forward.6} parent=5 // pred_region
      %s6555 = ssub.s32 %s11, 2
      // Predicated region
      $region45: #{bottleneck_forward.6} parent=43 // pred_check
        %p6556 = pneg %p108
      $region46: #{bottleneck_forward.6} parent=43 // pred_check_branch
        %6558 = sbr.rel (%p6556) target = $region48
      $region47: #{bottleneck_forward.6} parent=43 // pred_region
        %s6559 = smul.u32 4, %s17
        %p6560 = scmp.lt.s32.totalorder %s6559, 7
        %s6561 = scalar_select %p6560, %s6559, 7
        %s6562 = smul.addr %s6561, 8
        %s6563 = smul.addr %s6562, 4
        %s6564 = scalar_lea.vmem %s3, %s6563
      $region48: #{bottleneck_forward.6} parent=43 // pred_fallthru
        _
      // Predicated region
      $region49: #{bottleneck_forward.6} parent=43 // pred_check
        %p6565 = pneg %p134
      $region50: #{bottleneck_forward.6} parent=43 // pred_check_branch
        %6567 = sbr.rel (%p6565) target = $region52
      $region51: #{bottleneck_forward.6} parent=43 // pred_region
        %p6568 = scmp.lt.s32.totalorder %s17, 1
        %s6569 = scalar_select %p6568, %s17, 1
        %s6570 = smul.addr %s6569, 2
        %s6571 = scalar_lea.vmem %s4, %s6570
      $region52: #{bottleneck_forward.6} parent=43 // pred_fallthru
        _
    $region44: #{bottleneck_forward.6} parent=5 // pred_fallthru
      _
  $region6: #{bottleneck_forward.6} parent=0 // loop_footer
    %s15 = sadd.s32 1, %s11
  $region7: #{bottleneck_forward.6} parent=0 // loop_footer_branch
    %10 = sbr.rel target = $region3
  $region8: #{bottleneck_forward.6} parent=0 // loop_exit
    _

</llo_original>
